<compile_context>
chip_gen: v6e
topology: v6e:2x2x1
jax: 0.10.0
libtpu: 0.0.40
codegen_flags: <defaults>
</compile_context>

<pallas_src>
import jax
import jax.numpy as jnp
import numpy as np
from jax.experimental import pallas as pl
from jax.experimental.pallas import tpu as pltpu


# ----------------------------- Pallas kernel ------------------------------ #

def _make_fused_kernel(wp2, pitch, d_rows, u_rows, hp2, ho, wo, r_up,
                       inner_nc, outer_nc):
    """Fused lrelu -> Conv2d(k4,s2,p1) -> lrelu -> ConvT(k4,s2,p1) for one batch block.

    The wrapper delivers the padded, space-to-depth'd inputs of B_blk images stacked
    along the row axis at a fixed per-image pitch, so every conv tap is a plain
    row-shifted VMEM slice and the images stack directly into the matmul M dimension.
    """

    def kernel(xin_ref, wd_ref, wu_ref, u_ref, stats_ref, a_scr, d_scr):
        # LeakyReLU(0.2) applied ONCE per element; single f32->bf16 cast on write.
        # lrelu(0) == 0, so the structural zero-padding rows stay zero.
        x = xin_ref[...].astype(jnp.float32)
        a_scr[...] = jnp.where(x > 0, x, 0.2 * x).astype(jnp.bfloat16)

        # In-kernel masks (periodic in the per-image row pitch). Small-integer f32
        # division is exact, so floor() is safe here.
        def row_coords(nrows):
            g = jax.lax.broadcasted_iota(jnp.int32, (nrows, 1), 0).astype(jnp.float32)
            r = g - jnp.floor(g / pitch) * pitch          # per-image row
            oy = jnp.floor(r / wp2)
            ox = r - oy * wp2
            return r, oy, ox

        rd_, oy_d, ox_d = row_coords(d_rows)
        mask_d = ((rd_ < hp2 * wp2) & (oy_d >= 1) & (oy_d <= ho)
                  & (ox_d >= 1) & (ox_d <= wo))

        # ---- down: Conv2d(k=4, s=2, p=1) == 2x2 stride-1 conv over the space-to-
        # depth input -> 4 row-shifted bf16 slices, 4 MXU matmuls (f32 accumulate). ----
        acc = jnp.zeros((d_rows, inner_nc), jnp.float32)
        for t, (a, b) in enumerate(((0, 0), (0, 1), (1, 0), (1, 1))):
            s = a * wp2 + b
            acc += jnp.dot(a_scr[s:s + d_rows, :], wd_ref[t],
                           preferred_element_type=jnp.float32)
        # LeakyReLU epilogue + zero the ConvT padding border / junk rows; one
        # f32->bf16 cast; the inner activation never leaves VMEM.
        d = jnp.where(acc > 0, acc, 0.2 * acc)
        d_scr[...] = jnp.where(mask_d, d, 0.0).astype(jnp.bfloat16)

        ru_, _, ox_u = row_coords(u_rows)
        mask_up = (ru_ < r_up) & (ox_u < wo)

        # ---- up: ConvTranspose2d(k=4, s=2, p=1) as 4 sub-pixel phases, each an exact
        # 2x2 conv over d -> 16 bf16 MXU matmuls, no zero-stuffing. Each phase is
        # stored straight into its lane slice of the output (no concat). ----
        ssum = jnp.zeros((1, outer_nc), jnp.float32)
        ssq = jnp.zeros((1, outer_nc), jnp.float32)
        for dy in range(2):
            for dx in range(2):
                p = dy * 2 + dx
                acc_p = jnp.zeros((u_rows, outer_nc), jnp.float32)
                for a in range(2):
                    for b in range(2):
                        s = (dy + a) * wp2 + (dx + b)
                        acc_p += jnp.dot(d_scr[s:s + u_rows, :],
                                         wu_ref[p * 4 + a * 2 + b],
                                         preferred_element_type=jnp.float32)
                ym = jnp.where(mask_up, acc_p, 0.0)          # kill junk rows/cols
                ssum += jnp.sum(ym, axis=0, keepdims=True)
                ssq += jnp.sum(ym * ym, axis=0, keepdims=True)
                u_ref[:, p * outer_nc:(p + 1) * outer_nc] = ym.astype(u_ref.dtype)

        # Per-block BatchNorm partial statistics (junk rows/cols contribute exactly
        # zero to both sum and sumsq -- keep that invariant if masks ever change).
        stats_ref[0:1, :] = ssum
        stats_ref[1:2, :] = ssq

    return kernel


# ----------------------------- weight packing ------------------------------ #

def pack_params(params):
    """One-time weight packing into matmul-ready bf16 layouts (done outside jit)."""
    w_down = params["w_down"]                      # (inner, C_in, 4, 4)   OIHW
    w_up = params["w_up"]                          # (inner, outer, 4, 4)  ConvT (I,O,kh,kw)
    inner_nc, c_in = w_down.shape[0], w_down.shape[1]

    # Down-conv taps: wd[a*2+b, (p*2+q)*C+c, o] = w_down[o, c, 2a+p, 2b+q]
    wdr = w_down.reshape(inner_nc, c_in, 2, 2, 2, 2)           # o c a p b q
    wd_packed = jnp.transpose(wdr, (2, 4, 3, 5, 1, 0)).reshape(4, 4 * c_in, inner_nc)

    # Sub-pixel ConvT phases: wu[(dy*2+dx)*4 + a*2+b, i, o] = w_up[i, o, 3-2a-dy, 3-2b-dx]
    taps = []
    for dy in range(2):
        for dx in range(2):
            for a in range(2):
                for b in range(2):
                    taps.append(w_up[:, :, 3 - 2 * a - dy, 3 - 2 * b - dx])
    wu_packed = jnp.stack(taps, axis=0)                        # (16, inner, outer)

    return {
        "wd": wd_packed.astype(jnp.bfloat16),
        "wu": wu_packed.astype(jnp.bfloat16),
        "gamma": params["gamma"].astype(jnp.float32),
        "beta": params["beta"].astype(jnp.float32),
    }


# ------------------------------- forward pass ------------------------------ #

def unet_innermost_block_forward(x_nchw, packed):
    """out = concat([x, BN(ConvT(lrelu(Conv(lrelu(x)))))], dim=1)  (innermost block)."""
    wd, wu = packed["wd"], packed["wu"]
    gamma, beta = packed["gamma"], packed["beta"]

    n, c_in, h, w = x_nchw.shape
    assert h % 2 == 0 and w % 2 == 0, "UNet block expects even spatial dims"
    inner_nc = wd.shape[2]
    outer_nc = wu.shape[2]

    ho, wo = h // 2, w // 2
    hp2, wp2 = ho + 2, wo + 2           # ConvT-padded ("dpad") spatial dims
    hs, ws = ho + 1, wo + 1             # space-to-depth dims of the padded input
    c4 = 4 * c_in
    k4o = 4 * outer_nc
    r_d = hp2 * wp2 + 2                 # per-image valid down rows (+2 tap slack)
    r_up = ho * wp2                     # per-image valid up rows (junk cols >= wo)
    off = wp2 + 1                       # leading zero rows of the flat per-image input
    pitch = r_d + wp2 + 1               # per-image row pitch (zero borders included)

    # ---- batch blocking: B_blk images stacked along the matmul M dimension ----
    per_img_bytes = pitch * (c4 + k4o + inner_nc) * 2
    b_blk = 1
    for cand in (8, 4, 2, 1):
        if n % cand == 0 and cand * per_img_bytes <= (8 << 20):
            b_blk = cand
            break
    u_rows = b_blk * pitch                  # up rows computed per grid step
    d_rows = u_rows + 2 * wp2 + 2           # down rows (covers every up tap slice)
    a_rows = d_rows + wp2 + 1               # input rows (covers every down tap slice)

    # ---- layout prep: pad + space-to-depth + flatten + stack per block (byte-
    # neutral bf16, NO im2col expansion). ----
    x_nhwc = jnp.transpose(x_nchw, (0, 2, 3, 1))
    xp = jnp.pad(x_nhwc.astype(jnp.bfloat16), ((0, 0), (1, 1), (1, 1), (0, 0)))
    s2d = xp.reshape(n, hs, 2, ws, 2, c_in)
    s2d = jnp.transpose(s2d, (0, 1, 3, 2, 4, 5)).reshape(n, hs, ws, c4)
    s2d = jnp.pad(s2d, ((0, 0), (0, 0), (0, 1), (0, 0)))       # width ws -> wp2
    flat = s2d.reshape(n, hs * wp2, c4)
    xin = jnp.pad(flat, ((0, 0), (off, pitch - off - hs * wp2), (0, 0)))
    xin = xin.reshape(n // b_blk, b_blk * pitch, c4)
    xin = jnp.pad(xin, ((0, 0), (0, a_rows - b_blk * pitch), (0, 0)))

    # VMEM budget from actual buffer math (double-buffered streams + weights + bf16
    # scratch, 2x slack), capped for v7x's 64 MiB physical VMEM.
    stream_bytes = (a_rows * c4 + u_rows * k4o) * 2 + 2 * outer_nc * 4
    weight_bytes = (4 * c4 * inner_nc + 16 * inner_nc * outer_nc) * 2
    scratch_bytes = (a_rows * c4 + d_rows * inner_nc) * 2
    vmem_limit = int(min(32 << 20,
                         max(8 << 20,
                             2 * (2 * (stream_bytes + weight_bytes) + scratch_bytes))))

    # ---- fused down-conv + sub-pixel up-conv + BN partial stats ----
    kernel = _make_fused_kernel(wp2, pitch, d_rows, u_rows, hp2, ho, wo, r_up,
                                inner_nc, outer_nc)
    u_all, stats = pl.pallas_call(
        kernel,
        out_shape=(jax.ShapeDtypeStruct((n // b_blk, u_rows, k4o), jnp.bfloat16),
                   jax.ShapeDtypeStruct((n // b_blk, 2, outer_nc), jnp.float32)),
        grid_spec=pltpu.PrefetchScalarGridSpec(
            num_scalar_prefetch=0,
            grid=(n // b_blk,),
            in_specs=[
                pl.BlockSpec((None, a_rows, c4), lambda g: (g, 0, 0)),
                pl.BlockSpec((4, c4, inner_nc), lambda g: (0, 0, 0)),
                pl.BlockSpec((16, inner_nc, outer_nc), lambda g: (0, 0, 0)),
            ],
            out_specs=(
                pl.BlockSpec((None, u_rows, k4o), lambda g: (g, 0, 0)),
                pl.BlockSpec((None, 2, outer_nc), lambda g: (g, 0, 0)),
            ),
            scratch_shapes=[pltpu.VMEM((a_rows, c4), jnp.bfloat16),
                            pltpu.VMEM((d_rows, inner_nc), jnp.bfloat16)],
        ),
        compiler_params=pltpu.CompilerParams(
            dimension_semantics=("parallel",),
            vmem_limit_bytes=vmem_limit),
    )(xin, wd, wu)

    # ---- BatchNorm finalize (training-mode batch stats, biased var, eps=1e-5). The
    # affine is folded into the (XLA-fused) phase-reassembly transpose below; no
    # second pallas_call / HBM round trip. ----
    cnt = jnp.float32(n * h * w)
    mean = jnp.sum(stats[:, 0, :], axis=0) / cnt
    var = jnp.maximum(jnp.sum(stats[:, 1, :], axis=0) / cnt - mean * mean, 0.0)
    scale = gamma * jax.lax.rsqrt(var + 1e-5)
    bias = beta - mean * scale
    scale4 = jnp.tile(scale, 4)                     # (k4o,) -- per-phase replication
    bias4 = jnp.tile(bias, 4)

    # ---- reassemble the 4 sub-pixel phases into NCHW and apply the skip concat ----
    u_f = u_all.astype(jnp.float32).reshape(n, pitch, k4o)[:, :r_up]
    u_f = u_f * scale4 + bias4
    un = u_f.reshape(n, ho, wp2, 4, outer_nc)[:, :, :wo]        # drop junk columns
    un = un.reshape(n, ho, wo, 2, 2, outer_nc)
    un = jnp.transpose(un, (0, 1, 3, 2, 4, 5)).reshape(n, h, w, outer_nc)
    u_nchw = jnp.transpose(un, (0, 3, 1, 2)).astype(x_nchw.dtype)
    return jnp.concatenate([x_nchw, u_nchw], axis=1)


# ------------------------- pure-JAX reference check ------------------------- #

def _reference(x, params):
    w_down, w_up, gamma, beta = (params["w_down"], params["w_up"],
                                 params["gamma"], params["beta"])
    lrelu = lambda t: jnp.where(t > 0, t, 0.2 * t)
    a = lrelu(x)
    d = jax.lax.conv_general_dilated(
        a, w_down, (2, 2), ((1, 1), (1, 1)),
        dimension_numbers=("NCHW", "OIHW", "NCHW"))
    b = lrelu(d)
    w_up_conv = jnp.transpose(w_up[:, :, ::-1, ::-1], (1, 0, 2, 3))   # -> OIHW
    u = jax.lax.conv_general_dilated(
        b, w_up_conv, (1, 1), ((2, 2), (2, 2)), lhs_dilation=(2, 2),
        dimension_numbers=("NCHW", "OIHW", "NCHW"))
    mean = jnp.mean(u, axis=(0, 2, 3), keepdims=True)
    var = jnp.mean(jnp.square(u - mean), axis=(0, 2, 3), keepdims=True)
    u = (u - mean) * jax.lax.rsqrt(var + 1e-5)
    u = u * gamma.reshape(1, -1, 1, 1) + beta.reshape(1, -1, 1, 1)
    return jnp.concatenate([x, u], axis=1)


# ----------------------------------- main ----------------------------------- #

if __name__ == "__main__":
    key = jax.random.PRNGKey(0)
    k1, k2, k3, k4, k5 = jax.random.split(key, 5)

    n, input_nc, h, w = 2, 4, 16, 16
    outer_nc, inner_nc = 4, 8          # innermost: input_nc defaults to outer_nc

    x = jax.random.normal(k1, (n, input_nc, h, w), jnp.float32)
    params = {
        "w_down": 0.1 * jax.random.normal(k2, (inner_nc, input_nc, 4, 4), jnp.float32),
        "w_up":   0.1 * jax.random.normal(k3, (inner_nc, outer_nc, 4, 4), jnp.float32),
        "gamma":  1.0 + 0.1 * jax.random.normal(k4, (outer_nc,), jnp.float32),
        "beta":   0.1 * jax.random.normal(k5, (outer_nc,), jnp.float32),
    }

    packed = pack_params(params)            # one-time weight packing (not per call)
    fwd = jax.jit(unet_innermost_block_forward)
    out = jax.block_until_ready(fwd(x, packed))

    ref = _reference(x, params)
    assert out.shape == (n, input_nc + outer_nc, h, w), out.shape
    np.testing.assert_allclose(np.asarray(out), np.asarray(ref), atol=5e-2, rtol=5e-2)

    print("KERNEL_OK")
</pallas_src>

<mosaic_0001>
module attributes {stable_mosaic.version = 11 : i64} {
  func.func @kernel(%arg0: i32, %arg1: memref<1x259x16xbf16, #tpu.memory_space<vmem>>, %arg2: memref<4x16x8xbf16, #tpu.memory_space<vmem>>, %arg3: memref<16x8x4xbf16, #tpu.memory_space<vmem>>, %arg4: memref<1x226x16xbf16, #tpu.memory_space<vmem>>, %arg5: memref<1x2x4xf32, #tpu.memory_space<vmem>>, %arg6: memref<259x16xbf16, #tpu.memory_space<vmem>>, %arg7: memref<248x8xbf16, #tpu.memory_space<vmem>>) attributes {dimension_semantics = [#tpu.dimension_semantics<parallel>], iteration_bounds = array<i64: 1>, scalar_prefetch = 0 : i64, scratch_operands = 2 : i64, tpu.core_type = #tpu.core_type<tc>, window_params = [{transform_indices = @transform_0, window_bounds = array<i64: 1, 259, 16>}, {pipeline_mode = #tpu.pipeline_mode<synchronous>, transform_indices = @transform_1, window_bounds = array<i64: 4, 16, 8>}, {pipeline_mode = #tpu.pipeline_mode<synchronous>, transform_indices = @transform_2, window_bounds = array<i64: 16, 8, 4>}, {transform_indices = @transform_3, window_bounds = array<i64: 1, 226, 16>}, {transform_indices = @transform_4, window_bounds = array<i64: 1, 2, 4>}]} {
    %c0 = arith.constant 0 : index
    %c0_0 = arith.constant 0 : index
    %c0_1 = arith.constant 0 : index
    %0 = vector.load %arg1[%c0, %c0_0, %c0_1] : memref<1x259x16xbf16, #tpu.memory_space<vmem>>, vector<1x259x16xbf16>
    %1 = vector.shape_cast %0 : vector<1x259x16xbf16> to vector<259x16xbf16>
    %2 = arith.extf %1 : vector<259x16xbf16> to vector<259x16xf32>
    %cst = arith.constant 0.000000e+00 : f32
    %3 = vector.broadcast %cst : f32 to vector<259x16xf32>
    %4 = arith.cmpf ogt, %2, %3 : vector<259x16xf32>
    %cst_2 = arith.constant 2.000000e-01 : f32
    %5 = vector.broadcast %cst_2 : f32 to vector<259x16xf32>
    %6 = arith.mulf %5, %2 : vector<259x16xf32>
    %7 = arith.select %4, %2, %6 : vector<259x16xi1>, vector<259x16xf32>
    %8 = arith.truncf %7 : vector<259x16xf32> to vector<259x16xbf16>
    %c0_3 = arith.constant 0 : index
    %c0_4 = arith.constant 0 : index
    %9 = vector.load %arg6[%c0_3, %c0_4] : memref<259x16xbf16, #tpu.memory_space<vmem>>, vector<259x16xbf16>
    tpu.vector_store %arg6[%c0_3, %c0_4], %8 {strides = array<i32>} : memref<259x16xbf16, #tpu.memory_space<vmem>>, vector<259x16xbf16>,
    %10 = tpu.iota {dimensions = array<i32: 0>} : vector<248x1xi32>
    %11 = arith.sitofp %10 : vector<248x1xi32> to vector<248x1xf32>
    %cst_5 = arith.constant 1.130000e+02 : f32
    %12 = vector.broadcast %cst_5 : f32 to vector<248x1xf32>
    %13 = arith.divf %11, %12 : vector<248x1xf32>
    %14 = math.floor %13 : vector<248x1xf32>
    %cst_6 = arith.constant 1.130000e+02 : f32
    %15 = vector.broadcast %cst_6 : f32 to vector<248x1xf32>
    %16 = arith.mulf %14, %15 : vector<248x1xf32>
    %17 = arith.subf %11, %16 : vector<248x1xf32>
    %cst_7 = arith.constant 1.000000e+01 : f32
    %18 = vector.broadcast %cst_7 : f32 to vector<248x1xf32>
    %19 = arith.divf %17, %18 : vector<248x1xf32>
    %20 = math.floor %19 : vector<248x1xf32>
    %cst_8 = arith.constant 1.000000e+01 : f32
    %21 = vector.broadcast %cst_8 : f32 to vector<248x1xf32>
    %22 = arith.mulf %20, %21 : vector<248x1xf32>
    %23 = arith.subf %17, %22 : vector<248x1xf32>
    %cst_9 = arith.constant 1.000000e+02 : f32
    %24 = vector.broadcast %cst_9 : f32 to vector<248x1xf32>
    %25 = arith.cmpf olt, %17, %24 : vector<248x1xf32>
    %cst_10 = arith.constant 1.000000e+00 : f32
    %26 = vector.broadcast %cst_10 : f32 to vector<248x1xf32>
    %27 = arith.cmpf oge, %20, %26 : vector<248x1xf32>
    %28 = arith.andi %25, %27 : vector<248x1xi1>
    %cst_11 = arith.constant 8.000000e+00 : f32
    %29 = vector.broadcast %cst_11 : f32 to vector<248x1xf32>
    %30 = arith.cmpf ole, %20, %29 : vector<248x1xf32>
    %31 = arith.andi %28, %30 : vector<248x1xi1>
    %cst_12 = arith.constant 1.000000e+00 : f32
    %32 = vector.broadcast %cst_12 : f32 to vector<248x1xf32>
    %33 = arith.cmpf oge, %23, %32 : vector<248x1xf32>
    %34 = arith.andi %31, %33 : vector<248x1xi1>
    %cst_13 = arith.constant 8.000000e+00 : f32
    %35 = vector.broadcast %cst_13 : f32 to vector<248x1xf32>
    %36 = arith.cmpf ole, %23, %35 : vector<248x1xf32>
    %37 = arith.andi %34, %36 : vector<248x1xi1>
    %cst_14 = arith.constant 0.000000e+00 : f32
    %38 = vector.broadcast %cst_14 : f32 to vector<248x8xf32>
    %c0_15 = arith.constant 0 : index
    %c0_16 = arith.constant 0 : index
    %39 = vector.load %arg6[%c0_15, %c0_16] : memref<259x16xbf16, #tpu.memory_space<vmem>>, vector<248x16xbf16>
    %c0_17 = arith.constant 0 : index
    %c0_18 = arith.constant 0 : index
    %c0_19 = arith.constant 0 : index
    %40 = vector.load %arg2[%c0_17, %c0_18, %c0_19] : memref<4x16x8xbf16, #tpu.memory_space<vmem>>, vector<1x16x8xbf16>
    %41 = vector.shape_cast %40 : vector<1x16x8xbf16> to vector<16x8xbf16>
    %cst_20 = arith.constant dense<0.000000e+00> : vector<248x8xf32>
    %42 = tpu.matmul %39, %41, %cst_20 {dimension_numbers = #tpu.dot_dimension_numbers<[1], [0], [0], [1], [0, 0, 1, 1], [], []>} : vector<248x16xbf16>, vector<16x8xbf16>, vector<248x8xf32> -> vector<248x8xf32>
    %43 = arith.addf %38, %42 : vector<248x8xf32>
    %c1 = arith.constant 1 : index
    %c0_21 = arith.constant 0 : index
    %44 = vector.load %arg6[%c1, %c0_21] : memref<259x16xbf16, #tpu.memory_space<vmem>>, vector<248x16xbf16>
    %c1_22 = arith.constant 1 : index
    %c0_23 = arith.constant 0 : index
    %c0_24 = arith.constant 0 : index
    %45 = vector.load %arg2[%c1_22, %c0_23, %c0_24] : memref<4x16x8xbf16, #tpu.memory_space<vmem>>, vector<1x16x8xbf16>
    %46 = vector.shape_cast %45 : vector<1x16x8xbf16> to vector<16x8xbf16>
    %cst_25 = arith.constant dense<0.000000e+00> : vector<248x8xf32>
    %47 = tpu.matmul %44, %46, %cst_25 {dimension_numbers = #tpu.dot_dimension_numbers<[1], [0], [0], [1], [0, 0, 1, 1], [], []>} : vector<248x16xbf16>, vector<16x8xbf16>, vector<248x8xf32> -> vector<248x8xf32>
    %48 = arith.addf %43, %47 : vector<248x8xf32>
    %c10 = arith.constant 10 : index
    %c0_26 = arith.constant 0 : index
    %49 = vector.load %arg6[%c10, %c0_26] : memref<259x16xbf16, #tpu.memory_space<vmem>>, vector<248x16xbf16>
    %c2 = arith.constant 2 : index
    %c0_27 = arith.constant 0 : index
    %c0_28 = arith.constant 0 : index
    %50 = vector.load %arg2[%c2, %c0_27, %c0_28] : memref<4x16x8xbf16, #tpu.memory_space<vmem>>, vector<1x16x8xbf16>
    %51 = vector.shape_cast %50 : vector<1x16x8xbf16> to vector<16x8xbf16>
    %cst_29 = arith.constant dense<0.000000e+00> : vector<248x8xf32>
    %52 = tpu.matmul %49, %51, %cst_29 {dimension_numbers = #tpu.dot_dimension_numbers<[1], [0], [0], [1], [0, 0, 1, 1], [], []>} : vector<248x16xbf16>, vector<16x8xbf16>, vector<248x8xf32> -> vector<248x8xf32>
    %53 = arith.addf %48, %52 : vector<248x8xf32>
    %c11 = arith.constant 11 : index
    %c0_30 = arith.constant 0 : index
    %54 = vector.load %arg6[%c11, %c0_30] : memref<259x16xbf16, #tpu.memory_space<vmem>>, vector<248x16xbf16>
    %c3 = arith.constant 3 : index
    %c0_31 = arith.constant 0 : index
    %c0_32 = arith.constant 0 : index
    %55 = vector.load %arg2[%c3, %c0_31, %c0_32] : memref<4x16x8xbf16, #tpu.memory_space<vmem>>, vector<1x16x8xbf16>
    %56 = vector.shape_cast %55 : vector<1x16x8xbf16> to vector<16x8xbf16>
    %cst_33 = arith.constant dense<0.000000e+00> : vector<248x8xf32>
    %57 = tpu.matmul %54, %56, %cst_33 {dimension_numbers = #tpu.dot_dimension_numbers<[1], [0], [0], [1], [0, 0, 1, 1], [], []>} : vector<248x16xbf16>, vector<16x8xbf16>, vector<248x8xf32> -> vector<248x8xf32>
    %58 = arith.addf %53, %57 : vector<248x8xf32>
    %cst_34 = arith.constant 0.000000e+00 : f32
    %59 = vector.broadcast %cst_34 : f32 to vector<248x8xf32>
    %60 = arith.cmpf ogt, %58, %59 : vector<248x8xf32>
    %cst_35 = arith.constant 2.000000e-01 : f32
    %61 = vector.broadcast %cst_35 : f32 to vector<248x8xf32>
    %62 = arith.mulf %61, %58 : vector<248x8xf32>
    %63 = arith.select %60, %58, %62 : vector<248x8xi1>, vector<248x8xf32>
    %cst_36 = arith.constant 0.000000e+00 : f32
    %64 = vector.shape_cast %37 : vector<248x1xi1> to vector<248x1xi1>
    %65 = vector.broadcast %64 : vector<248x1xi1> to vector<248x8xi1>
    %66 = vector.broadcast %cst_36 : f32 to vector<248x8xf32>
    %67 = arith.select %65, %63, %66 : vector<248x8xi1>, vector<248x8xf32>
    %68 = arith.truncf %67 : vector<248x8xf32> to vector<248x8xbf16>
    %c0_37 = arith.constant 0 : index
    %c0_38 = arith.constant 0 : index
    %69 = vector.load %arg7[%c0_37, %c0_38] : memref<248x8xbf16, #tpu.memory_space<vmem>>, vector<248x8xbf16>
    tpu.vector_store %arg7[%c0_37, %c0_38], %68 {strides = array<i32>} : memref<248x8xbf16, #tpu.memory_space<vmem>>, vector<248x8xbf16>,
    %70 = tpu.iota {dimensions = array<i32: 0>} : vector<226x1xi32>
    %71 = arith.sitofp %70 : vector<226x1xi32> to vector<226x1xf32>
    %cst_39 = arith.constant 1.130000e+02 : f32
    %72 = vector.broadcast %cst_39 : f32 to vector<226x1xf32>
    %73 = arith.divf %71, %72 : vector<226x1xf32>
    %74 = math.floor %73 : vector<226x1xf32>
    %cst_40 = arith.constant 1.130000e+02 : f32
    %75 = vector.broadcast %cst_40 : f32 to vector<226x1xf32>
    %76 = arith.mulf %74, %75 : vector<226x1xf32>
    %77 = arith.subf %71, %76 : vector<226x1xf32>
    %cst_41 = arith.constant 1.000000e+01 : f32
    %78 = vector.broadcast %cst_41 : f32 to vector<226x1xf32>
    %79 = arith.divf %77, %78 : vector<226x1xf32>
    %80 = math.floor %79 : vector<226x1xf32>
    %cst_42 = arith.constant 1.000000e+01 : f32
    %81 = vector.broadcast %cst_42 : f32 to vector<226x1xf32>
    %82 = arith.mulf %80, %81 : vector<226x1xf32>
    %83 = arith.subf %77, %82 : vector<226x1xf32>
    %cst_43 = arith.constant 8.000000e+01 : f32
    %84 = vector.broadcast %cst_43 : f32 to vector<226x1xf32>
    %85 = arith.cmpf olt, %77, %84 : vector<226x1xf32>
    %cst_44 = arith.constant 8.000000e+00 : f32
    %86 = vector.broadcast %cst_44 : f32 to vector<226x1xf32>
    %87 = arith.cmpf olt, %83, %86 : vector<226x1xf32>
    %88 = arith.andi %85, %87 : vector<226x1xi1>
    %cst_45 = arith.constant 0.000000e+00 : f32
    %89 = vector.broadcast %cst_45 : f32 to vector<1x4xf32>
    %cst_46 = arith.constant 0.000000e+00 : f32
    %90 = vector.broadcast %cst_46 : f32 to vector<1x4xf32>
    %cst_47 = arith.constant 0.000000e+00 : f32
    %91 = vector.broadcast %cst_47 : f32 to vector<226x4xf32>
    %c0_48 = arith.constant 0 : index
    %c0_49 = arith.constant 0 : index
    %92 = vector.load %arg7[%c0_48, %c0_49] : memref<248x8xbf16, #tpu.memory_space<vmem>>, vector<226x8xbf16>
    %c0_50 = arith.constant 0 : index
    %c0_51 = arith.constant 0 : index
    %c0_52 = arith.constant 0 : index
    %93 = vector.load %arg3[%c0_50, %c0_51, %c0_52] : memref<16x8x4xbf16, #tpu.memory_space<vmem>>, vector<1x8x4xbf16>
    %94 = vector.shape_cast %93 : vector<1x8x4xbf16> to vector<8x4xbf16>
    %cst_53 = arith.constant dense<0.000000e+00> : vector<226x4xf32>
    %95 = tpu.matmul %92, %94, %cst_53 {dimension_numbers = #tpu.dot_dimension_numbers<[1], [0], [0], [1], [0, 0, 1, 1], [], []>} : vector<226x8xbf16>, vector<8x4xbf16>, vector<226x4xf32> -> vector<226x4xf32>
    %96 = arith.addf %91, %95 : vector<226x4xf32>
    %c1_54 = arith.constant 1 : index
    %c0_55 = arith.constant 0 : index
    %97 = vector.load %arg7[%c1_54, %c0_55] : memref<248x8xbf16, #tpu.memory_space<vmem>>, vector<226x8xbf16>
    %c1_56 = arith.constant 1 : index
    %c0_57 = arith.constant 0 : index
    %c0_58 = arith.constant 0 : index
    %98 = vector.load %arg3[%c1_56, %c0_57, %c0_58] : memref<16x8x4xbf16, #tpu.memory_space<vmem>>, vector<1x8x4xbf16>
    %99 = vector.shape_cast %98 : vector<1x8x4xbf16> to vector<8x4xbf16>
    %cst_59 = arith.constant dense<0.000000e+00> : vector<226x4xf32>
    %100 = tpu.matmul %97, %99, %cst_59 {dimension_numbers = #tpu.dot_dimension_numbers<[1], [0], [0], [1], [0, 0, 1, 1], [], []>} : vector<226x8xbf16>, vector<8x4xbf16>, vector<226x4xf32> -> vector<226x4xf32>
    %101 = arith.addf %96, %100 : vector<226x4xf32>
    %c10_60 = arith.constant 10 : index
    %c0_61 = arith.constant 0 : index
    %102 = vector.load %arg7[%c10_60, %c0_61] : memref<248x8xbf16, #tpu.memory_space<vmem>>, vector<226x8xbf16>
    %c2_62 = arith.constant 2 : index
    %c0_63 = arith.constant 0 : index
    %c0_64 = arith.constant 0 : index
    %103 = vector.load %arg3[%c2_62, %c0_63, %c0_64] : memref<16x8x4xbf16, #tpu.memory_space<vmem>>, vector<1x8x4xbf16>
    %104 = vector.shape_cast %103 : vector<1x8x4xbf16> to vector<8x4xbf16>
    %cst_65 = arith.constant dense<0.000000e+00> : vector<226x4xf32>
    %105 = tpu.matmul %102, %104, %cst_65 {dimension_numbers = #tpu.dot_dimension_numbers<[1], [0], [0], [1], [0, 0, 1, 1], [], []>} : vector<226x8xbf16>, vector<8x4xbf16>, vector<226x4xf32> -> vector<226x4xf32>
    %106 = arith.addf %101, %105 : vector<226x4xf32>
    %c11_66 = arith.constant 11 : index
    %c0_67 = arith.constant 0 : index
    %107 = vector.load %arg7[%c11_66, %c0_67] : memref<248x8xbf16, #tpu.memory_space<vmem>>, vector<226x8xbf16>
    %c3_68 = arith.constant 3 : index
    %c0_69 = arith.constant 0 : index
    %c0_70 = arith.constant 0 : index
    %108 = vector.load %arg3[%c3_68, %c0_69, %c0_70] : memref<16x8x4xbf16, #tpu.memory_space<vmem>>, vector<1x8x4xbf16>
    %109 = vector.shape_cast %108 : vector<1x8x4xbf16> to vector<8x4xbf16>
    %cst_71 = arith.constant dense<0.000000e+00> : vector<226x4xf32>
    %110 = tpu.matmul %107, %109, %cst_71 {dimension_numbers = #tpu.dot_dimension_numbers<[1], [0], [0], [1], [0, 0, 1, 1], [], []>} : vector<226x8xbf16>, vector<8x4xbf16>, vector<226x4xf32> -> vector<226x4xf32>
    %111 = arith.addf %106, %110 : vector<226x4xf32>
    %cst_72 = arith.constant 0.000000e+00 : f32
    %112 = vector.shape_cast %88 : vector<226x1xi1> to vector<226x1xi1>
    %113 = vector.broadcast %112 : vector<226x1xi1> to vector<226x4xi1>
    %114 = vector.broadcast %cst_72 : f32 to vector<226x4xf32>
    %115 = arith.select %113, %111, %114 : vector<226x4xi1>, vector<226x4xf32>
    %cst_73 = arith.constant dense<0.000000e+00> : vector<4xf32>
    %116 = vector.multi_reduction <add>, %115, %cst_73 [0] : vector<226x4xf32> to vector<4xf32>
    %117 = vector.shape_cast %116 : vector<4xf32> to vector<1x4xf32>
    %118 = arith.addf %89, %117 : vector<1x4xf32>
    %119 = arith.mulf %115, %115 : vector<226x4xf32>
    %cst_74 = arith.constant dense<0.000000e+00> : vector<4xf32>
    %120 = vector.multi_reduction <add>, %119, %cst_74 [0] : vector<226x4xf32> to vector<4xf32>
    %121 = vector.shape_cast %120 : vector<4xf32> to vector<1x4xf32>
    %122 = arith.addf %90, %121 : vector<1x4xf32>
    %123 = arith.truncf %115 : vector<226x4xf32> to vector<226x4xbf16>
    %c0_75 = arith.constant 0 : index
    %c0_76 = arith.constant 0 : index
    %c0_77 = arith.constant 0 : index
    %124 = vector.load %arg4[%c0_75, %c0_76, %c0_77] : memref<1x226x16xbf16, #tpu.memory_space<vmem>>, vector<1x226x4xbf16>
    %125 = vector.shape_cast %124 : vector<1x226x4xbf16> to vector<226x4xbf16>
    %126 = vector.shape_cast %123 : vector<226x4xbf16> to vector<1x226x4xbf16>
    tpu.vector_store %arg4[%c0_75, %c0_76, %c0_77], %126 {strides = array<i32>} : memref<1x226x16xbf16, #tpu.memory_space<vmem>>, vector<1x226x4xbf16>,
    %cst_78 = arith.constant 0.000000e+00 : f32
    %127 = vector.broadcast %cst_78 : f32 to vector<226x4xf32>
    %c1_79 = arith.constant 1 : index
    %c0_80 = arith.constant 0 : index
    %128 = vector.load %arg7[%c1_79, %c0_80] : memref<248x8xbf16, #tpu.memory_space<vmem>>, vector<226x8xbf16>
    %c4 = arith.constant 4 : index
    %c0_81 = arith.constant 0 : index
    %c0_82 = arith.constant 0 : index
    %129 = vector.load %arg3[%c4, %c0_81, %c0_82] : memref<16x8x4xbf16, #tpu.memory_space<vmem>>, vector<1x8x4xbf16>
    %130 = vector.shape_cast %129 : vector<1x8x4xbf16> to vector<8x4xbf16>
    %cst_83 = arith.constant dense<0.000000e+00> : vector<226x4xf32>
    %131 = tpu.matmul %128, %130, %cst_83 {dimension_numbers = #tpu.dot_dimension_numbers<[1], [0], [0], [1], [0, 0, 1, 1], [], []>} : vector<226x8xbf16>, vector<8x4xbf16>, vector<226x4xf32> -> vector<226x4xf32>
    %132 = arith.addf %127, %131 : vector<226x4xf32>
    %c2_84 = arith.constant 2 : index
    %c0_85 = arith.constant 0 : index
    %133 = vector.load %arg7[%c2_84, %c0_85] : memref<248x8xbf16, #tpu.memory_space<vmem>>, vector<226x8xbf16>
    %c5 = arith.constant 5 : index
    %c0_86 = arith.constant 0 : index
    %c0_87 = arith.constant 0 : index
    %134 = vector.load %arg3[%c5, %c0_86, %c0_87] : memref<16x8x4xbf16, #tpu.memory_space<vmem>>, vector<1x8x4xbf16>
    %135 = vector.shape_cast %134 : vector<1x8x4xbf16> to vector<8x4xbf16>
    %cst_88 = arith.constant dense<0.000000e+00> : vector<226x4xf32>
    %136 = tpu.matmul %133, %135, %cst_88 {dimension_numbers = #tpu.dot_dimension_numbers<[1], [0], [0], [1], [0, 0, 1, 1], [], []>} : vector<226x8xbf16>, vector<8x4xbf16>, vector<226x4xf32> -> vector<226x4xf32>
    %137 = arith.addf %132, %136 : vector<226x4xf32>
    %c11_89 = arith.constant 11 : index
    %c0_90 = arith.constant 0 : index
    %138 = vector.load %arg7[%c11_89, %c0_90] : memref<248x8xbf16, #tpu.memory_space<vmem>>, vector<226x8xbf16>
    %c6 = arith.constant 6 : index
    %c0_91 = arith.constant 0 : index
    %c0_92 = arith.constant 0 : index
    %139 = vector.load %arg3[%c6, %c0_91, %c0_92] : memref<16x8x4xbf16, #tpu.memory_space<vmem>>, vector<1x8x4xbf16>
    %140 = vector.shape_cast %139 : vector<1x8x4xbf16> to vector<8x4xbf16>
    %cst_93 = arith.constant dense<0.000000e+00> : vector<226x4xf32>
    %141 = tpu.matmul %138, %140, %cst_93 {dimension_numbers = #tpu.dot_dimension_numbers<[1], [0], [0], [1], [0, 0, 1, 1], [], []>} : vector<226x8xbf16>, vector<8x4xbf16>, vector<226x4xf32> -> vector<226x4xf32>
    %142 = arith.addf %137, %141 : vector<226x4xf32>
    %c12 = arith.constant 12 : index
    %c0_94 = arith.constant 0 : index
    %143 = vector.load %arg7[%c12, %c0_94] : memref<248x8xbf16, #tpu.memory_space<vmem>>, vector<226x8xbf16>
    %c7 = arith.constant 7 : index
    %c0_95 = arith.constant 0 : index
    %c0_96 = arith.constant 0 : index
    %144 = vector.load %arg3[%c7, %c0_95, %c0_96] : memref<16x8x4xbf16, #tpu.memory_space<vmem>>, vector<1x8x4xbf16>
    %145 = vector.shape_cast %144 : vector<1x8x4xbf16> to vector<8x4xbf16>
    %cst_97 = arith.constant dense<0.000000e+00> : vector<226x4xf32>
    %146 = tpu.matmul %143, %145, %cst_97 {dimension_numbers = #tpu.dot_dimension_numbers<[1], [0], [0], [1], [0, 0, 1, 1], [], []>} : vector<226x8xbf16>, vector<8x4xbf16>, vector<226x4xf32> -> vector<226x4xf32>
    %147 = arith.addf %142, %146 : vector<226x4xf32>
    %cst_98 = arith.constant 0.000000e+00 : f32
    %148 = vector.shape_cast %88 : vector<226x1xi1> to vector<226x1xi1>
    %149 = vector.broadcast %148 : vector<226x1xi1> to vector<226x4xi1>
    %150 = vector.broadcast %cst_98 : f32 to vector<226x4xf32>
    %151 = arith.select %149, %147, %150 : vector<226x4xi1>, vector<226x4xf32>
    %cst_99 = arith.constant dense<0.000000e+00> : vector<4xf32>
    %152 = vector.multi_reduction <add>, %151, %cst_99 [0] : vector<226x4xf32> to vector<4xf32>
    %153 = vector.shape_cast %152 : vector<4xf32> to vector<1x4xf32>
    %154 = arith.addf %118, %153 : vector<1x4xf32>
    %155 = arith.mulf %151, %151 : vector<226x4xf32>
    %cst_100 = arith.constant dense<0.000000e+00> : vector<4xf32>
    %156 = vector.multi_reduction <add>, %155, %cst_100 [0] : vector<226x4xf32> to vector<4xf32>
    %157 = vector.shape_cast %156 : vector<4xf32> to vector<1x4xf32>
    %158 = arith.addf %122, %157 : vector<1x4xf32>
    %159 = arith.truncf %151 : vector<226x4xf32> to vector<226x4xbf16>
    %c0_101 = arith.constant 0 : index
    %c0_102 = arith.constant 0 : index
    %c4_103 = arith.constant 4 : index
    %160 = vector.load %arg4[%c0_101, %c0_102, %c4_103] : memref<1x226x16xbf16, #tpu.memory_space<vmem>>, vector<1x226x4xbf16>
    %161 = vector.shape_cast %160 : vector<1x226x4xbf16> to vector<226x4xbf16>
    %162 = vector.shape_cast %159 : vector<226x4xbf16> to vector<1x226x4xbf16>
    tpu.vector_store %arg4[%c0_101, %c0_102, %c4_103], %162 {strides = array<i32>} : memref<1x226x16xbf16, #tpu.memory_space<vmem>>, vector<1x226x4xbf16>,
    %cst_104 = arith.constant 0.000000e+00 : f32
    %163 = vector.broadcast %cst_104 : f32 to vector<226x4xf32>
    %c10_105 = arith.constant 10 : index
    %c0_106 = arith.constant 0 : index
    %164 = vector.load %arg7[%c10_105, %c0_106] : memref<248x8xbf16, #tpu.memory_space<vmem>>, vector<226x8xbf16>
    %c8 = arith.constant 8 : index
    %c0_107 = arith.constant 0 : index
    %c0_108 = arith.constant 0 : index
    %165 = vector.load %arg3[%c8, %c0_107, %c0_108] : memref<16x8x4xbf16, #tpu.memory_space<vmem>>, vector<1x8x4xbf16>
    %166 = vector.shape_cast %165 : vector<1x8x4xbf16> to vector<8x4xbf16>
    %cst_109 = arith.constant dense<0.000000e+00> : vector<226x4xf32>
    %167 = tpu.matmul %164, %166, %cst_109 {dimension_numbers = #tpu.dot_dimension_numbers<[1], [0], [0], [1], [0, 0, 1, 1], [], []>} : vector<226x8xbf16>, vector<8x4xbf16>, vector<226x4xf32> -> vector<226x4xf32>
    %168 = arith.addf %163, %167 : vector<226x4xf32>
    %c11_110 = arith.constant 11 : index
    %c0_111 = arith.constant 0 : index
    %169 = vector.load %arg7[%c11_110, %c0_111] : memref<248x8xbf16, #tpu.memory_space<vmem>>, vector<226x8xbf16>
    %c9 = arith.constant 9 : index
    %c0_112 = arith.constant 0 : index
    %c0_113 = arith.constant 0 : index
    %170 = vector.load %arg3[%c9, %c0_112, %c0_113] : memref<16x8x4xbf16, #tpu.memory_space<vmem>>, vector<1x8x4xbf16>
    %171 = vector.shape_cast %170 : vector<1x8x4xbf16> to vector<8x4xbf16>
    %cst_114 = arith.constant dense<0.000000e+00> : vector<226x4xf32>
    %172 = tpu.matmul %169, %171, %cst_114 {dimension_numbers = #tpu.dot_dimension_numbers<[1], [0], [0], [1], [0, 0, 1, 1], [], []>} : vector<226x8xbf16>, vector<8x4xbf16>, vector<226x4xf32> -> vector<226x4xf32>
    %173 = arith.addf %168, %172 : vector<226x4xf32>
    %c20 = arith.constant 20 : index
    %c0_115 = arith.constant 0 : index
    %174 = vector.load %arg7[%c20, %c0_115] : memref<248x8xbf16, #tpu.memory_space<vmem>>, vector<226x8xbf16>
    %c10_116 = arith.constant 10 : index
    %c0_117 = arith.constant 0 : index
    %c0_118 = arith.constant 0 : index
    %175 = vector.load %arg3[%c10_116, %c0_117, %c0_118] : memref<16x8x4xbf16, #tpu.memory_space<vmem>>, vector<1x8x4xbf16>
    %176 = vector.shape_cast %175 : vector<1x8x4xbf16> to vector<8x4xbf16>
    %cst_119 = arith.constant dense<0.000000e+00> : vector<226x4xf32>
    %177 = tpu.matmul %174, %176, %cst_119 {dimension_numbers = #tpu.dot_dimension_numbers<[1], [0], [0], [1], [0, 0, 1, 1], [], []>} : vector<226x8xbf16>, vector<8x4xbf16>, vector<226x4xf32> -> vector<226x4xf32>
    %178 = arith.addf %173, %177 : vector<226x4xf32>
    %c21 = arith.constant 21 : index
    %c0_120 = arith.constant 0 : index
    %179 = vector.load %arg7[%c21, %c0_120] : memref<248x8xbf16, #tpu.memory_space<vmem>>, vector<226x8xbf16>
    %c11_121 = arith.constant 11 : index
    %c0_122 = arith.constant 0 : index
    %c0_123 = arith.constant 0 : index
    %180 = vector.load %arg3[%c11_121, %c0_122, %c0_123] : memref<16x8x4xbf16, #tpu.memory_space<vmem>>, vector<1x8x4xbf16>
    %181 = vector.shape_cast %180 : vector<1x8x4xbf16> to vector<8x4xbf16>
    %cst_124 = arith.constant dense<0.000000e+00> : vector<226x4xf32>
    %182 = tpu.matmul %179, %181, %cst_124 {dimension_numbers = #tpu.dot_dimension_numbers<[1], [0], [0], [1], [0, 0, 1, 1], [], []>} : vector<226x8xbf16>, vector<8x4xbf16>, vector<226x4xf32> -> vector<226x4xf32>
    %183 = arith.addf %178, %182 : vector<226x4xf32>
    %cst_125 = arith.constant 0.000000e+00 : f32
    %184 = vector.shape_cast %88 : vector<226x1xi1> to vector<226x1xi1>
    %185 = vector.broadcast %184 : vector<226x1xi1> to vector<226x4xi1>
    %186 = vector.broadcast %cst_125 : f32 to vector<226x4xf32>
    %187 = arith.select %185, %183, %186 : vector<226x4xi1>, vector<226x4xf32>
    %cst_126 = arith.constant dense<0.000000e+00> : vector<4xf32>
    %188 = vector.multi_reduction <add>, %187, %cst_126 [0] : vector<226x4xf32> to vector<4xf32>
    %189 = vector.shape_cast %188 : vector<4xf32> to vector<1x4xf32>
    %190 = arith.addf %154, %189 : vector<1x4xf32>
    %191 = arith.mulf %187, %187 : vector<226x4xf32>
    %cst_127 = arith.constant dense<0.000000e+00> : vector<4xf32>
    %192 = vector.multi_reduction <add>, %191, %cst_127 [0] : vector<226x4xf32> to vector<4xf32>
    %193 = vector.shape_cast %192 : vector<4xf32> to vector<1x4xf32>
    %194 = arith.addf %158, %193 : vector<1x4xf32>
    %195 = arith.truncf %187 : vector<226x4xf32> to vector<226x4xbf16>
    %c0_128 = arith.constant 0 : index
    %c0_129 = arith.constant 0 : index
    %c8_130 = arith.constant 8 : index
    %196 = vector.load %arg4[%c0_128, %c0_129, %c8_130] : memref<1x226x16xbf16, #tpu.memory_space<vmem>>, vector<1x226x4xbf16>
    %197 = vector.shape_cast %196 : vector<1x226x4xbf16> to vector<226x4xbf16>
    %198 = vector.shape_cast %195 : vector<226x4xbf16> to vector<1x226x4xbf16>
    tpu.vector_store %arg4[%c0_128, %c0_129, %c8_130], %198 {strides = array<i32>} : memref<1x226x16xbf16, #tpu.memory_space<vmem>>, vector<1x226x4xbf16>,
    %cst_131 = arith.constant 0.000000e+00 : f32
    %199 = vector.broadcast %cst_131 : f32 to vector<226x4xf32>
    %c11_132 = arith.constant 11 : index
    %c0_133 = arith.constant 0 : index
    %200 = vector.load %arg7[%c11_132, %c0_133] : memref<248x8xbf16, #tpu.memory_space<vmem>>, vector<226x8xbf16>
    %c12_134 = arith.constant 12 : index
    %c0_135 = arith.constant 0 : index
    %c0_136 = arith.constant 0 : index
    %201 = vector.load %arg3[%c12_134, %c0_135, %c0_136] : memref<16x8x4xbf16, #tpu.memory_space<vmem>>, vector<1x8x4xbf16>
    %202 = vector.shape_cast %201 : vector<1x8x4xbf16> to vector<8x4xbf16>
    %cst_137 = arith.constant dense<0.000000e+00> : vector<226x4xf32>
    %203 = tpu.matmul %200, %202, %cst_137 {dimension_numbers = #tpu.dot_dimension_numbers<[1], [0], [0], [1], [0, 0, 1, 1], [], []>} : vector<226x8xbf16>, vector<8x4xbf16>, vector<226x4xf32> -> vector<226x4xf32>
    %204 = arith.addf %199, %203 : vector<226x4xf32>
    %c12_138 = arith.constant 12 : index
    %c0_139 = arith.constant 0 : index
    %205 = vector.load %arg7[%c12_138, %c0_139] : memref<248x8xbf16, #tpu.memory_space<vmem>>, vector<226x8xbf16>
    %c13 = arith.constant 13 : index
    %c0_140 = arith.constant 0 : index
    %c0_141 = arith.constant 0 : index
    %206 = vector.load %arg3[%c13, %c0_140, %c0_141] : memref<16x8x4xbf16, #tpu.memory_space<vmem>>, vector<1x8x4xbf16>
    %207 = vector.shape_cast %206 : vector<1x8x4xbf16> to vector<8x4xbf16>
    %cst_142 = arith.constant dense<0.000000e+00> : vector<226x4xf32>
    %208 = tpu.matmul %205, %207, %cst_142 {dimension_numbers = #tpu.dot_dimension_numbers<[1], [0], [0], [1], [0, 0, 1, 1], [], []>} : vector<226x8xbf16>, vector<8x4xbf16>, vector<226x4xf32> -> vector<226x4xf32>
    %209 = arith.addf %204, %208 : vector<226x4xf32>
    %c21_143 = arith.constant 21 : index
    %c0_144 = arith.constant 0 : index
    %210 = vector.load %arg7[%c21_143, %c0_144] : memref<248x8xbf16, #tpu.memory_space<vmem>>, vector<226x8xbf16>
    %c14 = arith.constant 14 : index
    %c0_145 = arith.constant 0 : index
    %c0_146 = arith.constant 0 : index
    %211 = vector.load %arg3[%c14, %c0_145, %c0_146] : memref<16x8x4xbf16, #tpu.memory_space<vmem>>, vector<1x8x4xbf16>
    %212 = vector.shape_cast %211 : vector<1x8x4xbf16> to vector<8x4xbf16>
    %cst_147 = arith.constant dense<0.000000e+00> : vector<226x4xf32>
    %213 = tpu.matmul %210, %212, %cst_147 {dimension_numbers = #tpu.dot_dimension_numbers<[1], [0], [0], [1], [0, 0, 1, 1], [], []>} : vector<226x8xbf16>, vector<8x4xbf16>, vector<226x4xf32> -> vector<226x4xf32>
    %214 = arith.addf %209, %213 : vector<226x4xf32>
    %c22 = arith.constant 22 : index
    %c0_148 = arith.constant 0 : index
    %215 = vector.load %arg7[%c22, %c0_148] : memref<248x8xbf16, #tpu.memory_space<vmem>>, vector<226x8xbf16>
    %c15 = arith.constant 15 : index
    %c0_149 = arith.constant 0 : index
    %c0_150 = arith.constant 0 : index
    %216 = vector.load %arg3[%c15, %c0_149, %c0_150] : memref<16x8x4xbf16, #tpu.memory_space<vmem>>, vector<1x8x4xbf16>
    %217 = vector.shape_cast %216 : vector<1x8x4xbf16> to vector<8x4xbf16>
    %cst_151 = arith.constant dense<0.000000e+00> : vector<226x4xf32>
    %218 = tpu.matmul %215, %217, %cst_151 {dimension_numbers = #tpu.dot_dimension_numbers<[1], [0], [0], [1], [0, 0, 1, 1], [], []>} : vector<226x8xbf16>, vector<8x4xbf16>, vector<226x4xf32> -> vector<226x4xf32>
    %219 = arith.addf %214, %218 : vector<226x4xf32>
    %cst_152 = arith.constant 0.000000e+00 : f32
    %220 = vector.shape_cast %88 : vector<226x1xi1> to vector<226x1xi1>
    %221 = vector.broadcast %220 : vector<226x1xi1> to vector<226x4xi1>
    %222 = vector.broadcast %cst_152 : f32 to vector<226x4xf32>
    %223 = arith.select %221, %219, %222 : vector<226x4xi1>, vector<226x4xf32>
    %cst_153 = arith.constant dense<0.000000e+00> : vector<4xf32>
    %224 = vector.multi_reduction <add>, %223, %cst_153 [0] : vector<226x4xf32> to vector<4xf32>
    %225 = vector.shape_cast %224 : vector<4xf32> to vector<1x4xf32>
    %226 = arith.addf %190, %225 : vector<1x4xf32>
    %227 = arith.mulf %223, %223 : vector<226x4xf32>
    %cst_154 = arith.constant dense<0.000000e+00> : vector<4xf32>
    %228 = vector.multi_reduction <add>, %227, %cst_154 [0] : vector<226x4xf32> to vector<4xf32>
    %229 = vector.shape_cast %228 : vector<4xf32> to vector<1x4xf32>
    %230 = arith.addf %194, %229 : vector<1x4xf32>
    %231 = arith.truncf %223 : vector<226x4xf32> to vector<226x4xbf16>
    %c0_155 = arith.constant 0 : index
    %c0_156 = arith.constant 0 : index
    %c12_157 = arith.constant 12 : index
    %232 = vector.load %arg4[%c0_155, %c0_156, %c12_157] : memref<1x226x16xbf16, #tpu.memory_space<vmem>>, vector<1x226x4xbf16>
    %233 = vector.shape_cast %232 : vector<1x226x4xbf16> to vector<226x4xbf16>
    %234 = vector.shape_cast %231 : vector<226x4xbf16> to vector<1x226x4xbf16>
    tpu.vector_store %arg4[%c0_155, %c0_156, %c12_157], %234 {strides = array<i32>} : memref<1x226x16xbf16, #tpu.memory_space<vmem>>, vector<1x226x4xbf16>,
    %c0_158 = arith.constant 0 : index
    %c0_159 = arith.constant 0 : index
    %c0_160 = arith.constant 0 : index
    %235 = vector.load %arg5[%c0_158, %c0_159, %c0_160] : memref<1x2x4xf32, #tpu.memory_space<vmem>>, vector<1x1x4xf32>
    %236 = vector.shape_cast %235 : vector<1x1x4xf32> to vector<1x4xf32>
    %237 = vector.shape_cast %226 : vector<1x4xf32> to vector<1x1x4xf32>
    tpu.vector_store %arg5[%c0_158, %c0_159, %c0_160], %237 {strides = array<i32>} : memref<1x2x4xf32, #tpu.memory_space<vmem>>, vector<1x1x4xf32>,
    %c0_161 = arith.constant 0 : index
    %c1_162 = arith.constant 1 : index
    %c0_163 = arith.constant 0 : index
    %238 = vector.load %arg5[%c0_161, %c1_162, %c0_163] : memref<1x2x4xf32, #tpu.memory_space<vmem>>, vector<1x1x4xf32>
    %239 = vector.shape_cast %238 : vector<1x1x4xf32> to vector<1x4xf32>
    %240 = vector.shape_cast %230 : vector<1x4xf32> to vector<1x1x4xf32>
    tpu.vector_store %arg5[%c0_161, %c1_162, %c0_163], %240 {strides = array<i32>} : memref<1x2x4xf32, #tpu.memory_space<vmem>>, vector<1x1x4xf32>,
    return
  }
  func.func @transform_0(%arg0: i32) -> (i32, i32, i32) {
    %c0_i32 = arith.constant 0 : i32
    %c0_i32_0 = arith.constant 0 : i32
    %c0_i32_1 = arith.constant 0 : i32
    return %arg0, %c0_i32, %c0_i32_0 : i32, i32, i32
  }
  func.func @transform_1(%arg0: i32) -> (i32, i32, i32) {
    %c0_i32 = arith.constant 0 : i32
    %c0_i32_0 = arith.constant 0 : i32
    %c0_i32_1 = arith.constant 0 : i32
    %c0_i32_2 = arith.constant 0 : i32
    return %c0_i32, %c0_i32_0, %c0_i32_1 : i32, i32, i32
  }
  func.func @transform_2(%arg0: i32) -> (i32, i32, i32) {
    %c0_i32 = arith.constant 0 : i32
    %c0_i32_0 = arith.constant 0 : i32
    %c0_i32_1 = arith.constant 0 : i32
    %c0_i32_2 = arith.constant 0 : i32
    return %c0_i32, %c0_i32_0, %c0_i32_1 : i32, i32, i32
  }
  func.func @transform_3(%arg0: i32) -> (i32, i32, i32) {
    %c0_i32 = arith.constant 0 : i32
    %c0_i32_0 = arith.constant 0 : i32
    %c0_i32_1 = arith.constant 0 : i32
    return %arg0, %c0_i32, %c0_i32_0 : i32, i32, i32
  }
  func.func @transform_4(%arg0: i32) -> (i32, i32, i32) {
    %c0_i32 = arith.constant 0 : i32
    %c0_i32_0 = arith.constant 0 : i32
    %c0_i32_1 = arith.constant 0 : i32
    return %arg0, %c0_i32, %c0_i32_0 : i32, i32, i32
  }
}

</mosaic_0001>

<llo_original>
// kernel: tile.17
$region0: #{tile.17}
  #allocation0 [shape = 's32[1]{0}', space=sflag, size = 0x4, scoped, tag = 'scoped memory for tile.17']
  %s0 = inlined_call_operand.vmem [shape: f32[4], index: 0, kind: input, shape index: {}]
  %s1 = inlined_call_operand.vmem [shape: f32[4,4], index: 1, kind: output, shape index: {}]
  // Predicated region
  $region2: #{tile.17} parent=0 // pred_check
    _
  $region3: #{tile.17} parent=0 // pred_check_branch
    %3 = sbr.rel (0) target = $region5
  $region4: #{tile.17} parent=0 // pred_region
    _
  $region5: #{tile.17} parent=0 // pred_fallthru
    _
  %v4 = vld [vmem:[%s0] ss:$0 sm:$0xff]
  %5 = vst [vmem:[%s1] sm:$0xf] %v4

// kernel: unet_innermost_block_forward.1
$region0: #{unet_innermost_block_forward.1}
  #allocation0 [shape = 'u32[]', space=smem, size = 0x4, offset = 0x4, fixed_abs, tag = 'smem constant byte address 0x4 - core index']
  #allocation1 [shape = 'u32[144,128]{1,0:T(1,128)}', space=vmem, size = 0x12000, scoped, tag = 'internal scratch']
  #allocation2 [shape = 'bf16[259,16]{1,0:T(8,128)(2,1)}', space=vmem, size = 0x10800, scoped, tag = 'scratch operand']
  #allocation3 [shape = 'bf16[248,8]{1,0:T(8,128)(2,1)}', space=vmem, size = 0xf800, scoped, tag = 'scratch operand']
  %s0 = inlined_call_operand.vmem [shape: bf16[1,259,16], index: 0, kind: input, shape index: {}]
  %s1 = inlined_call_operand.vmem [shape: bf16[4,16,8], index: 1, kind: input, shape index: {}]
  %s2 = inlined_call_operand.vmem [shape: bf16[16,8,4], index: 2, kind: input, shape index: {}]
  %s3 = inlined_call_operand.vmem [shape: bf16[1,226,16], index: 3, kind: output, shape index: {0}]
  %s4 = inlined_call_operand.vmem [shape: f32[1,2,4], index: 4, kind: output, shape index: {1}]
  %5 = xla_tuple %s3, %s4
  %s6 = sld [smem:[#allocation0]]
  $region30: #{unet_innermost_block_forward.1} parent=0
    _
  %s8 = ssub.s32 1, %s6
  %s9 = scalar_select 0, %s8, %s6
  // Predicated region
  $region2: #{unet_innermost_block_forward.1} parent=0 // pred_check
    _
  $region3: #{unet_innermost_block_forward.1} parent=0 // pred_check_branch
    %11 = sbr.rel (0) target = $region5
  $region4: #{unet_innermost_block_forward.1} parent=0 // pred_region
    _
  $region5: #{unet_innermost_block_forward.1} parent=0 // pred_fallthru
    _
  // Predicated region
  $region6: #{unet_innermost_block_forward.1} parent=0 // pred_check
    _
  $region7: #{unet_innermost_block_forward.1} parent=0 // pred_check_branch
    %13 = sbr.rel (0) target = $region9
  $region8: #{unet_innermost_block_forward.1} parent=0 // pred_region
    _
  $region9: #{unet_innermost_block_forward.1} parent=0 // pred_fallthru
    _
  // Predicated region
  $region10: #{unet_innermost_block_forward.1} parent=0 // pred_check
    _
  $region11: #{unet_innermost_block_forward.1} parent=0 // pred_check_branch
    %15 = sbr.rel (0) target = $region13
  $region12: #{unet_innermost_block_forward.1} parent=0 // pred_region
    _
  $region13: #{unet_innermost_block_forward.1} parent=0 // pred_fallthru
    _
  %v17 = vld [vmem:[%s0] sm:$0xf]
  %v18 = vld [vmem:[%s0 + $0x4] sm:$0xf]
  %v19 = vld [vmem:[%s0 + $0x8] sm:$0xf]
  %v20 = vld [vmem:[%s0 + $0xc] sm:$0xf]
  %v21 = vld [vmem:[%s0 + $0x10] sm:$0xf]
  %v22 = vld [vmem:[%s0 + $0x14] sm:$0xf]
  %v23 = vld [vmem:[%s0 + $0x18] sm:$0xf]
  %v24 = vld [vmem:[%s0 + $0x1c] sm:$0xf]
  %v25 = vld [vmem:[%s0 + $0x20] sm:$0xf]
  %v26 = vld [vmem:[%s0 + $0x24] sm:$0xf]
  %v27 = vld [vmem:[%s0 + $0x28] sm:$0xf]
  %v28 = vld [vmem:[%s0 + $0x2c] sm:$0xf]
  %v29 = vld [vmem:[%s0 + $0x30] sm:$0xf]
  %v30 = vld [vmem:[%s0 + $0x34] sm:$0xf]
  %v31 = vld [vmem:[%s0 + $0x38] sm:$0xf]
  %v32 = vld [vmem:[%s0 + $0x3c] sm:$0xf]
  %v33 = vld [vmem:[%s0 + $0x40] sm:$0xf]
  %v34 = vld [vmem:[%s0 + $0x44] sm:$0xf]
  %v35 = vld [vmem:[%s0 + $0x48] sm:$0xf]
  %v36 = vld [vmem:[%s0 + $0x4c] sm:$0xf]
  %v37 = vld [vmem:[%s0 + $0x50] sm:$0xf]
  %v38 = vld [vmem:[%s0 + $0x54] sm:$0xf]
  %v39 = vld [vmem:[%s0 + $0x58] sm:$0xf]
  %v40 = vld [vmem:[%s0 + $0x5c] sm:$0xf]
  %v41 = vld [vmem:[%s0 + $0x60] sm:$0xf]
  %v42 = vld [vmem:[%s0 + $0x64] sm:$0xf]
  %v43 = vld [vmem:[%s0 + $0x68] sm:$0xf]
  %v44 = vld [vmem:[%s0 + $0x6c] sm:$0xf]
  %v45 = vld [vmem:[%s0 + $0x70] sm:$0xf]
  %v46 = vld [vmem:[%s0 + $0x74] sm:$0xf]
  %v47 = vld [vmem:[%s0 + $0x78] sm:$0xf]
  %v48 = vld [vmem:[%s0 + $0x7c] sm:$0xf]
  %v49 = vld [vmem:[%s0 + $0x80] sm:$0x3]
  %v50 = vunpack.c.l.bf16 %v17
  %v51 = vunpack.c.l.bf16 %v18
  %v52 = vunpack.c.l.bf16 %v19
  %v53 = vunpack.c.l.bf16 %v20
  %v54 = vunpack.c.l.bf16 %v21
  %v55 = vunpack.c.l.bf16 %v22
  %v56 = vunpack.c.l.bf16 %v23
  %v57 = vunpack.c.l.bf16 %v24
  %v58 = vunpack.c.l.bf16 %v25
  %v59 = vunpack.c.l.bf16 %v26
  %v60 = vunpack.c.l.bf16 %v27
  %v61 = vunpack.c.l.bf16 %v28
  %v62 = vunpack.c.l.bf16 %v29
  %v63 = vunpack.c.l.bf16 %v30
  %v64 = vunpack.c.l.bf16 %v31
  %v65 = vunpack.c.l.bf16 %v32
  %v66 = vunpack.c.l.bf16 %v33
  %v67 = vunpack.c.l.bf16 %v34
  %v68 = vunpack.c.l.bf16 %v35
  %v69 = vunpack.c.l.bf16 %v36
  %v70 = vunpack.c.l.bf16 %v37
  %v71 = vunpack.c.l.bf16 %v38
  %v72 = vunpack.c.l.bf16 %v39
  %v73 = vunpack.c.l.bf16 %v40
  %v74 = vunpack.c.l.bf16 %v41
  %v75 = vunpack.c.l.bf16 %v42
  %v76 = vunpack.c.l.bf16 %v43
  %v77 = vunpack.c.l.bf16 %v44
  %v78 = vunpack.c.l.bf16 %v45
  %v79 = vunpack.c.l.bf16 %v46
  %v80 = vunpack.c.l.bf16 %v47
  %v81 = vunpack.c.l.bf16 %v48
  %v82 = vunpack.c.l.bf16 %v49
  %vm83 = vcmp.gt.f32.partialorder %v50, 0.0
  %vm84 = vcmp.gt.f32.partialorder %v51, 0.0
  %vm85 = vcmp.gt.f32.partialorder %v52, 0.0
  %vm86 = vcmp.gt.f32.partialorder %v53, 0.0
  %vm87 = vcmp.gt.f32.partialorder %v54, 0.0
  %vm88 = vcmp.gt.f32.partialorder %v55, 0.0
  %vm89 = vcmp.gt.f32.partialorder %v56, 0.0
  %vm90 = vcmp.gt.f32.partialorder %v57, 0.0
  %vm91 = vcmp.gt.f32.partialorder %v58, 0.0
  %vm92 = vcmp.gt.f32.partialorder %v59, 0.0
  %vm93 = vcmp.gt.f32.partialorder %v60, 0.0
  %vm94 = vcmp.gt.f32.partialorder %v61, 0.0
  %vm95 = vcmp.gt.f32.partialorder %v62, 0.0
  %vm96 = vcmp.gt.f32.partialorder %v63, 0.0
  %vm97 = vcmp.gt.f32.partialorder %v64, 0.0
  %vm98 = vcmp.gt.f32.partialorder %v65, 0.0
  %vm99 = vcmp.gt.f32.partialorder %v66, 0.0
  %vm100 = vcmp.gt.f32.partialorder %v67, 0.0
  %vm101 = vcmp.gt.f32.partialorder %v68, 0.0
  %vm102 = vcmp.gt.f32.partialorder %v69, 0.0
  %vm103 = vcmp.gt.f32.partialorder %v70, 0.0
  %vm104 = vcmp.gt.f32.partialorder %v71, 0.0
  %vm105 = vcmp.gt.f32.partialorder %v72, 0.0
  %vm106 = vcmp.gt.f32.partialorder %v73, 0.0
  %vm107 = vcmp.gt.f32.partialorder %v74, 0.0
  %vm108 = vcmp.gt.f32.partialorder %v75, 0.0
  %vm109 = vcmp.gt.f32.partialorder %v76, 0.0
  %vm110 = vcmp.gt.f32.partialorder %v77, 0.0
  %vm111 = vcmp.gt.f32.partialorder %v78, 0.0
  %vm112 = vcmp.gt.f32.partialorder %v79, 0.0
  %vm113 = vcmp.gt.f32.partialorder %v80, 0.0
  %vm114 = vcmp.gt.f32.partialorder %v81, 0.0
  %vm115 = vcmp.gt.f32.partialorder %v82, 0.0
  %v116 = vmul.f32 %v50, 0.2
  %v117 = vmul.f32 %v51, 0.2
  %v118 = vmul.f32 %v52, 0.2
  %v119 = vmul.f32 %v53, 0.2
  %v120 = vmul.f32 %v54, 0.2
  %v121 = vmul.f32 %v55, 0.2
  %v122 = vmul.f32 %v56, 0.2
  %v123 = vmul.f32 %v57, 0.2
  %v124 = vmul.f32 %v58, 0.2
  %v125 = vmul.f32 %v59, 0.2
  %v126 = vmul.f32 %v60, 0.2
  %v127 = vmul.f32 %v61, 0.2
  %v128 = vmul.f32 %v62, 0.2
  %v129 = vmul.f32 %v63, 0.2
  %v130 = vmul.f32 %v64, 0.2
  %v131 = vmul.f32 %v65, 0.2
  %v132 = vmul.f32 %v66, 0.2
  %v133 = vmul.f32 %v67, 0.2
  %v134 = vmul.f32 %v68, 0.2
  %v135 = vmul.f32 %v69, 0.2
  %v136 = vmul.f32 %v70, 0.2
  %v137 = vmul.f32 %v71, 0.2
  %v138 = vmul.f32 %v72, 0.2
  %v139 = vmul.f32 %v73, 0.2
  %v140 = vmul.f32 %v74, 0.2
  %v141 = vmul.f32 %v75, 0.2
  %v142 = vmul.f32 %v76, 0.2
  %v143 = vmul.f32 %v77, 0.2
  %v144 = vmul.f32 %v78, 0.2
  %v145 = vmul.f32 %v79, 0.2
  %v146 = vmul.f32 %v80, 0.2
  %v147 = vmul.f32 %v81, 0.2
  %v148 = vmul.f32 %v82, 0.2
  %v149 = vsel %vm83, %v50, %v116
  %v150 = vsel %vm84, %v51, %v117
  %v151 = vsel %vm85, %v52, %v118
  %v152 = vsel %vm86, %v53, %v119
  %v153 = vsel %vm87, %v54, %v120
  %v154 = vsel %vm88, %v55, %v121
  %v155 = vsel %vm89, %v56, %v122
  %v156 = vsel %vm90, %v57, %v123
  %v157 = vsel %vm91, %v58, %v124
  %v158 = vsel %vm92, %v59, %v125
  %v159 = vsel %vm93, %v60, %v126
  %v160 = vsel %vm94, %v61, %v127
  %v161 = vsel %vm95, %v62, %v128
  %v162 = vsel %vm96, %v63, %v129
  %v163 = vsel %vm97, %v64, %v130
  %v164 = vsel %vm98, %v65, %v131
  %v165 = vsel %vm99, %v66, %v132
  %v166 = vsel %vm100, %v67, %v133
  %v167 = vsel %vm101, %v68, %v134
  %v168 = vsel %vm102, %v69, %v135
  %v169 = vsel %vm103, %v70, %v136
  %v170 = vsel %vm104, %v71, %v137
  %v171 = vsel %vm105, %v72, %v138
  %v172 = vsel %vm106, %v73, %v139
  %v173 = vsel %vm107, %v74, %v140
  %v174 = vsel %vm108, %v75, %v141
  %v175 = vsel %vm109, %v76, %v142
  %v176 = vsel %vm110, %v77, %v143
  %v177 = vsel %vm111, %v78, %v144
  %v178 = vsel %vm112, %v79, %v145
  %v179 = vsel %vm113, %v80, %v146
  %v180 = vsel %vm114, %v81, %v147
  %v181 = vsel %vm115, %v82, %v148
  %v182 = vpack.c.bf16 %v150, %v149
  %v183 = vpack.c.bf16 %v152, %v151
  %v184 = vpack.c.bf16 %v154, %v153
  %v185 = vpack.c.bf16 %v156, %v155
  %v186 = vpack.c.bf16 %v158, %v157
  %v187 = vpack.c.bf16 %v160, %v159
  %v188 = vpack.c.bf16 %v162, %v161
  %v189 = vpack.c.bf16 %v164, %v163
  %v190 = vpack.c.bf16 %v166, %v165
  %v191 = vpack.c.bf16 %v168, %v167
  %v192 = vpack.c.bf16 %v170, %v169
  %v193 = vpack.c.bf16 %v172, %v171
  %v194 = vpack.c.bf16 %v174, %v173
  %v195 = vpack.c.bf16 %v176, %v175
  %v196 = vpack.c.bf16 %v178, %v177
  %v197 = vpack.c.bf16 %v180, %v179
  %v198 = vpack.c.bf16 %v181, %v181
  %v216 = vunpack.c.l.b16 %v182
  %v217 = vunpack.c.h.b16 %v182
  %v218 = vunpack.c.l.b16 %v183
  %v219 = vunpack.c.h.b16 %v183
  %v220 = vunpack.c.l.b16 %v184
  %v221 = vunpack.c.h.b16 %v184
  %v222 = vunpack.c.l.b16 %v185
  %v223 = vunpack.c.h.b16 %v185
  %v224 = vunpack.c.l.b16 %v186
  %v225 = vunpack.c.h.b16 %v186
  %v226 = vunpack.c.l.b16 %v187
  %v227 = vunpack.c.h.b16 %v187
  %v228 = vunpack.c.l.b16 %v188
  %v229 = vunpack.c.h.b16 %v188
  %v230 = vunpack.c.l.b16 %v189
  %v231 = vunpack.c.h.b16 %v189
  %v232 = vunpack.c.l.b16 %v190
  %v233 = vunpack.c.h.b16 %v190
  %v234 = vunpack.c.l.b16 %v191
  %v235 = vunpack.c.h.b16 %v191
  %v236 = vunpack.c.l.b16 %v192
  %v237 = vunpack.c.h.b16 %v192
  %v238 = vunpack.c.l.b16 %v193
  %v239 = vunpack.c.h.b16 %v193
  %v240 = vunpack.c.l.b16 %v194
  %v241 = vunpack.c.h.b16 %v194
  %v242 = vunpack.c.l.b16 %v195
  %v243 = vunpack.c.h.b16 %v195
  %v244 = vunpack.c.l.b16 %v196
  %v245 = vunpack.c.h.b16 %v196
  %v246 = vunpack.c.l.b16 %v197
  %v247 = vunpack.c.h.b16 %v197
  %v248 = vunpack.c.l.b16 %v198
  %v249 = vpack.c.b16 %v216, %v216
  %v250 = vpack.c.b16 %v217, %v217
  %v251 = vpack.c.b16 %v218, %v218
  %v252 = vpack.c.b16 %v219, %v219
  %v253 = vpack.c.b16 %v220, %v220
  %v254 = vpack.c.b16 %v221, %v221
  %v255 = vpack.c.b16 %v222, %v222
  %v256 = vpack.c.b16 %v223, %v223
  %v257 = vpack.c.b16 %v224, %v224
  %v258 = vpack.c.b16 %v225, %v225
  %v259 = vpack.c.b16 %v226, %v226
  %v260 = vpack.c.b16 %v227, %v227
  %v261 = vpack.c.b16 %v228, %v228
  %v262 = vpack.c.b16 %v229, %v229
  %v263 = vpack.c.b16 %v230, %v230
  %v264 = vpack.c.b16 %v231, %v231
  %v265 = vpack.c.b16 %v232, %v232
  %v266 = vpack.c.b16 %v233, %v233
  %v267 = vpack.c.b16 %v234, %v234
  %v268 = vpack.c.b16 %v235, %v235
  %v269 = vpack.c.b16 %v236, %v236
  %v270 = vpack.c.b16 %v237, %v237
  %v271 = vpack.c.b16 %v238, %v238
  %v272 = vpack.c.b16 %v239, %v239
  %v273 = vpack.c.b16 %v240, %v240
  %v274 = vpack.c.b16 %v241, %v241
  %v275 = vpack.c.b16 %v242, %v242
  %v276 = vpack.c.b16 %v243, %v243
  %v277 = vpack.c.b16 %v244, %v244
  %v278 = vpack.c.b16 %v245, %v245
  %v279 = vpack.c.b16 %v246, %v246
  %v280 = vpack.c.b16 %v247, %v247
  %v281 = vpack.c.b16 %v248, %v248
  %vm315 = vcmask 125952
  %316 = vst.msk [vmem:[#allocation2] sm:$0xf] %vm315, %v249
  %317 = vst.msk [vmem:[#allocation2 + $0x4] sm:$0xf] %vm315, %v250
  %318 = vst.msk [vmem:[#allocation2 + $0x8] sm:$0xf] %vm315, %v251
  %319 = vst.msk [vmem:[#allocation2 + $0xc] sm:$0xf] %vm315, %v252
  %320 = vst.msk [vmem:[#allocation2 + $0x10] sm:$0xf] %vm315, %v253
  %321 = vst.msk [vmem:[#allocation2 + $0x14] sm:$0xf] %vm315, %v254
  %322 = vst.msk [vmem:[#allocation2 + $0x18] sm:$0xf] %vm315, %v255
  %323 = vst.msk [vmem:[#allocation2 + $0x1c] sm:$0xf] %vm315, %v256
  %324 = vst.msk [vmem:[#allocation2 + $0x20] sm:$0xf] %vm315, %v257
  %325 = vst.msk [vmem:[#allocation2 + $0x24] sm:$0xf] %vm315, %v258
  %326 = vst.msk [vmem:[#allocation2 + $0x28] sm:$0xf] %vm315, %v259
  %327 = vst.msk [vmem:[#allocation2 + $0x2c] sm:$0xf] %vm315, %v260
  %328 = vst.msk [vmem:[#allocation2 + $0x30] sm:$0xf] %vm315, %v261
  %329 = vst.msk [vmem:[#allocation2 + $0x34] sm:$0xf] %vm315, %v262
  %330 = vst.msk [vmem:[#allocation2 + $0x38] sm:$0xf] %vm315, %v263
  %331 = vst.msk [vmem:[#allocation2 + $0x3c] sm:$0xf] %vm315, %v264
  %332 = vst.msk [vmem:[#allocation2 + $0x40] sm:$0xf] %vm315, %v265
  %333 = vst.msk [vmem:[#allocation2 + $0x44] sm:$0xf] %vm315, %v266
  %334 = vst.msk [vmem:[#allocation2 + $0x48] sm:$0xf] %vm315, %v267
  %335 = vst.msk [vmem:[#allocation2 + $0x4c] sm:$0xf] %vm315, %v268
  %336 = vst.msk [vmem:[#allocation2 + $0x50] sm:$0xf] %vm315, %v269
  %337 = vst.msk [vmem:[#allocation2 + $0x54] sm:$0xf] %vm315, %v270
  %338 = vst.msk [vmem:[#allocation2 + $0x58] sm:$0xf] %vm315, %v271
  %339 = vst.msk [vmem:[#allocation2 + $0x5c] sm:$0xf] %vm315, %v272
  %340 = vst.msk [vmem:[#allocation2 + $0x60] sm:$0xf] %vm315, %v273
  %341 = vst.msk [vmem:[#allocation2 + $0x64] sm:$0xf] %vm315, %v274
  %342 = vst.msk [vmem:[#allocation2 + $0x68] sm:$0xf] %vm315, %v275
  %343 = vst.msk [vmem:[#allocation2 + $0x6c] sm:$0xf] %vm315, %v276
  %344 = vst.msk [vmem:[#allocation2 + $0x70] sm:$0xf] %vm315, %v277
  %345 = vst.msk [vmem:[#allocation2 + $0x74] sm:$0xf] %vm315, %v278
  %346 = vst.msk [vmem:[#allocation2 + $0x78] sm:$0xf] %vm315, %v279
  %347 = vst.msk [vmem:[#allocation2 + $0x7c] sm:$0xf] %vm315, %v280
  %vm348 = vcmask 123904
  %vm349 = vsmask.f32 1280
  %vm350 = vmand %vm348, %vm349
  %v351 = vld [vmem:[#allocation2 + $0x80] sm:$0x3]
  %v352 = vsel %vm350, %v281, %v351
  %353 = vst [vmem:[#allocation2 + $0x80] sm:$0x3] %v352
  %v354 = vlaneseq
  %v355 = vshrl.u32 %v354, 7
  %v356 = vadd.s32 %v355, 8
  %v357 = vadd.s32 %v355, 16
  %v358 = vadd.s32 %v355, 24
  %v359 = vadd.s32 %v355, 32
  %v360 = vadd.s32 %v355, 40
  %v361 = vadd.s32 %v355, 48
  %v362 = vadd.s32 %v355, 56
  %v363 = vadd.s32 %v355, 64
  %v364 = vadd.s32 %v355, 72
  %v365 = vadd.s32 %v355, 80
  %v366 = vadd.s32 %v355, 88
  %v367 = vadd.s32 %v355, 96
  %v368 = vadd.s32 %v355, 104
  %v369 = vadd.s32 %v355, 112
  %v370 = vadd.s32 %v355, 120
  %v371 = vadd.s32 %v355, 128
  %v372 = vadd.s32 %v355, 136
  %v373 = vadd.s32 %v355, 144
  %v374 = vadd.s32 %v355, 152
  %v375 = vadd.s32 %v355, 160
  %v376 = vadd.s32 %v355, 168
  %v377 = vadd.s32 %v355, 176
  %v378 = vadd.s32 %v355, 184
  %v379 = vadd.s32 %v355, 192
  %v380 = vadd.s32 %v355, 200
  %v381 = vadd.s32 %v355, 208
  %v382 = vadd.s32 %v355, 216
  %v383 = vadd.s32 %v355, 224
  %v384 = vadd.s32 %v355, 232
  %v385 = vadd.s32 %v355, 240
  %v386 = vcvt.s32.f32 %v355
  %v387 = vcvt.s32.f32 %v356
  %v388 = vcvt.s32.f32 %v357
  %v389 = vcvt.s32.f32 %v358
  %v390 = vcvt.s32.f32 %v359
  %v391 = vcvt.s32.f32 %v360
  %v392 = vcvt.s32.f32 %v361
  %v393 = vcvt.s32.f32 %v362
  %v394 = vcvt.s32.f32 %v363
  %v395 = vcvt.s32.f32 %v364
  %v396 = vcvt.s32.f32 %v365
  %v397 = vcvt.s32.f32 %v366
  %v398 = vcvt.s32.f32 %v367
  %v399 = vcvt.s32.f32 %v368
  %v400 = vcvt.s32.f32 %v369
  %v401 = vcvt.s32.f32 %v370
  %v402 = vcvt.s32.f32 %v371
  %v403 = vcvt.s32.f32 %v372
  %v404 = vcvt.s32.f32 %v373
  %v405 = vcvt.s32.f32 %v374
  %v406 = vcvt.s32.f32 %v375
  %v407 = vcvt.s32.f32 %v376
  %v408 = vcvt.s32.f32 %v377
  %v409 = vcvt.s32.f32 %v378
  %v410 = vcvt.s32.f32 %v379
  %v411 = vcvt.s32.f32 %v380
  %v412 = vcvt.s32.f32 %v381
  %v413 = vcvt.s32.f32 %v382
  %v414 = vcvt.s32.f32 %v383
  %v415 = vcvt.s32.f32 %v384
  %v416 = vcvt.s32.f32 %v385
  %v417 = vrcp.pop 113.0
  %v418 = vmul.f32 %v386, %v417
  %v419 = vmul.f32 %v387, %v417
  %v420 = vmul.f32 %v388, %v417
  %v421 = vmul.f32 %v389, %v417
  %v422 = vmul.f32 %v390, %v417
  %v423 = vmul.f32 %v391, %v417
  %v424 = vmul.f32 %v392, %v417
  %v425 = vmul.f32 %v393, %v417
  %v426 = vmul.f32 %v394, %v417
  %v427 = vmul.f32 %v395, %v417
  %v428 = vmul.f32 %v396, %v417
  %v429 = vmul.f32 %v397, %v417
  %v430 = vmul.f32 %v398, %v417
  %v431 = vmul.f32 %v399, %v417
  %v432 = vmul.f32 %v400, %v417
  %v433 = vmul.f32 %v401, %v417
  %v434 = vmul.f32 %v402, %v417
  %v435 = vmul.f32 %v403, %v417
  %v436 = vmul.f32 %v404, %v417
  %v437 = vmul.f32 %v405, %v417
  %v438 = vmul.f32 %v406, %v417
  %v439 = vmul.f32 %v407, %v417
  %v440 = vmul.f32 %v408, %v417
  %v441 = vmul.f32 %v409, %v417
  %v442 = vmul.f32 %v410, %v417
  %v443 = vmul.f32 %v411, %v417
  %v444 = vmul.f32 %v412, %v417
  %v445 = vmul.f32 %v413, %v417
  %v446 = vmul.f32 %v414, %v417
  %v447 = vmul.f32 %v415, %v417
  %v448 = vmul.f32 %v416, %v417
  %v449 = vfloor.f32 %v418
  %v450 = vfloor.f32 %v419
  %v451 = vfloor.f32 %v420
  %v452 = vfloor.f32 %v421
  %v453 = vfloor.f32 %v422
  %v454 = vfloor.f32 %v423
  %v455 = vfloor.f32 %v424
  %v456 = vfloor.f32 %v425
  %v457 = vfloor.f32 %v426
  %v458 = vfloor.f32 %v427
  %v459 = vfloor.f32 %v428
  %v460 = vfloor.f32 %v429
  %v461 = vfloor.f32 %v430
  %v462 = vfloor.f32 %v431
  %v463 = vfloor.f32 %v432
  %v464 = vfloor.f32 %v433
  %v465 = vfloor.f32 %v434
  %v466 = vfloor.f32 %v435
  %v467 = vfloor.f32 %v436
  %v468 = vfloor.f32 %v437
  %v469 = vfloor.f32 %v438
  %v470 = vfloor.f32 %v439
  %v471 = vfloor.f32 %v440
  %v472 = vfloor.f32 %v441
  %v473 = vfloor.f32 %v442
  %v474 = vfloor.f32 %v443
  %v475 = vfloor.f32 %v444
  %v476 = vfloor.f32 %v445
  %v477 = vfloor.f32 %v446
  %v478 = vfloor.f32 %v447
  %v479 = vfloor.f32 %v448
  %v480 = vmul.f32 %v449, 113.0
  %v481 = vmul.f32 %v450, 113.0
  %v482 = vmul.f32 %v451, 113.0
  %v483 = vmul.f32 %v452, 113.0
  %v484 = vmul.f32 %v453, 113.0
  %v485 = vmul.f32 %v454, 113.0
  %v486 = vmul.f32 %v455, 113.0
  %v487 = vmul.f32 %v456, 113.0
  %v488 = vmul.f32 %v457, 113.0
  %v489 = vmul.f32 %v458, 113.0
  %v490 = vmul.f32 %v459, 113.0
  %v491 = vmul.f32 %v460, 113.0
  %v492 = vmul.f32 %v461, 113.0
  %v493 = vmul.f32 %v462, 113.0
  %v494 = vmul.f32 %v463, 113.0
  %v495 = vmul.f32 %v464, 113.0
  %v496 = vmul.f32 %v465, 113.0
  %v497 = vmul.f32 %v466, 113.0
  %v498 = vmul.f32 %v467, 113.0
  %v499 = vmul.f32 %v468, 113.0
  %v500 = vmul.f32 %v469, 113.0
  %v501 = vmul.f32 %v470, 113.0
  %v502 = vmul.f32 %v471, 113.0
  %v503 = vmul.f32 %v472, 113.0
  %v504 = vmul.f32 %v473, 113.0
  %v505 = vmul.f32 %v474, 113.0
  %v506 = vmul.f32 %v475, 113.0
  %v507 = vmul.f32 %v476, 113.0
  %v508 = vmul.f32 %v477, 113.0
  %v509 = vmul.f32 %v478, 113.0
  %v510 = vmul.f32 %v479, 113.0
  %v511 = vsub.f32 %v386, %v480
  %v512 = vsub.f32 %v387, %v481
  %v513 = vsub.f32 %v388, %v482
  %v514 = vsub.f32 %v389, %v483
  %v515 = vsub.f32 %v390, %v484
  %v516 = vsub.f32 %v391, %v485
  %v517 = vsub.f32 %v392, %v486
  %v518 = vsub.f32 %v393, %v487
  %v519 = vsub.f32 %v394, %v488
  %v520 = vsub.f32 %v395, %v489
  %v521 = vsub.f32 %v396, %v490
  %v522 = vsub.f32 %v397, %v491
  %v523 = vsub.f32 %v398, %v492
  %v524 = vsub.f32 %v399, %v493
  %v525 = vsub.f32 %v400, %v494
  %v526 = vsub.f32 %v401, %v495
  %v527 = vsub.f32 %v402, %v496
  %v528 = vsub.f32 %v403, %v497
  %v529 = vsub.f32 %v404, %v498
  %v530 = vsub.f32 %v405, %v499
  %v531 = vsub.f32 %v406, %v500
  %v532 = vsub.f32 %v407, %v501
  %v533 = vsub.f32 %v408, %v502
  %v534 = vsub.f32 %v409, %v503
  %v535 = vsub.f32 %v410, %v504
  %v536 = vsub.f32 %v411, %v505
  %v537 = vsub.f32 %v412, %v506
  %v538 = vsub.f32 %v413, %v507
  %v539 = vsub.f32 %v414, %v508
  %v540 = vsub.f32 %v415, %v509
  %v541 = vsub.f32 %v416, %v510
  %v542 = vrcp.pop 10.0
  %v543 = vmul.f32 %v511, %v542
  %v544 = vmul.f32 %v512, %v542
  %v545 = vmul.f32 %v513, %v542
  %v546 = vmul.f32 %v514, %v542
  %v547 = vmul.f32 %v515, %v542
  %v548 = vmul.f32 %v516, %v542
  %v549 = vmul.f32 %v517, %v542
  %v550 = vmul.f32 %v518, %v542
  %v551 = vmul.f32 %v519, %v542
  %v552 = vmul.f32 %v520, %v542
  %v553 = vmul.f32 %v521, %v542
  %v554 = vmul.f32 %v522, %v542
  %v555 = vmul.f32 %v523, %v542
  %v556 = vmul.f32 %v524, %v542
  %v557 = vmul.f32 %v525, %v542
  %v558 = vmul.f32 %v526, %v542
  %v559 = vmul.f32 %v527, %v542
  %v560 = vmul.f32 %v528, %v542
  %v561 = vmul.f32 %v529, %v542
  %v562 = vmul.f32 %v530, %v542
  %v563 = vmul.f32 %v531, %v542
  %v564 = vmul.f32 %v532, %v542
  %v565 = vmul.f32 %v533, %v542
  %v566 = vmul.f32 %v534, %v542
  %v567 = vmul.f32 %v535, %v542
  %v568 = vmul.f32 %v536, %v542
  %v569 = vmul.f32 %v537, %v542
  %v570 = vmul.f32 %v538, %v542
  %v571 = vmul.f32 %v539, %v542
  %v572 = vmul.f32 %v540, %v542
  %v573 = vmul.f32 %v541, %v542
  %v574 = vfloor.f32 %v543
  %v575 = vfloor.f32 %v544
  %v576 = vfloor.f32 %v545
  %v577 = vfloor.f32 %v546
  %v578 = vfloor.f32 %v547
  %v579 = vfloor.f32 %v548
  %v580 = vfloor.f32 %v549
  %v581 = vfloor.f32 %v550
  %v582 = vfloor.f32 %v551
  %v583 = vfloor.f32 %v552
  %v584 = vfloor.f32 %v553
  %v585 = vfloor.f32 %v554
  %v586 = vfloor.f32 %v555
  %v587 = vfloor.f32 %v556
  %v588 = vfloor.f32 %v557
  %v589 = vfloor.f32 %v558
  %v590 = vfloor.f32 %v559
  %v591 = vfloor.f32 %v560
  %v592 = vfloor.f32 %v561
  %v593 = vfloor.f32 %v562
  %v594 = vfloor.f32 %v563
  %v595 = vfloor.f32 %v564
  %v596 = vfloor.f32 %v565
  %v597 = vfloor.f32 %v566
  %v598 = vfloor.f32 %v567
  %v599 = vfloor.f32 %v568
  %v600 = vfloor.f32 %v569
  %v601 = vfloor.f32 %v570
  %v602 = vfloor.f32 %v571
  %v603 = vfloor.f32 %v572
  %v604 = vfloor.f32 %v573
  %v605 = vmul.f32 %v574, 10.0
  %v606 = vmul.f32 %v575, 10.0
  %v607 = vmul.f32 %v576, 10.0
  %v608 = vmul.f32 %v577, 10.0
  %v609 = vmul.f32 %v578, 10.0
  %v610 = vmul.f32 %v579, 10.0
  %v611 = vmul.f32 %v580, 10.0
  %v612 = vmul.f32 %v581, 10.0
  %v613 = vmul.f32 %v582, 10.0
  %v614 = vmul.f32 %v583, 10.0
  %v615 = vmul.f32 %v584, 10.0
  %v616 = vmul.f32 %v585, 10.0
  %v617 = vmul.f32 %v586, 10.0
  %v618 = vmul.f32 %v587, 10.0
  %v619 = vmul.f32 %v588, 10.0
  %v620 = vmul.f32 %v589, 10.0
  %v621 = vmul.f32 %v590, 10.0
  %v622 = vmul.f32 %v591, 10.0
  %v623 = vmul.f32 %v592, 10.0
  %v624 = vmul.f32 %v593, 10.0
  %v625 = vmul.f32 %v594, 10.0
  %v626 = vmul.f32 %v595, 10.0
  %v627 = vmul.f32 %v596, 10.0
  %v628 = vmul.f32 %v597, 10.0
  %v629 = vmul.f32 %v598, 10.0
  %v630 = vmul.f32 %v599, 10.0
  %v631 = vmul.f32 %v600, 10.0
  %v632 = vmul.f32 %v601, 10.0
  %v633 = vmul.f32 %v602, 10.0
  %v634 = vmul.f32 %v603, 10.0
  %v635 = vmul.f32 %v604, 10.0
  %v636 = vsub.f32 %v511, %v605
  %v637 = vsub.f32 %v512, %v606
  %v638 = vsub.f32 %v513, %v607
  %v639 = vsub.f32 %v514, %v608
  %v640 = vsub.f32 %v515, %v609
  %v641 = vsub.f32 %v516, %v610
  %v642 = vsub.f32 %v517, %v611
  %v643 = vsub.f32 %v518, %v612
  %v644 = vsub.f32 %v519, %v613
  %v645 = vsub.f32 %v520, %v614
  %v646 = vsub.f32 %v521, %v615
  %v647 = vsub.f32 %v522, %v616
  %v648 = vsub.f32 %v523, %v617
  %v649 = vsub.f32 %v524, %v618
  %v650 = vsub.f32 %v525, %v619
  %v651 = vsub.f32 %v526, %v620
  %v652 = vsub.f32 %v527, %v621
  %v653 = vsub.f32 %v528, %v622
  %v654 = vsub.f32 %v529, %v623
  %v655 = vsub.f32 %v530, %v624
  %v656 = vsub.f32 %v531, %v625
  %v657 = vsub.f32 %v532, %v626
  %v658 = vsub.f32 %v533, %v627
  %v659 = vsub.f32 %v534, %v628
  %v660 = vsub.f32 %v535, %v629
  %v661 = vsub.f32 %v536, %v630
  %v662 = vsub.f32 %v537, %v631
  %v663 = vsub.f32 %v538, %v632
  %v664 = vsub.f32 %v539, %v633
  %v665 = vsub.f32 %v540, %v634
  %v666 = vsub.f32 %v541, %v635
  %vm667 = vcmp.lt.f32.partialorder %v511, 100.0
  %vm668 = vcmp.lt.f32.partialorder %v512, 100.0
  %vm669 = vcmp.lt.f32.partialorder %v513, 100.0
  %vm670 = vcmp.lt.f32.partialorder %v514, 100.0
  %vm671 = vcmp.lt.f32.partialorder %v515, 100.0
  %vm672 = vcmp.lt.f32.partialorder %v516, 100.0
  %vm673 = vcmp.lt.f32.partialorder %v517, 100.0
  %vm674 = vcmp.lt.f32.partialorder %v518, 100.0
  %vm675 = vcmp.lt.f32.partialorder %v519, 100.0
  %vm676 = vcmp.lt.f32.partialorder %v520, 100.0
  %vm677 = vcmp.lt.f32.partialorder %v521, 100.0
  %vm678 = vcmp.lt.f32.partialorder %v522, 100.0
  %vm679 = vcmp.lt.f32.partialorder %v523, 100.0
  %vm680 = vcmp.lt.f32.partialorder %v524, 100.0
  %vm681 = vcmp.lt.f32.partialorder %v525, 100.0
  %vm682 = vcmp.lt.f32.partialorder %v526, 100.0
  %vm683 = vcmp.lt.f32.partialorder %v527, 100.0
  %vm684 = vcmp.lt.f32.partialorder %v528, 100.0
  %vm685 = vcmp.lt.f32.partialorder %v529, 100.0
  %vm686 = vcmp.lt.f32.partialorder %v530, 100.0
  %vm687 = vcmp.lt.f32.partialorder %v531, 100.0
  %vm688 = vcmp.lt.f32.partialorder %v532, 100.0
  %vm689 = vcmp.lt.f32.partialorder %v533, 100.0
  %vm690 = vcmp.lt.f32.partialorder %v534, 100.0
  %vm691 = vcmp.lt.f32.partialorder %v535, 100.0
  %vm692 = vcmp.lt.f32.partialorder %v536, 100.0
  %vm693 = vcmp.lt.f32.partialorder %v537, 100.0
  %vm694 = vcmp.lt.f32.partialorder %v538, 100.0
  %vm695 = vcmp.lt.f32.partialorder %v539, 100.0
  %vm696 = vcmp.lt.f32.partialorder %v540, 100.0
  %vm697 = vcmp.lt.f32.partialorder %v541, 100.0
  %vm698 = vcmp.ge.f32.partialorder %v574, 1.0
  %vm699 = vcmp.ge.f32.partialorder %v575, 1.0
  %vm700 = vcmp.ge.f32.partialorder %v576, 1.0
  %vm701 = vcmp.ge.f32.partialorder %v577, 1.0
  %vm702 = vcmp.ge.f32.partialorder %v578, 1.0
  %vm703 = vcmp.ge.f32.partialorder %v579, 1.0
  %vm704 = vcmp.ge.f32.partialorder %v580, 1.0
  %vm705 = vcmp.ge.f32.partialorder %v581, 1.0
  %vm706 = vcmp.ge.f32.partialorder %v582, 1.0
  %vm707 = vcmp.ge.f32.partialorder %v583, 1.0
  %vm708 = vcmp.ge.f32.partialorder %v584, 1.0
  %vm709 = vcmp.ge.f32.partialorder %v585, 1.0
  %vm710 = vcmp.ge.f32.partialorder %v586, 1.0
  %vm711 = vcmp.ge.f32.partialorder %v587, 1.0
  %vm712 = vcmp.ge.f32.partialorder %v588, 1.0
  %vm713 = vcmp.ge.f32.partialorder %v589, 1.0
  %vm714 = vcmp.ge.f32.partialorder %v590, 1.0
  %vm715 = vcmp.ge.f32.partialorder %v591, 1.0
  %vm716 = vcmp.ge.f32.partialorder %v592, 1.0
  %vm717 = vcmp.ge.f32.partialorder %v593, 1.0
  %vm718 = vcmp.ge.f32.partialorder %v594, 1.0
  %vm719 = vcmp.ge.f32.partialorder %v595, 1.0
  %vm720 = vcmp.ge.f32.partialorder %v596, 1.0
  %vm721 = vcmp.ge.f32.partialorder %v597, 1.0
  %vm722 = vcmp.ge.f32.partialorder %v598, 1.0
  %vm723 = vcmp.ge.f32.partialorder %v599, 1.0
  %vm724 = vcmp.ge.f32.partialorder %v600, 1.0
  %vm725 = vcmp.ge.f32.partialorder %v601, 1.0
  %vm726 = vcmp.ge.f32.partialorder %v602, 1.0
  %vm727 = vcmp.ge.f32.partialorder %v603, 1.0
  %vm728 = vcmp.ge.f32.partialorder %v604, 1.0
  %vm729 = vmand %vm667, %vm698
  %vm730 = vmand %vm668, %vm699
  %vm731 = vmand %vm669, %vm700
  %vm732 = vmand %vm670, %vm701
  %vm733 = vmand %vm671, %vm702
  %vm734 = vmand %vm672, %vm703
  %vm735 = vmand %vm673, %vm704
  %vm736 = vmand %vm674, %vm705
  %vm737 = vmand %vm675, %vm706
  %vm738 = vmand %vm676, %vm707
  %vm739 = vmand %vm677, %vm708
  %vm740 = vmand %vm678, %vm709
  %vm741 = vmand %vm679, %vm710
  %vm742 = vmand %vm680, %vm711
  %vm743 = vmand %vm681, %vm712
  %vm744 = vmand %vm682, %vm713
  %vm745 = vmand %vm683, %vm714
  %vm746 = vmand %vm684, %vm715
  %vm747 = vmand %vm685, %vm716
  %vm748 = vmand %vm686, %vm717
  %vm749 = vmand %vm687, %vm718
  %vm750 = vmand %vm688, %vm719
  %vm751 = vmand %vm689, %vm720
  %vm752 = vmand %vm690, %vm721
  %vm753 = vmand %vm691, %vm722
  %vm754 = vmand %vm692, %vm723
  %vm755 = vmand %vm693, %vm724
  %vm756 = vmand %vm694, %vm725
  %vm757 = vmand %vm695, %vm726
  %vm758 = vmand %vm696, %vm727
  %vm759 = vmand %vm697, %vm728
  %vm760 = vcmp.le.f32.partialorder %v574, 8.0
  %vm761 = vcmp.le.f32.partialorder %v575, 8.0
  %vm762 = vcmp.le.f32.partialorder %v576, 8.0
  %vm763 = vcmp.le.f32.partialorder %v577, 8.0
  %vm764 = vcmp.le.f32.partialorder %v578, 8.0
  %vm765 = vcmp.le.f32.partialorder %v579, 8.0
  %vm766 = vcmp.le.f32.partialorder %v580, 8.0
  %vm767 = vcmp.le.f32.partialorder %v581, 8.0
  %vm768 = vcmp.le.f32.partialorder %v582, 8.0
  %vm769 = vcmp.le.f32.partialorder %v583, 8.0
  %vm770 = vcmp.le.f32.partialorder %v584, 8.0
  %vm771 = vcmp.le.f32.partialorder %v585, 8.0
  %vm772 = vcmp.le.f32.partialorder %v586, 8.0
  %vm773 = vcmp.le.f32.partialorder %v587, 8.0
  %vm774 = vcmp.le.f32.partialorder %v588, 8.0
  %vm775 = vcmp.le.f32.partialorder %v589, 8.0
  %vm776 = vcmp.le.f32.partialorder %v590, 8.0
  %vm777 = vcmp.le.f32.partialorder %v591, 8.0
  %vm778 = vcmp.le.f32.partialorder %v592, 8.0
  %vm779 = vcmp.le.f32.partialorder %v593, 8.0
  %vm780 = vcmp.le.f32.partialorder %v594, 8.0
  %vm781 = vcmp.le.f32.partialorder %v595, 8.0
  %vm782 = vcmp.le.f32.partialorder %v596, 8.0
  %vm783 = vcmp.le.f32.partialorder %v597, 8.0
  %vm784 = vcmp.le.f32.partialorder %v598, 8.0
  %vm785 = vcmp.le.f32.partialorder %v599, 8.0
  %vm786 = vcmp.le.f32.partialorder %v600, 8.0
  %vm787 = vcmp.le.f32.partialorder %v601, 8.0
  %vm788 = vcmp.le.f32.partialorder %v602, 8.0
  %vm789 = vcmp.le.f32.partialorder %v603, 8.0
  %vm790 = vcmp.le.f32.partialorder %v604, 8.0
  %vm791 = vmand %vm729, %vm760
  %vm792 = vmand %vm730, %vm761
  %vm793 = vmand %vm731, %vm762
  %vm794 = vmand %vm732, %vm763
  %vm795 = vmand %vm733, %vm764
  %vm796 = vmand %vm734, %vm765
  %vm797 = vmand %vm735, %vm766
  %vm798 = vmand %vm736, %vm767
  %vm799 = vmand %vm737, %vm768
  %vm800 = vmand %vm738, %vm769
  %vm801 = vmand %vm739, %vm770
  %vm802 = vmand %vm740, %vm771
  %vm803 = vmand %vm741, %vm772
  %vm804 = vmand %vm742, %vm773
  %vm805 = vmand %vm743, %vm774
  %vm806 = vmand %vm744, %vm775
  %vm807 = vmand %vm745, %vm776
  %vm808 = vmand %vm746, %vm777
  %vm809 = vmand %vm747, %vm778
  %vm810 = vmand %vm748, %vm779
  %vm811 = vmand %vm749, %vm780
  %vm812 = vmand %vm750, %vm781
  %vm813 = vmand %vm751, %vm782
  %vm814 = vmand %vm752, %vm783
  %vm815 = vmand %vm753, %vm784
  %vm816 = vmand %vm754, %vm785
  %vm817 = vmand %vm755, %vm786
  %vm818 = vmand %vm756, %vm787
  %vm819 = vmand %vm757, %vm788
  %vm820 = vmand %vm758, %vm789
  %vm821 = vmand %vm759, %vm790
  %vm822 = vcmp.ge.f32.partialorder %v636, 1.0
  %vm823 = vcmp.ge.f32.partialorder %v637, 1.0
  %vm824 = vcmp.ge.f32.partialorder %v638, 1.0
  %vm825 = vcmp.ge.f32.partialorder %v639, 1.0
  %vm826 = vcmp.ge.f32.partialorder %v640, 1.0
  %vm827 = vcmp.ge.f32.partialorder %v641, 1.0
  %vm828 = vcmp.ge.f32.partialorder %v642, 1.0
  %vm829 = vcmp.ge.f32.partialorder %v643, 1.0
  %vm830 = vcmp.ge.f32.partialorder %v644, 1.0
  %vm831 = vcmp.ge.f32.partialorder %v645, 1.0
  %vm832 = vcmp.ge.f32.partialorder %v646, 1.0
  %vm833 = vcmp.ge.f32.partialorder %v647, 1.0
  %vm834 = vcmp.ge.f32.partialorder %v648, 1.0
  %vm835 = vcmp.ge.f32.partialorder %v649, 1.0
  %vm836 = vcmp.ge.f32.partialorder %v650, 1.0
  %vm837 = vcmp.ge.f32.partialorder %v651, 1.0
  %vm838 = vcmp.ge.f32.partialorder %v652, 1.0
  %vm839 = vcmp.ge.f32.partialorder %v653, 1.0
  %vm840 = vcmp.ge.f32.partialorder %v654, 1.0
  %vm841 = vcmp.ge.f32.partialorder %v655, 1.0
  %vm842 = vcmp.ge.f32.partialorder %v656, 1.0
  %vm843 = vcmp.ge.f32.partialorder %v657, 1.0
  %vm844 = vcmp.ge.f32.partialorder %v658, 1.0
  %vm845 = vcmp.ge.f32.partialorder %v659, 1.0
  %vm846 = vcmp.ge.f32.partialorder %v660, 1.0
  %vm847 = vcmp.ge.f32.partialorder %v661, 1.0
  %vm848 = vcmp.ge.f32.partialorder %v662, 1.0
  %vm849 = vcmp.ge.f32.partialorder %v663, 1.0
  %vm850 = vcmp.ge.f32.partialorder %v664, 1.0
  %vm851 = vcmp.ge.f32.partialorder %v665, 1.0
  %vm852 = vcmp.ge.f32.partialorder %v666, 1.0
  %vm853 = vmand %vm791, %vm822
  %vm854 = vmand %vm792, %vm823
  %vm855 = vmand %vm793, %vm824
  %vm856 = vmand %vm794, %vm825
  %vm857 = vmand %vm795, %vm826
  %vm858 = vmand %vm796, %vm827
  %vm859 = vmand %vm797, %vm828
  %vm860 = vmand %vm798, %vm829
  %vm861 = vmand %vm799, %vm830
  %vm862 = vmand %vm800, %vm831
  %vm863 = vmand %vm801, %vm832
  %vm864 = vmand %vm802, %vm833
  %vm865 = vmand %vm803, %vm834
  %vm866 = vmand %vm804, %vm835
  %vm867 = vmand %vm805, %vm836
  %vm868 = vmand %vm806, %vm837
  %vm869 = vmand %vm807, %vm838
  %vm870 = vmand %vm808, %vm839
  %vm871 = vmand %vm809, %vm840
  %vm872 = vmand %vm810, %vm841
  %vm873 = vmand %vm811, %vm842
  %vm874 = vmand %vm812, %vm843
  %vm875 = vmand %vm813, %vm844
  %vm876 = vmand %vm814, %vm845
  %vm877 = vmand %vm815, %vm846
  %vm878 = vmand %vm816, %vm847
  %vm879 = vmand %vm817, %vm848
  %vm880 = vmand %vm818, %vm849
  %vm881 = vmand %vm819, %vm850
  %vm882 = vmand %vm820, %vm851
  %vm883 = vmand %vm821, %vm852
  %vm884 = vcmp.le.f32.partialorder %v636, 8.0
  %vm885 = vcmp.le.f32.partialorder %v637, 8.0
  %vm886 = vcmp.le.f32.partialorder %v638, 8.0
  %vm887 = vcmp.le.f32.partialorder %v639, 8.0
  %vm888 = vcmp.le.f32.partialorder %v640, 8.0
  %vm889 = vcmp.le.f32.partialorder %v641, 8.0
  %vm890 = vcmp.le.f32.partialorder %v642, 8.0
  %vm891 = vcmp.le.f32.partialorder %v643, 8.0
  %vm892 = vcmp.le.f32.partialorder %v644, 8.0
  %vm893 = vcmp.le.f32.partialorder %v645, 8.0
  %vm894 = vcmp.le.f32.partialorder %v646, 8.0
  %vm895 = vcmp.le.f32.partialorder %v647, 8.0
  %vm896 = vcmp.le.f32.partialorder %v648, 8.0
  %vm897 = vcmp.le.f32.partialorder %v649, 8.0
  %vm898 = vcmp.le.f32.partialorder %v650, 8.0
  %vm899 = vcmp.le.f32.partialorder %v651, 8.0
  %vm900 = vcmp.le.f32.partialorder %v652, 8.0
  %vm901 = vcmp.le.f32.partialorder %v653, 8.0
  %vm902 = vcmp.le.f32.partialorder %v654, 8.0
  %vm903 = vcmp.le.f32.partialorder %v655, 8.0
  %vm904 = vcmp.le.f32.partialorder %v656, 8.0
  %vm905 = vcmp.le.f32.partialorder %v657, 8.0
  %vm906 = vcmp.le.f32.partialorder %v658, 8.0
  %vm907 = vcmp.le.f32.partialorder %v659, 8.0
  %vm908 = vcmp.le.f32.partialorder %v660, 8.0
  %vm909 = vcmp.le.f32.partialorder %v661, 8.0
  %vm910 = vcmp.le.f32.partialorder %v662, 8.0
  %vm911 = vcmp.le.f32.partialorder %v663, 8.0
  %vm912 = vcmp.le.f32.partialorder %v664, 8.0
  %vm913 = vcmp.le.f32.partialorder %v665, 8.0
  %vm914 = vcmp.le.f32.partialorder %v666, 8.0
  %vm915 = vmand %vm853, %vm884
  %vm916 = vmand %vm854, %vm885
  %vm917 = vmand %vm855, %vm886
  %vm918 = vmand %vm856, %vm887
  %vm919 = vmand %vm857, %vm888
  %vm920 = vmand %vm858, %vm889
  %vm921 = vmand %vm859, %vm890
  %vm922 = vmand %vm860, %vm891
  %vm923 = vmand %vm861, %vm892
  %vm924 = vmand %vm862, %vm893
  %vm925 = vmand %vm863, %vm894
  %vm926 = vmand %vm864, %vm895
  %vm927 = vmand %vm865, %vm896
  %vm928 = vmand %vm866, %vm897
  %vm929 = vmand %vm867, %vm898
  %vm930 = vmand %vm868, %vm899
  %vm931 = vmand %vm869, %vm900
  %vm932 = vmand %vm870, %vm901
  %vm933 = vmand %vm871, %vm902
  %vm934 = vmand %vm872, %vm903
  %vm935 = vmand %vm873, %vm904
  %vm936 = vmand %vm874, %vm905
  %vm937 = vmand %vm875, %vm906
  %vm938 = vmand %vm876, %vm907
  %vm939 = vmand %vm877, %vm908
  %vm940 = vmand %vm878, %vm909
  %vm941 = vmand %vm879, %vm910
  %vm942 = vmand %vm880, %vm911
  %vm943 = vmand %vm881, %vm912
  %vm944 = vmand %vm882, %vm913
  %vm945 = vmand %vm883, %vm914
  %v946 = vld [vmem:[#allocation2] sm:$0xf]
  %v947 = vld [vmem:[#allocation2 + $0x4] sm:$0xf]
  %v948 = vld [vmem:[#allocation2 + $0x8] sm:$0xf]
  %v949 = vld [vmem:[#allocation2 + $0xc] sm:$0xf]
  %v950 = vld [vmem:[#allocation2 + $0x10] sm:$0xf]
  %v951 = vld [vmem:[#allocation2 + $0x14] sm:$0xf]
  %v952 = vld [vmem:[#allocation2 + $0x18] sm:$0xf]
  %v953 = vld [vmem:[#allocation2 + $0x1c] sm:$0xf]
  %v954 = vld [vmem:[#allocation2 + $0x20] sm:$0xf]
  %v955 = vld [vmem:[#allocation2 + $0x24] sm:$0xf]
  %v956 = vld [vmem:[#allocation2 + $0x28] sm:$0xf]
  %v957 = vld [vmem:[#allocation2 + $0x2c] sm:$0xf]
  %v958 = vld [vmem:[#allocation2 + $0x30] sm:$0xf]
  %v959 = vld [vmem:[#allocation2 + $0x34] sm:$0xf]
  %v960 = vld [vmem:[#allocation2 + $0x38] sm:$0xf]
  %v961 = vld [vmem:[#allocation2 + $0x3c] sm:$0xf]
  %v962 = vld [vmem:[#allocation2 + $0x40] sm:$0xf]
  %v963 = vld [vmem:[#allocation2 + $0x44] sm:$0xf]
  %v964 = vld [vmem:[#allocation2 + $0x48] sm:$0xf]
  %v965 = vld [vmem:[#allocation2 + $0x4c] sm:$0xf]
  %v966 = vld [vmem:[#allocation2 + $0x50] sm:$0xf]
  %v967 = vld [vmem:[#allocation2 + $0x54] sm:$0xf]
  %v968 = vld [vmem:[#allocation2 + $0x58] sm:$0xf]
  %v969 = vld [vmem:[#allocation2 + $0x5c] sm:$0xf]
  %v970 = vld [vmem:[#allocation2 + $0x60] sm:$0xf]
  %v971 = vld [vmem:[#allocation2 + $0x64] sm:$0xf]
  %v972 = vld [vmem:[#allocation2 + $0x68] sm:$0xf]
  %v973 = vld [vmem:[#allocation2 + $0x6c] sm:$0xf]
  %v974 = vld [vmem:[#allocation2 + $0x70] sm:$0xf]
  %v975 = vld [vmem:[#allocation2 + $0x74] sm:$0xf]
  %v976 = vld [vmem:[#allocation2 + $0x78] sm:$0xf]
  %v977 = vld [vmem:[%s1] sm:$0xf]
  %v978 = vld [vmem:[%s1 + $0x4] sm:$0xf]
  %v979 = vld [vmem:[#allocation2 + $0x7c] sm:$0x1]
  %s980 = scalar_lea.vmem %s1, 8
  %v981 = vld [vmem:[%s980] sm:$0xf]
  %v982 = vld [vmem:[%s980 + $0x4] sm:$0xf]
  %v1015 = vunpack.c.l.b16 %v946
  %v1016 = vunpack.c.l.b16 %v947
  %v1017 = vunpack.c.l.b16 %v948
  %v1018 = vunpack.c.l.b16 %v949
  %v1019 = vunpack.c.l.b16 %v950
  %v1020 = vunpack.c.l.b16 %v951
  %v1021 = vunpack.c.l.b16 %v952
  %v1022 = vunpack.c.l.b16 %v953
  %v1023 = vunpack.c.l.b16 %v954
  %v1024 = vunpack.c.l.b16 %v955
  %v1025 = vunpack.c.l.b16 %v956
  %v1026 = vunpack.c.l.b16 %v957
  %v1027 = vunpack.c.l.b16 %v958
  %v1028 = vunpack.c.l.b16 %v959
  %v1029 = vunpack.c.l.b16 %v960
  %v1030 = vunpack.c.l.b16 %v961
  %v1031 = vunpack.c.l.b16 %v962
  %v1032 = vunpack.c.l.b16 %v963
  %v1033 = vunpack.c.l.b16 %v964
  %v1034 = vunpack.c.l.b16 %v965
  %v1035 = vunpack.c.l.b16 %v966
  %v1036 = vunpack.c.l.b16 %v967
  %v1037 = vunpack.c.l.b16 %v968
  %v1038 = vunpack.c.l.b16 %v969
  %v1039 = vunpack.c.l.b16 %v970
  %v1040 = vunpack.c.l.b16 %v971
  %v1041 = vunpack.c.l.b16 %v972
  %v1042 = vunpack.c.l.b16 %v973
  %v1043 = vunpack.c.l.b16 %v974
  %v1044 = vunpack.c.l.b16 %v975
  %v1045 = vunpack.c.l.b16 %v976
  %v1046 = vunpack.c.l.b16 %v979
  %v1047 = vpack.c.b16 %v1016, %v1015
  %v1048 = vpack.c.b16 %v1018, %v1017
  %v1049 = vpack.c.b16 %v1020, %v1019
  %v1050 = vpack.c.b16 %v1022, %v1021
  %v1051 = vpack.c.b16 %v1024, %v1023
  %v1052 = vpack.c.b16 %v1026, %v1025
  %v1053 = vpack.c.b16 %v1028, %v1027
  %v1054 = vpack.c.b16 %v1030, %v1029
  %v1055 = vpack.c.b16 %v1032, %v1031
  %v1056 = vpack.c.b16 %v1034, %v1033
  %v1057 = vpack.c.b16 %v1036, %v1035
  %v1058 = vpack.c.b16 %v1038, %v1037
  %v1059 = vpack.c.b16 %v1040, %v1039
  %v1060 = vpack.c.b16 %v1042, %v1041
  %v1061 = vpack.c.b16 %v1044, %v1043
  %v1062 = vpack.c.b16 %v1046, %v1045
  %vm1063 = vsmask.f32 7424
  %v1065 = vshrl.u32 %v1047, 16
  %v1067 = vshll.u32 %v1047, 16
  %v1069 = vrot.slane %v1067, 1
  %v1070 = vor.u32 %v1065, %v1069
  %v1072 = vshll.u32 %v1048, 16
  %v1074 = vrot.slane %v1072, 1
  %v1075 = vsel %vm1063, %v1070, %v1074
  %v1076 = vshrl.u32 %v1048, 16
  %v1078 = vor.u32 %v1076, %v1074
  %v1080 = vshll.u32 %v1049, 16
  %v1082 = vrot.slane %v1080, 1
  %v1083 = vsel %vm1063, %v1078, %v1082
  %v1084 = vshrl.u32 %v1049, 16
  %v1086 = vor.u32 %v1084, %v1082
  %v1088 = vshll.u32 %v1050, 16
  %v1090 = vrot.slane %v1088, 1
  %v1091 = vsel %vm1063, %v1086, %v1090
  %v1092 = vshrl.u32 %v1050, 16
  %v1094 = vor.u32 %v1092, %v1090
  %v1096 = vshll.u32 %v1051, 16
  %v1098 = vrot.slane %v1096, 1
  %v1099 = vsel %vm1063, %v1094, %v1098
  %v1100 = vshrl.u32 %v1051, 16
  %v1102 = vor.u32 %v1100, %v1098
  %v1104 = vshll.u32 %v1052, 16
  %v1106 = vrot.slane %v1104, 1
  %v1107 = vsel %vm1063, %v1102, %v1106
  %v1108 = vshrl.u32 %v1052, 16
  %v1110 = vor.u32 %v1108, %v1106
  %v1112 = vshll.u32 %v1053, 16
  %v1114 = vrot.slane %v1112, 1
  %v1115 = vsel %vm1063, %v1110, %v1114
  %v1116 = vshrl.u32 %v1053, 16
  %v1118 = vor.u32 %v1116, %v1114
  %v1120 = vshll.u32 %v1054, 16
  %v1122 = vrot.slane %v1120, 1
  %v1123 = vsel %vm1063, %v1118, %v1122
  %v1124 = vshrl.u32 %v1054, 16
  %v1126 = vor.u32 %v1124, %v1122
  %v1128 = vshll.u32 %v1055, 16
  %v1130 = vrot.slane %v1128, 1
  %v1131 = vsel %vm1063, %v1126, %v1130
  %v1132 = vshrl.u32 %v1055, 16
  %v1134 = vor.u32 %v1132, %v1130
  %v1136 = vshll.u32 %v1056, 16
  %v1138 = vrot.slane %v1136, 1
  %v1139 = vsel %vm1063, %v1134, %v1138
  %v1140 = vshrl.u32 %v1056, 16
  %v1142 = vor.u32 %v1140, %v1138
  %v1144 = vshll.u32 %v1057, 16
  %v1146 = vrot.slane %v1144, 1
  %v1147 = vsel %vm1063, %v1142, %v1146
  %v1148 = vshrl.u32 %v1057, 16
  %v1150 = vor.u32 %v1148, %v1146
  %v1152 = vshll.u32 %v1058, 16
  %v1154 = vrot.slane %v1152, 1
  %v1155 = vsel %vm1063, %v1150, %v1154
  %v1156 = vshrl.u32 %v1058, 16
  %v1158 = vor.u32 %v1156, %v1154
  %v1160 = vshll.u32 %v1059, 16
  %v1162 = vrot.slane %v1160, 1
  %v1163 = vsel %vm1063, %v1158, %v1162
  %v1164 = vshrl.u32 %v1059, 16
  %v1166 = vor.u32 %v1164, %v1162
  %v1168 = vshll.u32 %v1060, 16
  %v1170 = vrot.slane %v1168, 1
  %v1171 = vsel %vm1063, %v1166, %v1170
  %v1172 = vshrl.u32 %v1060, 16
  %v1174 = vor.u32 %v1172, %v1170
  %v1176 = vshll.u32 %v1061, 16
  %v1178 = vrot.slane %v1176, 1
  %v1179 = vsel %vm1063, %v1174, %v1178
  %v1180 = vshrl.u32 %v1061, 16
  %v1182 = vor.u32 %v1180, %v1178
  %v1184 = vshll.u32 %v1062, 16
  %v1186 = vrot.slane %v1184, 1
  %v1187 = vsel %vm1063, %v1182, %v1186
  %v1188 = vshrl.u32 %v1062, 16
  %v1190 = vor.u32 %v1188, %v1186
  %v1193 = vunpack.c.l.b16 %v981
  %v1194 = vunpack.c.l.b16 %v982
  %v1195 = vpack.c.b16 %v1194, %v1193
  %vm1197 = vcmask 130048
  %v1199 = vsel %vm1197, %v1075, 0
  %v1202 = vsel %vm1197, %v1083, 0
  %v1205 = vsel %vm1197, %v1091, 0
  %v1208 = vsel %vm1197, %v1099, 0
  %v1211 = vsel %vm1197, %v1107, 0
  %v1214 = vsel %vm1197, %v1115, 0
  %v1217 = vsel %vm1197, %v1123, 0
  %v1220 = vsel %vm1197, %v1131, 0
  %v1223 = vsel %vm1197, %v1139, 0
  %v1226 = vsel %vm1197, %v1147, 0
  %v1229 = vsel %vm1197, %v1155, 0
  %v1232 = vsel %vm1197, %v1163, 0
  %v1235 = vsel %vm1197, %v1171, 0
  %v1238 = vsel %vm1197, %v1179, 0
  %v1241 = vsel %vm1197, %v1187, 0
  %v1244 = vsel %vm1197, %v1190, 0
  %1246 = vmatprep.subr.bf16.mxu0 0
  %1247 = vmatpush1.bf16.msra.mxu0 0
  %1248 = vmatprep.subr.bf16.mxu0 0
  %1249 = vmatpush1.bf16.msra.mxu0 0
  %1250 = vmatprep.subr.bf16.mxu0 0
  %1251 = vmatpush1.bf16.msra.mxu0 0
  %1252 = vmatprep.subr.bf16.mxu0 0
  %1253 = vmatpush1.bf16.msra.mxu0 0
  %1254 = vmatprep.subr.bf16.mxu0 0
  %1255 = vmatpush1.bf16.msra.mxu0 0
  %1256 = vmatprep.subr.bf16.mxu0 0
  %1257 = vmatpush1.bf16.msra.mxu0 0
  %1258 = vmatprep.subr.bf16.mxu0 0
  %1259 = vmatpush1.bf16.msra.mxu0 0
  %1260 = vmatprep.subr.bf16.mxu0 0
  %1261 = vmatpush1.bf16.msra.mxu0 %v1195
  %1262 = vmatprep.subr.bf16.mxu0 0
  %1263 = vmatpush2.bf16.msra.mxu0 0
  %1264 = vmatprep.subr.bf16.mxu0 0
  %1265 = vmatpush2.bf16.msra.mxu0 0
  %1266 = vmatprep.subr.bf16.mxu0 0
  %1267 = vmatpush2.bf16.msra.mxu0 0
  %1268 = vmatprep.subr.bf16.mxu0 0
  %1269 = vmatpush2.bf16.msra.mxu0 0
  %1270 = vmatprep.subr.bf16.mxu0 0
  %1271 = vmatpush2.bf16.msra.mxu0 0
  %1272 = vmatprep.subr.bf16.mxu0 0
  %1273 = vmatpush2.bf16.msra.mxu0 0
  %1274 = vmatprep.subr.bf16.mxu0 0
  %1275 = vmatpush2.bf16.msra.mxu0 0
  %1276 = vmatprep.subr.bf16.mxu0 0
  %1277 = vmatpush2.bf16.msra.mxu0 0
  %1278 = vmatprep.mubr.bf16.mxu0 0
  %1279 = vmatmul.mubr.bf16.gmra.mxu0 %v1199
  %v1280 = vpop.f32.mrf.mxu0
  %v1281 = vadd.f32 0.0, %v1280
  %v1282 = vpop.f32.mrf.mxu0
  %v1283 = vpop.f32.mrf.mxu0
  %v1284 = vadd.f32 0.0, %v1283
  %v1285 = vpop.f32.mrf.mxu0
  %1286 = vmatprep.mubr.bf16.mxu0 0
  %1287 = vmatmul.mubr.bf16.gmra.mxu0 %v1202
  %v1288 = vpop.f32.mrf.mxu0
  %v1289 = vadd.f32 0.0, %v1288
  %v1290 = vpop.f32.mrf.mxu0
  %v1291 = vpop.f32.mrf.mxu0
  %v1292 = vadd.f32 0.0, %v1291
  %v1293 = vpop.f32.mrf.mxu0
  %1294 = vmatprep.mubr.bf16.mxu0 0
  %1295 = vmatmul.mubr.bf16.gmra.mxu0 %v1205
  %v1296 = vpop.f32.mrf.mxu0
  %v1297 = vadd.f32 0.0, %v1296
  %v1298 = vpop.f32.mrf.mxu0
  %v1299 = vpop.f32.mrf.mxu0
  %v1300 = vadd.f32 0.0, %v1299
  %v1301 = vpop.f32.mrf.mxu0
  %1302 = vmatprep.mubr.bf16.mxu0 0
  %1303 = vmatmul.mubr.bf16.gmra.mxu0 %v1208
  %v1304 = vpop.f32.mrf.mxu0
  %v1305 = vadd.f32 0.0, %v1304
  %v1306 = vpop.f32.mrf.mxu0
  %v1307 = vpop.f32.mrf.mxu0
  %v1308 = vadd.f32 0.0, %v1307
  %v1309 = vpop.f32.mrf.mxu0
  %1310 = vmatprep.mubr.bf16.mxu0 0
  %1311 = vmatmul.mubr.bf16.gmra.mxu0 %v1211
  %v1312 = vpop.f32.mrf.mxu0
  %v1313 = vadd.f32 0.0, %v1312
  %v1314 = vpop.f32.mrf.mxu0
  %v1315 = vpop.f32.mrf.mxu0
  %v1316 = vadd.f32 0.0, %v1315
  %v1317 = vpop.f32.mrf.mxu0
  %1318 = vmatprep.mubr.bf16.mxu0 0
  %1319 = vmatmul.mubr.bf16.gmra.mxu0 %v1214
  %v1320 = vpop.f32.mrf.mxu0
  %v1321 = vadd.f32 0.0, %v1320
  %v1322 = vpop.f32.mrf.mxu0
  %v1323 = vpop.f32.mrf.mxu0
  %v1324 = vadd.f32 0.0, %v1323
  %v1325 = vpop.f32.mrf.mxu0
  %1326 = vmatprep.mubr.bf16.mxu0 0
  %1327 = vmatmul.mubr.bf16.gmra.mxu0 %v1217
  %v1328 = vpop.f32.mrf.mxu0
  %v1329 = vadd.f32 0.0, %v1328
  %v1330 = vpop.f32.mrf.mxu0
  %v1331 = vpop.f32.mrf.mxu0
  %v1332 = vadd.f32 0.0, %v1331
  %v1333 = vpop.f32.mrf.mxu0
  %1334 = vmatprep.mubr.bf16.mxu0 0
  %1335 = vmatmul.mubr.bf16.gmra.mxu0 %v1220
  %v1336 = vpop.f32.mrf.mxu0
  %v1337 = vadd.f32 0.0, %v1336
  %v1338 = vpop.f32.mrf.mxu0
  %v1339 = vpop.f32.mrf.mxu0
  %v1340 = vadd.f32 0.0, %v1339
  %v1341 = vpop.f32.mrf.mxu0
  %1342 = vmatprep.mubr.bf16.mxu0 0
  %1343 = vmatmul.mubr.bf16.gmra.mxu0 %v1223
  %v1344 = vpop.f32.mrf.mxu0
  %v1345 = vadd.f32 0.0, %v1344
  %v1346 = vpop.f32.mrf.mxu0
  %v1347 = vpop.f32.mrf.mxu0
  %v1348 = vadd.f32 0.0, %v1347
  %v1349 = vpop.f32.mrf.mxu0
  %1350 = vmatprep.mubr.bf16.mxu0 0
  %1351 = vmatmul.mubr.bf16.gmra.mxu0 %v1226
  %v1352 = vpop.f32.mrf.mxu0
  %v1353 = vadd.f32 0.0, %v1352
  %v1354 = vpop.f32.mrf.mxu0
  %v1355 = vpop.f32.mrf.mxu0
  %v1356 = vadd.f32 0.0, %v1355
  %v1357 = vpop.f32.mrf.mxu0
  %1358 = vmatprep.mubr.bf16.mxu0 0
  %1359 = vmatmul.mubr.bf16.gmra.mxu0 %v1229
  %v1360 = vpop.f32.mrf.mxu0
  %v1361 = vadd.f32 0.0, %v1360
  %v1362 = vpop.f32.mrf.mxu0
  %v1363 = vpop.f32.mrf.mxu0
  %v1364 = vadd.f32 0.0, %v1363
  %v1365 = vpop.f32.mrf.mxu0
  %1366 = vmatprep.mubr.bf16.mxu0 0
  %1367 = vmatmul.mubr.bf16.gmra.mxu0 %v1232
  %v1368 = vpop.f32.mrf.mxu0
  %v1369 = vadd.f32 0.0, %v1368
  %v1370 = vpop.f32.mrf.mxu0
  %v1371 = vpop.f32.mrf.mxu0
  %v1372 = vadd.f32 0.0, %v1371
  %v1373 = vpop.f32.mrf.mxu0
  %1374 = vmatprep.mubr.bf16.mxu0 0
  %1375 = vmatmul.mubr.bf16.gmra.mxu0 %v1235
  %v1376 = vpop.f32.mrf.mxu0
  %v1377 = vadd.f32 0.0, %v1376
  %v1378 = vpop.f32.mrf.mxu0
  %v1379 = vpop.f32.mrf.mxu0
  %v1380 = vadd.f32 0.0, %v1379
  %v1381 = vpop.f32.mrf.mxu0
  %1382 = vmatprep.mubr.bf16.mxu0 0
  %1383 = vmatmul.mubr.bf16.gmra.mxu0 %v1238
  %v1384 = vpop.f32.mrf.mxu0
  %v1385 = vadd.f32 0.0, %v1384
  %v1386 = vpop.f32.mrf.mxu0
  %v1387 = vpop.f32.mrf.mxu0
  %v1388 = vadd.f32 0.0, %v1387
  %v1389 = vpop.f32.mrf.mxu0
  %1390 = vmatprep.mubr.bf16.mxu0 0
  %1391 = vmatmul.mubr.bf16.gmra.mxu0 %v1241
  %v1392 = vpop.f32.mrf.mxu0
  %v1393 = vadd.f32 0.0, %v1392
  %v1394 = vpop.f32.mrf.mxu0
  %v1395 = vpop.f32.mrf.mxu0
  %v1396 = vadd.f32 0.0, %v1395
  %v1397 = vpop.f32.mrf.mxu0
  %1398 = vmatprep.mubr.bf16.mxu0 0
  %1399 = vmatmul.mubr.bf16.gmra.mxu0 %v1244
  %v1400 = vpop.f32.mrf.mxu0
  %v1401 = vadd.f32 0.0, %v1400
  %v1402 = vpop.f32.mrf.mxu0
  %v1403 = vpop.f32.mrf.mxu0
  %v1404 = vpop.f32.mrf.mxu0
  %1405 = vdwg.mxu0
  %v1406 = vpack.c.b16 %v1045, %v1045
  %v1409 = vunpack.c.l.b16 %v977
  %v1410 = vunpack.c.l.b16 %v978
  %v1411 = vpack.c.b16 %v1410, %v1409
  %v1413 = vsel %vm1197, %v1047, 0
  %v1415 = vsel %vm1197, %v1048, 0
  %v1417 = vsel %vm1197, %v1049, 0
  %v1419 = vsel %vm1197, %v1050, 0
  %v1421 = vsel %vm1197, %v1051, 0
  %v1423 = vsel %vm1197, %v1052, 0
  %v1425 = vsel %vm1197, %v1053, 0
  %v1427 = vsel %vm1197, %v1054, 0
  %v1429 = vsel %vm1197, %v1055, 0
  %v1431 = vsel %vm1197, %v1056, 0
  %v1433 = vsel %vm1197, %v1057, 0
  %v1435 = vsel %vm1197, %v1058, 0
  %v1437 = vsel %vm1197, %v1059, 0
  %v1439 = vsel %vm1197, %v1060, 0
  %v1441 = vsel %vm1197, %v1061, 0
  %v1444 = vsel %vm1197, %v1406, 0
  %1446 = vmatprep.subr.bf16.mxu0 0
  %1447 = vmatpush1.bf16.msra.mxu0 0
  %1448 = vmatprep.subr.bf16.mxu0 0
  %1449 = vmatpush1.bf16.msra.mxu0 0
  %1450 = vmatprep.subr.bf16.mxu0 0
  %1451 = vmatpush1.bf16.msra.mxu0 0
  %1452 = vmatprep.subr.bf16.mxu0 0
  %1453 = vmatpush1.bf16.msra.mxu0 0
  %1454 = vmatprep.subr.bf16.mxu0 0
  %1455 = vmatpush1.bf16.msra.mxu0 0
  %1456 = vmatprep.subr.bf16.mxu0 0
  %1457 = vmatpush1.bf16.msra.mxu0 0
  %1458 = vmatprep.subr.bf16.mxu0 0
  %1459 = vmatpush1.bf16.msra.mxu0 0
  %1460 = vmatprep.subr.bf16.mxu0 0
  %1461 = vmatpush1.bf16.msra.mxu0 %v1411
  %1462 = vmatprep.subr.bf16.mxu0 0
  %1463 = vmatpush2.bf16.msra.mxu0 0
  %1464 = vmatprep.subr.bf16.mxu0 0
  %1465 = vmatpush2.bf16.msra.mxu0 0
  %1466 = vmatprep.subr.bf16.mxu0 0
  %1467 = vmatpush2.bf16.msra.mxu0 0
  %1468 = vmatprep.subr.bf16.mxu0 0
  %1469 = vmatpush2.bf16.msra.mxu0 0
  %1470 = vmatprep.subr.bf16.mxu0 0
  %1471 = vmatpush2.bf16.msra.mxu0 0
  %1472 = vmatprep.subr.bf16.mxu0 0
  %1473 = vmatpush2.bf16.msra.mxu0 0
  %1474 = vmatprep.subr.bf16.mxu0 0
  %1475 = vmatpush2.bf16.msra.mxu0 0
  %1476 = vmatprep.subr.bf16.mxu0 0
  %1477 = vmatpush2.bf16.msra.mxu0 0
  %1478 = vmatprep.mubr.bf16.mxu0 0
  %1479 = vmatmul.mubr.bf16.gmra.mxu0 %v1413
  %v1480 = vpop.f32.mrf.mxu0
  %v1481 = vadd.f32 %v1281, %v1480
  %v1482 = vpop.f32.mrf.mxu0
  %v1483 = vpop.f32.mrf.mxu0
  %v1484 = vadd.f32 %v1284, %v1483
  %v1485 = vpop.f32.mrf.mxu0
  %1486 = vmatprep.mubr.bf16.mxu0 0
  %1487 = vmatmul.mubr.bf16.gmra.mxu0 %v1415
  %v1488 = vpop.f32.mrf.mxu0
  %v1489 = vadd.f32 %v1289, %v1488
  %v1490 = vpop.f32.mrf.mxu0
  %v1491 = vpop.f32.mrf.mxu0
  %v1492 = vadd.f32 %v1292, %v1491
  %v1493 = vpop.f32.mrf.mxu0
  %1494 = vmatprep.mubr.bf16.mxu0 0
  %1495 = vmatmul.mubr.bf16.gmra.mxu0 %v1417
  %v1496 = vpop.f32.mrf.mxu0
  %v1497 = vadd.f32 %v1297, %v1496
  %v1498 = vpop.f32.mrf.mxu0
  %v1499 = vpop.f32.mrf.mxu0
  %v1500 = vadd.f32 %v1300, %v1499
  %v1501 = vpop.f32.mrf.mxu0
  %1502 = vmatprep.mubr.bf16.mxu0 0
  %1503 = vmatmul.mubr.bf16.gmra.mxu0 %v1419
  %v1504 = vpop.f32.mrf.mxu0
  %v1505 = vadd.f32 %v1305, %v1504
  %v1506 = vpop.f32.mrf.mxu0
  %v1507 = vpop.f32.mrf.mxu0
  %v1508 = vadd.f32 %v1308, %v1507
  %v1509 = vpop.f32.mrf.mxu0
  %1510 = vmatprep.mubr.bf16.mxu0 0
  %1511 = vmatmul.mubr.bf16.gmra.mxu0 %v1421
  %v1512 = vpop.f32.mrf.mxu0
  %v1513 = vadd.f32 %v1313, %v1512
  %v1514 = vpop.f32.mrf.mxu0
  %v1515 = vpop.f32.mrf.mxu0
  %v1516 = vadd.f32 %v1316, %v1515
  %v1517 = vpop.f32.mrf.mxu0
  %1518 = vmatprep.mubr.bf16.mxu0 0
  %1519 = vmatmul.mubr.bf16.gmra.mxu0 %v1423
  %v1520 = vpop.f32.mrf.mxu0
  %v1521 = vadd.f32 %v1321, %v1520
  %v1522 = vpop.f32.mrf.mxu0
  %v1523 = vpop.f32.mrf.mxu0
  %v1524 = vadd.f32 %v1324, %v1523
  %v1525 = vpop.f32.mrf.mxu0
  %1526 = vmatprep.mubr.bf16.mxu0 0
  %1527 = vmatmul.mubr.bf16.gmra.mxu0 %v1425
  %v1528 = vpop.f32.mrf.mxu0
  %v1529 = vadd.f32 %v1329, %v1528
  %v1530 = vpop.f32.mrf.mxu0
  %v1531 = vpop.f32.mrf.mxu0
  %v1532 = vadd.f32 %v1332, %v1531
  %v1533 = vpop.f32.mrf.mxu0
  %1534 = vmatprep.mubr.bf16.mxu0 0
  %1535 = vmatmul.mubr.bf16.gmra.mxu0 %v1427
  %v1536 = vpop.f32.mrf.mxu0
  %v1537 = vadd.f32 %v1337, %v1536
  %v1538 = vpop.f32.mrf.mxu0
  %v1539 = vpop.f32.mrf.mxu0
  %v1540 = vadd.f32 %v1340, %v1539
  %v1541 = vpop.f32.mrf.mxu0
  %1542 = vmatprep.mubr.bf16.mxu0 0
  %1543 = vmatmul.mubr.bf16.gmra.mxu0 %v1429
  %v1544 = vpop.f32.mrf.mxu0
  %v1545 = vadd.f32 %v1345, %v1544
  %v1546 = vpop.f32.mrf.mxu0
  %v1547 = vpop.f32.mrf.mxu0
  %v1548 = vadd.f32 %v1348, %v1547
  %v1549 = vpop.f32.mrf.mxu0
  %1550 = vmatprep.mubr.bf16.mxu0 0
  %1551 = vmatmul.mubr.bf16.gmra.mxu0 %v1431
  %v1552 = vpop.f32.mrf.mxu0
  %v1553 = vadd.f32 %v1353, %v1552
  %v1554 = vpop.f32.mrf.mxu0
  %v1555 = vpop.f32.mrf.mxu0
  %v1556 = vadd.f32 %v1356, %v1555
  %v1557 = vpop.f32.mrf.mxu0
  %1558 = vmatprep.mubr.bf16.mxu0 0
  %1559 = vmatmul.mubr.bf16.gmra.mxu0 %v1433
  %v1560 = vpop.f32.mrf.mxu0
  %v1561 = vadd.f32 %v1361, %v1560
  %v1562 = vpop.f32.mrf.mxu0
  %v1563 = vpop.f32.mrf.mxu0
  %v1564 = vadd.f32 %v1364, %v1563
  %v1565 = vpop.f32.mrf.mxu0
  %1566 = vmatprep.mubr.bf16.mxu0 0
  %1567 = vmatmul.mubr.bf16.gmra.mxu0 %v1435
  %v1568 = vpop.f32.mrf.mxu0
  %v1569 = vadd.f32 %v1369, %v1568
  %v1570 = vpop.f32.mrf.mxu0
  %v1571 = vpop.f32.mrf.mxu0
  %v1572 = vadd.f32 %v1372, %v1571
  %v1573 = vpop.f32.mrf.mxu0
  %1574 = vmatprep.mubr.bf16.mxu0 0
  %1575 = vmatmul.mubr.bf16.gmra.mxu0 %v1437
  %v1576 = vpop.f32.mrf.mxu0
  %v1577 = vadd.f32 %v1377, %v1576
  %v1578 = vpop.f32.mrf.mxu0
  %v1579 = vpop.f32.mrf.mxu0
  %v1580 = vadd.f32 %v1380, %v1579
  %v1581 = vpop.f32.mrf.mxu0
  %1582 = vmatprep.mubr.bf16.mxu0 0
  %1583 = vmatmul.mubr.bf16.gmra.mxu0 %v1439
  %v1584 = vpop.f32.mrf.mxu0
  %v1585 = vadd.f32 %v1385, %v1584
  %v1586 = vpop.f32.mrf.mxu0
  %v1587 = vpop.f32.mrf.mxu0
  %v1588 = vadd.f32 %v1388, %v1587
  %v1589 = vpop.f32.mrf.mxu0
  %1590 = vmatprep.mubr.bf16.mxu0 0
  %1591 = vmatmul.mubr.bf16.gmra.mxu0 %v1441
  %v1592 = vpop.f32.mrf.mxu0
  %v1593 = vadd.f32 %v1393, %v1592
  %v1594 = vpop.f32.mrf.mxu0
  %v1595 = vpop.f32.mrf.mxu0
  %v1596 = vadd.f32 %v1396, %v1595
  %v1597 = vpop.f32.mrf.mxu0
  %1598 = vmatprep.mubr.bf16.mxu0 0
  %1599 = vmatmul.mubr.bf16.gmra.mxu0 %v1444
  %v1600 = vpop.f32.mrf.mxu0
  %v1601 = vadd.f32 %v1401, %v1600
  %v1602 = vpop.f32.mrf.mxu0
  %v1603 = vpop.f32.mrf.mxu0
  %v1604 = vpop.f32.mrf.mxu0
  %1605 = vdwg.mxu0
  %v1606 = vld [vmem:[#allocation2 + $0x4] sm:$0xe]
  %v1607 = vld [vmem:[#allocation2 + $0x8] sm:$0xf]
  %v1608 = vld [vmem:[#allocation2 + $0xc] sm:$0xf]
  %v1609 = vld [vmem:[#allocation2 + $0x10] sm:$0xf]
  %v1610 = vld [vmem:[#allocation2 + $0x14] sm:$0xf]
  %v1611 = vld [vmem:[#allocation2 + $0x18] sm:$0xf]
  %v1612 = vld [vmem:[#allocation2 + $0x1c] sm:$0xf]
  %v1613 = vld [vmem:[#allocation2 + $0x20] sm:$0xf]
  %v1614 = vld [vmem:[#allocation2 + $0x24] sm:$0xf]
  %v1615 = vld [vmem:[#allocation2 + $0x28] sm:$0xf]
  %v1616 = vld [vmem:[#allocation2 + $0x2c] sm:$0xf]
  %v1617 = vld [vmem:[#allocation2 + $0x30] sm:$0xf]
  %v1618 = vld [vmem:[#allocation2 + $0x34] sm:$0xf]
  %v1619 = vld [vmem:[#allocation2 + $0x38] sm:$0xf]
  %v1620 = vld [vmem:[#allocation2 + $0x3c] sm:$0xf]
  %v1621 = vld [vmem:[#allocation2 + $0x40] sm:$0xf]
  %v1622 = vld [vmem:[#allocation2 + $0x44] sm:$0xf]
  %v1623 = vld [vmem:[#allocation2 + $0x48] sm:$0xf]
  %v1624 = vld [vmem:[#allocation2 + $0x4c] sm:$0xf]
  %v1625 = vld [vmem:[#allocation2 + $0x50] sm:$0xf]
  %v1626 = vld [vmem:[#allocation2 + $0x54] sm:$0xf]
  %v1627 = vld [vmem:[#allocation2 + $0x58] sm:$0xf]
  %v1628 = vld [vmem:[#allocation2 + $0x5c] sm:$0xf]
  %v1629 = vld [vmem:[#allocation2 + $0x60] sm:$0xf]
  %v1630 = vld [vmem:[#allocation2 + $0x64] sm:$0xf]
  %v1631 = vld [vmem:[#allocation2 + $0x68] sm:$0xf]
  %v1632 = vld [vmem:[#allocation2 + $0x6c] sm:$0xf]
  %v1633 = vld [vmem:[#allocation2 + $0x70] sm:$0xf]
  %v1634 = vld [vmem:[#allocation2 + $0x74] sm:$0xf]
  %v1635 = vld [vmem:[#allocation2 + $0x78] sm:$0xf]
  %v1636 = vld [vmem:[#allocation2 + $0x7c] sm:$0xf]
  %v1637 = vld [vmem:[#allocation2 + $0x80] sm:$0x1]
  %s1638 = scalar_lea.vmem %s1, 16
  %v1639 = vld [vmem:[%s1638] sm:$0xf]
  %v1640 = vld [vmem:[%s1638 + $0x4] sm:$0xf]
  %v1673 = vunpack.c.l.b16 %v1606
  %v1674 = vunpack.c.l.b16 %v1607
  %v1675 = vunpack.c.l.b16 %v1608
  %v1676 = vunpack.c.l.b16 %v1609
  %v1677 = vunpack.c.l.b16 %v1610
  %v1678 = vunpack.c.l.b16 %v1611
  %v1679 = vunpack.c.l.b16 %v1612
  %v1680 = vunpack.c.l.b16 %v1613
  %v1681 = vunpack.c.l.b16 %v1614
  %v1682 = vunpack.c.l.b16 %v1615
  %v1683 = vunpack.c.l.b16 %v1616
  %v1684 = vunpack.c.l.b16 %v1617
  %v1685 = vunpack.c.l.b16 %v1618
  %v1686 = vunpack.c.l.b16 %v1619
  %v1687 = vunpack.c.l.b16 %v1620
  %v1688 = vunpack.c.l.b16 %v1621
  %v1689 = vunpack.c.l.b16 %v1622
  %v1690 = vunpack.c.l.b16 %v1623
  %v1691 = vunpack.c.l.b16 %v1624
  %v1692 = vunpack.c.l.b16 %v1625
  %v1693 = vunpack.c.l.b16 %v1626
  %v1694 = vunpack.c.l.b16 %v1627
  %v1695 = vunpack.c.l.b16 %v1628
  %v1696 = vunpack.c.l.b16 %v1629
  %v1697 = vunpack.c.l.b16 %v1630
  %v1698 = vunpack.c.l.b16 %v1631
  %v1699 = vunpack.c.l.b16 %v1632
  %v1700 = vunpack.c.l.b16 %v1633
  %v1701 = vunpack.c.l.b16 %v1634
  %v1702 = vunpack.c.l.b16 %v1635
  %v1703 = vunpack.c.l.b16 %v1636
  %v1704 = vunpack.c.l.b16 %v1637
  %v1705 = vpack.c.b16 %v1674, %v1673
  %v1706 = vpack.c.b16 %v1676, %v1675
  %v1707 = vpack.c.b16 %v1678, %v1677
  %v1708 = vpack.c.b16 %v1680, %v1679
  %v1709 = vpack.c.b16 %v1682, %v1681
  %v1710 = vpack.c.b16 %v1684, %v1683
  %v1711 = vpack.c.b16 %v1686, %v1685
  %v1712 = vpack.c.b16 %v1688, %v1687
  %v1713 = vpack.c.b16 %v1690, %v1689
  %v1714 = vpack.c.b16 %v1692, %v1691
  %v1715 = vpack.c.b16 %v1694, %v1693
  %v1716 = vpack.c.b16 %v1696, %v1695
  %v1717 = vpack.c.b16 %v1698, %v1697
  %v1718 = vpack.c.b16 %v1700, %v1699
  %v1719 = vpack.c.b16 %v1702, %v1701
  %v1720 = vpack.c.b16 %v1704, %v1703
  %vm1721 = vcmask 1046528
  %v1722 = vrot.slane %v1705, 1
  %v1723 = vrot.slane %v1706, 1
  %v1724 = vsel %vm1721, %v1722, %v1723
  %v1725 = vrot.slane %v1707, 1
  %v1726 = vsel %vm1721, %v1723, %v1725
  %v1727 = vrot.slane %v1708, 1
  %v1728 = vsel %vm1721, %v1725, %v1727
  %v1729 = vrot.slane %v1709, 1
  %v1730 = vsel %vm1721, %v1727, %v1729
  %v1731 = vrot.slane %v1710, 1
  %v1732 = vsel %vm1721, %v1729, %v1731
  %v1733 = vrot.slane %v1711, 1
  %v1734 = vsel %vm1721, %v1731, %v1733
  %v1735 = vrot.slane %v1712, 1
  %v1736 = vsel %vm1721, %v1733, %v1735
  %v1737 = vrot.slane %v1713, 1
  %v1738 = vsel %vm1721, %v1735, %v1737
  %v1739 = vrot.slane %v1714, 1
  %v1740 = vsel %vm1721, %v1737, %v1739
  %v1741 = vrot.slane %v1715, 1
  %v1742 = vsel %vm1721, %v1739, %v1741
  %v1743 = vrot.slane %v1716, 1
  %v1744 = vsel %vm1721, %v1741, %v1743
  %v1745 = vrot.slane %v1717, 1
  %v1746 = vsel %vm1721, %v1743, %v1745
  %v1747 = vrot.slane %v1718, 1
  %v1748 = vsel %vm1721, %v1745, %v1747
  %v1749 = vrot.slane %v1719, 1
  %v1750 = vsel %vm1721, %v1747, %v1749
  %v1751 = vrot.slane %v1720, 1
  %v1752 = vsel %vm1721, %v1749, %v1751
  %v1755 = vunpack.c.l.b16 %v1639
  %v1756 = vunpack.c.l.b16 %v1640
  %v1757 = vpack.c.b16 %v1756, %v1755
  %v1760 = vsel %vm1197, %v1724, 0
  %v1763 = vsel %vm1197, %v1726, 0
  %v1766 = vsel %vm1197, %v1728, 0
  %v1769 = vsel %vm1197, %v1730, 0
  %v1772 = vsel %vm1197, %v1732, 0
  %v1775 = vsel %vm1197, %v1734, 0
  %v1778 = vsel %vm1197, %v1736, 0
  %v1781 = vsel %vm1197, %v1738, 0
  %v1784 = vsel %vm1197, %v1740, 0
  %v1787 = vsel %vm1197, %v1742, 0
  %v1790 = vsel %vm1197, %v1744, 0
  %v1793 = vsel %vm1197, %v1746, 0
  %v1796 = vsel %vm1197, %v1748, 0
  %v1799 = vsel %vm1197, %v1750, 0
  %v1802 = vsel %vm1197, %v1752, 0
  %v1805 = vsel %vm1197, %v1751, 0
  %1807 = vmatprep.subr.bf16.mxu0 0
  %1808 = vmatpush1.bf16.msra.mxu0 0
  %1809 = vmatprep.subr.bf16.mxu0 0
  %1810 = vmatpush1.bf16.msra.mxu0 0
  %1811 = vmatprep.subr.bf16.mxu0 0
  %1812 = vmatpush1.bf16.msra.mxu0 0
  %1813 = vmatprep.subr.bf16.mxu0 0
  %1814 = vmatpush1.bf16.msra.mxu0 0
  %1815 = vmatprep.subr.bf16.mxu0 0
  %1816 = vmatpush1.bf16.msra.mxu0 0
  %1817 = vmatprep.subr.bf16.mxu0 0
  %1818 = vmatpush1.bf16.msra.mxu0 0
  %1819 = vmatprep.subr.bf16.mxu0 0
  %1820 = vmatpush1.bf16.msra.mxu0 0
  %1821 = vmatprep.subr.bf16.mxu0 0
  %1822 = vmatpush1.bf16.msra.mxu0 %v1757
  %1823 = vmatprep.subr.bf16.mxu0 0
  %1824 = vmatpush2.bf16.msra.mxu0 0
  %1825 = vmatprep.subr.bf16.mxu0 0
  %1826 = vmatpush2.bf16.msra.mxu0 0
  %1827 = vmatprep.subr.bf16.mxu0 0
  %1828 = vmatpush2.bf16.msra.mxu0 0
  %1829 = vmatprep.subr.bf16.mxu0 0
  %1830 = vmatpush2.bf16.msra.mxu0 0
  %1831 = vmatprep.subr.bf16.mxu0 0
  %1832 = vmatpush2.bf16.msra.mxu0 0
  %1833 = vmatprep.subr.bf16.mxu0 0
  %1834 = vmatpush2.bf16.msra.mxu0 0
  %1835 = vmatprep.subr.bf16.mxu0 0
  %1836 = vmatpush2.bf16.msra.mxu0 0
  %1837 = vmatprep.subr.bf16.mxu0 0
  %1838 = vmatpush2.bf16.msra.mxu0 0
  %1839 = vmatprep.mubr.bf16.mxu0 0
  %1840 = vmatmul.mubr.bf16.gmra.mxu0 %v1760
  %v1841 = vpop.f32.mrf.mxu0
  %v1842 = vadd.f32 0.0, %v1841
  %v1843 = vpop.f32.mrf.mxu0
  %v1844 = vpop.f32.mrf.mxu0
  %v1845 = vadd.f32 0.0, %v1844
  %v1846 = vpop.f32.mrf.mxu0
  %1847 = vmatprep.mubr.bf16.mxu0 0
  %1848 = vmatmul.mubr.bf16.gmra.mxu0 %v1763
  %v1849 = vpop.f32.mrf.mxu0
  %v1850 = vadd.f32 0.0, %v1849
  %v1851 = vpop.f32.mrf.mxu0
  %v1852 = vpop.f32.mrf.mxu0
  %v1853 = vadd.f32 0.0, %v1852
  %v1854 = vpop.f32.mrf.mxu0
  %1855 = vmatprep.mubr.bf16.mxu0 0
  %1856 = vmatmul.mubr.bf16.gmra.mxu0 %v1766
  %v1857 = vpop.f32.mrf.mxu0
  %v1858 = vadd.f32 0.0, %v1857
  %v1859 = vpop.f32.mrf.mxu0
  %v1860 = vpop.f32.mrf.mxu0
  %v1861 = vadd.f32 0.0, %v1860
  %v1862 = vpop.f32.mrf.mxu0
  %1863 = vmatprep.mubr.bf16.mxu0 0
  %1864 = vmatmul.mubr.bf16.gmra.mxu0 %v1769
  %v1865 = vpop.f32.mrf.mxu0
  %v1866 = vadd.f32 0.0, %v1865
  %v1867 = vpop.f32.mrf.mxu0
  %v1868 = vpop.f32.mrf.mxu0
  %v1869 = vadd.f32 0.0, %v1868
  %v1870 = vpop.f32.mrf.mxu0
  %1871 = vmatprep.mubr.bf16.mxu0 0
  %1872 = vmatmul.mubr.bf16.gmra.mxu0 %v1772
  %v1873 = vpop.f32.mrf.mxu0
  %v1874 = vadd.f32 0.0, %v1873
  %v1875 = vpop.f32.mrf.mxu0
  %v1876 = vpop.f32.mrf.mxu0
  %v1877 = vadd.f32 0.0, %v1876
  %v1878 = vpop.f32.mrf.mxu0
  %1879 = vmatprep.mubr.bf16.mxu0 0
  %1880 = vmatmul.mubr.bf16.gmra.mxu0 %v1775
  %v1881 = vpop.f32.mrf.mxu0
  %v1882 = vadd.f32 0.0, %v1881
  %v1883 = vpop.f32.mrf.mxu0
  %v1884 = vpop.f32.mrf.mxu0
  %v1885 = vadd.f32 0.0, %v1884
  %v1886 = vpop.f32.mrf.mxu0
  %1887 = vmatprep.mubr.bf16.mxu0 0
  %1888 = vmatmul.mubr.bf16.gmra.mxu0 %v1778
  %v1889 = vpop.f32.mrf.mxu0
  %v1890 = vadd.f32 0.0, %v1889
  %v1891 = vpop.f32.mrf.mxu0
  %v1892 = vpop.f32.mrf.mxu0
  %v1893 = vadd.f32 0.0, %v1892
  %v1894 = vpop.f32.mrf.mxu0
  %1895 = vmatprep.mubr.bf16.mxu0 0
  %1896 = vmatmul.mubr.bf16.gmra.mxu0 %v1781
  %v1897 = vpop.f32.mrf.mxu0
  %v1898 = vadd.f32 0.0, %v1897
  %v1899 = vpop.f32.mrf.mxu0
  %v1900 = vpop.f32.mrf.mxu0
  %v1901 = vadd.f32 0.0, %v1900
  %v1902 = vpop.f32.mrf.mxu0
  %1903 = vmatprep.mubr.bf16.mxu0 0
  %1904 = vmatmul.mubr.bf16.gmra.mxu0 %v1784
  %v1905 = vpop.f32.mrf.mxu0
  %v1906 = vadd.f32 0.0, %v1905
  %v1907 = vpop.f32.mrf.mxu0
  %v1908 = vpop.f32.mrf.mxu0
  %v1909 = vadd.f32 0.0, %v1908
  %v1910 = vpop.f32.mrf.mxu0
  %1911 = vmatprep.mubr.bf16.mxu0 0
  %1912 = vmatmul.mubr.bf16.gmra.mxu0 %v1787
  %v1913 = vpop.f32.mrf.mxu0
  %v1914 = vadd.f32 0.0, %v1913
  %v1915 = vpop.f32.mrf.mxu0
  %v1916 = vpop.f32.mrf.mxu0
  %v1917 = vadd.f32 0.0, %v1916
  %v1918 = vpop.f32.mrf.mxu0
  %1919 = vmatprep.mubr.bf16.mxu0 0
  %1920 = vmatmul.mubr.bf16.gmra.mxu0 %v1790
  %v1921 = vpop.f32.mrf.mxu0
  %v1922 = vadd.f32 0.0, %v1921
  %v1923 = vpop.f32.mrf.mxu0
  %v1924 = vpop.f32.mrf.mxu0
  %v1925 = vadd.f32 0.0, %v1924
  %v1926 = vpop.f32.mrf.mxu0
  %1927 = vmatprep.mubr.bf16.mxu0 0
  %1928 = vmatmul.mubr.bf16.gmra.mxu0 %v1793
  %v1929 = vpop.f32.mrf.mxu0
  %v1930 = vadd.f32 0.0, %v1929
  %v1931 = vpop.f32.mrf.mxu0
  %v1932 = vpop.f32.mrf.mxu0
  %v1933 = vadd.f32 0.0, %v1932
  %v1934 = vpop.f32.mrf.mxu0
  %1935 = vmatprep.mubr.bf16.mxu0 0
  %1936 = vmatmul.mubr.bf16.gmra.mxu0 %v1796
  %v1937 = vpop.f32.mrf.mxu0
  %v1938 = vadd.f32 0.0, %v1937
  %v1939 = vpop.f32.mrf.mxu0
  %v1940 = vpop.f32.mrf.mxu0
  %v1941 = vadd.f32 0.0, %v1940
  %v1942 = vpop.f32.mrf.mxu0
  %1943 = vmatprep.mubr.bf16.mxu0 0
  %1944 = vmatmul.mubr.bf16.gmra.mxu0 %v1799
  %v1945 = vpop.f32.mrf.mxu0
  %v1946 = vadd.f32 0.0, %v1945
  %v1947 = vpop.f32.mrf.mxu0
  %v1948 = vpop.f32.mrf.mxu0
  %v1949 = vadd.f32 0.0, %v1948
  %v1950 = vpop.f32.mrf.mxu0
  %1951 = vmatprep.mubr.bf16.mxu0 0
  %1952 = vmatmul.mubr.bf16.gmra.mxu0 %v1802
  %v1953 = vpop.f32.mrf.mxu0
  %v1954 = vadd.f32 0.0, %v1953
  %v1955 = vpop.f32.mrf.mxu0
  %v1956 = vpop.f32.mrf.mxu0
  %v1957 = vadd.f32 0.0, %v1956
  %v1958 = vpop.f32.mrf.mxu0
  %1959 = vmatprep.mubr.bf16.mxu0 0
  %1960 = vmatmul.mubr.bf16.gmra.mxu0 %v1805
  %v1961 = vpop.f32.mrf.mxu0
  %v1962 = vadd.f32 0.0, %v1961
  %v1963 = vpop.f32.mrf.mxu0
  %v1964 = vpop.f32.mrf.mxu0
  %v1965 = vpop.f32.mrf.mxu0
  %1966 = vdwg.mxu0
  %v1967 = vadd.f32 %v1481, %v1842
  %v1968 = vadd.f32 %v1484, %v1845
  %v1969 = vadd.f32 %v1489, %v1850
  %v1970 = vadd.f32 %v1492, %v1853
  %v1971 = vadd.f32 %v1497, %v1858
  %v1972 = vadd.f32 %v1500, %v1861
  %v1973 = vadd.f32 %v1505, %v1866
  %v1974 = vadd.f32 %v1508, %v1869
  %v1975 = vadd.f32 %v1513, %v1874
  %v1976 = vadd.f32 %v1516, %v1877
  %v1977 = vadd.f32 %v1521, %v1882
  %v1978 = vadd.f32 %v1524, %v1885
  %v1979 = vadd.f32 %v1529, %v1890
  %v1980 = vadd.f32 %v1532, %v1893
  %v1981 = vadd.f32 %v1537, %v1898
  %v1982 = vadd.f32 %v1540, %v1901
  %v1983 = vadd.f32 %v1545, %v1906
  %v1984 = vadd.f32 %v1548, %v1909
  %v1985 = vadd.f32 %v1553, %v1914
  %v1986 = vadd.f32 %v1556, %v1917
  %v1987 = vadd.f32 %v1561, %v1922
  %v1988 = vadd.f32 %v1564, %v1925
  %v1989 = vadd.f32 %v1569, %v1930
  %v1990 = vadd.f32 %v1572, %v1933
  %v1991 = vadd.f32 %v1577, %v1938
  %v1992 = vadd.f32 %v1580, %v1941
  %v1993 = vadd.f32 %v1585, %v1946
  %v1994 = vadd.f32 %v1588, %v1949
  %v1995 = vadd.f32 %v1593, %v1954
  %v1996 = vadd.f32 %v1596, %v1957
  %v1997 = vadd.f32 %v1601, %v1962
  %v1998 = vld [vmem:[#allocation2 + $0x80] sm:$0x3]
  %s1999 = scalar_lea.vmem %s1, 24
  %v2000 = vld [vmem:[%s1999] sm:$0xf]
  %v2001 = vld [vmem:[%s1999 + $0x4] sm:$0xf]
  %v2003 = vunpack.c.l.b16 %v1998
  %v2004 = vpack.c.b16 %v2003, %v1703
  %vm2005 = vsmask.f32 6400
  %v2007 = vshrl.u32 %v1705, 16
  %v2009 = vrot.slane %v2007, 1
  %v2010 = vshll.u32 %v1705, 16
  %v2012 = vrot.slane %v2010, 2
  %v2013 = vor.u32 %v2009, %v2012
  %v2015 = vshrl.u32 %v1706, 16
  %v2017 = vrot.slane %v2015, 1
  %v2018 = vshll.u32 %v1706, 16
  %v2020 = vrot.slane %v2018, 2
  %v2021 = vor.u32 %v2017, %v2020
  %v2022 = vsel %vm2005, %v2013, %v2021
  %v2024 = vshrl.u32 %v1707, 16
  %v2026 = vrot.slane %v2024, 1
  %v2027 = vshll.u32 %v1707, 16
  %v2029 = vrot.slane %v2027, 2
  %v2030 = vor.u32 %v2026, %v2029
  %v2031 = vsel %vm2005, %v2021, %v2030
  %v2033 = vshrl.u32 %v1708, 16
  %v2035 = vrot.slane %v2033, 1
  %v2036 = vshll.u32 %v1708, 16
  %v2038 = vrot.slane %v2036, 2
  %v2039 = vor.u32 %v2035, %v2038
  %v2040 = vsel %vm2005, %v2030, %v2039
  %v2042 = vshrl.u32 %v1709, 16
  %v2044 = vrot.slane %v2042, 1
  %v2045 = vshll.u32 %v1709, 16
  %v2047 = vrot.slane %v2045, 2
  %v2048 = vor.u32 %v2044, %v2047
  %v2049 = vsel %vm2005, %v2039, %v2048
  %v2051 = vshrl.u32 %v1710, 16
  %v2053 = vrot.slane %v2051, 1
  %v2054 = vshll.u32 %v1710, 16
  %v2056 = vrot.slane %v2054, 2
  %v2057 = vor.u32 %v2053, %v2056
  %v2058 = vsel %vm2005, %v2048, %v2057
  %v2060 = vshrl.u32 %v1711, 16
  %v2062 = vrot.slane %v2060, 1
  %v2063 = vshll.u32 %v1711, 16
  %v2065 = vrot.slane %v2063, 2
  %v2066 = vor.u32 %v2062, %v2065
  %v2067 = vsel %vm2005, %v2057, %v2066
  %v2069 = vshrl.u32 %v1712, 16
  %v2071 = vrot.slane %v2069, 1
  %v2072 = vshll.u32 %v1712, 16
  %v2074 = vrot.slane %v2072, 2
  %v2075 = vor.u32 %v2071, %v2074
  %v2076 = vsel %vm2005, %v2066, %v2075
  %v2078 = vshrl.u32 %v1713, 16
  %v2080 = vrot.slane %v2078, 1
  %v2081 = vshll.u32 %v1713, 16
  %v2083 = vrot.slane %v2081, 2
  %v2084 = vor.u32 %v2080, %v2083
  %v2085 = vsel %vm2005, %v2075, %v2084
  %v2087 = vshrl.u32 %v1714, 16
  %v2089 = vrot.slane %v2087, 1
  %v2090 = vshll.u32 %v1714, 16
  %v2092 = vrot.slane %v2090, 2
  %v2093 = vor.u32 %v2089, %v2092
  %v2094 = vsel %vm2005, %v2084, %v2093
  %v2096 = vshrl.u32 %v1715, 16
  %v2098 = vrot.slane %v2096, 1
  %v2099 = vshll.u32 %v1715, 16
  %v2101 = vrot.slane %v2099, 2
  %v2102 = vor.u32 %v2098, %v2101
  %v2103 = vsel %vm2005, %v2093, %v2102
  %v2105 = vshrl.u32 %v1716, 16
  %v2107 = vrot.slane %v2105, 1
  %v2108 = vshll.u32 %v1716, 16
  %v2110 = vrot.slane %v2108, 2
  %v2111 = vor.u32 %v2107, %v2110
  %v2112 = vsel %vm2005, %v2102, %v2111
  %v2114 = vshrl.u32 %v1717, 16
  %v2116 = vrot.slane %v2114, 1
  %v2117 = vshll.u32 %v1717, 16
  %v2119 = vrot.slane %v2117, 2
  %v2120 = vor.u32 %v2116, %v2119
  %v2121 = vsel %vm2005, %v2111, %v2120
  %v2123 = vshrl.u32 %v1718, 16
  %v2125 = vrot.slane %v2123, 1
  %v2126 = vshll.u32 %v1718, 16
  %v2128 = vrot.slane %v2126, 2
  %v2129 = vor.u32 %v2125, %v2128
  %v2130 = vsel %vm2005, %v2120, %v2129
  %v2132 = vshrl.u32 %v1719, 16
  %v2134 = vrot.slane %v2132, 1
  %v2135 = vshll.u32 %v1719, 16
  %v2137 = vrot.slane %v2135, 2
  %v2138 = vor.u32 %v2134, %v2137
  %v2139 = vsel %vm2005, %v2129, %v2138
  %v2141 = vshrl.u32 %v2004, 16
  %v2143 = vrot.slane %v2141, 1
  %v2144 = vshll.u32 %v2004, 16
  %v2146 = vrot.slane %v2144, 2
  %v2147 = vor.u32 %v2143, %v2146
  %v2148 = vsel %vm2005, %v2138, %v2147
  %v2151 = vunpack.c.l.b16 %v2000
  %v2152 = vunpack.c.l.b16 %v2001
  %v2153 = vpack.c.b16 %v2152, %v2151
  %v2156 = vsel %vm1197, %v2022, 0
  %v2159 = vsel %vm1197, %v2031, 0
  %v2162 = vsel %vm1197, %v2040, 0
  %v2165 = vsel %vm1197, %v2049, 0
  %v2168 = vsel %vm1197, %v2058, 0
  %v2171 = vsel %vm1197, %v2067, 0
  %v2174 = vsel %vm1197, %v2076, 0
  %v2177 = vsel %vm1197, %v2085, 0
  %v2180 = vsel %vm1197, %v2094, 0
  %v2183 = vsel %vm1197, %v2103, 0
  %v2186 = vsel %vm1197, %v2112, 0
  %v2189 = vsel %vm1197, %v2121, 0
  %v2192 = vsel %vm1197, %v2130, 0
  %v2195 = vsel %vm1197, %v2139, 0
  %v2198 = vsel %vm1197, %v2148, 0
  %v2201 = vsel %vm1197, %v2147, 0
  %2203 = vmatprep.subr.bf16.mxu0 0
  %2204 = vmatpush1.bf16.msra.mxu0 0
  %2205 = vmatprep.subr.bf16.mxu0 0
  %2206 = vmatpush1.bf16.msra.mxu0 0
  %2207 = vmatprep.subr.bf16.mxu0 0
  %2208 = vmatpush1.bf16.msra.mxu0 0
  %2209 = vmatprep.subr.bf16.mxu0 0
  %2210 = vmatpush1.bf16.msra.mxu0 0
  %2211 = vmatprep.subr.bf16.mxu0 0
  %2212 = vmatpush1.bf16.msra.mxu0 0
  %2213 = vmatprep.subr.bf16.mxu0 0
  %2214 = vmatpush1.bf16.msra.mxu0 0
  %2215 = vmatprep.subr.bf16.mxu0 0
  %2216 = vmatpush1.bf16.msra.mxu0 0
  %2217 = vmatprep.subr.bf16.mxu0 0
  %2218 = vmatpush1.bf16.msra.mxu0 %v2153
  %2219 = vmatprep.subr.bf16.mxu0 0
  %2220 = vmatpush2.bf16.msra.mxu0 0
  %2221 = vmatprep.subr.bf16.mxu0 0
  %2222 = vmatpush2.bf16.msra.mxu0 0
  %2223 = vmatprep.subr.bf16.mxu0 0
  %2224 = vmatpush2.bf16.msra.mxu0 0
  %2225 = vmatprep.subr.bf16.mxu0 0
  %2226 = vmatpush2.bf16.msra.mxu0 0
  %2227 = vmatprep.subr.bf16.mxu0 0
  %2228 = vmatpush2.bf16.msra.mxu0 0
  %2229 = vmatprep.subr.bf16.mxu0 0
  %2230 = vmatpush2.bf16.msra.mxu0 0
  %2231 = vmatprep.subr.bf16.mxu0 0
  %2232 = vmatpush2.bf16.msra.mxu0 0
  %2233 = vmatprep.subr.bf16.mxu0 0
  %2234 = vmatpush2.bf16.msra.mxu0 0
  %2235 = vmatprep.mubr.bf16.mxu0 0
  %2236 = vmatmul.mubr.bf16.gmra.mxu0 %v2156
  %v2237 = vpop.f32.mrf.mxu0
  %v2238 = vadd.f32 0.0, %v2237
  %v2239 = vpop.f32.mrf.mxu0
  %v2240 = vpop.f32.mrf.mxu0
  %v2241 = vadd.f32 0.0, %v2240
  %v2242 = vpop.f32.mrf.mxu0
  %2243 = vmatprep.mubr.bf16.mxu0 0
  %2244 = vmatmul.mubr.bf16.gmra.mxu0 %v2159
  %v2245 = vpop.f32.mrf.mxu0
  %v2246 = vadd.f32 0.0, %v2245
  %v2247 = vpop.f32.mrf.mxu0
  %v2248 = vpop.f32.mrf.mxu0
  %v2249 = vadd.f32 0.0, %v2248
  %v2250 = vpop.f32.mrf.mxu0
  %2251 = vmatprep.mubr.bf16.mxu0 0
  %2252 = vmatmul.mubr.bf16.gmra.mxu0 %v2162
  %v2253 = vpop.f32.mrf.mxu0
  %v2254 = vadd.f32 0.0, %v2253
  %v2255 = vpop.f32.mrf.mxu0
  %v2256 = vpop.f32.mrf.mxu0
  %v2257 = vadd.f32 0.0, %v2256
  %v2258 = vpop.f32.mrf.mxu0
  %2259 = vmatprep.mubr.bf16.mxu0 0
  %2260 = vmatmul.mubr.bf16.gmra.mxu0 %v2165
  %v2261 = vpop.f32.mrf.mxu0
  %v2262 = vadd.f32 0.0, %v2261
  %v2263 = vpop.f32.mrf.mxu0
  %v2264 = vpop.f32.mrf.mxu0
  %v2265 = vadd.f32 0.0, %v2264
  %v2266 = vpop.f32.mrf.mxu0
  %2267 = vmatprep.mubr.bf16.mxu0 0
  %2268 = vmatmul.mubr.bf16.gmra.mxu0 %v2168
  %v2269 = vpop.f32.mrf.mxu0
  %v2270 = vadd.f32 0.0, %v2269
  %v2271 = vpop.f32.mrf.mxu0
  %v2272 = vpop.f32.mrf.mxu0
  %v2273 = vadd.f32 0.0, %v2272
  %v2274 = vpop.f32.mrf.mxu0
  %2275 = vmatprep.mubr.bf16.mxu0 0
  %2276 = vmatmul.mubr.bf16.gmra.mxu0 %v2171
  %v2277 = vpop.f32.mrf.mxu0
  %v2278 = vadd.f32 0.0, %v2277
  %v2279 = vpop.f32.mrf.mxu0
  %v2280 = vpop.f32.mrf.mxu0
  %v2281 = vadd.f32 0.0, %v2280
  %v2282 = vpop.f32.mrf.mxu0
  %2283 = vmatprep.mubr.bf16.mxu0 0
  %2284 = vmatmul.mubr.bf16.gmra.mxu0 %v2174
  %v2285 = vpop.f32.mrf.mxu0
  %v2286 = vadd.f32 0.0, %v2285
  %v2287 = vpop.f32.mrf.mxu0
  %v2288 = vpop.f32.mrf.mxu0
  %v2289 = vadd.f32 0.0, %v2288
  %v2290 = vpop.f32.mrf.mxu0
  %2291 = vmatprep.mubr.bf16.mxu0 0
  %2292 = vmatmul.mubr.bf16.gmra.mxu0 %v2177
  %v2293 = vpop.f32.mrf.mxu0
  %v2294 = vadd.f32 0.0, %v2293
  %v2295 = vpop.f32.mrf.mxu0
  %v2296 = vpop.f32.mrf.mxu0
  %v2297 = vadd.f32 0.0, %v2296
  %v2298 = vpop.f32.mrf.mxu0
  %2299 = vmatprep.mubr.bf16.mxu0 0
  %2300 = vmatmul.mubr.bf16.gmra.mxu0 %v2180
  %v2301 = vpop.f32.mrf.mxu0
  %v2302 = vadd.f32 0.0, %v2301
  %v2303 = vpop.f32.mrf.mxu0
  %v2304 = vpop.f32.mrf.mxu0
  %v2305 = vadd.f32 0.0, %v2304
  %v2306 = vpop.f32.mrf.mxu0
  %2307 = vmatprep.mubr.bf16.mxu0 0
  %2308 = vmatmul.mubr.bf16.gmra.mxu0 %v2183
  %v2309 = vpop.f32.mrf.mxu0
  %v2310 = vadd.f32 0.0, %v2309
  %v2311 = vpop.f32.mrf.mxu0
  %v2312 = vpop.f32.mrf.mxu0
  %v2313 = vadd.f32 0.0, %v2312
  %v2314 = vpop.f32.mrf.mxu0
  %2315 = vmatprep.mubr.bf16.mxu0 0
  %2316 = vmatmul.mubr.bf16.gmra.mxu0 %v2186
  %v2317 = vpop.f32.mrf.mxu0
  %v2318 = vadd.f32 0.0, %v2317
  %v2319 = vpop.f32.mrf.mxu0
  %v2320 = vpop.f32.mrf.mxu0
  %v2321 = vadd.f32 0.0, %v2320
  %v2322 = vpop.f32.mrf.mxu0
  %2323 = vmatprep.mubr.bf16.mxu0 0
  %2324 = vmatmul.mubr.bf16.gmra.mxu0 %v2189
  %v2325 = vpop.f32.mrf.mxu0
  %v2326 = vadd.f32 0.0, %v2325
  %v2327 = vpop.f32.mrf.mxu0
  %v2328 = vpop.f32.mrf.mxu0
  %v2329 = vadd.f32 0.0, %v2328
  %v2330 = vpop.f32.mrf.mxu0
  %2331 = vmatprep.mubr.bf16.mxu0 0
  %2332 = vmatmul.mubr.bf16.gmra.mxu0 %v2192
  %v2333 = vpop.f32.mrf.mxu0
  %v2334 = vadd.f32 0.0, %v2333
  %v2335 = vpop.f32.mrf.mxu0
  %v2336 = vpop.f32.mrf.mxu0
  %v2337 = vadd.f32 0.0, %v2336
  %v2338 = vpop.f32.mrf.mxu0
  %2339 = vmatprep.mubr.bf16.mxu0 0
  %2340 = vmatmul.mubr.bf16.gmra.mxu0 %v2195
  %v2341 = vpop.f32.mrf.mxu0
  %v2342 = vadd.f32 0.0, %v2341
  %v2343 = vpop.f32.mrf.mxu0
  %v2344 = vpop.f32.mrf.mxu0
  %v2345 = vadd.f32 0.0, %v2344
  %v2346 = vpop.f32.mrf.mxu0
  %2347 = vmatprep.mubr.bf16.mxu0 0
  %2348 = vmatmul.mubr.bf16.gmra.mxu0 %v2198
  %v2349 = vpop.f32.mrf.mxu0
  %v2350 = vadd.f32 0.0, %v2349
  %v2351 = vpop.f32.mrf.mxu0
  %v2352 = vpop.f32.mrf.mxu0
  %v2353 = vadd.f32 0.0, %v2352
  %v2354 = vpop.f32.mrf.mxu0
  %2355 = vmatprep.mubr.bf16.mxu0 0
  %2356 = vmatmul.mubr.bf16.gmra.mxu0 %v2201
  %v2357 = vpop.f32.mrf.mxu0
  %v2358 = vadd.f32 0.0, %v2357
  %v2359 = vpop.f32.mrf.mxu0
  %v2360 = vpop.f32.mrf.mxu0
  %v2361 = vpop.f32.mrf.mxu0
  %2362 = vdwg.mxu0
  %v2363 = vadd.f32 %v1967, %v2238
  %v2364 = vadd.f32 %v1968, %v2241
  %v2365 = vadd.f32 %v1969, %v2246
  %v2366 = vadd.f32 %v1970, %v2249
  %v2367 = vadd.f32 %v1971, %v2254
  %v2368 = vadd.f32 %v1972, %v2257
  %v2369 = vadd.f32 %v1973, %v2262
  %v2370 = vadd.f32 %v1974, %v2265
  %v2371 = vadd.f32 %v1975, %v2270
  %v2372 = vadd.f32 %v1976, %v2273
  %v2373 = vadd.f32 %v1977, %v2278
  %v2374 = vadd.f32 %v1978, %v2281
  %v2375 = vadd.f32 %v1979, %v2286
  %v2376 = vadd.f32 %v1980, %v2289
  %v2377 = vadd.f32 %v1981, %v2294
  %v2378 = vadd.f32 %v1982, %v2297
  %v2379 = vadd.f32 %v1983, %v2302
  %v2380 = vadd.f32 %v1984, %v2305
  %v2381 = vadd.f32 %v1985, %v2310
  %v2382 = vadd.f32 %v1986, %v2313
  %v2383 = vadd.f32 %v1987, %v2318
  %v2384 = vadd.f32 %v1988, %v2321
  %v2385 = vadd.f32 %v1989, %v2326
  %v2386 = vadd.f32 %v1990, %v2329
  %v2387 = vadd.f32 %v1991, %v2334
  %v2388 = vadd.f32 %v1992, %v2337
  %v2389 = vadd.f32 %v1993, %v2342
  %v2390 = vadd.f32 %v1994, %v2345
  %v2391 = vadd.f32 %v1995, %v2350
  %v2392 = vadd.f32 %v1996, %v2353
  %v2393 = vadd.f32 %v1997, %v2358
  %vm2394 = vcmp.gt.f32.partialorder %v2363, 0.0
  %vm2395 = vcmp.gt.f32.partialorder %v2364, 0.0
  %vm2396 = vcmp.gt.f32.partialorder %v2365, 0.0
  %vm2397 = vcmp.gt.f32.partialorder %v2366, 0.0
  %vm2398 = vcmp.gt.f32.partialorder %v2367, 0.0
  %vm2399 = vcmp.gt.f32.partialorder %v2368, 0.0
  %vm2400 = vcmp.gt.f32.partialorder %v2369, 0.0
  %vm2401 = vcmp.gt.f32.partialorder %v2370, 0.0
  %vm2402 = vcmp.gt.f32.partialorder %v2371, 0.0
  %vm2403 = vcmp.gt.f32.partialorder %v2372, 0.0
  %vm2404 = vcmp.gt.f32.partialorder %v2373, 0.0
  %vm2405 = vcmp.gt.f32.partialorder %v2374, 0.0
  %vm2406 = vcmp.gt.f32.partialorder %v2375, 0.0
  %vm2407 = vcmp.gt.f32.partialorder %v2376, 0.0
  %vm2408 = vcmp.gt.f32.partialorder %v2377, 0.0
  %vm2409 = vcmp.gt.f32.partialorder %v2378, 0.0
  %vm2410 = vcmp.gt.f32.partialorder %v2379, 0.0
  %vm2411 = vcmp.gt.f32.partialorder %v2380, 0.0
  %vm2412 = vcmp.gt.f32.partialorder %v2381, 0.0
  %vm2413 = vcmp.gt.f32.partialorder %v2382, 0.0
  %vm2414 = vcmp.gt.f32.partialorder %v2383, 0.0
  %vm2415 = vcmp.gt.f32.partialorder %v2384, 0.0
  %vm2416 = vcmp.gt.f32.partialorder %v2385, 0.0
  %vm2417 = vcmp.gt.f32.partialorder %v2386, 0.0
  %vm2418 = vcmp.gt.f32.partialorder %v2387, 0.0
  %vm2419 = vcmp.gt.f32.partialorder %v2388, 0.0
  %vm2420 = vcmp.gt.f32.partialorder %v2389, 0.0
  %vm2421 = vcmp.gt.f32.partialorder %v2390, 0.0
  %vm2422 = vcmp.gt.f32.partialorder %v2391, 0.0
  %vm2423 = vcmp.gt.f32.partialorder %v2392, 0.0
  %vm2424 = vcmp.gt.f32.partialorder %v2393, 0.0
  %v2425 = vmul.f32 %v2363, 0.2
  %v2426 = vmul.f32 %v2364, 0.2
  %v2427 = vmul.f32 %v2365, 0.2
  %v2428 = vmul.f32 %v2366, 0.2
  %v2429 = vmul.f32 %v2367, 0.2
  %v2430 = vmul.f32 %v2368, 0.2
  %v2431 = vmul.f32 %v2369, 0.2
  %v2432 = vmul.f32 %v2370, 0.2
  %v2433 = vmul.f32 %v2371, 0.2
  %v2434 = vmul.f32 %v2372, 0.2
  %v2435 = vmul.f32 %v2373, 0.2
  %v2436 = vmul.f32 %v2374, 0.2
  %v2437 = vmul.f32 %v2375, 0.2
  %v2438 = vmul.f32 %v2376, 0.2
  %v2439 = vmul.f32 %v2377, 0.2
  %v2440 = vmul.f32 %v2378, 0.2
  %v2441 = vmul.f32 %v2379, 0.2
  %v2442 = vmul.f32 %v2380, 0.2
  %v2443 = vmul.f32 %v2381, 0.2
  %v2444 = vmul.f32 %v2382, 0.2
  %v2445 = vmul.f32 %v2383, 0.2
  %v2446 = vmul.f32 %v2384, 0.2
  %v2447 = vmul.f32 %v2385, 0.2
  %v2448 = vmul.f32 %v2386, 0.2
  %v2449 = vmul.f32 %v2387, 0.2
  %v2450 = vmul.f32 %v2388, 0.2
  %v2451 = vmul.f32 %v2389, 0.2
  %v2452 = vmul.f32 %v2390, 0.2
  %v2453 = vmul.f32 %v2391, 0.2
  %v2454 = vmul.f32 %v2392, 0.2
  %v2455 = vmul.f32 %v2393, 0.2
  %v2456 = vsel %vm2394, %v2363, %v2425
  %v2457 = vsel %vm2395, %v2364, %v2426
  %v2458 = vsel %vm2396, %v2365, %v2427
  %v2459 = vsel %vm2397, %v2366, %v2428
  %v2460 = vsel %vm2398, %v2367, %v2429
  %v2461 = vsel %vm2399, %v2368, %v2430
  %v2462 = vsel %vm2400, %v2369, %v2431
  %v2463 = vsel %vm2401, %v2370, %v2432
  %v2464 = vsel %vm2402, %v2371, %v2433
  %v2465 = vsel %vm2403, %v2372, %v2434
  %v2466 = vsel %vm2404, %v2373, %v2435
  %v2467 = vsel %vm2405, %v2374, %v2436
  %v2468 = vsel %vm2406, %v2375, %v2437
  %v2469 = vsel %vm2407, %v2376, %v2438
  %v2470 = vsel %vm2408, %v2377, %v2439
  %v2471 = vsel %vm2409, %v2378, %v2440
  %v2472 = vsel %vm2410, %v2379, %v2441
  %v2473 = vsel %vm2411, %v2380, %v2442
  %v2474 = vsel %vm2412, %v2381, %v2443
  %v2475 = vsel %vm2413, %v2382, %v2444
  %v2476 = vsel %vm2414, %v2383, %v2445
  %v2477 = vsel %vm2415, %v2384, %v2446
  %v2478 = vsel %vm2416, %v2385, %v2447
  %v2479 = vsel %vm2417, %v2386, %v2448
  %v2480 = vsel %vm2418, %v2387, %v2449
  %v2481 = vsel %vm2419, %v2388, %v2450
  %v2482 = vsel %vm2420, %v2389, %v2451
  %v2483 = vsel %vm2421, %v2390, %v2452
  %v2484 = vsel %vm2422, %v2391, %v2453
  %v2485 = vsel %vm2423, %v2392, %v2454
  %v2486 = vsel %vm2424, %v2393, %v2455
  %v2487 = vsel %vm915, 1, 0
  %v2488 = vsel %vm916, 1, 0
  %v2489 = vsel %vm917, 1, 0
  %v2490 = vsel %vm918, 1, 0
  %v2491 = vsel %vm919, 1, 0
  %v2492 = vsel %vm920, 1, 0
  %v2493 = vsel %vm921, 1, 0
  %v2494 = vsel %vm922, 1, 0
  %v2495 = vsel %vm923, 1, 0
  %v2496 = vsel %vm924, 1, 0
  %v2497 = vsel %vm925, 1, 0
  %v2498 = vsel %vm926, 1, 0
  %v2499 = vsel %vm927, 1, 0
  %v2500 = vsel %vm928, 1, 0
  %v2501 = vsel %vm929, 1, 0
  %v2502 = vsel %vm930, 1, 0
  %v2503 = vsel %vm931, 1, 0
  %v2504 = vsel %vm932, 1, 0
  %v2505 = vsel %vm933, 1, 0
  %v2506 = vsel %vm934, 1, 0
  %v2507 = vsel %vm935, 1, 0
  %v2508 = vsel %vm936, 1, 0
  %v2509 = vsel %vm937, 1, 0
  %v2510 = vsel %vm938, 1, 0
  %v2511 = vsel %vm939, 1, 0
  %v2512 = vsel %vm940, 1, 0
  %v2513 = vsel %vm941, 1, 0
  %v2514 = vsel %vm942, 1, 0
  %v2515 = vsel %vm943, 1, 0
  %v2516 = vsel %vm944, 1, 0
  %v2517 = vsel %vm945, 1, 0
  %vm2518 = vcmp.eq.s32.totalorder %v2487, 1
  %vm2519 = vcmp.eq.s32.totalorder %v2488, 1
  %vm2520 = vcmp.eq.s32.totalorder %v2489, 1
  %vm2521 = vcmp.eq.s32.totalorder %v2490, 1
  %vm2522 = vcmp.eq.s32.totalorder %v2491, 1
  %vm2523 = vcmp.eq.s32.totalorder %v2492, 1
  %vm2524 = vcmp.eq.s32.totalorder %v2493, 1
  %vm2525 = vcmp.eq.s32.totalorder %v2494, 1
  %vm2526 = vcmp.eq.s32.totalorder %v2495, 1
  %vm2527 = vcmp.eq.s32.totalorder %v2496, 1
  %vm2528 = vcmp.eq.s32.totalorder %v2497, 1
  %vm2529 = vcmp.eq.s32.totalorder %v2498, 1
  %vm2530 = vcmp.eq.s32.totalorder %v2499, 1
  %vm2531 = vcmp.eq.s32.totalorder %v2500, 1
  %vm2532 = vcmp.eq.s32.totalorder %v2501, 1
  %vm2533 = vcmp.eq.s32.totalorder %v2502, 1
  %vm2534 = vcmp.eq.s32.totalorder %v2503, 1
  %vm2535 = vcmp.eq.s32.totalorder %v2504, 1
  %vm2536 = vcmp.eq.s32.totalorder %v2505, 1
  %vm2537 = vcmp.eq.s32.totalorder %v2506, 1
  %vm2538 = vcmp.eq.s32.totalorder %v2507, 1
  %vm2539 = vcmp.eq.s32.totalorder %v2508, 1
  %vm2540 = vcmp.eq.s32.totalorder %v2509, 1
  %vm2541 = vcmp.eq.s32.totalorder %v2510, 1
  %vm2542 = vcmp.eq.s32.totalorder %v2511, 1
  %vm2543 = vcmp.eq.s32.totalorder %v2512, 1
  %vm2544 = vcmp.eq.s32.totalorder %v2513, 1
  %vm2545 = vcmp.eq.s32.totalorder %v2514, 1
  %vm2546 = vcmp.eq.s32.totalorder %v2515, 1
  %vm2547 = vcmp.eq.s32.totalorder %v2516, 1
  %vm2548 = vcmp.eq.s32.totalorder %v2517, 1
  %v2549 = vsel %vm2518, %v2456, 0.0
  %v2550 = vsel %vm2519, %v2457, 0.0
  %v2551 = vsel %vm2520, %v2458, 0.0
  %v2552 = vsel %vm2521, %v2459, 0.0
  %v2553 = vsel %vm2522, %v2460, 0.0
  %v2554 = vsel %vm2523, %v2461, 0.0
  %v2555 = vsel %vm2524, %v2462, 0.0
  %v2556 = vsel %vm2525, %v2463, 0.0
  %v2557 = vsel %vm2526, %v2464, 0.0
  %v2558 = vsel %vm2527, %v2465, 0.0
  %v2559 = vsel %vm2528, %v2466, 0.0
  %v2560 = vsel %vm2529, %v2467, 0.0
  %v2561 = vsel %vm2530, %v2468, 0.0
  %v2562 = vsel %vm2531, %v2469, 0.0
  %v2563 = vsel %vm2532, %v2470, 0.0
  %v2564 = vsel %vm2533, %v2471, 0.0
  %v2565 = vsel %vm2534, %v2472, 0.0
  %v2566 = vsel %vm2535, %v2473, 0.0
  %v2567 = vsel %vm2536, %v2474, 0.0
  %v2568 = vsel %vm2537, %v2475, 0.0
  %v2569 = vsel %vm2538, %v2476, 0.0
  %v2570 = vsel %vm2539, %v2477, 0.0
  %v2571 = vsel %vm2540, %v2478, 0.0
  %v2572 = vsel %vm2541, %v2479, 0.0
  %v2573 = vsel %vm2542, %v2480, 0.0
  %v2574 = vsel %vm2543, %v2481, 0.0
  %v2575 = vsel %vm2544, %v2482, 0.0
  %v2576 = vsel %vm2545, %v2483, 0.0
  %v2577 = vsel %vm2546, %v2484, 0.0
  %v2578 = vsel %vm2547, %v2485, 0.0
  %v2579 = vsel %vm2548, %v2486, 0.0
  %v2580 = vpack.c.bf16 %v2550, %v2549
  %v2581 = vpack.c.bf16 %v2552, %v2551
  %v2582 = vpack.c.bf16 %v2554, %v2553
  %v2583 = vpack.c.bf16 %v2556, %v2555
  %v2584 = vpack.c.bf16 %v2558, %v2557
  %v2585 = vpack.c.bf16 %v2560, %v2559
  %v2586 = vpack.c.bf16 %v2562, %v2561
  %v2587 = vpack.c.bf16 %v2564, %v2563
  %v2588 = vpack.c.bf16 %v2566, %v2565
  %v2589 = vpack.c.bf16 %v2568, %v2567
  %v2590 = vpack.c.bf16 %v2570, %v2569
  %v2591 = vpack.c.bf16 %v2572, %v2571
  %v2592 = vpack.c.bf16 %v2574, %v2573
  %v2593 = vpack.c.bf16 %v2576, %v2575
  %v2594 = vpack.c.bf16 %v2578, %v2577
  %v2595 = vpack.c.bf16 %v2579, %v2579
  %v2612 = vunpack.c.l.b16 %v2580
  %v2613 = vunpack.c.h.b16 %v2580
  %v2614 = vunpack.c.l.b16 %v2581
  %v2615 = vunpack.c.h.b16 %v2581
  %v2616 = vunpack.c.l.b16 %v2582
  %v2617 = vunpack.c.h.b16 %v2582
  %v2618 = vunpack.c.l.b16 %v2583
  %v2619 = vunpack.c.h.b16 %v2583
  %v2620 = vunpack.c.l.b16 %v2584
  %v2621 = vunpack.c.h.b16 %v2584
  %v2622 = vunpack.c.l.b16 %v2585
  %v2623 = vunpack.c.h.b16 %v2585
  %v2624 = vunpack.c.l.b16 %v2586
  %v2625 = vunpack.c.h.b16 %v2586
  %v2626 = vunpack.c.l.b16 %v2587
  %v2627 = vunpack.c.h.b16 %v2587
  %v2628 = vunpack.c.l.b16 %v2588
  %v2629 = vunpack.c.h.b16 %v2588
  %v2630 = vunpack.c.l.b16 %v2589
  %v2631 = vunpack.c.h.b16 %v2589
  %v2632 = vunpack.c.l.b16 %v2590
  %v2633 = vunpack.c.h.b16 %v2590
  %v2634 = vunpack.c.l.b16 %v2591
  %v2635 = vunpack.c.h.b16 %v2591
  %v2636 = vunpack.c.l.b16 %v2592
  %v2637 = vunpack.c.h.b16 %v2592
  %v2638 = vunpack.c.l.b16 %v2593
  %v2639 = vunpack.c.h.b16 %v2593
  %v2640 = vunpack.c.l.b16 %v2594
  %v2641 = vunpack.c.h.b16 %v2594
  %v2642 = vunpack.c.l.b16 %v2595
  %v2643 = vpack.c.b16 %v2612, %v2612
  %v2644 = vpack.c.b16 %v2613, %v2613
  %v2645 = vpack.c.b16 %v2614, %v2614
  %v2646 = vpack.c.b16 %v2615, %v2615
  %v2647 = vpack.c.b16 %v2616, %v2616
  %v2648 = vpack.c.b16 %v2617, %v2617
  %v2649 = vpack.c.b16 %v2618, %v2618
  %v2650 = vpack.c.b16 %v2619, %v2619
  %v2651 = vpack.c.b16 %v2620, %v2620
  %v2652 = vpack.c.b16 %v2621, %v2621
  %v2653 = vpack.c.b16 %v2622, %v2622
  %v2654 = vpack.c.b16 %v2623, %v2623
  %v2655 = vpack.c.b16 %v2624, %v2624
  %v2656 = vpack.c.b16 %v2625, %v2625
  %v2657 = vpack.c.b16 %v2626, %v2626
  %v2658 = vpack.c.b16 %v2627, %v2627
  %v2659 = vpack.c.b16 %v2628, %v2628
  %v2660 = vpack.c.b16 %v2629, %v2629
  %v2661 = vpack.c.b16 %v2630, %v2630
  %v2662 = vpack.c.b16 %v2631, %v2631
  %v2663 = vpack.c.b16 %v2632, %v2632
  %v2664 = vpack.c.b16 %v2633, %v2633
  %v2665 = vpack.c.b16 %v2634, %v2634
  %v2666 = vpack.c.b16 %v2635, %v2635
  %v2667 = vpack.c.b16 %v2636, %v2636
  %v2668 = vpack.c.b16 %v2637, %v2637
  %v2669 = vpack.c.b16 %v2638, %v2638
  %v2670 = vpack.c.b16 %v2639, %v2639
  %v2671 = vpack.c.b16 %v2640, %v2640
  %v2672 = vpack.c.b16 %v2641, %v2641
  %v2673 = vpack.c.b16 %v2642, %v2642
  %vm2705 = vcmask 60416
  %2706 = vst.msk [vmem:[#allocation3] sm:$0xf] %vm2705, %v2643
  %2707 = vst.msk [vmem:[#allocation3 + $0x4] sm:$0xf] %vm2705, %v2644
  %2708 = vst.msk [vmem:[#allocation3 + $0x8] sm:$0xf] %vm2705, %v2645
  %2709 = vst.msk [vmem:[#allocation3 + $0xc] sm:$0xf] %vm2705, %v2646
  %2710 = vst.msk [vmem:[#allocation3 + $0x10] sm:$0xf] %vm2705, %v2647
  %2711 = vst.msk [vmem:[#allocation3 + $0x14] sm:$0xf] %vm2705, %v2648
  %2712 = vst.msk [vmem:[#allocation3 + $0x18] sm:$0xf] %vm2705, %v2649
  %2713 = vst.msk [vmem:[#allocation3 + $0x1c] sm:$0xf] %vm2705, %v2650
  %2714 = vst.msk [vmem:[#allocation3 + $0x20] sm:$0xf] %vm2705, %v2651
  %2715 = vst.msk [vmem:[#allocation3 + $0x24] sm:$0xf] %vm2705, %v2652
  %2716 = vst.msk [vmem:[#allocation3 + $0x28] sm:$0xf] %vm2705, %v2653
  %2717 = vst.msk [vmem:[#allocation3 + $0x2c] sm:$0xf] %vm2705, %v2654
  %2718 = vst.msk [vmem:[#allocation3 + $0x30] sm:$0xf] %vm2705, %v2655
  %2719 = vst.msk [vmem:[#allocation3 + $0x34] sm:$0xf] %vm2705, %v2656
  %2720 = vst.msk [vmem:[#allocation3 + $0x38] sm:$0xf] %vm2705, %v2657
  %2721 = vst.msk [vmem:[#allocation3 + $0x3c] sm:$0xf] %vm2705, %v2658
  %2722 = vst.msk [vmem:[#allocation3 + $0x40] sm:$0xf] %vm2705, %v2659
  %2723 = vst.msk [vmem:[#allocation3 + $0x44] sm:$0xf] %vm2705, %v2660
  %2724 = vst.msk [vmem:[#allocation3 + $0x48] sm:$0xf] %vm2705, %v2661
  %2725 = vst.msk [vmem:[#allocation3 + $0x4c] sm:$0xf] %vm2705, %v2662
  %2726 = vst.msk [vmem:[#allocation3 + $0x50] sm:$0xf] %vm2705, %v2663
  %2727 = vst.msk [vmem:[#allocation3 + $0x54] sm:$0xf] %vm2705, %v2664
  %2728 = vst.msk [vmem:[#allocation3 + $0x58] sm:$0xf] %vm2705, %v2665
  %2729 = vst.msk [vmem:[#allocation3 + $0x5c] sm:$0xf] %vm2705, %v2666
  %2730 = vst.msk [vmem:[#allocation3 + $0x60] sm:$0xf] %vm2705, %v2667
  %2731 = vst.msk [vmem:[#allocation3 + $0x64] sm:$0xf] %vm2705, %v2668
  %2732 = vst.msk [vmem:[#allocation3 + $0x68] sm:$0xf] %vm2705, %v2669
  %2733 = vst.msk [vmem:[#allocation3 + $0x6c] sm:$0xf] %vm2705, %v2670
  %2734 = vst.msk [vmem:[#allocation3 + $0x70] sm:$0xf] %vm2705, %v2671
  %2735 = vst.msk [vmem:[#allocation3 + $0x74] sm:$0xf] %vm2705, %v2672
  %2736 = vst.msk [vmem:[#allocation3 + $0x78] sm:$0xf] %vm2705, %v2673
  %vm2737 = vcmp.lt.f32.partialorder %v511, 80.0
  %vm2738 = vcmp.lt.f32.partialorder %v512, 80.0
  %vm2739 = vcmp.lt.f32.partialorder %v513, 80.0
  %vm2740 = vcmp.lt.f32.partialorder %v514, 80.0
  %vm2741 = vcmp.lt.f32.partialorder %v515, 80.0
  %vm2742 = vcmp.lt.f32.partialorder %v516, 80.0
  %vm2743 = vcmp.lt.f32.partialorder %v517, 80.0
  %vm2744 = vcmp.lt.f32.partialorder %v518, 80.0
  %vm2745 = vcmp.lt.f32.partialorder %v519, 80.0
  %vm2746 = vcmp.lt.f32.partialorder %v520, 80.0
  %vm2747 = vcmp.lt.f32.partialorder %v521, 80.0
  %vm2748 = vcmp.lt.f32.partialorder %v522, 80.0
  %vm2749 = vcmp.lt.f32.partialorder %v523, 80.0
  %vm2750 = vcmp.lt.f32.partialorder %v524, 80.0
  %vm2751 = vcmp.lt.f32.partialorder %v525, 80.0
  %vm2752 = vcmp.lt.f32.partialorder %v526, 80.0
  %vm2753 = vcmp.lt.f32.partialorder %v527, 80.0
  %vm2754 = vcmp.lt.f32.partialorder %v528, 80.0
  %vm2755 = vcmp.lt.f32.partialorder %v529, 80.0
  %vm2756 = vcmp.lt.f32.partialorder %v530, 80.0
  %vm2757 = vcmp.lt.f32.partialorder %v531, 80.0
  %vm2758 = vcmp.lt.f32.partialorder %v532, 80.0
  %vm2759 = vcmp.lt.f32.partialorder %v533, 80.0
  %vm2760 = vcmp.lt.f32.partialorder %v534, 80.0
  %vm2761 = vcmp.lt.f32.partialorder %v535, 80.0
  %vm2762 = vcmp.lt.f32.partialorder %v536, 80.0
  %vm2763 = vcmp.lt.f32.partialorder %v537, 80.0
  %vm2764 = vcmp.lt.f32.partialorder %v538, 80.0
  %vm2765 = vcmp.lt.f32.partialorder %v539, 80.0
  %vm2766 = vcmp.lt.f32.partialorder %v636, 8.0
  %vm2767 = vcmp.lt.f32.partialorder %v637, 8.0
  %vm2768 = vcmp.lt.f32.partialorder %v638, 8.0
  %vm2769 = vcmp.lt.f32.partialorder %v639, 8.0
  %vm2770 = vcmp.lt.f32.partialorder %v640, 8.0
  %vm2771 = vcmp.lt.f32.partialorder %v641, 8.0
  %vm2772 = vcmp.lt.f32.partialorder %v642, 8.0
  %vm2773 = vcmp.lt.f32.partialorder %v643, 8.0
  %vm2774 = vcmp.lt.f32.partialorder %v644, 8.0
  %vm2775 = vcmp.lt.f32.partialorder %v645, 8.0
  %vm2776 = vcmp.lt.f32.partialorder %v646, 8.0
  %vm2777 = vcmp.lt.f32.partialorder %v647, 8.0
  %vm2778 = vcmp.lt.f32.partialorder %v648, 8.0
  %vm2779 = vcmp.lt.f32.partialorder %v649, 8.0
  %vm2780 = vcmp.lt.f32.partialorder %v650, 8.0
  %vm2781 = vcmp.lt.f32.partialorder %v651, 8.0
  %vm2782 = vcmp.lt.f32.partialorder %v652, 8.0
  %vm2783 = vcmp.lt.f32.partialorder %v653, 8.0
  %vm2784 = vcmp.lt.f32.partialorder %v654, 8.0
  %vm2785 = vcmp.lt.f32.partialorder %v655, 8.0
  %vm2786 = vcmp.lt.f32.partialorder %v656, 8.0
  %vm2787 = vcmp.lt.f32.partialorder %v657, 8.0
  %vm2788 = vcmp.lt.f32.partialorder %v658, 8.0
  %vm2789 = vcmp.lt.f32.partialorder %v659, 8.0
  %vm2790 = vcmp.lt.f32.partialorder %v660, 8.0
  %vm2791 = vcmp.lt.f32.partialorder %v661, 8.0
  %vm2792 = vcmp.lt.f32.partialorder %v662, 8.0
  %vm2793 = vcmp.lt.f32.partialorder %v663, 8.0
  %vm2794 = vcmp.lt.f32.partialorder %v664, 8.0
  %vm2795 = vmand %vm2737, %vm2766
  %vm2796 = vmand %vm2738, %vm2767
  %vm2797 = vmand %vm2739, %vm2768
  %vm2798 = vmand %vm2740, %vm2769
  %vm2799 = vmand %vm2741, %vm2770
  %vm2800 = vmand %vm2742, %vm2771
  %vm2801 = vmand %vm2743, %vm2772
  %vm2802 = vmand %vm2744, %vm2773
  %vm2803 = vmand %vm2745, %vm2774
  %vm2804 = vmand %vm2746, %vm2775
  %vm2805 = vmand %vm2747, %vm2776
  %vm2806 = vmand %vm2748, %vm2777
  %vm2807 = vmand %vm2749, %vm2778
  %vm2808 = vmand %vm2750, %vm2779
  %vm2809 = vmand %vm2751, %vm2780
  %vm2810 = vmand %vm2752, %vm2781
  %vm2811 = vmand %vm2753, %vm2782
  %vm2812 = vmand %vm2754, %vm2783
  %vm2813 = vmand %vm2755, %vm2784
  %vm2814 = vmand %vm2756, %vm2785
  %vm2815 = vmand %vm2757, %vm2786
  %vm2816 = vmand %vm2758, %vm2787
  %vm2817 = vmand %vm2759, %vm2788
  %vm2818 = vmand %vm2760, %vm2789
  %vm2819 = vmand %vm2761, %vm2790
  %vm2820 = vmand %vm2762, %vm2791
  %vm2821 = vmand %vm2763, %vm2792
  %vm2822 = vmand %vm2764, %vm2793
  %vm2823 = vmand %vm2765, %vm2794
  %v2824 = vld [vmem:[#allocation3] sm:$0xf]
  %v2825 = vld [vmem:[#allocation3 + $0x4] sm:$0xf]
  %v2826 = vld [vmem:[#allocation3 + $0x8] sm:$0xf]
  %v2827 = vld [vmem:[#allocation3 + $0xc] sm:$0xf]
  %v2828 = vld [vmem:[#allocation3 + $0x10] sm:$0xf]
  %v2829 = vld [vmem:[#allocation3 + $0x14] sm:$0xf]
  %v2830 = vld [vmem:[#allocation3 + $0x18] sm:$0xf]
  %v2831 = vld [vmem:[#allocation3 + $0x1c] sm:$0xf]
  %v2832 = vld [vmem:[#allocation3 + $0x20] sm:$0xf]
  %v2833 = vld [vmem:[#allocation3 + $0x24] sm:$0xf]
  %v2834 = vld [vmem:[#allocation3 + $0x28] sm:$0xf]
  %v2835 = vld [vmem:[#allocation3 + $0x2c] sm:$0xf]
  %v2836 = vld [vmem:[#allocation3 + $0x30] sm:$0xf]
  %v2837 = vld [vmem:[#allocation3 + $0x34] sm:$0xf]
  %v2838 = vld [vmem:[#allocation3 + $0x38] sm:$0xf]
  %v2839 = vld [vmem:[#allocation3 + $0x3c] sm:$0xf]
  %v2840 = vld [vmem:[#allocation3 + $0x40] sm:$0xf]
  %v2841 = vld [vmem:[#allocation3 + $0x44] sm:$0xf]
  %v2842 = vld [vmem:[#allocation3 + $0x48] sm:$0xf]
  %v2843 = vld [vmem:[#allocation3 + $0x4c] sm:$0xf]
  %v2844 = vld [vmem:[#allocation3 + $0x50] sm:$0xf]
  %v2845 = vld [vmem:[#allocation3 + $0x54] sm:$0xf]
  %v2846 = vld [vmem:[#allocation3 + $0x58] sm:$0xf]
  %v2847 = vld [vmem:[#allocation3 + $0x5c] sm:$0xf]
  %v2848 = vld [vmem:[#allocation3 + $0x60] sm:$0xf]
  %v2849 = vld [vmem:[#allocation3 + $0x64] sm:$0xf]
  %v2850 = vld [vmem:[#allocation3 + $0x68] sm:$0xf]
  %v2851 = vld [vmem:[#allocation3 + $0x6c] sm:$0xf]
  %v2852 = vld [vmem:[#allocation3 + $0x70] sm:$0x1]
  %v2853 = vld [vmem:[%s2] sm:$0xf]
  %v2854 = vld [vmem:[#allocation3 + $0x70] sm:$0x3]
  %s2855 = scalar_lea.vmem %s2, 4
  %v2856 = vld [vmem:[%s2855] sm:$0xf]
  %v2886 = vunpack.c.l.b16 %v2824
  %v2887 = vunpack.c.l.b16 %v2825
  %v2888 = vunpack.c.l.b16 %v2826
  %v2889 = vunpack.c.l.b16 %v2827
  %v2890 = vunpack.c.l.b16 %v2828
  %v2891 = vunpack.c.l.b16 %v2829
  %v2892 = vunpack.c.l.b16 %v2830
  %v2893 = vunpack.c.l.b16 %v2831
  %v2894 = vunpack.c.l.b16 %v2832
  %v2895 = vunpack.c.l.b16 %v2833
  %v2896 = vunpack.c.l.b16 %v2834
  %v2897 = vunpack.c.l.b16 %v2835
  %v2898 = vunpack.c.l.b16 %v2836
  %v2899 = vunpack.c.l.b16 %v2837
  %v2900 = vunpack.c.l.b16 %v2838
  %v2901 = vunpack.c.l.b16 %v2839
  %v2902 = vunpack.c.l.b16 %v2840
  %v2903 = vunpack.c.l.b16 %v2841
  %v2904 = vunpack.c.l.b16 %v2842
  %v2905 = vunpack.c.l.b16 %v2843
  %v2906 = vunpack.c.l.b16 %v2844
  %v2907 = vunpack.c.l.b16 %v2845
  %v2908 = vunpack.c.l.b16 %v2846
  %v2909 = vunpack.c.l.b16 %v2847
  %v2910 = vunpack.c.l.b16 %v2848
  %v2911 = vunpack.c.l.b16 %v2849
  %v2912 = vunpack.c.l.b16 %v2850
  %v2913 = vunpack.c.l.b16 %v2851
  %v2914 = vunpack.c.l.b16 %v2854
  %v2915 = vpack.c.b16 %v2887, %v2886
  %v2916 = vpack.c.b16 %v2889, %v2888
  %v2917 = vpack.c.b16 %v2891, %v2890
  %v2918 = vpack.c.b16 %v2893, %v2892
  %v2919 = vpack.c.b16 %v2895, %v2894
  %v2920 = vpack.c.b16 %v2897, %v2896
  %v2921 = vpack.c.b16 %v2899, %v2898
  %v2922 = vpack.c.b16 %v2901, %v2900
  %v2923 = vpack.c.b16 %v2903, %v2902
  %v2924 = vpack.c.b16 %v2905, %v2904
  %v2925 = vpack.c.b16 %v2907, %v2906
  %v2926 = vpack.c.b16 %v2909, %v2908
  %v2927 = vpack.c.b16 %v2911, %v2910
  %v2928 = vpack.c.b16 %v2913, %v2912
  %v2929 = vpack.c.b16 %v2914, %v2914
  %v2931 = vshrl.u32 %v2915, 16
  %v2933 = vshll.u32 %v2915, 16
  %v2935 = vrot.slane %v2933, 1
  %v2936 = vor.u32 %v2931, %v2935
  %v2938 = vshll.u32 %v2916, 16
  %v2940 = vrot.slane %v2938, 1
  %v2941 = vsel %vm1063, %v2936, %v2940
  %v2942 = vshrl.u32 %v2916, 16
  %v2944 = vor.u32 %v2942, %v2940
  %v2946 = vshll.u32 %v2917, 16
  %v2948 = vrot.slane %v2946, 1
  %v2949 = vsel %vm1063, %v2944, %v2948
  %v2950 = vshrl.u32 %v2917, 16
  %v2952 = vor.u32 %v2950, %v2948
  %v2954 = vshll.u32 %v2918, 16
  %v2956 = vrot.slane %v2954, 1
  %v2957 = vsel %vm1063, %v2952, %v2956
  %v2958 = vshrl.u32 %v2918, 16
  %v2960 = vor.u32 %v2958, %v2956
  %v2962 = vshll.u32 %v2919, 16
  %v2964 = vrot.slane %v2962, 1
  %v2965 = vsel %vm1063, %v2960, %v2964
  %v2966 = vshrl.u32 %v2919, 16
  %v2968 = vor.u32 %v2966, %v2964
  %v2970 = vshll.u32 %v2920, 16
  %v2972 = vrot.slane %v2970, 1
  %v2973 = vsel %vm1063, %v2968, %v2972
  %v2974 = vshrl.u32 %v2920, 16
  %v2976 = vor.u32 %v2974, %v2972
  %v2978 = vshll.u32 %v2921, 16
  %v2980 = vrot.slane %v2978, 1
  %v2981 = vsel %vm1063, %v2976, %v2980
  %v2982 = vshrl.u32 %v2921, 16
  %v2984 = vor.u32 %v2982, %v2980
  %v2986 = vshll.u32 %v2922, 16
  %v2988 = vrot.slane %v2986, 1
  %v2989 = vsel %vm1063, %v2984, %v2988
  %v2990 = vshrl.u32 %v2922, 16
  %v2992 = vor.u32 %v2990, %v2988
  %v2994 = vshll.u32 %v2923, 16
  %v2996 = vrot.slane %v2994, 1
  %v2997 = vsel %vm1063, %v2992, %v2996
  %v2998 = vshrl.u32 %v2923, 16
  %v3000 = vor.u32 %v2998, %v2996
  %v3002 = vshll.u32 %v2924, 16
  %v3004 = vrot.slane %v3002, 1
  %v3005 = vsel %vm1063, %v3000, %v3004
  %v3006 = vshrl.u32 %v2924, 16
  %v3008 = vor.u32 %v3006, %v3004
  %v3010 = vshll.u32 %v2925, 16
  %v3012 = vrot.slane %v3010, 1
  %v3013 = vsel %vm1063, %v3008, %v3012
  %v3014 = vshrl.u32 %v2925, 16
  %v3016 = vor.u32 %v3014, %v3012
  %v3018 = vshll.u32 %v2926, 16
  %v3020 = vrot.slane %v3018, 1
  %v3021 = vsel %vm1063, %v3016, %v3020
  %v3022 = vshrl.u32 %v2926, 16
  %v3024 = vor.u32 %v3022, %v3020
  %v3026 = vshll.u32 %v2927, 16
  %v3028 = vrot.slane %v3026, 1
  %v3029 = vsel %vm1063, %v3024, %v3028
  %v3030 = vshrl.u32 %v2927, 16
  %v3032 = vor.u32 %v3030, %v3028
  %v3034 = vshll.u32 %v2928, 16
  %v3036 = vrot.slane %v3034, 1
  %v3037 = vsel %vm1063, %v3032, %v3036
  %v3038 = vshrl.u32 %v2928, 16
  %v3040 = vor.u32 %v3038, %v3036
  %v3042 = vshll.u32 %v2929, 16
  %v3044 = vrot.slane %v3042, 1
  %v3045 = vsel %vm1063, %v3040, %v3044
  %v3046 = vshrl.u32 %v2929, 16
  %v3048 = vor.u32 %v3046, %v3044
  %vm3049 = vcmask 64512
  %v3051 = vsel %vm3049, %v2941, 0
  %v3054 = vsel %vm3049, %v2949, 0
  %v3057 = vsel %vm3049, %v2957, 0
  %v3060 = vsel %vm3049, %v2965, 0
  %v3063 = vsel %vm3049, %v2973, 0
  %v3066 = vsel %vm3049, %v2981, 0
  %v3069 = vsel %vm3049, %v2989, 0
  %v3072 = vsel %vm3049, %v2997, 0
  %v3075 = vsel %vm3049, %v3005, 0
  %v3078 = vsel %vm3049, %v3013, 0
  %v3081 = vsel %vm3049, %v3021, 0
  %v3084 = vsel %vm3049, %v3029, 0
  %v3087 = vsel %vm3049, %v3037, 0
  %v3090 = vsel %vm3049, %v3045, 0
  %v3093 = vsel %vm3049, %v3048, 0
  %vm3095 = vcmask 1043456
  %v3097 = vsel %vm3095, %v2856, 0
  %3099 = vmatprep.subr.bf16.mxu0 0
  %3100 = vmatpush1.bf16.msra.mxu0 0
  %3101 = vmatprep.subr.bf16.mxu0 0
  %3102 = vmatpush1.bf16.msra.mxu0 0
  %3103 = vmatprep.subr.bf16.mxu0 0
  %3104 = vmatpush1.bf16.msra.mxu0 0
  %3105 = vmatprep.subr.bf16.mxu0 0
  %3106 = vmatpush1.bf16.msra.mxu0 0
  %3107 = vmatprep.subr.bf16.mxu0 0
  %3108 = vmatpush1.bf16.msra.mxu0 0
  %3109 = vmatprep.subr.bf16.mxu0 0
  %3110 = vmatpush1.bf16.msra.mxu0 0
  %3111 = vmatprep.subr.bf16.mxu0 0
  %3112 = vmatpush1.bf16.msra.mxu0 0
  %3113 = vmatprep.subr.bf16.mxu0 0
  %3114 = vmatpush1.bf16.msra.mxu0 %v3097
  %3115 = vmatprep.subr.bf16.mxu0 0
  %3116 = vmatpush2.bf16.msra.mxu0 0
  %3117 = vmatprep.subr.bf16.mxu0 0
  %3118 = vmatpush2.bf16.msra.mxu0 0
  %3119 = vmatprep.subr.bf16.mxu0 0
  %3120 = vmatpush2.bf16.msra.mxu0 0
  %3121 = vmatprep.subr.bf16.mxu0 0
  %3122 = vmatpush2.bf16.msra.mxu0 0
  %3123 = vmatprep.subr.bf16.mxu0 0
  %3124 = vmatpush2.bf16.msra.mxu0 0
  %3125 = vmatprep.subr.bf16.mxu0 0
  %3126 = vmatpush2.bf16.msra.mxu0 0
  %3127 = vmatprep.subr.bf16.mxu0 0
  %3128 = vmatpush2.bf16.msra.mxu0 0
  %3129 = vmatprep.subr.bf16.mxu0 0
  %3130 = vmatpush2.bf16.msra.mxu0 0
  %3131 = vmatprep.mubr.bf16.mxu0 0
  %3132 = vmatmul.mubr.bf16.gmra.mxu0 %v3051
  %v3133 = vpop.f32.mrf.mxu0
  %v3134 = vadd.f32 0.0, %v3133
  %v3135 = vpop.f32.mrf.mxu0
  %v3136 = vpop.f32.mrf.mxu0
  %v3137 = vadd.f32 0.0, %v3136
  %v3138 = vpop.f32.mrf.mxu0
  %3139 = vmatprep.mubr.bf16.mxu0 0
  %3140 = vmatmul.mubr.bf16.gmra.mxu0 %v3054
  %v3141 = vpop.f32.mrf.mxu0
  %v3142 = vadd.f32 0.0, %v3141
  %v3143 = vpop.f32.mrf.mxu0
  %v3144 = vpop.f32.mrf.mxu0
  %v3145 = vadd.f32 0.0, %v3144
  %v3146 = vpop.f32.mrf.mxu0
  %3147 = vmatprep.mubr.bf16.mxu0 0
  %3148 = vmatmul.mubr.bf16.gmra.mxu0 %v3057
  %v3149 = vpop.f32.mrf.mxu0
  %v3150 = vadd.f32 0.0, %v3149
  %v3151 = vpop.f32.mrf.mxu0
  %v3152 = vpop.f32.mrf.mxu0
  %v3153 = vadd.f32 0.0, %v3152
  %v3154 = vpop.f32.mrf.mxu0
  %3155 = vmatprep.mubr.bf16.mxu0 0
  %3156 = vmatmul.mubr.bf16.gmra.mxu0 %v3060
  %v3157 = vpop.f32.mrf.mxu0
  %v3158 = vadd.f32 0.0, %v3157
  %v3159 = vpop.f32.mrf.mxu0
  %v3160 = vpop.f32.mrf.mxu0
  %v3161 = vadd.f32 0.0, %v3160
  %v3162 = vpop.f32.mrf.mxu0
  %3163 = vmatprep.mubr.bf16.mxu0 0
  %3164 = vmatmul.mubr.bf16.gmra.mxu0 %v3063
  %v3165 = vpop.f32.mrf.mxu0
  %v3166 = vadd.f32 0.0, %v3165
  %v3167 = vpop.f32.mrf.mxu0
  %v3168 = vpop.f32.mrf.mxu0
  %v3169 = vadd.f32 0.0, %v3168
  %v3170 = vpop.f32.mrf.mxu0
  %3171 = vmatprep.mubr.bf16.mxu0 0
  %3172 = vmatmul.mubr.bf16.gmra.mxu0 %v3066
  %v3173 = vpop.f32.mrf.mxu0
  %v3174 = vadd.f32 0.0, %v3173
  %v3175 = vpop.f32.mrf.mxu0
  %v3176 = vpop.f32.mrf.mxu0
  %v3177 = vadd.f32 0.0, %v3176
  %v3178 = vpop.f32.mrf.mxu0
  %3179 = vmatprep.mubr.bf16.mxu0 0
  %3180 = vmatmul.mubr.bf16.gmra.mxu0 %v3069
  %v3181 = vpop.f32.mrf.mxu0
  %v3182 = vadd.f32 0.0, %v3181
  %v3183 = vpop.f32.mrf.mxu0
  %v3184 = vpop.f32.mrf.mxu0
  %v3185 = vadd.f32 0.0, %v3184
  %v3186 = vpop.f32.mrf.mxu0
  %3187 = vmatprep.mubr.bf16.mxu0 0
  %3188 = vmatmul.mubr.bf16.gmra.mxu0 %v3072
  %v3189 = vpop.f32.mrf.mxu0
  %v3190 = vadd.f32 0.0, %v3189
  %v3191 = vpop.f32.mrf.mxu0
  %v3192 = vpop.f32.mrf.mxu0
  %v3193 = vadd.f32 0.0, %v3192
  %v3194 = vpop.f32.mrf.mxu0
  %3195 = vmatprep.mubr.bf16.mxu0 0
  %3196 = vmatmul.mubr.bf16.gmra.mxu0 %v3075
  %v3197 = vpop.f32.mrf.mxu0
  %v3198 = vadd.f32 0.0, %v3197
  %v3199 = vpop.f32.mrf.mxu0
  %v3200 = vpop.f32.mrf.mxu0
  %v3201 = vadd.f32 0.0, %v3200
  %v3202 = vpop.f32.mrf.mxu0
  %3203 = vmatprep.mubr.bf16.mxu0 0
  %3204 = vmatmul.mubr.bf16.gmra.mxu0 %v3078
  %v3205 = vpop.f32.mrf.mxu0
  %v3206 = vadd.f32 0.0, %v3205
  %v3207 = vpop.f32.mrf.mxu0
  %v3208 = vpop.f32.mrf.mxu0
  %v3209 = vadd.f32 0.0, %v3208
  %v3210 = vpop.f32.mrf.mxu0
  %3211 = vmatprep.mubr.bf16.mxu0 0
  %3212 = vmatmul.mubr.bf16.gmra.mxu0 %v3081
  %v3213 = vpop.f32.mrf.mxu0
  %v3214 = vadd.f32 0.0, %v3213
  %v3215 = vpop.f32.mrf.mxu0
  %v3216 = vpop.f32.mrf.mxu0
  %v3217 = vadd.f32 0.0, %v3216
  %v3218 = vpop.f32.mrf.mxu0
  %3219 = vmatprep.mubr.bf16.mxu0 0
  %3220 = vmatmul.mubr.bf16.gmra.mxu0 %v3084
  %v3221 = vpop.f32.mrf.mxu0
  %v3222 = vadd.f32 0.0, %v3221
  %v3223 = vpop.f32.mrf.mxu0
  %v3224 = vpop.f32.mrf.mxu0
  %v3225 = vadd.f32 0.0, %v3224
  %v3226 = vpop.f32.mrf.mxu0
  %3227 = vmatprep.mubr.bf16.mxu0 0
  %3228 = vmatmul.mubr.bf16.gmra.mxu0 %v3087
  %v3229 = vpop.f32.mrf.mxu0
  %v3230 = vadd.f32 0.0, %v3229
  %v3231 = vpop.f32.mrf.mxu0
  %v3232 = vpop.f32.mrf.mxu0
  %v3233 = vadd.f32 0.0, %v3232
  %v3234 = vpop.f32.mrf.mxu0
  %3235 = vmatprep.mubr.bf16.mxu0 0
  %3236 = vmatmul.mubr.bf16.gmra.mxu0 %v3090
  %v3237 = vpop.f32.mrf.mxu0
  %v3238 = vadd.f32 0.0, %v3237
  %v3239 = vpop.f32.mrf.mxu0
  %v3240 = vpop.f32.mrf.mxu0
  %v3241 = vadd.f32 0.0, %v3240
  %v3242 = vpop.f32.mrf.mxu0
  %3243 = vmatprep.mubr.bf16.mxu0 0
  %3244 = vmatmul.mubr.bf16.gmra.mxu0 %v3093
  %v3245 = vpop.f32.mrf.mxu0
  %v3246 = vadd.f32 0.0, %v3245
  %v3247 = vpop.f32.mrf.mxu0
  %v3248 = vpop.f32.mrf.mxu0
  %v3249 = vpop.f32.mrf.mxu0
  %3250 = vdwg.mxu0
  %v3252 = vunpack.c.l.b16 %v2852
  %v3253 = vpack.c.b16 %v3252, %v3252
  %v3254 = vsel %vm3049, %v2915, 0
  %v3256 = vsel %vm3049, %v2916, 0
  %v3258 = vsel %vm3049, %v2917, 0
  %v3260 = vsel %vm3049, %v2918, 0
  %v3262 = vsel %vm3049, %v2919, 0
  %v3264 = vsel %vm3049, %v2920, 0
  %v3266 = vsel %vm3049, %v2921, 0
  %v3268 = vsel %vm3049, %v2922, 0
  %v3270 = vsel %vm3049, %v2923, 0
  %v3272 = vsel %vm3049, %v2924, 0
  %v3274 = vsel %vm3049, %v2925, 0
  %v3276 = vsel %vm3049, %v2926, 0
  %v3278 = vsel %vm3049, %v2927, 0
  %v3280 = vsel %vm3049, %v2928, 0
  %v3283 = vsel %vm3049, %v3253, 0
  %v3286 = vsel %vm3095, %v2853, 0
  %3288 = vmatprep.subr.bf16.mxu0 0
  %3289 = vmatpush1.bf16.msra.mxu0 0
  %3290 = vmatprep.subr.bf16.mxu0 0
  %3291 = vmatpush1.bf16.msra.mxu0 0
  %3292 = vmatprep.subr.bf16.mxu0 0
  %3293 = vmatpush1.bf16.msra.mxu0 0
  %3294 = vmatprep.subr.bf16.mxu0 0
  %3295 = vmatpush1.bf16.msra.mxu0 0
  %3296 = vmatprep.subr.bf16.mxu0 0
  %3297 = vmatpush1.bf16.msra.mxu0 0
  %3298 = vmatprep.subr.bf16.mxu0 0
  %3299 = vmatpush1.bf16.msra.mxu0 0
  %3300 = vmatprep.subr.bf16.mxu0 0
  %3301 = vmatpush1.bf16.msra.mxu0 0
  %3302 = vmatprep.subr.bf16.mxu0 0
  %3303 = vmatpush1.bf16.msra.mxu0 %v3286
  %3304 = vmatprep.subr.bf16.mxu0 0
  %3305 = vmatpush2.bf16.msra.mxu0 0
  %3306 = vmatprep.subr.bf16.mxu0 0
  %3307 = vmatpush2.bf16.msra.mxu0 0
  %3308 = vmatprep.subr.bf16.mxu0 0
  %3309 = vmatpush2.bf16.msra.mxu0 0
  %3310 = vmatprep.subr.bf16.mxu0 0
  %3311 = vmatpush2.bf16.msra.mxu0 0
  %3312 = vmatprep.subr.bf16.mxu0 0
  %3313 = vmatpush2.bf16.msra.mxu0 0
  %3314 = vmatprep.subr.bf16.mxu0 0
  %3315 = vmatpush2.bf16.msra.mxu0 0
  %3316 = vmatprep.subr.bf16.mxu0 0
  %3317 = vmatpush2.bf16.msra.mxu0 0
  %3318 = vmatprep.subr.bf16.mxu0 0
  %3319 = vmatpush2.bf16.msra.mxu0 0
  %3320 = vmatprep.mubr.bf16.mxu0 0
  %3321 = vmatmul.mubr.bf16.gmra.mxu0 %v3254
  %v3322 = vpop.f32.mrf.mxu0
  %v3323 = vadd.f32 %v3134, %v3322
  %v3324 = vpop.f32.mrf.mxu0
  %v3325 = vpop.f32.mrf.mxu0
  %v3326 = vadd.f32 %v3137, %v3325
  %v3327 = vpop.f32.mrf.mxu0
  %3328 = vmatprep.mubr.bf16.mxu0 0
  %3329 = vmatmul.mubr.bf16.gmra.mxu0 %v3256
  %v3330 = vpop.f32.mrf.mxu0
  %v3331 = vadd.f32 %v3142, %v3330
  %v3332 = vpop.f32.mrf.mxu0
  %v3333 = vpop.f32.mrf.mxu0
  %v3334 = vadd.f32 %v3145, %v3333
  %v3335 = vpop.f32.mrf.mxu0
  %3336 = vmatprep.mubr.bf16.mxu0 0
  %3337 = vmatmul.mubr.bf16.gmra.mxu0 %v3258
  %v3338 = vpop.f32.mrf.mxu0
  %v3339 = vadd.f32 %v3150, %v3338
  %v3340 = vpop.f32.mrf.mxu0
  %v3341 = vpop.f32.mrf.mxu0
  %v3342 = vadd.f32 %v3153, %v3341
  %v3343 = vpop.f32.mrf.mxu0
  %3344 = vmatprep.mubr.bf16.mxu0 0
  %3345 = vmatmul.mubr.bf16.gmra.mxu0 %v3260
  %v3346 = vpop.f32.mrf.mxu0
  %v3347 = vadd.f32 %v3158, %v3346
  %v3348 = vpop.f32.mrf.mxu0
  %v3349 = vpop.f32.mrf.mxu0
  %v3350 = vadd.f32 %v3161, %v3349
  %v3351 = vpop.f32.mrf.mxu0
  %3352 = vmatprep.mubr.bf16.mxu0 0
  %3353 = vmatmul.mubr.bf16.gmra.mxu0 %v3262
  %v3354 = vpop.f32.mrf.mxu0
  %v3355 = vadd.f32 %v3166, %v3354
  %v3356 = vpop.f32.mrf.mxu0
  %v3357 = vpop.f32.mrf.mxu0
  %v3358 = vadd.f32 %v3169, %v3357
  %v3359 = vpop.f32.mrf.mxu0
  %3360 = vmatprep.mubr.bf16.mxu0 0
  %3361 = vmatmul.mubr.bf16.gmra.mxu0 %v3264
  %v3362 = vpop.f32.mrf.mxu0
  %v3363 = vadd.f32 %v3174, %v3362
  %v3364 = vpop.f32.mrf.mxu0
  %v3365 = vpop.f32.mrf.mxu0
  %v3366 = vadd.f32 %v3177, %v3365
  %v3367 = vpop.f32.mrf.mxu0
  %3368 = vmatprep.mubr.bf16.mxu0 0
  %3369 = vmatmul.mubr.bf16.gmra.mxu0 %v3266
  %v3370 = vpop.f32.mrf.mxu0
  %v3371 = vadd.f32 %v3182, %v3370
  %v3372 = vpop.f32.mrf.mxu0
  %v3373 = vpop.f32.mrf.mxu0
  %v3374 = vadd.f32 %v3185, %v3373
  %v3375 = vpop.f32.mrf.mxu0
  %3376 = vmatprep.mubr.bf16.mxu0 0
  %3377 = vmatmul.mubr.bf16.gmra.mxu0 %v3268
  %v3378 = vpop.f32.mrf.mxu0
  %v3379 = vadd.f32 %v3190, %v3378
  %v3380 = vpop.f32.mrf.mxu0
  %v3381 = vpop.f32.mrf.mxu0
  %v3382 = vadd.f32 %v3193, %v3381
  %v3383 = vpop.f32.mrf.mxu0
  %3384 = vmatprep.mubr.bf16.mxu0 0
  %3385 = vmatmul.mubr.bf16.gmra.mxu0 %v3270
  %v3386 = vpop.f32.mrf.mxu0
  %v3387 = vadd.f32 %v3198, %v3386
  %v3388 = vpop.f32.mrf.mxu0
  %v3389 = vpop.f32.mrf.mxu0
  %v3390 = vadd.f32 %v3201, %v3389
  %v3391 = vpop.f32.mrf.mxu0
  %3392 = vmatprep.mubr.bf16.mxu0 0
  %3393 = vmatmul.mubr.bf16.gmra.mxu0 %v3272
  %v3394 = vpop.f32.mrf.mxu0
  %v3395 = vadd.f32 %v3206, %v3394
  %v3396 = vpop.f32.mrf.mxu0
  %v3397 = vpop.f32.mrf.mxu0
  %v3398 = vadd.f32 %v3209, %v3397
  %v3399 = vpop.f32.mrf.mxu0
  %3400 = vmatprep.mubr.bf16.mxu0 0
  %3401 = vmatmul.mubr.bf16.gmra.mxu0 %v3274
  %v3402 = vpop.f32.mrf.mxu0
  %v3403 = vadd.f32 %v3214, %v3402
  %v3404 = vpop.f32.mrf.mxu0
  %v3405 = vpop.f32.mrf.mxu0
  %v3406 = vadd.f32 %v3217, %v3405
  %v3407 = vpop.f32.mrf.mxu0
  %3408 = vmatprep.mubr.bf16.mxu0 0
  %3409 = vmatmul.mubr.bf16.gmra.mxu0 %v3276
  %v3410 = vpop.f32.mrf.mxu0
  %v3411 = vadd.f32 %v3222, %v3410
  %v3412 = vpop.f32.mrf.mxu0
  %v3413 = vpop.f32.mrf.mxu0
  %v3414 = vadd.f32 %v3225, %v3413
  %v3415 = vpop.f32.mrf.mxu0
  %3416 = vmatprep.mubr.bf16.mxu0 0
  %3417 = vmatmul.mubr.bf16.gmra.mxu0 %v3278
  %v3418 = vpop.f32.mrf.mxu0
  %v3419 = vadd.f32 %v3230, %v3418
  %v3420 = vpop.f32.mrf.mxu0
  %v3421 = vpop.f32.mrf.mxu0
  %v3422 = vadd.f32 %v3233, %v3421
  %v3423 = vpop.f32.mrf.mxu0
  %3424 = vmatprep.mubr.bf16.mxu0 0
  %3425 = vmatmul.mubr.bf16.gmra.mxu0 %v3280
  %v3426 = vpop.f32.mrf.mxu0
  %v3427 = vadd.f32 %v3238, %v3426
  %v3428 = vpop.f32.mrf.mxu0
  %v3429 = vpop.f32.mrf.mxu0
  %v3430 = vadd.f32 %v3241, %v3429
  %v3431 = vpop.f32.mrf.mxu0
  %3432 = vmatprep.mubr.bf16.mxu0 0
  %3433 = vmatmul.mubr.bf16.gmra.mxu0 %v3283
  %v3434 = vpop.f32.mrf.mxu0
  %v3435 = vadd.f32 %v3246, %v3434
  %v3436 = vpop.f32.mrf.mxu0
  %v3437 = vpop.f32.mrf.mxu0
  %v3438 = vpop.f32.mrf.mxu0
  %3439 = vdwg.mxu0
  %v3440 = vld [vmem:[#allocation3 + $0x4] sm:$0xe]
  %v3441 = vld [vmem:[#allocation3 + $0x8] sm:$0xf]
  %v3442 = vld [vmem:[#allocation3 + $0xc] sm:$0xf]
  %v3443 = vld [vmem:[#allocation3 + $0x10] sm:$0xf]
  %v3444 = vld [vmem:[#allocation3 + $0x14] sm:$0xf]
  %v3445 = vld [vmem:[#allocation3 + $0x18] sm:$0xf]
  %v3446 = vld [vmem:[#allocation3 + $0x1c] sm:$0xf]
  %v3447 = vld [vmem:[#allocation3 + $0x20] sm:$0xf]
  %v3448 = vld [vmem:[#allocation3 + $0x24] sm:$0xf]
  %v3449 = vld [vmem:[#allocation3 + $0x28] sm:$0xf]
  %v3450 = vld [vmem:[#allocation3 + $0x2c] sm:$0xf]
  %v3451 = vld [vmem:[#allocation3 + $0x30] sm:$0xf]
  %v3452 = vld [vmem:[#allocation3 + $0x34] sm:$0xf]
  %v3453 = vld [vmem:[#allocation3 + $0x38] sm:$0xf]
  %v3454 = vld [vmem:[#allocation3 + $0x3c] sm:$0xf]
  %v3455 = vld [vmem:[#allocation3 + $0x40] sm:$0xf]
  %v3456 = vld [vmem:[#allocation3 + $0x44] sm:$0xf]
  %v3457 = vld [vmem:[#allocation3 + $0x48] sm:$0xf]
  %v3458 = vld [vmem:[#allocation3 + $0x4c] sm:$0xf]
  %v3459 = vld [vmem:[#allocation3 + $0x50] sm:$0xf]
  %v3460 = vld [vmem:[#allocation3 + $0x54] sm:$0xf]
  %v3461 = vld [vmem:[#allocation3 + $0x58] sm:$0xf]
  %v3462 = vld [vmem:[#allocation3 + $0x5c] sm:$0xf]
  %v3463 = vld [vmem:[#allocation3 + $0x60] sm:$0xf]
  %v3464 = vld [vmem:[#allocation3 + $0x64] sm:$0xf]
  %v3465 = vld [vmem:[#allocation3 + $0x68] sm:$0xf]
  %v3466 = vld [vmem:[#allocation3 + $0x6c] sm:$0xf]
  %v3467 = vld [vmem:[#allocation3 + $0x70] sm:$0xf]
  %v3468 = vld [vmem:[#allocation3 + $0x74] sm:$0x3]
  %s3469 = scalar_lea.vmem %s2, 8
  %v3470 = vld [vmem:[%s3469] sm:$0xf]
  %v3500 = vunpack.c.l.b16 %v3440
  %v3501 = vunpack.c.l.b16 %v3441
  %v3502 = vunpack.c.l.b16 %v3442
  %v3503 = vunpack.c.l.b16 %v3443
  %v3504 = vunpack.c.l.b16 %v3444
  %v3505 = vunpack.c.l.b16 %v3445
  %v3506 = vunpack.c.l.b16 %v3446
  %v3507 = vunpack.c.l.b16 %v3447
  %v3508 = vunpack.c.l.b16 %v3448
  %v3509 = vunpack.c.l.b16 %v3449
  %v3510 = vunpack.c.l.b16 %v3450
  %v3511 = vunpack.c.l.b16 %v3451
  %v3512 = vunpack.c.l.b16 %v3452
  %v3513 = vunpack.c.l.b16 %v3453
  %v3514 = vunpack.c.l.b16 %v3454
  %v3515 = vunpack.c.l.b16 %v3455
  %v3516 = vunpack.c.l.b16 %v3456
  %v3517 = vunpack.c.l.b16 %v3457
  %v3518 = vunpack.c.l.b16 %v3458
  %v3519 = vunpack.c.l.b16 %v3459
  %v3520 = vunpack.c.l.b16 %v3460
  %v3521 = vunpack.c.l.b16 %v3461
  %v3522 = vunpack.c.l.b16 %v3462
  %v3523 = vunpack.c.l.b16 %v3463
  %v3524 = vunpack.c.l.b16 %v3464
  %v3525 = vunpack.c.l.b16 %v3465
  %v3526 = vunpack.c.l.b16 %v3466
  %v3527 = vunpack.c.l.b16 %v3467
  %v3528 = vunpack.c.l.b16 %v3468
  %v3529 = vpack.c.b16 %v3501, %v3500
  %v3530 = vpack.c.b16 %v3503, %v3502
  %v3531 = vpack.c.b16 %v3505, %v3504
  %v3532 = vpack.c.b16 %v3507, %v3506
  %v3533 = vpack.c.b16 %v3509, %v3508
  %v3534 = vpack.c.b16 %v3511, %v3510
  %v3535 = vpack.c.b16 %v3513, %v3512
  %v3536 = vpack.c.b16 %v3515, %v3514
  %v3537 = vpack.c.b16 %v3517, %v3516
  %v3538 = vpack.c.b16 %v3519, %v3518
  %v3539 = vpack.c.b16 %v3521, %v3520
  %v3540 = vpack.c.b16 %v3523, %v3522
  %v3541 = vpack.c.b16 %v3525, %v3524
  %v3542 = vpack.c.b16 %v3527, %v3526
  %v3543 = vpack.c.b16 %v3528, %v3528
  %v3544 = vrot.slane %v3529, 1
  %v3545 = vrot.slane %v3530, 1
  %v3546 = vsel %vm1721, %v3544, %v3545
  %v3547 = vrot.slane %v3531, 1
  %v3548 = vsel %vm1721, %v3545, %v3547
  %v3549 = vrot.slane %v3532, 1
  %v3550 = vsel %vm1721, %v3547, %v3549
  %v3551 = vrot.slane %v3533, 1
  %v3552 = vsel %vm1721, %v3549, %v3551
  %v3553 = vrot.slane %v3534, 1
  %v3554 = vsel %vm1721, %v3551, %v3553
  %v3555 = vrot.slane %v3535, 1
  %v3556 = vsel %vm1721, %v3553, %v3555
  %v3557 = vrot.slane %v3536, 1
  %v3558 = vsel %vm1721, %v3555, %v3557
  %v3559 = vrot.slane %v3537, 1
  %v3560 = vsel %vm1721, %v3557, %v3559
  %v3561 = vrot.slane %v3538, 1
  %v3562 = vsel %vm1721, %v3559, %v3561
  %v3563 = vrot.slane %v3539, 1
  %v3564 = vsel %vm1721, %v3561, %v3563
  %v3565 = vrot.slane %v3540, 1
  %v3566 = vsel %vm1721, %v3563, %v3565
  %v3567 = vrot.slane %v3541, 1
  %v3568 = vsel %vm1721, %v3565, %v3567
  %v3569 = vrot.slane %v3542, 1
  %v3570 = vsel %vm1721, %v3567, %v3569
  %v3571 = vrot.slane %v3543, 1
  %v3572 = vsel %vm1721, %v3569, %v3571
  %v3574 = vsel %vm3049, %v3546, 0
  %v3577 = vsel %vm3049, %v3548, 0
  %v3580 = vsel %vm3049, %v3550, 0
  %v3583 = vsel %vm3049, %v3552, 0
  %v3586 = vsel %vm3049, %v3554, 0
  %v3589 = vsel %vm3049, %v3556, 0
  %v3592 = vsel %vm3049, %v3558, 0
  %v3595 = vsel %vm3049, %v3560, 0
  %v3598 = vsel %vm3049, %v3562, 0
  %v3601 = vsel %vm3049, %v3564, 0
  %v3604 = vsel %vm3049, %v3566, 0
  %v3607 = vsel %vm3049, %v3568, 0
  %v3610 = vsel %vm3049, %v3570, 0
  %v3613 = vsel %vm3049, %v3572, 0
  %v3616 = vsel %vm3049, %v3571, 0
  %v3619 = vsel %vm3095, %v3470, 0
  %3621 = vmatprep.subr.bf16.mxu0 0
  %3622 = vmatpush1.bf16.msra.mxu0 0
  %3623 = vmatprep.subr.bf16.mxu0 0
  %3624 = vmatpush1.bf16.msra.mxu0 0
  %3625 = vmatprep.subr.bf16.mxu0 0
  %3626 = vmatpush1.bf16.msra.mxu0 0
  %3627 = vmatprep.subr.bf16.mxu0 0
  %3628 = vmatpush1.bf16.msra.mxu0 0
  %3629 = vmatprep.subr.bf16.mxu0 0
  %3630 = vmatpush1.bf16.msra.mxu0 0
  %3631 = vmatprep.subr.bf16.mxu0 0
  %3632 = vmatpush1.bf16.msra.mxu0 0
  %3633 = vmatprep.subr.bf16.mxu0 0
  %3634 = vmatpush1.bf16.msra.mxu0 0
  %3635 = vmatprep.subr.bf16.mxu0 0
  %3636 = vmatpush1.bf16.msra.mxu0 %v3619
  %3637 = vmatprep.subr.bf16.mxu0 0
  %3638 = vmatpush2.bf16.msra.mxu0 0
  %3639 = vmatprep.subr.bf16.mxu0 0
  %3640 = vmatpush2.bf16.msra.mxu0 0
  %3641 = vmatprep.subr.bf16.mxu0 0
  %3642 = vmatpush2.bf16.msra.mxu0 0
  %3643 = vmatprep.subr.bf16.mxu0 0
  %3644 = vmatpush2.bf16.msra.mxu0 0
  %3645 = vmatprep.subr.bf16.mxu0 0
  %3646 = vmatpush2.bf16.msra.mxu0 0
  %3647 = vmatprep.subr.bf16.mxu0 0
  %3648 = vmatpush2.bf16.msra.mxu0 0
  %3649 = vmatprep.subr.bf16.mxu0 0
  %3650 = vmatpush2.bf16.msra.mxu0 0
  %3651 = vmatprep.subr.bf16.mxu0 0
  %3652 = vmatpush2.bf16.msra.mxu0 0
  %3653 = vmatprep.mubr.bf16.mxu0 0
  %3654 = vmatmul.mubr.bf16.gmra.mxu0 %v3574
  %v3655 = vpop.f32.mrf.mxu0
  %v3656 = vadd.f32 0.0, %v3655
  %v3657 = vpop.f32.mrf.mxu0
  %v3658 = vpop.f32.mrf.mxu0
  %v3659 = vadd.f32 0.0, %v3658
  %v3660 = vpop.f32.mrf.mxu0
  %3661 = vmatprep.mubr.bf16.mxu0 0
  %3662 = vmatmul.mubr.bf16.gmra.mxu0 %v3577
  %v3663 = vpop.f32.mrf.mxu0
  %v3664 = vadd.f32 0.0, %v3663
  %v3665 = vpop.f32.mrf.mxu0
  %v3666 = vpop.f32.mrf.mxu0
  %v3667 = vadd.f32 0.0, %v3666
  %v3668 = vpop.f32.mrf.mxu0
  %3669 = vmatprep.mubr.bf16.mxu0 0
  %3670 = vmatmul.mubr.bf16.gmra.mxu0 %v3580
  %v3671 = vpop.f32.mrf.mxu0
  %v3672 = vadd.f32 0.0, %v3671
  %v3673 = vpop.f32.mrf.mxu0
  %v3674 = vpop.f32.mrf.mxu0
  %v3675 = vadd.f32 0.0, %v3674
  %v3676 = vpop.f32.mrf.mxu0
  %3677 = vmatprep.mubr.bf16.mxu0 0
  %3678 = vmatmul.mubr.bf16.gmra.mxu0 %v3583
  %v3679 = vpop.f32.mrf.mxu0
  %v3680 = vadd.f32 0.0, %v3679
  %v3681 = vpop.f32.mrf.mxu0
  %v3682 = vpop.f32.mrf.mxu0
  %v3683 = vadd.f32 0.0, %v3682
  %v3684 = vpop.f32.mrf.mxu0
  %3685 = vmatprep.mubr.bf16.mxu0 0
  %3686 = vmatmul.mubr.bf16.gmra.mxu0 %v3586
  %v3687 = vpop.f32.mrf.mxu0
  %v3688 = vadd.f32 0.0, %v3687
  %v3689 = vpop.f32.mrf.mxu0
  %v3690 = vpop.f32.mrf.mxu0
  %v3691 = vadd.f32 0.0, %v3690
  %v3692 = vpop.f32.mrf.mxu0
  %3693 = vmatprep.mubr.bf16.mxu0 0
  %3694 = vmatmul.mubr.bf16.gmra.mxu0 %v3589
  %v3695 = vpop.f32.mrf.mxu0
  %v3696 = vadd.f32 0.0, %v3695
  %v3697 = vpop.f32.mrf.mxu0
  %v3698 = vpop.f32.mrf.mxu0
  %v3699 = vadd.f32 0.0, %v3698
  %v3700 = vpop.f32.mrf.mxu0
  %3701 = vmatprep.mubr.bf16.mxu0 0
  %3702 = vmatmul.mubr.bf16.gmra.mxu0 %v3592
  %v3703 = vpop.f32.mrf.mxu0
  %v3704 = vadd.f32 0.0, %v3703
  %v3705 = vpop.f32.mrf.mxu0
  %v3706 = vpop.f32.mrf.mxu0
  %v3707 = vadd.f32 0.0, %v3706
  %v3708 = vpop.f32.mrf.mxu0
  %3709 = vmatprep.mubr.bf16.mxu0 0
  %3710 = vmatmul.mubr.bf16.gmra.mxu0 %v3595
  %v3711 = vpop.f32.mrf.mxu0
  %v3712 = vadd.f32 0.0, %v3711
  %v3713 = vpop.f32.mrf.mxu0
  %v3714 = vpop.f32.mrf.mxu0
  %v3715 = vadd.f32 0.0, %v3714
  %v3716 = vpop.f32.mrf.mxu0
  %3717 = vmatprep.mubr.bf16.mxu0 0
  %3718 = vmatmul.mubr.bf16.gmra.mxu0 %v3598
  %v3719 = vpop.f32.mrf.mxu0
  %v3720 = vadd.f32 0.0, %v3719
  %v3721 = vpop.f32.mrf.mxu0
  %v3722 = vpop.f32.mrf.mxu0
  %v3723 = vadd.f32 0.0, %v3722
  %v3724 = vpop.f32.mrf.mxu0
  %3725 = vmatprep.mubr.bf16.mxu0 0
  %3726 = vmatmul.mubr.bf16.gmra.mxu0 %v3601
  %v3727 = vpop.f32.mrf.mxu0
  %v3728 = vadd.f32 0.0, %v3727
  %v3729 = vpop.f32.mrf.mxu0
  %v3730 = vpop.f32.mrf.mxu0
  %v3731 = vadd.f32 0.0, %v3730
  %v3732 = vpop.f32.mrf.mxu0
  %3733 = vmatprep.mubr.bf16.mxu0 0
  %3734 = vmatmul.mubr.bf16.gmra.mxu0 %v3604
  %v3735 = vpop.f32.mrf.mxu0
  %v3736 = vadd.f32 0.0, %v3735
  %v3737 = vpop.f32.mrf.mxu0
  %v3738 = vpop.f32.mrf.mxu0
  %v3739 = vadd.f32 0.0, %v3738
  %v3740 = vpop.f32.mrf.mxu0
  %3741 = vmatprep.mubr.bf16.mxu0 0
  %3742 = vmatmul.mubr.bf16.gmra.mxu0 %v3607
  %v3743 = vpop.f32.mrf.mxu0
  %v3744 = vadd.f32 0.0, %v3743
  %v3745 = vpop.f32.mrf.mxu0
  %v3746 = vpop.f32.mrf.mxu0
  %v3747 = vadd.f32 0.0, %v3746
  %v3748 = vpop.f32.mrf.mxu0
  %3749 = vmatprep.mubr.bf16.mxu0 0
  %3750 = vmatmul.mubr.bf16.gmra.mxu0 %v3610
  %v3751 = vpop.f32.mrf.mxu0
  %v3752 = vadd.f32 0.0, %v3751
  %v3753 = vpop.f32.mrf.mxu0
  %v3754 = vpop.f32.mrf.mxu0
  %v3755 = vadd.f32 0.0, %v3754
  %v3756 = vpop.f32.mrf.mxu0
  %3757 = vmatprep.mubr.bf16.mxu0 0
  %3758 = vmatmul.mubr.bf16.gmra.mxu0 %v3613
  %v3759 = vpop.f32.mrf.mxu0
  %v3760 = vadd.f32 0.0, %v3759
  %v3761 = vpop.f32.mrf.mxu0
  %v3762 = vpop.f32.mrf.mxu0
  %v3763 = vadd.f32 0.0, %v3762
  %v3764 = vpop.f32.mrf.mxu0
  %3765 = vmatprep.mubr.bf16.mxu0 0
  %3766 = vmatmul.mubr.bf16.gmra.mxu0 %v3616
  %v3767 = vpop.f32.mrf.mxu0
  %v3768 = vadd.f32 0.0, %v3767
  %v3769 = vpop.f32.mrf.mxu0
  %v3770 = vpop.f32.mrf.mxu0
  %v3771 = vpop.f32.mrf.mxu0
  %3772 = vdwg.mxu0
  %v3773 = vadd.f32 %v3323, %v3656
  %v3774 = vadd.f32 %v3326, %v3659
  %v3775 = vadd.f32 %v3331, %v3664
  %v3776 = vadd.f32 %v3334, %v3667
  %v3777 = vadd.f32 %v3339, %v3672
  %v3778 = vadd.f32 %v3342, %v3675
  %v3779 = vadd.f32 %v3347, %v3680
  %v3780 = vadd.f32 %v3350, %v3683
  %v3781 = vadd.f32 %v3355, %v3688
  %v3782 = vadd.f32 %v3358, %v3691
  %v3783 = vadd.f32 %v3363, %v3696
  %v3784 = vadd.f32 %v3366, %v3699
  %v3785 = vadd.f32 %v3371, %v3704
  %v3786 = vadd.f32 %v3374, %v3707
  %v3787 = vadd.f32 %v3379, %v3712
  %v3788 = vadd.f32 %v3382, %v3715
  %v3789 = vadd.f32 %v3387, %v3720
  %v3790 = vadd.f32 %v3390, %v3723
  %v3791 = vadd.f32 %v3395, %v3728
  %v3792 = vadd.f32 %v3398, %v3731
  %v3793 = vadd.f32 %v3403, %v3736
  %v3794 = vadd.f32 %v3406, %v3739
  %v3795 = vadd.f32 %v3411, %v3744
  %v3796 = vadd.f32 %v3414, %v3747
  %v3797 = vadd.f32 %v3419, %v3752
  %v3798 = vadd.f32 %v3422, %v3755
  %v3799 = vadd.f32 %v3427, %v3760
  %v3800 = vadd.f32 %v3430, %v3763
  %v3801 = vadd.f32 %v3435, %v3768
  %v3802 = vld [vmem:[#allocation3 + $0x74] sm:$0x7]
  %s3803 = scalar_lea.vmem %s2, 12
  %v3804 = vld [vmem:[%s3803] sm:$0xf]
  %v3806 = vunpack.c.l.b16 %v3802
  %v3807 = vpack.c.b16 %v3806, %v3806
  %v3809 = vshrl.u32 %v3529, 16
  %v3811 = vrot.slane %v3809, 1
  %v3812 = vshll.u32 %v3529, 16
  %v3814 = vrot.slane %v3812, 2
  %v3815 = vor.u32 %v3811, %v3814
  %v3817 = vshrl.u32 %v3530, 16
  %v3819 = vrot.slane %v3817, 1
  %v3820 = vshll.u32 %v3530, 16
  %v3822 = vrot.slane %v3820, 2
  %v3823 = vor.u32 %v3819, %v3822
  %v3824 = vsel %vm2005, %v3815, %v3823
  %v3826 = vshrl.u32 %v3531, 16
  %v3828 = vrot.slane %v3826, 1
  %v3829 = vshll.u32 %v3531, 16
  %v3831 = vrot.slane %v3829, 2
  %v3832 = vor.u32 %v3828, %v3831
  %v3833 = vsel %vm2005, %v3823, %v3832
  %v3835 = vshrl.u32 %v3532, 16
  %v3837 = vrot.slane %v3835, 1
  %v3838 = vshll.u32 %v3532, 16
  %v3840 = vrot.slane %v3838, 2
  %v3841 = vor.u32 %v3837, %v3840
  %v3842 = vsel %vm2005, %v3832, %v3841
  %v3844 = vshrl.u32 %v3533, 16
  %v3846 = vrot.slane %v3844, 1
  %v3847 = vshll.u32 %v3533, 16
  %v3849 = vrot.slane %v3847, 2
  %v3850 = vor.u32 %v3846, %v3849
  %v3851 = vsel %vm2005, %v3841, %v3850
  %v3853 = vshrl.u32 %v3534, 16
  %v3855 = vrot.slane %v3853, 1
  %v3856 = vshll.u32 %v3534, 16
  %v3858 = vrot.slane %v3856, 2
  %v3859 = vor.u32 %v3855, %v3858
  %v3860 = vsel %vm2005, %v3850, %v3859
  %v3862 = vshrl.u32 %v3535, 16
  %v3864 = vrot.slane %v3862, 1
  %v3865 = vshll.u32 %v3535, 16
  %v3867 = vrot.slane %v3865, 2
  %v3868 = vor.u32 %v3864, %v3867
  %v3869 = vsel %vm2005, %v3859, %v3868
  %v3871 = vshrl.u32 %v3536, 16
  %v3873 = vrot.slane %v3871, 1
  %v3874 = vshll.u32 %v3536, 16
  %v3876 = vrot.slane %v3874, 2
  %v3877 = vor.u32 %v3873, %v3876
  %v3878 = vsel %vm2005, %v3868, %v3877
  %v3880 = vshrl.u32 %v3537, 16
  %v3882 = vrot.slane %v3880, 1
  %v3883 = vshll.u32 %v3537, 16
  %v3885 = vrot.slane %v3883, 2
  %v3886 = vor.u32 %v3882, %v3885
  %v3887 = vsel %vm2005, %v3877, %v3886
  %v3889 = vshrl.u32 %v3538, 16
  %v3891 = vrot.slane %v3889, 1
  %v3892 = vshll.u32 %v3538, 16
  %v3894 = vrot.slane %v3892, 2
  %v3895 = vor.u32 %v3891, %v3894
  %v3896 = vsel %vm2005, %v3886, %v3895
  %v3898 = vshrl.u32 %v3539, 16
  %v3900 = vrot.slane %v3898, 1
  %v3901 = vshll.u32 %v3539, 16
  %v3903 = vrot.slane %v3901, 2
  %v3904 = vor.u32 %v3900, %v3903
  %v3905 = vsel %vm2005, %v3895, %v3904
  %v3907 = vshrl.u32 %v3540, 16
  %v3909 = vrot.slane %v3907, 1
  %v3910 = vshll.u32 %v3540, 16
  %v3912 = vrot.slane %v3910, 2
  %v3913 = vor.u32 %v3909, %v3912
  %v3914 = vsel %vm2005, %v3904, %v3913
  %v3916 = vshrl.u32 %v3541, 16
  %v3918 = vrot.slane %v3916, 1
  %v3919 = vshll.u32 %v3541, 16
  %v3921 = vrot.slane %v3919, 2
  %v3922 = vor.u32 %v3918, %v3921
  %v3923 = vsel %vm2005, %v3913, %v3922
  %v3925 = vshrl.u32 %v3542, 16
  %v3927 = vrot.slane %v3925, 1
  %v3928 = vshll.u32 %v3542, 16
  %v3930 = vrot.slane %v3928, 2
  %v3931 = vor.u32 %v3927, %v3930
  %v3932 = vsel %vm2005, %v3922, %v3931
  %v3934 = vshrl.u32 %v3807, 16
  %v3936 = vrot.slane %v3934, 1
  %v3937 = vshll.u32 %v3807, 16
  %v3939 = vrot.slane %v3937, 2
  %v3940 = vor.u32 %v3936, %v3939
  %v3941 = vsel %vm2005, %v3931, %v3940
  %v3943 = vsel %vm3049, %v3824, 0
  %v3946 = vsel %vm3049, %v3833, 0
  %v3949 = vsel %vm3049, %v3842, 0
  %v3952 = vsel %vm3049, %v3851, 0
  %v3955 = vsel %vm3049, %v3860, 0
  %v3958 = vsel %vm3049, %v3869, 0
  %v3961 = vsel %vm3049, %v3878, 0
  %v3964 = vsel %vm3049, %v3887, 0
  %v3967 = vsel %vm3049, %v3896, 0
  %v3970 = vsel %vm3049, %v3905, 0
  %v3973 = vsel %vm3049, %v3914, 0
  %v3976 = vsel %vm3049, %v3923, 0
  %v3979 = vsel %vm3049, %v3932, 0
  %v3982 = vsel %vm3049, %v3941, 0
  %v3985 = vsel %vm3049, %v3940, 0
  %v3988 = vsel %vm3095, %v3804, 0
  %3990 = vmatprep.subr.bf16.mxu0 0
  %3991 = vmatpush1.bf16.msra.mxu0 0
  %3992 = vmatprep.subr.bf16.mxu0 0
  %3993 = vmatpush1.bf16.msra.mxu0 0
  %3994 = vmatprep.subr.bf16.mxu0 0
  %3995 = vmatpush1.bf16.msra.mxu0 0
  %3996 = vmatprep.subr.bf16.mxu0 0
  %3997 = vmatpush1.bf16.msra.mxu0 0
  %3998 = vmatprep.subr.bf16.mxu0 0
  %3999 = vmatpush1.bf16.msra.mxu0 0
  %4000 = vmatprep.subr.bf16.mxu0 0
  %4001 = vmatpush1.bf16.msra.mxu0 0
  %4002 = vmatprep.subr.bf16.mxu0 0
  %4003 = vmatpush1.bf16.msra.mxu0 0
  %4004 = vmatprep.subr.bf16.mxu0 0
  %4005 = vmatpush1.bf16.msra.mxu0 %v3988
  %4006 = vmatprep.subr.bf16.mxu0 0
  %4007 = vmatpush2.bf16.msra.mxu0 0
  %4008 = vmatprep.subr.bf16.mxu0 0
  %4009 = vmatpush2.bf16.msra.mxu0 0
  %4010 = vmatprep.subr.bf16.mxu0 0
  %4011 = vmatpush2.bf16.msra.mxu0 0
  %4012 = vmatprep.subr.bf16.mxu0 0
  %4013 = vmatpush2.bf16.msra.mxu0 0
  %4014 = vmatprep.subr.bf16.mxu0 0
  %4015 = vmatpush2.bf16.msra.mxu0 0
  %4016 = vmatprep.subr.bf16.mxu0 0
  %4017 = vmatpush2.bf16.msra.mxu0 0
  %4018 = vmatprep.subr.bf16.mxu0 0
  %4019 = vmatpush2.bf16.msra.mxu0 0
  %4020 = vmatprep.subr.bf16.mxu0 0
  %4021 = vmatpush2.bf16.msra.mxu0 0
  %4022 = vmatprep.mubr.bf16.mxu0 0
  %4023 = vmatmul.mubr.bf16.gmra.mxu0 %v3943
  %v4024 = vpop.f32.mrf.mxu0
  %v4025 = vadd.f32 0.0, %v4024
  %v4026 = vpop.f32.mrf.mxu0
  %v4027 = vpop.f32.mrf.mxu0
  %v4028 = vadd.f32 0.0, %v4027
  %v4029 = vpop.f32.mrf.mxu0
  %4030 = vmatprep.mubr.bf16.mxu0 0
  %4031 = vmatmul.mubr.bf16.gmra.mxu0 %v3946
  %v4032 = vpop.f32.mrf.mxu0
  %v4033 = vadd.f32 0.0, %v4032
  %v4034 = vpop.f32.mrf.mxu0
  %v4035 = vpop.f32.mrf.mxu0
  %v4036 = vadd.f32 0.0, %v4035
  %v4037 = vpop.f32.mrf.mxu0
  %4038 = vmatprep.mubr.bf16.mxu0 0
  %4039 = vmatmul.mubr.bf16.gmra.mxu0 %v3949
  %v4040 = vpop.f32.mrf.mxu0
  %v4041 = vadd.f32 0.0, %v4040
  %v4042 = vpop.f32.mrf.mxu0
  %v4043 = vpop.f32.mrf.mxu0
  %v4044 = vadd.f32 0.0, %v4043
  %v4045 = vpop.f32.mrf.mxu0
  %4046 = vmatprep.mubr.bf16.mxu0 0
  %4047 = vmatmul.mubr.bf16.gmra.mxu0 %v3952
  %v4048 = vpop.f32.mrf.mxu0
  %v4049 = vadd.f32 0.0, %v4048
  %v4050 = vpop.f32.mrf.mxu0
  %v4051 = vpop.f32.mrf.mxu0
  %v4052 = vadd.f32 0.0, %v4051
  %v4053 = vpop.f32.mrf.mxu0
  %4054 = vmatprep.mubr.bf16.mxu0 0
  %4055 = vmatmul.mubr.bf16.gmra.mxu0 %v3955
  %v4056 = vpop.f32.mrf.mxu0
  %v4057 = vadd.f32 0.0, %v4056
  %v4058 = vpop.f32.mrf.mxu0
  %v4059 = vpop.f32.mrf.mxu0
  %v4060 = vadd.f32 0.0, %v4059
  %v4061 = vpop.f32.mrf.mxu0
  %4062 = vmatprep.mubr.bf16.mxu0 0
  %4063 = vmatmul.mubr.bf16.gmra.mxu0 %v3958
  %v4064 = vpop.f32.mrf.mxu0
  %v4065 = vadd.f32 0.0, %v4064
  %v4066 = vpop.f32.mrf.mxu0
  %v4067 = vpop.f32.mrf.mxu0
  %v4068 = vadd.f32 0.0, %v4067
  %v4069 = vpop.f32.mrf.mxu0
  %4070 = vmatprep.mubr.bf16.mxu0 0
  %4071 = vmatmul.mubr.bf16.gmra.mxu0 %v3961
  %v4072 = vpop.f32.mrf.mxu0
  %v4073 = vadd.f32 0.0, %v4072
  %v4074 = vpop.f32.mrf.mxu0
  %v4075 = vpop.f32.mrf.mxu0
  %v4076 = vadd.f32 0.0, %v4075
  %v4077 = vpop.f32.mrf.mxu0
  %4078 = vmatprep.mubr.bf16.mxu0 0
  %4079 = vmatmul.mubr.bf16.gmra.mxu0 %v3964
  %v4080 = vpop.f32.mrf.mxu0
  %v4081 = vadd.f32 0.0, %v4080
  %v4082 = vpop.f32.mrf.mxu0
  %v4083 = vpop.f32.mrf.mxu0
  %v4084 = vadd.f32 0.0, %v4083
  %v4085 = vpop.f32.mrf.mxu0
  %4086 = vmatprep.mubr.bf16.mxu0 0
  %4087 = vmatmul.mubr.bf16.gmra.mxu0 %v3967
  %v4088 = vpop.f32.mrf.mxu0
  %v4089 = vadd.f32 0.0, %v4088
  %v4090 = vpop.f32.mrf.mxu0
  %v4091 = vpop.f32.mrf.mxu0
  %v4092 = vadd.f32 0.0, %v4091
  %v4093 = vpop.f32.mrf.mxu0
  %4094 = vmatprep.mubr.bf16.mxu0 0
  %4095 = vmatmul.mubr.bf16.gmra.mxu0 %v3970
  %v4096 = vpop.f32.mrf.mxu0
  %v4097 = vadd.f32 0.0, %v4096
  %v4098 = vpop.f32.mrf.mxu0
  %v4099 = vpop.f32.mrf.mxu0
  %v4100 = vadd.f32 0.0, %v4099
  %v4101 = vpop.f32.mrf.mxu0
  %4102 = vmatprep.mubr.bf16.mxu0 0
  %4103 = vmatmul.mubr.bf16.gmra.mxu0 %v3973
  %v4104 = vpop.f32.mrf.mxu0
  %v4105 = vadd.f32 0.0, %v4104
  %v4106 = vpop.f32.mrf.mxu0
  %v4107 = vpop.f32.mrf.mxu0
  %v4108 = vadd.f32 0.0, %v4107
  %v4109 = vpop.f32.mrf.mxu0
  %4110 = vmatprep.mubr.bf16.mxu0 0
  %4111 = vmatmul.mubr.bf16.gmra.mxu0 %v3976
  %v4112 = vpop.f32.mrf.mxu0
  %v4113 = vadd.f32 0.0, %v4112
  %v4114 = vpop.f32.mrf.mxu0
  %v4115 = vpop.f32.mrf.mxu0
  %v4116 = vadd.f32 0.0, %v4115
  %v4117 = vpop.f32.mrf.mxu0
  %4118 = vmatprep.mubr.bf16.mxu0 0
  %4119 = vmatmul.mubr.bf16.gmra.mxu0 %v3979
  %v4120 = vpop.f32.mrf.mxu0
  %v4121 = vadd.f32 0.0, %v4120
  %v4122 = vpop.f32.mrf.mxu0
  %v4123 = vpop.f32.mrf.mxu0
  %v4124 = vadd.f32 0.0, %v4123
  %v4125 = vpop.f32.mrf.mxu0
  %4126 = vmatprep.mubr.bf16.mxu0 0
  %4127 = vmatmul.mubr.bf16.gmra.mxu0 %v3982
  %v4128 = vpop.f32.mrf.mxu0
  %v4129 = vadd.f32 0.0, %v4128
  %v4130 = vpop.f32.mrf.mxu0
  %v4131 = vpop.f32.mrf.mxu0
  %v4132 = vadd.f32 0.0, %v4131
  %v4133 = vpop.f32.mrf.mxu0
  %4134 = vmatprep.mubr.bf16.mxu0 0
  %4135 = vmatmul.mubr.bf16.gmra.mxu0 %v3985
  %v4136 = vpop.f32.mrf.mxu0
  %v4137 = vadd.f32 0.0, %v4136
  %v4138 = vpop.f32.mrf.mxu0
  %v4139 = vpop.f32.mrf.mxu0
  %v4140 = vpop.f32.mrf.mxu0
  %4141 = vdwg.mxu0
  %v4142 = vadd.f32 %v3773, %v4025
  %v4143 = vadd.f32 %v3774, %v4028
  %v4144 = vadd.f32 %v3775, %v4033
  %v4145 = vadd.f32 %v3776, %v4036
  %v4146 = vadd.f32 %v3777, %v4041
  %v4147 = vadd.f32 %v3778, %v4044
  %v4148 = vadd.f32 %v3779, %v4049
  %v4149 = vadd.f32 %v3780, %v4052
  %v4150 = vadd.f32 %v3781, %v4057
  %v4151 = vadd.f32 %v3782, %v4060
  %v4152 = vadd.f32 %v3783, %v4065
  %v4153 = vadd.f32 %v3784, %v4068
  %v4154 = vadd.f32 %v3785, %v4073
  %v4155 = vadd.f32 %v3786, %v4076
  %v4156 = vadd.f32 %v3787, %v4081
  %v4157 = vadd.f32 %v3788, %v4084
  %v4158 = vadd.f32 %v3789, %v4089
  %v4159 = vadd.f32 %v3790, %v4092
  %v4160 = vadd.f32 %v3791, %v4097
  %v4161 = vadd.f32 %v3792, %v4100
  %v4162 = vadd.f32 %v3793, %v4105
  %v4163 = vadd.f32 %v3794, %v4108
  %v4164 = vadd.f32 %v3795, %v4113
  %v4165 = vadd.f32 %v3796, %v4116
  %v4166 = vadd.f32 %v3797, %v4121
  %v4167 = vadd.f32 %v3798, %v4124
  %v4168 = vadd.f32 %v3799, %v4129
  %v4169 = vadd.f32 %v3800, %v4132
  %v4170 = vadd.f32 %v3801, %v4137
  %v4171 = vsel %vm2795, 1, 0
  %v4172 = vsel %vm2796, 1, 0
  %v4173 = vsel %vm2797, 1, 0
  %v4174 = vsel %vm2798, 1, 0
  %v4175 = vsel %vm2799, 1, 0
  %v4176 = vsel %vm2800, 1, 0
  %v4177 = vsel %vm2801, 1, 0
  %v4178 = vsel %vm2802, 1, 0
  %v4179 = vsel %vm2803, 1, 0
  %v4180 = vsel %vm2804, 1, 0
  %v4181 = vsel %vm2805, 1, 0
  %v4182 = vsel %vm2806, 1, 0
  %v4183 = vsel %vm2807, 1, 0
  %v4184 = vsel %vm2808, 1, 0
  %v4185 = vsel %vm2809, 1, 0
  %v4186 = vsel %vm2810, 1, 0
  %v4187 = vsel %vm2811, 1, 0
  %v4188 = vsel %vm2812, 1, 0
  %v4189 = vsel %vm2813, 1, 0
  %v4190 = vsel %vm2814, 1, 0
  %v4191 = vsel %vm2815, 1, 0
  %v4192 = vsel %vm2816, 1, 0
  %v4193 = vsel %vm2817, 1, 0
  %v4194 = vsel %vm2818, 1, 0
  %v4195 = vsel %vm2819, 1, 0
  %v4196 = vsel %vm2820, 1, 0
  %v4197 = vsel %vm2821, 1, 0
  %v4198 = vsel %vm2822, 1, 0
  %v4199 = vsel %vm2823, 1, 0
  %vm4200 = vcmp.eq.s32.totalorder %v4171, 1
  %vm4201 = vcmp.eq.s32.totalorder %v4172, 1
  %vm4202 = vcmp.eq.s32.totalorder %v4173, 1
  %vm4203 = vcmp.eq.s32.totalorder %v4174, 1
  %vm4204 = vcmp.eq.s32.totalorder %v4175, 1
  %vm4205 = vcmp.eq.s32.totalorder %v4176, 1
  %vm4206 = vcmp.eq.s32.totalorder %v4177, 1
  %vm4207 = vcmp.eq.s32.totalorder %v4178, 1
  %vm4208 = vcmp.eq.s32.totalorder %v4179, 1
  %vm4209 = vcmp.eq.s32.totalorder %v4180, 1
  %vm4210 = vcmp.eq.s32.totalorder %v4181, 1
  %vm4211 = vcmp.eq.s32.totalorder %v4182, 1
  %vm4212 = vcmp.eq.s32.totalorder %v4183, 1
  %vm4213 = vcmp.eq.s32.totalorder %v4184, 1
  %vm4214 = vcmp.eq.s32.totalorder %v4185, 1
  %vm4215 = vcmp.eq.s32.totalorder %v4186, 1
  %vm4216 = vcmp.eq.s32.totalorder %v4187, 1
  %vm4217 = vcmp.eq.s32.totalorder %v4188, 1
  %vm4218 = vcmp.eq.s32.totalorder %v4189, 1
  %vm4219 = vcmp.eq.s32.totalorder %v4190, 1
  %vm4220 = vcmp.eq.s32.totalorder %v4191, 1
  %vm4221 = vcmp.eq.s32.totalorder %v4192, 1
  %vm4222 = vcmp.eq.s32.totalorder %v4193, 1
  %vm4223 = vcmp.eq.s32.totalorder %v4194, 1
  %vm4224 = vcmp.eq.s32.totalorder %v4195, 1
  %vm4225 = vcmp.eq.s32.totalorder %v4196, 1
  %vm4226 = vcmp.eq.s32.totalorder %v4197, 1
  %vm4227 = vcmp.eq.s32.totalorder %v4198, 1
  %vm4228 = vcmp.eq.s32.totalorder %v4199, 1
  %v4229 = vsel %vm4200, %v4142, 0.0
  %v4230 = vsel %vm4201, %v4143, 0.0
  %v4231 = vsel %vm4202, %v4144, 0.0
  %v4232 = vsel %vm4203, %v4145, 0.0
  %v4233 = vsel %vm4204, %v4146, 0.0
  %v4234 = vsel %vm4205, %v4147, 0.0
  %v4235 = vsel %vm4206, %v4148, 0.0
  %v4236 = vsel %vm4207, %v4149, 0.0
  %v4237 = vsel %vm4208, %v4150, 0.0
  %v4238 = vsel %vm4209, %v4151, 0.0
  %v4239 = vsel %vm4210, %v4152, 0.0
  %v4240 = vsel %vm4211, %v4153, 0.0
  %v4241 = vsel %vm4212, %v4154, 0.0
  %v4242 = vsel %vm4213, %v4155, 0.0
  %v4243 = vsel %vm4214, %v4156, 0.0
  %v4244 = vsel %vm4215, %v4157, 0.0
  %v4245 = vsel %vm4216, %v4158, 0.0
  %v4246 = vsel %vm4217, %v4159, 0.0
  %v4247 = vsel %vm4218, %v4160, 0.0
  %v4248 = vsel %vm4219, %v4161, 0.0
  %v4249 = vsel %vm4220, %v4162, 0.0
  %v4250 = vsel %vm4221, %v4163, 0.0
  %v4251 = vsel %vm4222, %v4164, 0.0
  %v4252 = vsel %vm4223, %v4165, 0.0
  %v4253 = vsel %vm4224, %v4166, 0.0
  %v4254 = vsel %vm4225, %v4167, 0.0
  %v4255 = vsel %vm4226, %v4168, 0.0
  %v4256 = vsel %vm4227, %v4169, 0.0
  %v4257 = vsel %vm4228, %v4170, 0.0
  %vm4258 = vcmask 31744
  %v4259 = vsel %vm4258, %v4229, 0.0
  %v4260 = vsel %vm4258, %v4230, 0.0
  %v4261 = vadd.f32 %v4259, %v4260
  %v4262 = vsel %vm4258, %v4231, 0.0
  %v4263 = vadd.f32 %v4261, %v4262
  %v4264 = vsel %vm4258, %v4232, 0.0
  %v4265 = vadd.f32 %v4263, %v4264
  %v4266 = vsel %vm4258, %v4233, 0.0
  %v4267 = vadd.f32 %v4265, %v4266
  %v4268 = vsel %vm4258, %v4234, 0.0
  %v4269 = vadd.f32 %v4267, %v4268
  %v4270 = vsel %vm4258, %v4235, 0.0
  %v4271 = vadd.f32 %v4269, %v4270
  %v4272 = vsel %vm4258, %v4236, 0.0
  %v4273 = vadd.f32 %v4271, %v4272
  %v4274 = vsel %vm4258, %v4237, 0.0
  %v4275 = vadd.f32 %v4273, %v4274
  %v4276 = vsel %vm4258, %v4238, 0.0
  %v4277 = vadd.f32 %v4275, %v4276
  %v4278 = vsel %vm4258, %v4239, 0.0
  %v4279 = vadd.f32 %v4277, %v4278
  %v4280 = vsel %vm4258, %v4240, 0.0
  %v4281 = vadd.f32 %v4279, %v4280
  %v4282 = vsel %vm4258, %v4241, 0.0
  %v4283 = vadd.f32 %v4281, %v4282
  %v4284 = vsel %vm4258, %v4242, 0.0
  %v4285 = vadd.f32 %v4283, %v4284
  %v4286 = vsel %vm4258, %v4243, 0.0
  %v4287 = vadd.f32 %v4285, %v4286
  %v4288 = vsel %vm4258, %v4244, 0.0
  %v4289 = vadd.f32 %v4287, %v4288
  %v4290 = vsel %vm4258, %v4245, 0.0
  %v4291 = vadd.f32 %v4289, %v4290
  %v4292 = vsel %vm4258, %v4246, 0.0
  %v4293 = vadd.f32 %v4291, %v4292
  %v4294 = vsel %vm4258, %v4247, 0.0
  %v4295 = vadd.f32 %v4293, %v4294
  %v4296 = vsel %vm4258, %v4248, 0.0
  %v4297 = vadd.f32 %v4295, %v4296
  %v4298 = vsel %vm4258, %v4249, 0.0
  %v4299 = vadd.f32 %v4297, %v4298
  %v4300 = vsel %vm4258, %v4250, 0.0
  %v4301 = vadd.f32 %v4299, %v4300
  %v4302 = vsel %vm4258, %v4251, 0.0
  %v4303 = vadd.f32 %v4301, %v4302
  %v4304 = vsel %vm4258, %v4252, 0.0
  %v4305 = vadd.f32 %v4303, %v4304
  %v4306 = vsel %vm4258, %v4253, 0.0
  %v4307 = vadd.f32 %v4305, %v4306
  %v4308 = vsel %vm4258, %v4254, 0.0
  %v4309 = vadd.f32 %v4307, %v4308
  %v4310 = vsel %vm4258, %v4255, 0.0
  %v4311 = vadd.f32 %v4309, %v4310
  %v4312 = vsel %vm4258, %v4256, 0.0
  %v4313 = vadd.f32 %v4311, %v4312
  %vm4314 = vcmask 25600
  %v4315 = vsel %vm4314, %v4257, 0.0
  %v4316 = vadd.f32 %v4313, %v4315
  %v4317 = vrot.slane %v4316, 4
  %v4318 = vadd.f32 %v4316, %v4317
  %v4319 = vrot.slane %v4318, 2
  %v4320 = vadd.f32 %v4318, %v4319
  %v4321 = vrot.slane %v4320, 1
  %v4322 = vadd.f32 %v4320, %v4321
  %v4323 = vadd.f32 %v4322, 0.0
  %v4324 = vmul.f32 %v4229, %v4229
  %v4325 = vmul.f32 %v4230, %v4230
  %v4326 = vmul.f32 %v4231, %v4231
  %v4327 = vmul.f32 %v4232, %v4232
  %v4328 = vmul.f32 %v4233, %v4233
  %v4329 = vmul.f32 %v4234, %v4234
  %v4330 = vmul.f32 %v4235, %v4235
  %v4331 = vmul.f32 %v4236, %v4236
  %v4332 = vmul.f32 %v4237, %v4237
  %v4333 = vmul.f32 %v4238, %v4238
  %v4334 = vmul.f32 %v4239, %v4239
  %v4335 = vmul.f32 %v4240, %v4240
  %v4336 = vmul.f32 %v4241, %v4241
  %v4337 = vmul.f32 %v4242, %v4242
  %v4338 = vmul.f32 %v4243, %v4243
  %v4339 = vmul.f32 %v4244, %v4244
  %v4340 = vmul.f32 %v4245, %v4245
  %v4341 = vmul.f32 %v4246, %v4246
  %v4342 = vmul.f32 %v4247, %v4247
  %v4343 = vmul.f32 %v4248, %v4248
  %v4344 = vmul.f32 %v4249, %v4249
  %v4345 = vmul.f32 %v4250, %v4250
  %v4346 = vmul.f32 %v4251, %v4251
  %v4347 = vmul.f32 %v4252, %v4252
  %v4348 = vmul.f32 %v4253, %v4253
  %v4349 = vmul.f32 %v4254, %v4254
  %v4350 = vmul.f32 %v4255, %v4255
  %v4351 = vmul.f32 %v4256, %v4256
  %v4352 = vmul.f32 %v4257, %v4257
  %v4353 = vsel %vm4258, %v4324, 0.0
  %v4354 = vsel %vm4258, %v4325, 0.0
  %v4355 = vadd.f32 %v4353, %v4354
  %v4356 = vsel %vm4258, %v4326, 0.0
  %v4357 = vadd.f32 %v4355, %v4356
  %v4358 = vsel %vm4258, %v4327, 0.0
  %v4359 = vadd.f32 %v4357, %v4358
  %v4360 = vsel %vm4258, %v4328, 0.0
  %v4361 = vadd.f32 %v4359, %v4360
  %v4362 = vsel %vm4258, %v4329, 0.0
  %v4363 = vadd.f32 %v4361, %v4362
  %v4364 = vsel %vm4258, %v4330, 0.0
  %v4365 = vadd.f32 %v4363, %v4364
  %v4366 = vsel %vm4258, %v4331, 0.0
  %v4367 = vadd.f32 %v4365, %v4366
  %v4368 = vsel %vm4258, %v4332, 0.0
  %v4369 = vadd.f32 %v4367, %v4368
  %v4370 = vsel %vm4258, %v4333, 0.0
  %v4371 = vadd.f32 %v4369, %v4370
  %v4372 = vsel %vm4258, %v4334, 0.0
  %v4373 = vadd.f32 %v4371, %v4372
  %v4374 = vsel %vm4258, %v4335, 0.0
  %v4375 = vadd.f32 %v4373, %v4374
  %v4376 = vsel %vm4258, %v4336, 0.0
  %v4377 = vadd.f32 %v4375, %v4376
  %v4378 = vsel %vm4258, %v4337, 0.0
  %v4379 = vadd.f32 %v4377, %v4378
  %v4380 = vsel %vm4258, %v4338, 0.0
  %v4381 = vadd.f32 %v4379, %v4380
  %v4382 = vsel %vm4258, %v4339, 0.0
  %v4383 = vadd.f32 %v4381, %v4382
  %v4384 = vsel %vm4258, %v4340, 0.0
  %v4385 = vadd.f32 %v4383, %v4384
  %v4386 = vsel %vm4258, %v4341, 0.0
  %v4387 = vadd.f32 %v4385, %v4386
  %v4388 = vsel %vm4258, %v4342, 0.0
  %v4389 = vadd.f32 %v4387, %v4388
  %v4390 = vsel %vm4258, %v4343, 0.0
  %v4391 = vadd.f32 %v4389, %v4390
  %v4392 = vsel %vm4258, %v4344, 0.0
  %v4393 = vadd.f32 %v4391, %v4392
  %v4394 = vsel %vm4258, %v4345, 0.0
  %v4395 = vadd.f32 %v4393, %v4394
  %v4396 = vsel %vm4258, %v4346, 0.0
  %v4397 = vadd.f32 %v4395, %v4396
  %v4398 = vsel %vm4258, %v4347, 0.0
  %v4399 = vadd.f32 %v4397, %v4398
  %v4400 = vsel %vm4258, %v4348, 0.0
  %v4401 = vadd.f32 %v4399, %v4400
  %v4402 = vsel %vm4258, %v4349, 0.0
  %v4403 = vadd.f32 %v4401, %v4402
  %v4404 = vsel %vm4258, %v4350, 0.0
  %v4405 = vadd.f32 %v4403, %v4404
  %v4406 = vsel %vm4258, %v4351, 0.0
  %v4407 = vadd.f32 %v4405, %v4406
  %v4408 = vsel %vm4314, %v4352, 0.0
  %v4409 = vadd.f32 %v4407, %v4408
  %v4410 = vrot.slane %v4409, 4
  %v4411 = vadd.f32 %v4409, %v4410
  %v4412 = vrot.slane %v4411, 2
  %v4413 = vadd.f32 %v4411, %v4412
  %v4414 = vrot.slane %v4413, 1
  %v4415 = vadd.f32 %v4413, %v4414
  %v4416 = vadd.f32 %v4415, 0.0
  %v4417 = vpack.c.bf16 %v4230, %v4229
  %v4418 = vpack.c.bf16 %v4232, %v4231
  %v4419 = vpack.c.bf16 %v4234, %v4233
  %v4420 = vpack.c.bf16 %v4236, %v4235
  %v4421 = vpack.c.bf16 %v4238, %v4237
  %v4422 = vpack.c.bf16 %v4240, %v4239
  %v4423 = vpack.c.bf16 %v4242, %v4241
  %v4424 = vpack.c.bf16 %v4244, %v4243
  %v4425 = vpack.c.bf16 %v4246, %v4245
  %v4426 = vpack.c.bf16 %v4248, %v4247
  %v4427 = vpack.c.bf16 %v4250, %v4249
  %v4428 = vpack.c.bf16 %v4252, %v4251
  %v4429 = vpack.c.bf16 %v4254, %v4253
  %v4430 = vpack.c.bf16 %v4256, %v4255
  %v4431 = vpack.c.bf16 %v4257, %v4257
  %v4447 = vunpack.c.l.b16 %v4417
  %v4448 = vunpack.c.h.b16 %v4417
  %v4449 = vunpack.c.l.b16 %v4418
  %v4450 = vunpack.c.h.b16 %v4418
  %v4451 = vunpack.c.l.b16 %v4419
  %v4452 = vunpack.c.h.b16 %v4419
  %v4453 = vunpack.c.l.b16 %v4420
  %v4454 = vunpack.c.h.b16 %v4420
  %v4455 = vunpack.c.l.b16 %v4421
  %v4456 = vunpack.c.h.b16 %v4421
  %v4457 = vunpack.c.l.b16 %v4422
  %v4458 = vunpack.c.h.b16 %v4422
  %v4459 = vunpack.c.l.b16 %v4423
  %v4460 = vunpack.c.h.b16 %v4423
  %v4461 = vunpack.c.l.b16 %v4424
  %v4462 = vunpack.c.h.b16 %v4424
  %v4463 = vunpack.c.l.b16 %v4425
  %v4464 = vunpack.c.h.b16 %v4425
  %v4465 = vunpack.c.l.b16 %v4426
  %v4466 = vunpack.c.h.b16 %v4426
  %v4467 = vunpack.c.l.b16 %v4427
  %v4468 = vunpack.c.h.b16 %v4427
  %v4469 = vunpack.c.l.b16 %v4428
  %v4470 = vunpack.c.h.b16 %v4428
  %v4471 = vunpack.c.l.b16 %v4429
  %v4472 = vunpack.c.h.b16 %v4429
  %v4473 = vunpack.c.l.b16 %v4430
  %v4474 = vunpack.c.h.b16 %v4430
  %v4475 = vunpack.c.l.b16 %v4431
  %v4476 = vpack.c.b16 %v4447, %v4447
  %v4477 = vpack.c.b16 %v4448, %v4448
  %v4478 = vpack.c.b16 %v4449, %v4449
  %v4479 = vpack.c.b16 %v4450, %v4450
  %v4480 = vpack.c.b16 %v4451, %v4451
  %v4481 = vpack.c.b16 %v4452, %v4452
  %v4482 = vpack.c.b16 %v4453, %v4453
  %v4483 = vpack.c.b16 %v4454, %v4454
  %v4484 = vpack.c.b16 %v4455, %v4455
  %v4485 = vpack.c.b16 %v4456, %v4456
  %v4486 = vpack.c.b16 %v4457, %v4457
  %v4487 = vpack.c.b16 %v4458, %v4458
  %v4488 = vpack.c.b16 %v4459, %v4459
  %v4489 = vpack.c.b16 %v4460, %v4460
  %v4490 = vpack.c.b16 %v4461, %v4461
  %v4491 = vpack.c.b16 %v4462, %v4462
  %v4492 = vpack.c.b16 %v4463, %v4463
  %v4493 = vpack.c.b16 %v4464, %v4464
  %v4494 = vpack.c.b16 %v4465, %v4465
  %v4495 = vpack.c.b16 %v4466, %v4466
  %v4496 = vpack.c.b16 %v4467, %v4467
  %v4497 = vpack.c.b16 %v4468, %v4468
  %v4498 = vpack.c.b16 %v4469, %v4469
  %v4499 = vpack.c.b16 %v4470, %v4470
  %v4500 = vpack.c.b16 %v4471, %v4471
  %v4501 = vpack.c.b16 %v4472, %v4472
  %v4502 = vpack.c.b16 %v4473, %v4473
  %v4503 = vpack.c.b16 %v4474, %v4474
  %v4504 = vpack.c.b16 %v4475, %v4475
  %vm4534 = vcmask 27648
  %4535 = vst.msk [vmem:[%s3] sm:$0xf] %vm4534, %v4476
  %4536 = vst.msk [vmem:[%s3 + $0x4] sm:$0xf] %vm4534, %v4477
  %4537 = vst.msk [vmem:[%s3 + $0x8] sm:$0xf] %vm4534, %v4478
  %4538 = vst.msk [vmem:[%s3 + $0xc] sm:$0xf] %vm4534, %v4479
  %4539 = vst.msk [vmem:[%s3 + $0x10] sm:$0xf] %vm4534, %v4480
  %4540 = vst.msk [vmem:[%s3 + $0x14] sm:$0xf] %vm4534, %v4481
  %4541 = vst.msk [vmem:[%s3 + $0x18] sm:$0xf] %vm4534, %v4482
  %4542 = vst.msk [vmem:[%s3 + $0x1c] sm:$0xf] %vm4534, %v4483
  %4543 = vst.msk [vmem:[%s3 + $0x20] sm:$0xf] %vm4534, %v4484
  %4544 = vst.msk [vmem:[%s3 + $0x24] sm:$0xf] %vm4534, %v4485
  %4545 = vst.msk [vmem:[%s3 + $0x28] sm:$0xf] %vm4534, %v4486
  %4546 = vst.msk [vmem:[%s3 + $0x2c] sm:$0xf] %vm4534, %v4487
  %4547 = vst.msk [vmem:[%s3 + $0x30] sm:$0xf] %vm4534, %v4488
  %4548 = vst.msk [vmem:[%s3 + $0x34] sm:$0xf] %vm4534, %v4489
  %4549 = vst.msk [vmem:[%s3 + $0x38] sm:$0xf] %vm4534, %v4490
  %4550 = vst.msk [vmem:[%s3 + $0x3c] sm:$0xf] %vm4534, %v4491
  %4551 = vst.msk [vmem:[%s3 + $0x40] sm:$0xf] %vm4534, %v4492
  %4552 = vst.msk [vmem:[%s3 + $0x44] sm:$0xf] %vm4534, %v4493
  %4553 = vst.msk [vmem:[%s3 + $0x48] sm:$0xf] %vm4534, %v4494
  %4554 = vst.msk [vmem:[%s3 + $0x4c] sm:$0xf] %vm4534, %v4495
  %4555 = vst.msk [vmem:[%s3 + $0x50] sm:$0xf] %vm4534, %v4496
  %4556 = vst.msk [vmem:[%s3 + $0x54] sm:$0xf] %vm4534, %v4497
  %4557 = vst.msk [vmem:[%s3 + $0x58] sm:$0xf] %vm4534, %v4498
  %4558 = vst.msk [vmem:[%s3 + $0x5c] sm:$0xf] %vm4534, %v4499
  %4559 = vst.msk [vmem:[%s3 + $0x60] sm:$0xf] %vm4534, %v4500
  %4560 = vst.msk [vmem:[%s3 + $0x64] sm:$0xf] %vm4534, %v4501
  %4561 = vst.msk [vmem:[%s3 + $0x68] sm:$0xf] %vm4534, %v4502
  %4562 = vst.msk [vmem:[%s3 + $0x6c] sm:$0xf] %vm4534, %v4503
  %vm4563 = vcmask 24576
  %4564 = vst.msk [vmem:[%s3 + $0x70] sm:$0x1] %vm4563, %v4504
  %v4565 = vld [vmem:[#allocation3] sm:$0xf]
  %v4566 = vld [vmem:[#allocation3 + $0x4] sm:$0xf]
  %v4567 = vld [vmem:[#allocation3 + $0x8] sm:$0xf]
  %v4568 = vld [vmem:[#allocation3 + $0xc] sm:$0xf]
  %v4569 = vld [vmem:[#allocation3 + $0x10] sm:$0xf]
  %v4570 = vld [vmem:[#allocation3 + $0x14] sm:$0xf]
  %v4571 = vld [vmem:[#allocation3 + $0x18] sm:$0xf]
  %v4572 = vld [vmem:[#allocation3 + $0x1c] sm:$0xf]
  %v4573 = vld [vmem:[#allocation3 + $0x20] sm:$0xf]
  %v4574 = vld [vmem:[#allocation3 + $0x24] sm:$0xf]
  %v4575 = vld [vmem:[#allocation3 + $0x28] sm:$0xf]
  %v4576 = vld [vmem:[#allocation3 + $0x2c] sm:$0xf]
  %v4577 = vld [vmem:[#allocation3 + $0x30] sm:$0xf]
  %v4578 = vld [vmem:[#allocation3 + $0x34] sm:$0xf]
  %v4579 = vld [vmem:[#allocation3 + $0x38] sm:$0xf]
  %v4580 = vld [vmem:[#allocation3 + $0x3c] sm:$0xf]
  %v4581 = vld [vmem:[#allocation3 + $0x40] sm:$0xf]
  %v4582 = vld [vmem:[#allocation3 + $0x44] sm:$0xf]
  %v4583 = vld [vmem:[#allocation3 + $0x48] sm:$0xf]
  %v4584 = vld [vmem:[#allocation3 + $0x4c] sm:$0xf]
  %v4585 = vld [vmem:[#allocation3 + $0x50] sm:$0xf]
  %v4586 = vld [vmem:[#allocation3 + $0x54] sm:$0xf]
  %v4587 = vld [vmem:[#allocation3 + $0x58] sm:$0xf]
  %v4588 = vld [vmem:[#allocation3 + $0x5c] sm:$0xf]
  %v4589 = vld [vmem:[#allocation3 + $0x60] sm:$0xf]
  %v4590 = vld [vmem:[#allocation3 + $0x64] sm:$0xf]
  %v4591 = vld [vmem:[#allocation3 + $0x68] sm:$0xf]
  %v4592 = vld [vmem:[#allocation3 + $0x6c] sm:$0xf]
  %v4593 = vld [vmem:[#allocation3 + $0x70] sm:$0x3]
  %s4594 = scalar_lea.vmem %s2, 16
  %v4595 = vld [vmem:[%s4594] sm:$0xf]
  %v4596 = vld [vmem:[#allocation3] sm:$0xe]
  %s4597 = scalar_lea.vmem %s2, 20
  %v4598 = vld [vmem:[%s4597] sm:$0xf]
  %v4628 = vunpack.c.l.b16 %v4596
  %v4629 = vunpack.c.l.b16 %v4566
  %v4630 = vunpack.c.l.b16 %v4567
  %v4631 = vunpack.c.l.b16 %v4568
  %v4632 = vunpack.c.l.b16 %v4569
  %v4633 = vunpack.c.l.b16 %v4570
  %v4634 = vunpack.c.l.b16 %v4571
  %v4635 = vunpack.c.l.b16 %v4572
  %v4636 = vunpack.c.l.b16 %v4573
  %v4637 = vunpack.c.l.b16 %v4574
  %v4638 = vunpack.c.l.b16 %v4575
  %v4639 = vunpack.c.l.b16 %v4576
  %v4640 = vunpack.c.l.b16 %v4577
  %v4641 = vunpack.c.l.b16 %v4578
  %v4642 = vunpack.c.l.b16 %v4579
  %v4643 = vunpack.c.l.b16 %v4580
  %v4644 = vunpack.c.l.b16 %v4581
  %v4645 = vunpack.c.l.b16 %v4582
  %v4646 = vunpack.c.l.b16 %v4583
  %v4647 = vunpack.c.l.b16 %v4584
  %v4648 = vunpack.c.l.b16 %v4585
  %v4649 = vunpack.c.l.b16 %v4586
  %v4650 = vunpack.c.l.b16 %v4587
  %v4651 = vunpack.c.l.b16 %v4588
  %v4652 = vunpack.c.l.b16 %v4589
  %v4653 = vunpack.c.l.b16 %v4590
  %v4654 = vunpack.c.l.b16 %v4591
  %v4655 = vunpack.c.l.b16 %v4592
  %v4656 = vunpack.c.l.b16 %v4593
  %v4657 = vpack.c.b16 %v4629, %v4628
  %v4658 = vpack.c.b16 %v4631, %v4630
  %v4659 = vpack.c.b16 %v4633, %v4632
  %v4660 = vpack.c.b16 %v4635, %v4634
  %v4661 = vpack.c.b16 %v4637, %v4636
  %v4662 = vpack.c.b16 %v4639, %v4638
  %v4663 = vpack.c.b16 %v4641, %v4640
  %v4664 = vpack.c.b16 %v4643, %v4642
  %v4665 = vpack.c.b16 %v4645, %v4644
  %v4666 = vpack.c.b16 %v4647, %v4646
  %v4667 = vpack.c.b16 %v4649, %v4648
  %v4668 = vpack.c.b16 %v4651, %v4650
  %v4669 = vpack.c.b16 %v4653, %v4652
  %v4670 = vpack.c.b16 %v4655, %v4654
  %v4671 = vpack.c.b16 %v4656, %v4656
  %v4672 = vrot.slane %v4657, 1
  %v4673 = vrot.slane %v4658, 1
  %v4674 = vsel %vm1721, %v4672, %v4673
  %v4675 = vrot.slane %v4659, 1
  %v4676 = vsel %vm1721, %v4673, %v4675
  %v4677 = vrot.slane %v4660, 1
  %v4678 = vsel %vm1721, %v4675, %v4677
  %v4679 = vrot.slane %v4661, 1
  %v4680 = vsel %vm1721, %v4677, %v4679
  %v4681 = vrot.slane %v4662, 1
  %v4682 = vsel %vm1721, %v4679, %v4681
  %v4683 = vrot.slane %v4663, 1
  %v4684 = vsel %vm1721, %v4681, %v4683
  %v4685 = vrot.slane %v4664, 1
  %v4686 = vsel %vm1721, %v4683, %v4685
  %v4687 = vrot.slane %v4665, 1
  %v4688 = vsel %vm1721, %v4685, %v4687
  %v4689 = vrot.slane %v4666, 1
  %v4690 = vsel %vm1721, %v4687, %v4689
  %v4691 = vrot.slane %v4667, 1
  %v4692 = vsel %vm1721, %v4689, %v4691
  %v4693 = vrot.slane %v4668, 1
  %v4694 = vsel %vm1721, %v4691, %v4693
  %v4695 = vrot.slane %v4669, 1
  %v4696 = vsel %vm1721, %v4693, %v4695
  %v4697 = vrot.slane %v4670, 1
  %v4698 = vsel %vm1721, %v4695, %v4697
  %v4699 = vrot.slane %v4671, 1
  %v4700 = vsel %vm1721, %v4697, %v4699
  %v4702 = vsel %vm3049, %v4674, 0
  %v4705 = vsel %vm3049, %v4676, 0
  %v4708 = vsel %vm3049, %v4678, 0
  %v4711 = vsel %vm3049, %v4680, 0
  %v4714 = vsel %vm3049, %v4682, 0
  %v4717 = vsel %vm3049, %v4684, 0
  %v4720 = vsel %vm3049, %v4686, 0
  %v4723 = vsel %vm3049, %v4688, 0
  %v4726 = vsel %vm3049, %v4690, 0
  %v4729 = vsel %vm3049, %v4692, 0
  %v4732 = vsel %vm3049, %v4694, 0
  %v4735 = vsel %vm3049, %v4696, 0
  %v4738 = vsel %vm3049, %v4698, 0
  %v4741 = vsel %vm3049, %v4700, 0
  %v4744 = vsel %vm3049, %v4699, 0
  %v4747 = vsel %vm3095, %v4598, 0
  %4749 = vmatprep.subr.bf16.mxu0 0
  %4750 = vmatpush1.bf16.msra.mxu0 0
  %4751 = vmatprep.subr.bf16.mxu0 0
  %4752 = vmatpush1.bf16.msra.mxu0 0
  %4753 = vmatprep.subr.bf16.mxu0 0
  %4754 = vmatpush1.bf16.msra.mxu0 0
  %4755 = vmatprep.subr.bf16.mxu0 0
  %4756 = vmatpush1.bf16.msra.mxu0 0
  %4757 = vmatprep.subr.bf16.mxu0 0
  %4758 = vmatpush1.bf16.msra.mxu0 0
  %4759 = vmatprep.subr.bf16.mxu0 0
  %4760 = vmatpush1.bf16.msra.mxu0 0
  %4761 = vmatprep.subr.bf16.mxu0 0
  %4762 = vmatpush1.bf16.msra.mxu0 0
  %4763 = vmatprep.subr.bf16.mxu0 0
  %4764 = vmatpush1.bf16.msra.mxu0 %v4747
  %4765 = vmatprep.subr.bf16.mxu0 0
  %4766 = vmatpush2.bf16.msra.mxu0 0
  %4767 = vmatprep.subr.bf16.mxu0 0
  %4768 = vmatpush2.bf16.msra.mxu0 0
  %4769 = vmatprep.subr.bf16.mxu0 0
  %4770 = vmatpush2.bf16.msra.mxu0 0
  %4771 = vmatprep.subr.bf16.mxu0 0
  %4772 = vmatpush2.bf16.msra.mxu0 0
  %4773 = vmatprep.subr.bf16.mxu0 0
  %4774 = vmatpush2.bf16.msra.mxu0 0
  %4775 = vmatprep.subr.bf16.mxu0 0
  %4776 = vmatpush2.bf16.msra.mxu0 0
  %4777 = vmatprep.subr.bf16.mxu0 0
  %4778 = vmatpush2.bf16.msra.mxu0 0
  %4779 = vmatprep.subr.bf16.mxu0 0
  %4780 = vmatpush2.bf16.msra.mxu0 0
  %4781 = vmatprep.mubr.bf16.mxu0 0
  %4782 = vmatmul.mubr.bf16.gmra.mxu0 %v4702
  %v4783 = vpop.f32.mrf.mxu0
  %v4784 = vadd.f32 0.0, %v4783
  %v4785 = vpop.f32.mrf.mxu0
  %v4786 = vpop.f32.mrf.mxu0
  %v4787 = vadd.f32 0.0, %v4786
  %v4788 = vpop.f32.mrf.mxu0
  %4789 = vmatprep.mubr.bf16.mxu0 0
  %4790 = vmatmul.mubr.bf16.gmra.mxu0 %v4705
  %v4791 = vpop.f32.mrf.mxu0
  %v4792 = vadd.f32 0.0, %v4791
  %v4793 = vpop.f32.mrf.mxu0
  %v4794 = vpop.f32.mrf.mxu0
  %v4795 = vadd.f32 0.0, %v4794
  %v4796 = vpop.f32.mrf.mxu0
  %4797 = vmatprep.mubr.bf16.mxu0 0
  %4798 = vmatmul.mubr.bf16.gmra.mxu0 %v4708
  %v4799 = vpop.f32.mrf.mxu0
  %v4800 = vadd.f32 0.0, %v4799
  %v4801 = vpop.f32.mrf.mxu0
  %v4802 = vpop.f32.mrf.mxu0
  %v4803 = vadd.f32 0.0, %v4802
  %v4804 = vpop.f32.mrf.mxu0
  %4805 = vmatprep.mubr.bf16.mxu0 0
  %4806 = vmatmul.mubr.bf16.gmra.mxu0 %v4711
  %v4807 = vpop.f32.mrf.mxu0
  %v4808 = vadd.f32 0.0, %v4807
  %v4809 = vpop.f32.mrf.mxu0
  %v4810 = vpop.f32.mrf.mxu0
  %v4811 = vadd.f32 0.0, %v4810
  %v4812 = vpop.f32.mrf.mxu0
  %4813 = vmatprep.mubr.bf16.mxu0 0
  %4814 = vmatmul.mubr.bf16.gmra.mxu0 %v4714
  %v4815 = vpop.f32.mrf.mxu0
  %v4816 = vadd.f32 0.0, %v4815
  %v4817 = vpop.f32.mrf.mxu0
  %v4818 = vpop.f32.mrf.mxu0
  %v4819 = vadd.f32 0.0, %v4818
  %v4820 = vpop.f32.mrf.mxu0
  %4821 = vmatprep.mubr.bf16.mxu0 0
  %4822 = vmatmul.mubr.bf16.gmra.mxu0 %v4717
  %v4823 = vpop.f32.mrf.mxu0
  %v4824 = vadd.f32 0.0, %v4823
  %v4825 = vpop.f32.mrf.mxu0
  %v4826 = vpop.f32.mrf.mxu0
  %v4827 = vadd.f32 0.0, %v4826
  %v4828 = vpop.f32.mrf.mxu0
  %4829 = vmatprep.mubr.bf16.mxu0 0
  %4830 = vmatmul.mubr.bf16.gmra.mxu0 %v4720
  %v4831 = vpop.f32.mrf.mxu0
  %v4832 = vadd.f32 0.0, %v4831
  %v4833 = vpop.f32.mrf.mxu0
  %v4834 = vpop.f32.mrf.mxu0
  %v4835 = vadd.f32 0.0, %v4834
  %v4836 = vpop.f32.mrf.mxu0
  %4837 = vmatprep.mubr.bf16.mxu0 0
  %4838 = vmatmul.mubr.bf16.gmra.mxu0 %v4723
  %v4839 = vpop.f32.mrf.mxu0
  %v4840 = vadd.f32 0.0, %v4839
  %v4841 = vpop.f32.mrf.mxu0
  %v4842 = vpop.f32.mrf.mxu0
  %v4843 = vadd.f32 0.0, %v4842
  %v4844 = vpop.f32.mrf.mxu0
  %4845 = vmatprep.mubr.bf16.mxu0 0
  %4846 = vmatmul.mubr.bf16.gmra.mxu0 %v4726
  %v4847 = vpop.f32.mrf.mxu0
  %v4848 = vadd.f32 0.0, %v4847
  %v4849 = vpop.f32.mrf.mxu0
  %v4850 = vpop.f32.mrf.mxu0
  %v4851 = vadd.f32 0.0, %v4850
  %v4852 = vpop.f32.mrf.mxu0
  %4853 = vmatprep.mubr.bf16.mxu0 0
  %4854 = vmatmul.mubr.bf16.gmra.mxu0 %v4729
  %v4855 = vpop.f32.mrf.mxu0
  %v4856 = vadd.f32 0.0, %v4855
  %v4857 = vpop.f32.mrf.mxu0
  %v4858 = vpop.f32.mrf.mxu0
  %v4859 = vadd.f32 0.0, %v4858
  %v4860 = vpop.f32.mrf.mxu0
  %4861 = vmatprep.mubr.bf16.mxu0 0
  %4862 = vmatmul.mubr.bf16.gmra.mxu0 %v4732
  %v4863 = vpop.f32.mrf.mxu0
  %v4864 = vadd.f32 0.0, %v4863
  %v4865 = vpop.f32.mrf.mxu0
  %v4866 = vpop.f32.mrf.mxu0
  %v4867 = vadd.f32 0.0, %v4866
  %v4868 = vpop.f32.mrf.mxu0
  %4869 = vmatprep.mubr.bf16.mxu0 0
  %4870 = vmatmul.mubr.bf16.gmra.mxu0 %v4735
  %v4871 = vpop.f32.mrf.mxu0
  %v4872 = vadd.f32 0.0, %v4871
  %v4873 = vpop.f32.mrf.mxu0
  %v4874 = vpop.f32.mrf.mxu0
  %v4875 = vadd.f32 0.0, %v4874
  %v4876 = vpop.f32.mrf.mxu0
  %4877 = vmatprep.mubr.bf16.mxu0 0
  %4878 = vmatmul.mubr.bf16.gmra.mxu0 %v4738
  %v4879 = vpop.f32.mrf.mxu0
  %v4880 = vadd.f32 0.0, %v4879
  %v4881 = vpop.f32.mrf.mxu0
  %v4882 = vpop.f32.mrf.mxu0
  %v4883 = vadd.f32 0.0, %v4882
  %v4884 = vpop.f32.mrf.mxu0
  %4885 = vmatprep.mubr.bf16.mxu0 0
  %4886 = vmatmul.mubr.bf16.gmra.mxu0 %v4741
  %v4887 = vpop.f32.mrf.mxu0
  %v4888 = vadd.f32 0.0, %v4887
  %v4889 = vpop.f32.mrf.mxu0
  %v4890 = vpop.f32.mrf.mxu0
  %v4891 = vadd.f32 0.0, %v4890
  %v4892 = vpop.f32.mrf.mxu0
  %4893 = vmatprep.mubr.bf16.mxu0 0
  %4894 = vmatmul.mubr.bf16.gmra.mxu0 %v4744
  %v4895 = vpop.f32.mrf.mxu0
  %v4896 = vadd.f32 0.0, %v4895
  %v4897 = vpop.f32.mrf.mxu0
  %v4898 = vpop.f32.mrf.mxu0
  %v4899 = vpop.f32.mrf.mxu0
  %4900 = vdwg.mxu0
  %v4902 = vunpack.c.l.b16 %v4565
  %v4903 = vpack.c.b16 %v4629, %v4902
  %v4905 = vshrl.u32 %v4903, 16
  %v4907 = vshll.u32 %v4903, 16
  %v4909 = vrot.slane %v4907, 1
  %v4910 = vor.u32 %v4905, %v4909
  %v4912 = vshll.u32 %v4658, 16
  %v4914 = vrot.slane %v4912, 1
  %v4915 = vsel %vm1063, %v4910, %v4914
  %v4916 = vshrl.u32 %v4658, 16
  %v4918 = vor.u32 %v4916, %v4914
  %v4920 = vshll.u32 %v4659, 16
  %v4922 = vrot.slane %v4920, 1
  %v4923 = vsel %vm1063, %v4918, %v4922
  %v4924 = vshrl.u32 %v4659, 16
  %v4926 = vor.u32 %v4924, %v4922
  %v4928 = vshll.u32 %v4660, 16
  %v4930 = vrot.slane %v4928, 1
  %v4931 = vsel %vm1063, %v4926, %v4930
  %v4932 = vshrl.u32 %v4660, 16
  %v4934 = vor.u32 %v4932, %v4930
  %v4936 = vshll.u32 %v4661, 16
  %v4938 = vrot.slane %v4936, 1
  %v4939 = vsel %vm1063, %v4934, %v4938
  %v4940 = vshrl.u32 %v4661, 16
  %v4942 = vor.u32 %v4940, %v4938
  %v4944 = vshll.u32 %v4662, 16
  %v4946 = vrot.slane %v4944, 1
  %v4947 = vsel %vm1063, %v4942, %v4946
  %v4948 = vshrl.u32 %v4662, 16
  %v4950 = vor.u32 %v4948, %v4946
  %v4952 = vshll.u32 %v4663, 16
  %v4954 = vrot.slane %v4952, 1
  %v4955 = vsel %vm1063, %v4950, %v4954
  %v4956 = vshrl.u32 %v4663, 16
  %v4958 = vor.u32 %v4956, %v4954
  %v4960 = vshll.u32 %v4664, 16
  %v4962 = vrot.slane %v4960, 1
  %v4963 = vsel %vm1063, %v4958, %v4962
  %v4964 = vshrl.u32 %v4664, 16
  %v4966 = vor.u32 %v4964, %v4962
  %v4968 = vshll.u32 %v4665, 16
  %v4970 = vrot.slane %v4968, 1
  %v4971 = vsel %vm1063, %v4966, %v4970
  %v4972 = vshrl.u32 %v4665, 16
  %v4974 = vor.u32 %v4972, %v4970
  %v4976 = vshll.u32 %v4666, 16
  %v4978 = vrot.slane %v4976, 1
  %v4979 = vsel %vm1063, %v4974, %v4978
  %v4980 = vshrl.u32 %v4666, 16
  %v4982 = vor.u32 %v4980, %v4978
  %v4984 = vshll.u32 %v4667, 16
  %v4986 = vrot.slane %v4984, 1
  %v4987 = vsel %vm1063, %v4982, %v4986
  %v4988 = vshrl.u32 %v4667, 16
  %v4990 = vor.u32 %v4988, %v4986
  %v4992 = vshll.u32 %v4668, 16
  %v4994 = vrot.slane %v4992, 1
  %v4995 = vsel %vm1063, %v4990, %v4994
  %v4996 = vshrl.u32 %v4668, 16
  %v4998 = vor.u32 %v4996, %v4994
  %v5000 = vshll.u32 %v4669, 16
  %v5002 = vrot.slane %v5000, 1
  %v5003 = vsel %vm1063, %v4998, %v5002
  %v5004 = vshrl.u32 %v4669, 16
  %v5006 = vor.u32 %v5004, %v5002
  %v5008 = vshll.u32 %v4670, 16
  %v5010 = vrot.slane %v5008, 1
  %v5011 = vsel %vm1063, %v5006, %v5010
  %v5012 = vshrl.u32 %v4670, 16
  %v5014 = vor.u32 %v5012, %v5010
  %v5016 = vshll.u32 %v4671, 16
  %v5018 = vrot.slane %v5016, 1
  %v5019 = vsel %vm1063, %v5014, %v5018
  %v5020 = vshrl.u32 %v4671, 16
  %v5022 = vor.u32 %v5020, %v5018
  %v5024 = vsel %vm3049, %v4915, 0
  %v5027 = vsel %vm3049, %v4923, 0
  %v5030 = vsel %vm3049, %v4931, 0
  %v5033 = vsel %vm3049, %v4939, 0
  %v5036 = vsel %vm3049, %v4947, 0
  %v5039 = vsel %vm3049, %v4955, 0
  %v5042 = vsel %vm3049, %v4963, 0
  %v5045 = vsel %vm3049, %v4971, 0
  %v5048 = vsel %vm3049, %v4979, 0
  %v5051 = vsel %vm3049, %v4987, 0
  %v5054 = vsel %vm3049, %v4995, 0
  %v5057 = vsel %vm3049, %v5003, 0
  %v5060 = vsel %vm3049, %v5011, 0
  %v5063 = vsel %vm3049, %v5019, 0
  %v5066 = vsel %vm3049, %v5022, 0
  %v5069 = vsel %vm3095, %v4595, 0
  %5071 = vmatprep.subr.bf16.mxu0 0
  %5072 = vmatpush1.bf16.msra.mxu0 0
  %5073 = vmatprep.subr.bf16.mxu0 0
  %5074 = vmatpush1.bf16.msra.mxu0 0
  %5075 = vmatprep.subr.bf16.mxu0 0
  %5076 = vmatpush1.bf16.msra.mxu0 0
  %5077 = vmatprep.subr.bf16.mxu0 0
  %5078 = vmatpush1.bf16.msra.mxu0 0
  %5079 = vmatprep.subr.bf16.mxu0 0
  %5080 = vmatpush1.bf16.msra.mxu0 0
  %5081 = vmatprep.subr.bf16.mxu0 0
  %5082 = vmatpush1.bf16.msra.mxu0 0
  %5083 = vmatprep.subr.bf16.mxu0 0
  %5084 = vmatpush1.bf16.msra.mxu0 0
  %5085 = vmatprep.subr.bf16.mxu0 0
  %5086 = vmatpush1.bf16.msra.mxu0 %v5069
  %5087 = vmatprep.subr.bf16.mxu0 0
  %5088 = vmatpush2.bf16.msra.mxu0 0
  %5089 = vmatprep.subr.bf16.mxu0 0
  %5090 = vmatpush2.bf16.msra.mxu0 0
  %5091 = vmatprep.subr.bf16.mxu0 0
  %5092 = vmatpush2.bf16.msra.mxu0 0
  %5093 = vmatprep.subr.bf16.mxu0 0
  %5094 = vmatpush2.bf16.msra.mxu0 0
  %5095 = vmatprep.subr.bf16.mxu0 0
  %5096 = vmatpush2.bf16.msra.mxu0 0
  %5097 = vmatprep.subr.bf16.mxu0 0
  %5098 = vmatpush2.bf16.msra.mxu0 0
  %5099 = vmatprep.subr.bf16.mxu0 0
  %5100 = vmatpush2.bf16.msra.mxu0 0
  %5101 = vmatprep.subr.bf16.mxu0 0
  %5102 = vmatpush2.bf16.msra.mxu0 0
  %5103 = vmatprep.mubr.bf16.mxu0 0
  %5104 = vmatmul.mubr.bf16.gmra.mxu0 %v5024
  %v5105 = vpop.f32.mrf.mxu0
  %v5106 = vadd.f32 %v4784, %v5105
  %v5107 = vpop.f32.mrf.mxu0
  %v5108 = vpop.f32.mrf.mxu0
  %v5109 = vadd.f32 %v4787, %v5108
  %v5110 = vpop.f32.mrf.mxu0
  %5111 = vmatprep.mubr.bf16.mxu0 0
  %5112 = vmatmul.mubr.bf16.gmra.mxu0 %v5027
  %v5113 = vpop.f32.mrf.mxu0
  %v5114 = vadd.f32 %v4792, %v5113
  %v5115 = vpop.f32.mrf.mxu0
  %v5116 = vpop.f32.mrf.mxu0
  %v5117 = vadd.f32 %v4795, %v5116
  %v5118 = vpop.f32.mrf.mxu0
  %5119 = vmatprep.mubr.bf16.mxu0 0
  %5120 = vmatmul.mubr.bf16.gmra.mxu0 %v5030
  %v5121 = vpop.f32.mrf.mxu0
  %v5122 = vadd.f32 %v4800, %v5121
  %v5123 = vpop.f32.mrf.mxu0
  %v5124 = vpop.f32.mrf.mxu0
  %v5125 = vadd.f32 %v4803, %v5124
  %v5126 = vpop.f32.mrf.mxu0
  %5127 = vmatprep.mubr.bf16.mxu0 0
  %5128 = vmatmul.mubr.bf16.gmra.mxu0 %v5033
  %v5129 = vpop.f32.mrf.mxu0
  %v5130 = vadd.f32 %v4808, %v5129
  %v5131 = vpop.f32.mrf.mxu0
  %v5132 = vpop.f32.mrf.mxu0
  %v5133 = vadd.f32 %v4811, %v5132
  %v5134 = vpop.f32.mrf.mxu0
  %5135 = vmatprep.mubr.bf16.mxu0 0
  %5136 = vmatmul.mubr.bf16.gmra.mxu0 %v5036
  %v5137 = vpop.f32.mrf.mxu0
  %v5138 = vadd.f32 %v4816, %v5137
  %v5139 = vpop.f32.mrf.mxu0
  %v5140 = vpop.f32.mrf.mxu0
  %v5141 = vadd.f32 %v4819, %v5140
  %v5142 = vpop.f32.mrf.mxu0
  %5143 = vmatprep.mubr.bf16.mxu0 0
  %5144 = vmatmul.mubr.bf16.gmra.mxu0 %v5039
  %v5145 = vpop.f32.mrf.mxu0
  %v5146 = vadd.f32 %v4824, %v5145
  %v5147 = vpop.f32.mrf.mxu0
  %v5148 = vpop.f32.mrf.mxu0
  %v5149 = vadd.f32 %v4827, %v5148
  %v5150 = vpop.f32.mrf.mxu0
  %5151 = vmatprep.mubr.bf16.mxu0 0
  %5152 = vmatmul.mubr.bf16.gmra.mxu0 %v5042
  %v5153 = vpop.f32.mrf.mxu0
  %v5154 = vadd.f32 %v4832, %v5153
  %v5155 = vpop.f32.mrf.mxu0
  %v5156 = vpop.f32.mrf.mxu0
  %v5157 = vadd.f32 %v4835, %v5156
  %v5158 = vpop.f32.mrf.mxu0
  %5159 = vmatprep.mubr.bf16.mxu0 0
  %5160 = vmatmul.mubr.bf16.gmra.mxu0 %v5045
  %v5161 = vpop.f32.mrf.mxu0
  %v5162 = vadd.f32 %v4840, %v5161
  %v5163 = vpop.f32.mrf.mxu0
  %v5164 = vpop.f32.mrf.mxu0
  %v5165 = vadd.f32 %v4843, %v5164
  %v5166 = vpop.f32.mrf.mxu0
  %5167 = vmatprep.mubr.bf16.mxu0 0
  %5168 = vmatmul.mubr.bf16.gmra.mxu0 %v5048
  %v5169 = vpop.f32.mrf.mxu0
  %v5170 = vadd.f32 %v4848, %v5169
  %v5171 = vpop.f32.mrf.mxu0
  %v5172 = vpop.f32.mrf.mxu0
  %v5173 = vadd.f32 %v4851, %v5172
  %v5174 = vpop.f32.mrf.mxu0
  %5175 = vmatprep.mubr.bf16.mxu0 0
  %5176 = vmatmul.mubr.bf16.gmra.mxu0 %v5051
  %v5177 = vpop.f32.mrf.mxu0
  %v5178 = vadd.f32 %v4856, %v5177
  %v5179 = vpop.f32.mrf.mxu0
  %v5180 = vpop.f32.mrf.mxu0
  %v5181 = vadd.f32 %v4859, %v5180
  %v5182 = vpop.f32.mrf.mxu0
  %5183 = vmatprep.mubr.bf16.mxu0 0
  %5184 = vmatmul.mubr.bf16.gmra.mxu0 %v5054
  %v5185 = vpop.f32.mrf.mxu0
  %v5186 = vadd.f32 %v4864, %v5185
  %v5187 = vpop.f32.mrf.mxu0
  %v5188 = vpop.f32.mrf.mxu0
  %v5189 = vadd.f32 %v4867, %v5188
  %v5190 = vpop.f32.mrf.mxu0
  %5191 = vmatprep.mubr.bf16.mxu0 0
  %5192 = vmatmul.mubr.bf16.gmra.mxu0 %v5057
  %v5193 = vpop.f32.mrf.mxu0
  %v5194 = vadd.f32 %v4872, %v5193
  %v5195 = vpop.f32.mrf.mxu0
  %v5196 = vpop.f32.mrf.mxu0
  %v5197 = vadd.f32 %v4875, %v5196
  %v5198 = vpop.f32.mrf.mxu0
  %5199 = vmatprep.mubr.bf16.mxu0 0
  %5200 = vmatmul.mubr.bf16.gmra.mxu0 %v5060
  %v5201 = vpop.f32.mrf.mxu0
  %v5202 = vadd.f32 %v4880, %v5201
  %v5203 = vpop.f32.mrf.mxu0
  %v5204 = vpop.f32.mrf.mxu0
  %v5205 = vadd.f32 %v4883, %v5204
  %v5206 = vpop.f32.mrf.mxu0
  %5207 = vmatprep.mubr.bf16.mxu0 0
  %5208 = vmatmul.mubr.bf16.gmra.mxu0 %v5063
  %v5209 = vpop.f32.mrf.mxu0
  %v5210 = vadd.f32 %v4888, %v5209
  %v5211 = vpop.f32.mrf.mxu0
  %v5212 = vpop.f32.mrf.mxu0
  %v5213 = vadd.f32 %v4891, %v5212
  %v5214 = vpop.f32.mrf.mxu0
  %5215 = vmatprep.mubr.bf16.mxu0 0
  %5216 = vmatmul.mubr.bf16.gmra.mxu0 %v5066
  %v5217 = vpop.f32.mrf.mxu0
  %v5218 = vadd.f32 %v4896, %v5217
  %v5219 = vpop.f32.mrf.mxu0
  %v5220 = vpop.f32.mrf.mxu0
  %v5221 = vpop.f32.mrf.mxu0
  %5222 = vdwg.mxu0
  %v5223 = vld [vmem:[#allocation3 + $0x4] sm:$0xe]
  %v5224 = vld [vmem:[#allocation3 + $0x8] sm:$0xf]
  %v5225 = vld [vmem:[#allocation3 + $0xc] sm:$0xf]
  %v5226 = vld [vmem:[#allocation3 + $0x10] sm:$0xf]
  %v5227 = vld [vmem:[#allocation3 + $0x14] sm:$0xf]
  %v5228 = vld [vmem:[#allocation3 + $0x18] sm:$0xf]
  %v5229 = vld [vmem:[#allocation3 + $0x1c] sm:$0xf]
  %v5230 = vld [vmem:[#allocation3 + $0x20] sm:$0xf]
  %v5231 = vld [vmem:[#allocation3 + $0x24] sm:$0xf]
  %v5232 = vld [vmem:[#allocation3 + $0x28] sm:$0xf]
  %v5233 = vld [vmem:[#allocation3 + $0x2c] sm:$0xf]
  %v5234 = vld [vmem:[#allocation3 + $0x30] sm:$0xf]
  %v5235 = vld [vmem:[#allocation3 + $0x34] sm:$0xf]
  %v5236 = vld [vmem:[#allocation3 + $0x38] sm:$0xf]
  %v5237 = vld [vmem:[#allocation3 + $0x3c] sm:$0xf]
  %v5238 = vld [vmem:[#allocation3 + $0x40] sm:$0xf]
  %v5239 = vld [vmem:[#allocation3 + $0x44] sm:$0xf]
  %v5240 = vld [vmem:[#allocation3 + $0x48] sm:$0xf]
  %v5241 = vld [vmem:[#allocation3 + $0x4c] sm:$0xf]
  %v5242 = vld [vmem:[#allocation3 + $0x50] sm:$0xf]
  %v5243 = vld [vmem:[#allocation3 + $0x54] sm:$0xf]
  %v5244 = vld [vmem:[#allocation3 + $0x58] sm:$0xf]
  %v5245 = vld [vmem:[#allocation3 + $0x5c] sm:$0xf]
  %v5246 = vld [vmem:[#allocation3 + $0x60] sm:$0xf]
  %v5247 = vld [vmem:[#allocation3 + $0x64] sm:$0xf]
  %v5248 = vld [vmem:[#allocation3 + $0x68] sm:$0xf]
  %v5249 = vld [vmem:[#allocation3 + $0x6c] sm:$0xf]
  %v5250 = vld [vmem:[#allocation3 + $0x70] sm:$0xf]
  %v5251 = vld [vmem:[#allocation3 + $0x74] sm:$0x7]
  %s5252 = scalar_lea.vmem %s2, 24
  %v5253 = vld [vmem:[%s5252] sm:$0xf]
  %v5283 = vunpack.c.l.b16 %v5223
  %v5284 = vunpack.c.l.b16 %v5224
  %v5285 = vunpack.c.l.b16 %v5225
  %v5286 = vunpack.c.l.b16 %v5226
  %v5287 = vunpack.c.l.b16 %v5227
  %v5288 = vunpack.c.l.b16 %v5228
  %v5289 = vunpack.c.l.b16 %v5229
  %v5290 = vunpack.c.l.b16 %v5230
  %v5291 = vunpack.c.l.b16 %v5231
  %v5292 = vunpack.c.l.b16 %v5232
  %v5293 = vunpack.c.l.b16 %v5233
  %v5294 = vunpack.c.l.b16 %v5234
  %v5295 = vunpack.c.l.b16 %v5235
  %v5296 = vunpack.c.l.b16 %v5236
  %v5297 = vunpack.c.l.b16 %v5237
  %v5298 = vunpack.c.l.b16 %v5238
  %v5299 = vunpack.c.l.b16 %v5239
  %v5300 = vunpack.c.l.b16 %v5240
  %v5301 = vunpack.c.l.b16 %v5241
  %v5302 = vunpack.c.l.b16 %v5242
  %v5303 = vunpack.c.l.b16 %v5243
  %v5304 = vunpack.c.l.b16 %v5244
  %v5305 = vunpack.c.l.b16 %v5245
  %v5306 = vunpack.c.l.b16 %v5246
  %v5307 = vunpack.c.l.b16 %v5247
  %v5308 = vunpack.c.l.b16 %v5248
  %v5309 = vunpack.c.l.b16 %v5249
  %v5310 = vunpack.c.l.b16 %v5250
  %v5311 = vunpack.c.l.b16 %v5251
  %v5312 = vpack.c.b16 %v5284, %v5283
  %v5313 = vpack.c.b16 %v5286, %v5285
  %v5314 = vpack.c.b16 %v5288, %v5287
  %v5315 = vpack.c.b16 %v5290, %v5289
  %v5316 = vpack.c.b16 %v5292, %v5291
  %v5317 = vpack.c.b16 %v5294, %v5293
  %v5318 = vpack.c.b16 %v5296, %v5295
  %v5319 = vpack.c.b16 %v5298, %v5297
  %v5320 = vpack.c.b16 %v5300, %v5299
  %v5321 = vpack.c.b16 %v5302, %v5301
  %v5322 = vpack.c.b16 %v5304, %v5303
  %v5323 = vpack.c.b16 %v5306, %v5305
  %v5324 = vpack.c.b16 %v5308, %v5307
  %v5325 = vpack.c.b16 %v5310, %v5309
  %v5326 = vpack.c.b16 %v5311, %v5311
  %v5328 = vshrl.u32 %v5312, 16
  %v5330 = vrot.slane %v5328, 1
  %v5331 = vshll.u32 %v5312, 16
  %v5333 = vrot.slane %v5331, 2
  %v5334 = vor.u32 %v5330, %v5333
  %v5336 = vshrl.u32 %v5313, 16
  %v5338 = vrot.slane %v5336, 1
  %v5339 = vshll.u32 %v5313, 16
  %v5341 = vrot.slane %v5339, 2
  %v5342 = vor.u32 %v5338, %v5341
  %v5343 = vsel %vm2005, %v5334, %v5342
  %v5345 = vshrl.u32 %v5314, 16
  %v5347 = vrot.slane %v5345, 1
  %v5348 = vshll.u32 %v5314, 16
  %v5350 = vrot.slane %v5348, 2
  %v5351 = vor.u32 %v5347, %v5350
  %v5352 = vsel %vm2005, %v5342, %v5351
  %v5354 = vshrl.u32 %v5315, 16
  %v5356 = vrot.slane %v5354, 1
  %v5357 = vshll.u32 %v5315, 16
  %v5359 = vrot.slane %v5357, 2
  %v5360 = vor.u32 %v5356, %v5359
  %v5361 = vsel %vm2005, %v5351, %v5360
  %v5363 = vshrl.u32 %v5316, 16
  %v5365 = vrot.slane %v5363, 1
  %v5366 = vshll.u32 %v5316, 16
  %v5368 = vrot.slane %v5366, 2
  %v5369 = vor.u32 %v5365, %v5368
  %v5370 = vsel %vm2005, %v5360, %v5369
  %v5372 = vshrl.u32 %v5317, 16
  %v5374 = vrot.slane %v5372, 1
  %v5375 = vshll.u32 %v5317, 16
  %v5377 = vrot.slane %v5375, 2
  %v5378 = vor.u32 %v5374, %v5377
  %v5379 = vsel %vm2005, %v5369, %v5378
  %v5381 = vshrl.u32 %v5318, 16
  %v5383 = vrot.slane %v5381, 1
  %v5384 = vshll.u32 %v5318, 16
  %v5386 = vrot.slane %v5384, 2
  %v5387 = vor.u32 %v5383, %v5386
  %v5388 = vsel %vm2005, %v5378, %v5387
  %v5390 = vshrl.u32 %v5319, 16
  %v5392 = vrot.slane %v5390, 1
  %v5393 = vshll.u32 %v5319, 16
  %v5395 = vrot.slane %v5393, 2
  %v5396 = vor.u32 %v5392, %v5395
  %v5397 = vsel %vm2005, %v5387, %v5396
  %v5399 = vshrl.u32 %v5320, 16
  %v5401 = vrot.slane %v5399, 1
  %v5402 = vshll.u32 %v5320, 16
  %v5404 = vrot.slane %v5402, 2
  %v5405 = vor.u32 %v5401, %v5404
  %v5406 = vsel %vm2005, %v5396, %v5405
  %v5408 = vshrl.u32 %v5321, 16
  %v5410 = vrot.slane %v5408, 1
  %v5411 = vshll.u32 %v5321, 16
  %v5413 = vrot.slane %v5411, 2
  %v5414 = vor.u32 %v5410, %v5413
  %v5415 = vsel %vm2005, %v5405, %v5414
  %v5417 = vshrl.u32 %v5322, 16
  %v5419 = vrot.slane %v5417, 1
  %v5420 = vshll.u32 %v5322, 16
  %v5422 = vrot.slane %v5420, 2
  %v5423 = vor.u32 %v5419, %v5422
  %v5424 = vsel %vm2005, %v5414, %v5423
  %v5426 = vshrl.u32 %v5323, 16
  %v5428 = vrot.slane %v5426, 1
  %v5429 = vshll.u32 %v5323, 16
  %v5431 = vrot.slane %v5429, 2
  %v5432 = vor.u32 %v5428, %v5431
  %v5433 = vsel %vm2005, %v5423, %v5432
  %v5435 = vshrl.u32 %v5324, 16
  %v5437 = vrot.slane %v5435, 1
  %v5438 = vshll.u32 %v5324, 16
  %v5440 = vrot.slane %v5438, 2
  %v5441 = vor.u32 %v5437, %v5440
  %v5442 = vsel %vm2005, %v5432, %v5441
  %v5444 = vshrl.u32 %v5325, 16
  %v5446 = vrot.slane %v5444, 1
  %v5447 = vshll.u32 %v5325, 16
  %v5449 = vrot.slane %v5447, 2
  %v5450 = vor.u32 %v5446, %v5449
  %v5451 = vsel %vm2005, %v5441, %v5450
  %v5453 = vshrl.u32 %v5326, 16
  %v5455 = vrot.slane %v5453, 1
  %v5456 = vshll.u32 %v5326, 16
  %v5458 = vrot.slane %v5456, 2
  %v5459 = vor.u32 %v5455, %v5458
  %v5460 = vsel %vm2005, %v5450, %v5459
  %v5462 = vsel %vm3049, %v5343, 0
  %v5465 = vsel %vm3049, %v5352, 0
  %v5468 = vsel %vm3049, %v5361, 0
  %v5471 = vsel %vm3049, %v5370, 0
  %v5474 = vsel %vm3049, %v5379, 0
  %v5477 = vsel %vm3049, %v5388, 0
  %v5480 = vsel %vm3049, %v5397, 0
  %v5483 = vsel %vm3049, %v5406, 0
  %v5486 = vsel %vm3049, %v5415, 0
  %v5489 = vsel %vm3049, %v5424, 0
  %v5492 = vsel %vm3049, %v5433, 0
  %v5495 = vsel %vm3049, %v5442, 0
  %v5498 = vsel %vm3049, %v5451, 0
  %v5501 = vsel %vm3049, %v5460, 0
  %v5504 = vsel %vm3049, %v5459, 0
  %v5507 = vsel %vm3095, %v5253, 0
  %5509 = vmatprep.subr.bf16.mxu0 0
  %5510 = vmatpush1.bf16.msra.mxu0 0
  %5511 = vmatprep.subr.bf16.mxu0 0
  %5512 = vmatpush1.bf16.msra.mxu0 0
  %5513 = vmatprep.subr.bf16.mxu0 0
  %5514 = vmatpush1.bf16.msra.mxu0 0
  %5515 = vmatprep.subr.bf16.mxu0 0
  %5516 = vmatpush1.bf16.msra.mxu0 0
  %5517 = vmatprep.subr.bf16.mxu0 0
  %5518 = vmatpush1.bf16.msra.mxu0 0
  %5519 = vmatprep.subr.bf16.mxu0 0
  %5520 = vmatpush1.bf16.msra.mxu0 0
  %5521 = vmatprep.subr.bf16.mxu0 0
  %5522 = vmatpush1.bf16.msra.mxu0 0
  %5523 = vmatprep.subr.bf16.mxu0 0
  %5524 = vmatpush1.bf16.msra.mxu0 %v5507
  %5525 = vmatprep.subr.bf16.mxu0 0
  %5526 = vmatpush2.bf16.msra.mxu0 0
  %5527 = vmatprep.subr.bf16.mxu0 0
  %5528 = vmatpush2.bf16.msra.mxu0 0
  %5529 = vmatprep.subr.bf16.mxu0 0
  %5530 = vmatpush2.bf16.msra.mxu0 0
  %5531 = vmatprep.subr.bf16.mxu0 0
  %5532 = vmatpush2.bf16.msra.mxu0 0
  %5533 = vmatprep.subr.bf16.mxu0 0
  %5534 = vmatpush2.bf16.msra.mxu0 0
  %5535 = vmatprep.subr.bf16.mxu0 0
  %5536 = vmatpush2.bf16.msra.mxu0 0
  %5537 = vmatprep.subr.bf16.mxu0 0
  %5538 = vmatpush2.bf16.msra.mxu0 0
  %5539 = vmatprep.subr.bf16.mxu0 0
  %5540 = vmatpush2.bf16.msra.mxu0 0
  %5541 = vmatprep.mubr.bf16.mxu0 0
  %5542 = vmatmul.mubr.bf16.gmra.mxu0 %v5462
  %v5543 = vpop.f32.mrf.mxu0
  %v5544 = vadd.f32 0.0, %v5543
  %v5545 = vpop.f32.mrf.mxu0
  %v5546 = vpop.f32.mrf.mxu0
  %v5547 = vadd.f32 0.0, %v5546
  %v5548 = vpop.f32.mrf.mxu0
  %5549 = vmatprep.mubr.bf16.mxu0 0
  %5550 = vmatmul.mubr.bf16.gmra.mxu0 %v5465
  %v5551 = vpop.f32.mrf.mxu0
  %v5552 = vadd.f32 0.0, %v5551
  %v5553 = vpop.f32.mrf.mxu0
  %v5554 = vpop.f32.mrf.mxu0
  %v5555 = vadd.f32 0.0, %v5554
  %v5556 = vpop.f32.mrf.mxu0
  %5557 = vmatprep.mubr.bf16.mxu0 0
  %5558 = vmatmul.mubr.bf16.gmra.mxu0 %v5468
  %v5559 = vpop.f32.mrf.mxu0
  %v5560 = vadd.f32 0.0, %v5559
  %v5561 = vpop.f32.mrf.mxu0
  %v5562 = vpop.f32.mrf.mxu0
  %v5563 = vadd.f32 0.0, %v5562
  %v5564 = vpop.f32.mrf.mxu0
  %5565 = vmatprep.mubr.bf16.mxu0 0
  %5566 = vmatmul.mubr.bf16.gmra.mxu0 %v5471
  %v5567 = vpop.f32.mrf.mxu0
  %v5568 = vadd.f32 0.0, %v5567
  %v5569 = vpop.f32.mrf.mxu0
  %v5570 = vpop.f32.mrf.mxu0
  %v5571 = vadd.f32 0.0, %v5570
  %v5572 = vpop.f32.mrf.mxu0
  %5573 = vmatprep.mubr.bf16.mxu0 0
  %5574 = vmatmul.mubr.bf16.gmra.mxu0 %v5474
  %v5575 = vpop.f32.mrf.mxu0
  %v5576 = vadd.f32 0.0, %v5575
  %v5577 = vpop.f32.mrf.mxu0
  %v5578 = vpop.f32.mrf.mxu0
  %v5579 = vadd.f32 0.0, %v5578
  %v5580 = vpop.f32.mrf.mxu0
  %5581 = vmatprep.mubr.bf16.mxu0 0
  %5582 = vmatmul.mubr.bf16.gmra.mxu0 %v5477
  %v5583 = vpop.f32.mrf.mxu0
  %v5584 = vadd.f32 0.0, %v5583
  %v5585 = vpop.f32.mrf.mxu0
  %v5586 = vpop.f32.mrf.mxu0
  %v5587 = vadd.f32 0.0, %v5586
  %v5588 = vpop.f32.mrf.mxu0
  %5589 = vmatprep.mubr.bf16.mxu0 0
  %5590 = vmatmul.mubr.bf16.gmra.mxu0 %v5480
  %v5591 = vpop.f32.mrf.mxu0
  %v5592 = vadd.f32 0.0, %v5591
  %v5593 = vpop.f32.mrf.mxu0
  %v5594 = vpop.f32.mrf.mxu0
  %v5595 = vadd.f32 0.0, %v5594
  %v5596 = vpop.f32.mrf.mxu0
  %5597 = vmatprep.mubr.bf16.mxu0 0
  %5598 = vmatmul.mubr.bf16.gmra.mxu0 %v5483
  %v5599 = vpop.f32.mrf.mxu0
  %v5600 = vadd.f32 0.0, %v5599
  %v5601 = vpop.f32.mrf.mxu0
  %v5602 = vpop.f32.mrf.mxu0
  %v5603 = vadd.f32 0.0, %v5602
  %v5604 = vpop.f32.mrf.mxu0
  %5605 = vmatprep.mubr.bf16.mxu0 0
  %5606 = vmatmul.mubr.bf16.gmra.mxu0 %v5486
  %v5607 = vpop.f32.mrf.mxu0
  %v5608 = vadd.f32 0.0, %v5607
  %v5609 = vpop.f32.mrf.mxu0
  %v5610 = vpop.f32.mrf.mxu0
  %v5611 = vadd.f32 0.0, %v5610
  %v5612 = vpop.f32.mrf.mxu0
  %5613 = vmatprep.mubr.bf16.mxu0 0
  %5614 = vmatmul.mubr.bf16.gmra.mxu0 %v5489
  %v5615 = vpop.f32.mrf.mxu0
  %v5616 = vadd.f32 0.0, %v5615
  %v5617 = vpop.f32.mrf.mxu0
  %v5618 = vpop.f32.mrf.mxu0
  %v5619 = vadd.f32 0.0, %v5618
  %v5620 = vpop.f32.mrf.mxu0
  %5621 = vmatprep.mubr.bf16.mxu0 0
  %5622 = vmatmul.mubr.bf16.gmra.mxu0 %v5492
  %v5623 = vpop.f32.mrf.mxu0
  %v5624 = vadd.f32 0.0, %v5623
  %v5625 = vpop.f32.mrf.mxu0
  %v5626 = vpop.f32.mrf.mxu0
  %v5627 = vadd.f32 0.0, %v5626
  %v5628 = vpop.f32.mrf.mxu0
  %5629 = vmatprep.mubr.bf16.mxu0 0
  %5630 = vmatmul.mubr.bf16.gmra.mxu0 %v5495
  %v5631 = vpop.f32.mrf.mxu0
  %v5632 = vadd.f32 0.0, %v5631
  %v5633 = vpop.f32.mrf.mxu0
  %v5634 = vpop.f32.mrf.mxu0
  %v5635 = vadd.f32 0.0, %v5634
  %v5636 = vpop.f32.mrf.mxu0
  %5637 = vmatprep.mubr.bf16.mxu0 0
  %5638 = vmatmul.mubr.bf16.gmra.mxu0 %v5498
  %v5639 = vpop.f32.mrf.mxu0
  %v5640 = vadd.f32 0.0, %v5639
  %v5641 = vpop.f32.mrf.mxu0
  %v5642 = vpop.f32.mrf.mxu0
  %v5643 = vadd.f32 0.0, %v5642
  %v5644 = vpop.f32.mrf.mxu0
  %5645 = vmatprep.mubr.bf16.mxu0 0
  %5646 = vmatmul.mubr.bf16.gmra.mxu0 %v5501
  %v5647 = vpop.f32.mrf.mxu0
  %v5648 = vadd.f32 0.0, %v5647
  %v5649 = vpop.f32.mrf.mxu0
  %v5650 = vpop.f32.mrf.mxu0
  %v5651 = vadd.f32 0.0, %v5650
  %v5652 = vpop.f32.mrf.mxu0
  %5653 = vmatprep.mubr.bf16.mxu0 0
  %5654 = vmatmul.mubr.bf16.gmra.mxu0 %v5504
  %v5655 = vpop.f32.mrf.mxu0
  %v5656 = vadd.f32 0.0, %v5655
  %v5657 = vpop.f32.mrf.mxu0
  %v5658 = vpop.f32.mrf.mxu0
  %v5659 = vpop.f32.mrf.mxu0
  %5660 = vdwg.mxu0
  %v5661 = vadd.f32 %v5106, %v5544
  %v5662 = vadd.f32 %v5109, %v5547
  %v5663 = vadd.f32 %v5114, %v5552
  %v5664 = vadd.f32 %v5117, %v5555
  %v5665 = vadd.f32 %v5122, %v5560
  %v5666 = vadd.f32 %v5125, %v5563
  %v5667 = vadd.f32 %v5130, %v5568
  %v5668 = vadd.f32 %v5133, %v5571
  %v5669 = vadd.f32 %v5138, %v5576
  %v5670 = vadd.f32 %v5141, %v5579
  %v5671 = vadd.f32 %v5146, %v5584
  %v5672 = vadd.f32 %v5149, %v5587
  %v5673 = vadd.f32 %v5154, %v5592
  %v5674 = vadd.f32 %v5157, %v5595
  %v5675 = vadd.f32 %v5162, %v5600
  %v5676 = vadd.f32 %v5165, %v5603
  %v5677 = vadd.f32 %v5170, %v5608
  %v5678 = vadd.f32 %v5173, %v5611
  %v5679 = vadd.f32 %v5178, %v5616
  %v5680 = vadd.f32 %v5181, %v5619
  %v5681 = vadd.f32 %v5186, %v5624
  %v5682 = vadd.f32 %v5189, %v5627
  %v5683 = vadd.f32 %v5194, %v5632
  %v5684 = vadd.f32 %v5197, %v5635
  %v5685 = vadd.f32 %v5202, %v5640
  %v5686 = vadd.f32 %v5205, %v5643
  %v5687 = vadd.f32 %v5210, %v5648
  %v5688 = vadd.f32 %v5213, %v5651
  %v5689 = vadd.f32 %v5218, %v5656
  %v5690 = vld [vmem:[#allocation3 + $0x4] sm:$0xc]
  %s5691 = scalar_lea.vmem %s2, 28
  %v5692 = vld [vmem:[%s5691] sm:$0xf]
  %v5694 = vunpack.c.l.b16 %v5690
  %v5695 = vpack.c.b16 %v5284, %v5694
  %vm5696 = vcmask 1045504
  %v5697 = vrot.slane %v5695, 2
  %v5698 = vrot.slane %v5313, 2
  %v5699 = vsel %vm5696, %v5697, %v5698
  %v5700 = vrot.slane %v5314, 2
  %v5701 = vsel %vm5696, %v5698, %v5700
  %v5702 = vrot.slane %v5315, 2
  %v5703 = vsel %vm5696, %v5700, %v5702
  %v5704 = vrot.slane %v5316, 2
  %v5705 = vsel %vm5696, %v5702, %v5704
  %v5706 = vrot.slane %v5317, 2
  %v5707 = vsel %vm5696, %v5704, %v5706
  %v5708 = vrot.slane %v5318, 2
  %v5709 = vsel %vm5696, %v5706, %v5708
  %v5710 = vrot.slane %v5319, 2
  %v5711 = vsel %vm5696, %v5708, %v5710
  %v5712 = vrot.slane %v5320, 2
  %v5713 = vsel %vm5696, %v5710, %v5712
  %v5714 = vrot.slane %v5321, 2
  %v5715 = vsel %vm5696, %v5712, %v5714
  %v5716 = vrot.slane %v5322, 2
  %v5717 = vsel %vm5696, %v5714, %v5716
  %v5718 = vrot.slane %v5323, 2
  %v5719 = vsel %vm5696, %v5716, %v5718
  %v5720 = vrot.slane %v5324, 2
  %v5721 = vsel %vm5696, %v5718, %v5720
  %v5722 = vrot.slane %v5325, 2
  %v5723 = vsel %vm5696, %v5720, %v5722
  %v5724 = vrot.slane %v5326, 2
  %v5725 = vsel %vm5696, %v5722, %v5724
  %v5727 = vsel %vm3049, %v5699, 0
  %v5730 = vsel %vm3049, %v5701, 0
  %v5733 = vsel %vm3049, %v5703, 0
  %v5736 = vsel %vm3049, %v5705, 0
  %v5739 = vsel %vm3049, %v5707, 0
  %v5742 = vsel %vm3049, %v5709, 0
  %v5745 = vsel %vm3049, %v5711, 0
  %v5748 = vsel %vm3049, %v5713, 0
  %v5751 = vsel %vm3049, %v5715, 0
  %v5754 = vsel %vm3049, %v5717, 0
  %v5757 = vsel %vm3049, %v5719, 0
  %v5760 = vsel %vm3049, %v5721, 0
  %v5763 = vsel %vm3049, %v5723, 0
  %v5766 = vsel %vm3049, %v5725, 0
  %v5769 = vsel %vm3049, %v5724, 0
  %v5772 = vsel %vm3095, %v5692, 0
  %5774 = vmatprep.subr.bf16.mxu0 0
  %5775 = vmatpush1.bf16.msra.mxu0 0
  %5776 = vmatprep.subr.bf16.mxu0 0
  %5777 = vmatpush1.bf16.msra.mxu0 0
  %5778 = vmatprep.subr.bf16.mxu0 0
  %5779 = vmatpush1.bf16.msra.mxu0 0
  %5780 = vmatprep.subr.bf16.mxu0 0
  %5781 = vmatpush1.bf16.msra.mxu0 0
  %5782 = vmatprep.subr.bf16.mxu0 0
  %5783 = vmatpush1.bf16.msra.mxu0 0
  %5784 = vmatprep.subr.bf16.mxu0 0
  %5785 = vmatpush1.bf16.msra.mxu0 0
  %5786 = vmatprep.subr.bf16.mxu0 0
  %5787 = vmatpush1.bf16.msra.mxu0 0
  %5788 = vmatprep.subr.bf16.mxu0 0
  %5789 = vmatpush1.bf16.msra.mxu0 %v5772
  %5790 = vmatprep.subr.bf16.mxu0 0
  %5791 = vmatpush2.bf16.msra.mxu0 0
  %5792 = vmatprep.subr.bf16.mxu0 0
  %5793 = vmatpush2.bf16.msra.mxu0 0
  %5794 = vmatprep.subr.bf16.mxu0 0
  %5795 = vmatpush2.bf16.msra.mxu0 0
  %5796 = vmatprep.subr.bf16.mxu0 0
  %5797 = vmatpush2.bf16.msra.mxu0 0
  %5798 = vmatprep.subr.bf16.mxu0 0
  %5799 = vmatpush2.bf16.msra.mxu0 0
  %5800 = vmatprep.subr.bf16.mxu0 0
  %5801 = vmatpush2.bf16.msra.mxu0 0
  %5802 = vmatprep.subr.bf16.mxu0 0
  %5803 = vmatpush2.bf16.msra.mxu0 0
  %5804 = vmatprep.subr.bf16.mxu0 0
  %5805 = vmatpush2.bf16.msra.mxu0 0
  %5806 = vmatprep.mubr.bf16.mxu0 0
  %5807 = vmatmul.mubr.bf16.gmra.mxu0 %v5727
  %v5808 = vpop.f32.mrf.mxu0
  %v5809 = vadd.f32 0.0, %v5808
  %v5810 = vpop.f32.mrf.mxu0
  %v5811 = vpop.f32.mrf.mxu0
  %v5812 = vadd.f32 0.0, %v5811
  %v5813 = vpop.f32.mrf.mxu0
  %5814 = vmatprep.mubr.bf16.mxu0 0
  %5815 = vmatmul.mubr.bf16.gmra.mxu0 %v5730
  %v5816 = vpop.f32.mrf.mxu0
  %v5817 = vadd.f32 0.0, %v5816
  %v5818 = vpop.f32.mrf.mxu0
  %v5819 = vpop.f32.mrf.mxu0
  %v5820 = vadd.f32 0.0, %v5819
  %v5821 = vpop.f32.mrf.mxu0
  %5822 = vmatprep.mubr.bf16.mxu0 0
  %5823 = vmatmul.mubr.bf16.gmra.mxu0 %v5733
  %v5824 = vpop.f32.mrf.mxu0
  %v5825 = vadd.f32 0.0, %v5824
  %v5826 = vpop.f32.mrf.mxu0
  %v5827 = vpop.f32.mrf.mxu0
  %v5828 = vadd.f32 0.0, %v5827
  %v5829 = vpop.f32.mrf.mxu0
  %5830 = vmatprep.mubr.bf16.mxu0 0
  %5831 = vmatmul.mubr.bf16.gmra.mxu0 %v5736
  %v5832 = vpop.f32.mrf.mxu0
  %v5833 = vadd.f32 0.0, %v5832
  %v5834 = vpop.f32.mrf.mxu0
  %v5835 = vpop.f32.mrf.mxu0
  %v5836 = vadd.f32 0.0, %v5835
  %v5837 = vpop.f32.mrf.mxu0
  %5838 = vmatprep.mubr.bf16.mxu0 0
  %5839 = vmatmul.mubr.bf16.gmra.mxu0 %v5739
  %v5840 = vpop.f32.mrf.mxu0
  %v5841 = vadd.f32 0.0, %v5840
  %v5842 = vpop.f32.mrf.mxu0
  %v5843 = vpop.f32.mrf.mxu0
  %v5844 = vadd.f32 0.0, %v5843
  %v5845 = vpop.f32.mrf.mxu0
  %5846 = vmatprep.mubr.bf16.mxu0 0
  %5847 = vmatmul.mubr.bf16.gmra.mxu0 %v5742
  %v5848 = vpop.f32.mrf.mxu0
  %v5849 = vadd.f32 0.0, %v5848
  %v5850 = vpop.f32.mrf.mxu0
  %v5851 = vpop.f32.mrf.mxu0
  %v5852 = vadd.f32 0.0, %v5851
  %v5853 = vpop.f32.mrf.mxu0
  %5854 = vmatprep.mubr.bf16.mxu0 0
  %5855 = vmatmul.mubr.bf16.gmra.mxu0 %v5745
  %v5856 = vpop.f32.mrf.mxu0
  %v5857 = vadd.f32 0.0, %v5856
  %v5858 = vpop.f32.mrf.mxu0
  %v5859 = vpop.f32.mrf.mxu0
  %v5860 = vadd.f32 0.0, %v5859
  %v5861 = vpop.f32.mrf.mxu0
  %5862 = vmatprep.mubr.bf16.mxu0 0
  %5863 = vmatmul.mubr.bf16.gmra.mxu0 %v5748
  %v5864 = vpop.f32.mrf.mxu0
  %v5865 = vadd.f32 0.0, %v5864
  %v5866 = vpop.f32.mrf.mxu0
  %v5867 = vpop.f32.mrf.mxu0
  %v5868 = vadd.f32 0.0, %v5867
  %v5869 = vpop.f32.mrf.mxu0
  %5870 = vmatprep.mubr.bf16.mxu0 0
  %5871 = vmatmul.mubr.bf16.gmra.mxu0 %v5751
  %v5872 = vpop.f32.mrf.mxu0
  %v5873 = vadd.f32 0.0, %v5872
  %v5874 = vpop.f32.mrf.mxu0
  %v5875 = vpop.f32.mrf.mxu0
  %v5876 = vadd.f32 0.0, %v5875
  %v5877 = vpop.f32.mrf.mxu0
  %5878 = vmatprep.mubr.bf16.mxu0 0
  %5879 = vmatmul.mubr.bf16.gmra.mxu0 %v5754
  %v5880 = vpop.f32.mrf.mxu0
  %v5881 = vadd.f32 0.0, %v5880
  %v5882 = vpop.f32.mrf.mxu0
  %v5883 = vpop.f32.mrf.mxu0
  %v5884 = vadd.f32 0.0, %v5883
  %v5885 = vpop.f32.mrf.mxu0
  %5886 = vmatprep.mubr.bf16.mxu0 0
  %5887 = vmatmul.mubr.bf16.gmra.mxu0 %v5757
  %v5888 = vpop.f32.mrf.mxu0
  %v5889 = vadd.f32 0.0, %v5888
  %v5890 = vpop.f32.mrf.mxu0
  %v5891 = vpop.f32.mrf.mxu0
  %v5892 = vadd.f32 0.0, %v5891
  %v5893 = vpop.f32.mrf.mxu0
  %5894 = vmatprep.mubr.bf16.mxu0 0
  %5895 = vmatmul.mubr.bf16.gmra.mxu0 %v5760
  %v5896 = vpop.f32.mrf.mxu0
  %v5897 = vadd.f32 0.0, %v5896
  %v5898 = vpop.f32.mrf.mxu0
  %v5899 = vpop.f32.mrf.mxu0
  %v5900 = vadd.f32 0.0, %v5899
  %v5901 = vpop.f32.mrf.mxu0
  %5902 = vmatprep.mubr.bf16.mxu0 0
  %5903 = vmatmul.mubr.bf16.gmra.mxu0 %v5763
  %v5904 = vpop.f32.mrf.mxu0
  %v5905 = vadd.f32 0.0, %v5904
  %v5906 = vpop.f32.mrf.mxu0
  %v5907 = vpop.f32.mrf.mxu0
  %v5908 = vadd.f32 0.0, %v5907
  %v5909 = vpop.f32.mrf.mxu0
  %5910 = vmatprep.mubr.bf16.mxu0 0
  %5911 = vmatmul.mubr.bf16.gmra.mxu0 %v5766
  %v5912 = vpop.f32.mrf.mxu0
  %v5913 = vadd.f32 0.0, %v5912
  %v5914 = vpop.f32.mrf.mxu0
  %v5915 = vpop.f32.mrf.mxu0
  %v5916 = vadd.f32 0.0, %v5915
  %v5917 = vpop.f32.mrf.mxu0
  %5918 = vmatprep.mubr.bf16.mxu0 0
  %5919 = vmatmul.mubr.bf16.gmra.mxu0 %v5769
  %v5920 = vpop.f32.mrf.mxu0
  %v5921 = vadd.f32 0.0, %v5920
  %v5922 = vpop.f32.mrf.mxu0
  %v5923 = vpop.f32.mrf.mxu0
  %v5924 = vpop.f32.mrf.mxu0
  %5925 = vdwg.mxu0
  %v5926 = vadd.f32 %v5661, %v5809
  %v5927 = vadd.f32 %v5662, %v5812
  %v5928 = vadd.f32 %v5663, %v5817
  %v5929 = vadd.f32 %v5664, %v5820
  %v5930 = vadd.f32 %v5665, %v5825
  %v5931 = vadd.f32 %v5666, %v5828
  %v5932 = vadd.f32 %v5667, %v5833
  %v5933 = vadd.f32 %v5668, %v5836
  %v5934 = vadd.f32 %v5669, %v5841
  %v5935 = vadd.f32 %v5670, %v5844
  %v5936 = vadd.f32 %v5671, %v5849
  %v5937 = vadd.f32 %v5672, %v5852
  %v5938 = vadd.f32 %v5673, %v5857
  %v5939 = vadd.f32 %v5674, %v5860
  %v5940 = vadd.f32 %v5675, %v5865
  %v5941 = vadd.f32 %v5676, %v5868
  %v5942 = vadd.f32 %v5677, %v5873
  %v5943 = vadd.f32 %v5678, %v5876
  %v5944 = vadd.f32 %v5679, %v5881
  %v5945 = vadd.f32 %v5680, %v5884
  %v5946 = vadd.f32 %v5681, %v5889
  %v5947 = vadd.f32 %v5682, %v5892
  %v5948 = vadd.f32 %v5683, %v5897
  %v5949 = vadd.f32 %v5684, %v5900
  %v5950 = vadd.f32 %v5685, %v5905
  %v5951 = vadd.f32 %v5686, %v5908
  %v5952 = vadd.f32 %v5687, %v5913
  %v5953 = vadd.f32 %v5688, %v5916
  %v5954 = vadd.f32 %v5689, %v5921
  %v5955 = vsel %vm4200, %v5926, 0.0
  %v5956 = vsel %vm4201, %v5927, 0.0
  %v5957 = vsel %vm4202, %v5928, 0.0
  %v5958 = vsel %vm4203, %v5929, 0.0
  %v5959 = vsel %vm4204, %v5930, 0.0
  %v5960 = vsel %vm4205, %v5931, 0.0
  %v5961 = vsel %vm4206, %v5932, 0.0
  %v5962 = vsel %vm4207, %v5933, 0.0
  %v5963 = vsel %vm4208, %v5934, 0.0
  %v5964 = vsel %vm4209, %v5935, 0.0
  %v5965 = vsel %vm4210, %v5936, 0.0
  %v5966 = vsel %vm4211, %v5937, 0.0
  %v5967 = vsel %vm4212, %v5938, 0.0
  %v5968 = vsel %vm4213, %v5939, 0.0
  %v5969 = vsel %vm4214, %v5940, 0.0
  %v5970 = vsel %vm4215, %v5941, 0.0
  %v5971 = vsel %vm4216, %v5942, 0.0
  %v5972 = vsel %vm4217, %v5943, 0.0
  %v5973 = vsel %vm4218, %v5944, 0.0
  %v5974 = vsel %vm4219, %v5945, 0.0
  %v5975 = vsel %vm4220, %v5946, 0.0
  %v5976 = vsel %vm4221, %v5947, 0.0
  %v5977 = vsel %vm4222, %v5948, 0.0
  %v5978 = vsel %vm4223, %v5949, 0.0
  %v5979 = vsel %vm4224, %v5950, 0.0
  %v5980 = vsel %vm4225, %v5951, 0.0
  %v5981 = vsel %vm4226, %v5952, 0.0
  %v5982 = vsel %vm4227, %v5953, 0.0
  %v5983 = vsel %vm4228, %v5954, 0.0
  %v5984 = vsel %vm4258, %v5955, 0.0
  %v5985 = vsel %vm4258, %v5956, 0.0
  %v5986 = vadd.f32 %v5984, %v5985
  %v5987 = vsel %vm4258, %v5957, 0.0
  %v5988 = vadd.f32 %v5986, %v5987
  %v5989 = vsel %vm4258, %v5958, 0.0
  %v5990 = vadd.f32 %v5988, %v5989
  %v5991 = vsel %vm4258, %v5959, 0.0
  %v5992 = vadd.f32 %v5990, %v5991
  %v5993 = vsel %vm4258, %v5960, 0.0
  %v5994 = vadd.f32 %v5992, %v5993
  %v5995 = vsel %vm4258, %v5961, 0.0
  %v5996 = vadd.f32 %v5994, %v5995
  %v5997 = vsel %vm4258, %v5962, 0.0
  %v5998 = vadd.f32 %v5996, %v5997
  %v5999 = vsel %vm4258, %v5963, 0.0
  %v6000 = vadd.f32 %v5998, %v5999
  %v6001 = vsel %vm4258, %v5964, 0.0
  %v6002 = vadd.f32 %v6000, %v6001
  %v6003 = vsel %vm4258, %v5965, 0.0
  %v6004 = vadd.f32 %v6002, %v6003
  %v6005 = vsel %vm4258, %v5966, 0.0
  %v6006 = vadd.f32 %v6004, %v6005
  %v6007 = vsel %vm4258, %v5967, 0.0
  %v6008 = vadd.f32 %v6006, %v6007
  %v6009 = vsel %vm4258, %v5968, 0.0
  %v6010 = vadd.f32 %v6008, %v6009
  %v6011 = vsel %vm4258, %v5969, 0.0
  %v6012 = vadd.f32 %v6010, %v6011
  %v6013 = vsel %vm4258, %v5970, 0.0
  %v6014 = vadd.f32 %v6012, %v6013
  %v6015 = vsel %vm4258, %v5971, 0.0
  %v6016 = vadd.f32 %v6014, %v6015
  %v6017 = vsel %vm4258, %v5972, 0.0
  %v6018 = vadd.f32 %v6016, %v6017
  %v6019 = vsel %vm4258, %v5973, 0.0
  %v6020 = vadd.f32 %v6018, %v6019
  %v6021 = vsel %vm4258, %v5974, 0.0
  %v6022 = vadd.f32 %v6020, %v6021
  %v6023 = vsel %vm4258, %v5975, 0.0
  %v6024 = vadd.f32 %v6022, %v6023
  %v6025 = vsel %vm4258, %v5976, 0.0
  %v6026 = vadd.f32 %v6024, %v6025
  %v6027 = vsel %vm4258, %v5977, 0.0
  %v6028 = vadd.f32 %v6026, %v6027
  %v6029 = vsel %vm4258, %v5978, 0.0
  %v6030 = vadd.f32 %v6028, %v6029
  %v6031 = vsel %vm4258, %v5979, 0.0
  %v6032 = vadd.f32 %v6030, %v6031
  %v6033 = vsel %vm4258, %v5980, 0.0
  %v6034 = vadd.f32 %v6032, %v6033
  %v6035 = vsel %vm4258, %v5981, 0.0
  %v6036 = vadd.f32 %v6034, %v6035
  %v6037 = vsel %vm4258, %v5982, 0.0
  %v6038 = vadd.f32 %v6036, %v6037
  %v6039 = vsel %vm4314, %v5983, 0.0
  %v6040 = vadd.f32 %v6038, %v6039
  %v6041 = vrot.slane %v6040, 4
  %v6042 = vadd.f32 %v6040, %v6041
  %v6043 = vrot.slane %v6042, 2
  %v6044 = vadd.f32 %v6042, %v6043
  %v6045 = vrot.slane %v6044, 1
  %v6046 = vadd.f32 %v6044, %v6045
  %v6047 = vadd.f32 %v4323, %v6046
  %v6048 = vmul.f32 %v5955, %v5955
  %v6049 = vmul.f32 %v5956, %v5956
  %v6050 = vmul.f32 %v5957, %v5957
  %v6051 = vmul.f32 %v5958, %v5958
  %v6052 = vmul.f32 %v5959, %v5959
  %v6053 = vmul.f32 %v5960, %v5960
  %v6054 = vmul.f32 %v5961, %v5961
  %v6055 = vmul.f32 %v5962, %v5962
  %v6056 = vmul.f32 %v5963, %v5963
  %v6057 = vmul.f32 %v5964, %v5964
  %v6058 = vmul.f32 %v5965, %v5965
  %v6059 = vmul.f32 %v5966, %v5966
  %v6060 = vmul.f32 %v5967, %v5967
  %v6061 = vmul.f32 %v5968, %v5968
  %v6062 = vmul.f32 %v5969, %v5969
  %v6063 = vmul.f32 %v5970, %v5970
  %v6064 = vmul.f32 %v5971, %v5971
  %v6065 = vmul.f32 %v5972, %v5972
  %v6066 = vmul.f32 %v5973, %v5973
  %v6067 = vmul.f32 %v5974, %v5974
  %v6068 = vmul.f32 %v5975, %v5975
  %v6069 = vmul.f32 %v5976, %v5976
  %v6070 = vmul.f32 %v5977, %v5977
  %v6071 = vmul.f32 %v5978, %v5978
  %v6072 = vmul.f32 %v5979, %v5979
  %v6073 = vmul.f32 %v5980, %v5980
  %v6074 = vmul.f32 %v5981, %v5981
  %v6075 = vmul.f32 %v5982, %v5982
  %v6076 = vmul.f32 %v5983, %v5983
  %v6077 = vsel %vm4258, %v6048, 0.0
  %v6078 = vsel %vm4258, %v6049, 0.0
  %v6079 = vadd.f32 %v6077, %v6078
  %v6080 = vsel %vm4258, %v6050, 0.0
  %v6081 = vadd.f32 %v6079, %v6080
  %v6082 = vsel %vm4258, %v6051, 0.0
  %v6083 = vadd.f32 %v6081, %v6082
  %v6084 = vsel %vm4258, %v6052, 0.0
  %v6085 = vadd.f32 %v6083, %v6084
  %v6086 = vsel %vm4258, %v6053, 0.0
  %v6087 = vadd.f32 %v6085, %v6086
  %v6088 = vsel %vm4258, %v6054, 0.0
  %v6089 = vadd.f32 %v6087, %v6088
  %v6090 = vsel %vm4258, %v6055, 0.0
  %v6091 = vadd.f32 %v6089, %v6090
  %v6092 = vsel %vm4258, %v6056, 0.0
  %v6093 = vadd.f32 %v6091, %v6092
  %v6094 = vsel %vm4258, %v6057, 0.0
  %v6095 = vadd.f32 %v6093, %v6094
  %v6096 = vsel %vm4258, %v6058, 0.0
  %v6097 = vadd.f32 %v6095, %v6096
  %v6098 = vsel %vm4258, %v6059, 0.0
  %v6099 = vadd.f32 %v6097, %v6098
  %v6100 = vsel %vm4258, %v6060, 0.0
  %v6101 = vadd.f32 %v6099, %v6100
  %v6102 = vsel %vm4258, %v6061, 0.0
  %v6103 = vadd.f32 %v6101, %v6102
  %v6104 = vsel %vm4258, %v6062, 0.0
  %v6105 = vadd.f32 %v6103, %v6104
  %v6106 = vsel %vm4258, %v6063, 0.0
  %v6107 = vadd.f32 %v6105, %v6106
  %v6108 = vsel %vm4258, %v6064, 0.0
  %v6109 = vadd.f32 %v6107, %v6108
  %v6110 = vsel %vm4258, %v6065, 0.0
  %v6111 = vadd.f32 %v6109, %v6110
  %v6112 = vsel %vm4258, %v6066, 0.0
  %v6113 = vadd.f32 %v6111, %v6112
  %v6114 = vsel %vm4258, %v6067, 0.0
  %v6115 = vadd.f32 %v6113, %v6114
  %v6116 = vsel %vm4258, %v6068, 0.0
  %v6117 = vadd.f32 %v6115, %v6116
  %v6118 = vsel %vm4258, %v6069, 0.0
  %v6119 = vadd.f32 %v6117, %v6118
  %v6120 = vsel %vm4258, %v6070, 0.0
  %v6121 = vadd.f32 %v6119, %v6120
  %v6122 = vsel %vm4258, %v6071, 0.0
  %v6123 = vadd.f32 %v6121, %v6122
  %v6124 = vsel %vm4258, %v6072, 0.0
  %v6125 = vadd.f32 %v6123, %v6124
  %v6126 = vsel %vm4258, %v6073, 0.0
  %v6127 = vadd.f32 %v6125, %v6126
  %v6128 = vsel %vm4258, %v6074, 0.0
  %v6129 = vadd.f32 %v6127, %v6128
  %v6130 = vsel %vm4258, %v6075, 0.0
  %v6131 = vadd.f32 %v6129, %v6130
  %v6132 = vsel %vm4314, %v6076, 0.0
  %v6133 = vadd.f32 %v6131, %v6132
  %v6134 = vrot.slane %v6133, 4
  %v6135 = vadd.f32 %v6133, %v6134
  %v6136 = vrot.slane %v6135, 2
  %v6137 = vadd.f32 %v6135, %v6136
  %v6138 = vrot.slane %v6137, 1
  %v6139 = vadd.f32 %v6137, %v6138
  %v6140 = vadd.f32 %v4416, %v6139
  %v6141 = vpack.c.bf16 %v5956, %v5955
  %v6142 = vpack.c.bf16 %v5958, %v5957
  %v6143 = vpack.c.bf16 %v5960, %v5959
  %v6144 = vpack.c.bf16 %v5962, %v5961
  %v6145 = vpack.c.bf16 %v5964, %v5963
  %v6146 = vpack.c.bf16 %v5966, %v5965
  %v6147 = vpack.c.bf16 %v5968, %v5967
  %v6148 = vpack.c.bf16 %v5970, %v5969
  %v6149 = vpack.c.bf16 %v5972, %v5971
  %v6150 = vpack.c.bf16 %v5974, %v5973
  %v6151 = vpack.c.bf16 %v5976, %v5975
  %v6152 = vpack.c.bf16 %v5978, %v5977
  %v6153 = vpack.c.bf16 %v5980, %v5979
  %v6154 = vpack.c.bf16 %v5982, %v5981
  %v6155 = vpack.c.bf16 %v5983, %v5983
  %v6171 = vunpack.c.l.b16 %v6141
  %v6172 = vunpack.c.h.b16 %v6141
  %v6173 = vunpack.c.l.b16 %v6142
  %v6174 = vunpack.c.h.b16 %v6142
  %v6175 = vunpack.c.l.b16 %v6143
  %v6176 = vunpack.c.h.b16 %v6143
  %v6177 = vunpack.c.l.b16 %v6144
  %v6178 = vunpack.c.h.b16 %v6144
  %v6179 = vunpack.c.l.b16 %v6145
  %v6180 = vunpack.c.h.b16 %v6145
  %v6181 = vunpack.c.l.b16 %v6146
  %v6182 = vunpack.c.h.b16 %v6146
  %v6183 = vunpack.c.l.b16 %v6147
  %v6184 = vunpack.c.h.b16 %v6147
  %v6185 = vunpack.c.l.b16 %v6148
  %v6186 = vunpack.c.h.b16 %v6148
  %v6187 = vunpack.c.l.b16 %v6149
  %v6188 = vunpack.c.h.b16 %v6149
  %v6189 = vunpack.c.l.b16 %v6150
  %v6190 = vunpack.c.h.b16 %v6150
  %v6191 = vunpack.c.l.b16 %v6151
  %v6192 = vunpack.c.h.b16 %v6151
  %v6193 = vunpack.c.l.b16 %v6152
  %v6194 = vunpack.c.h.b16 %v6152
  %v6195 = vunpack.c.l.b16 %v6153
  %v6196 = vunpack.c.h.b16 %v6153
  %v6197 = vunpack.c.l.b16 %v6154
  %v6198 = vunpack.c.h.b16 %v6154
  %v6199 = vunpack.c.l.b16 %v6155
  %v6200 = vpack.c.b16 %v6171, %v6171
  %v6201 = vpack.c.b16 %v6172, %v6172
  %v6202 = vpack.c.b16 %v6173, %v6173
  %v6203 = vpack.c.b16 %v6174, %v6174
  %v6204 = vpack.c.b16 %v6175, %v6175
  %v6205 = vpack.c.b16 %v6176, %v6176
  %v6206 = vpack.c.b16 %v6177, %v6177
  %v6207 = vpack.c.b16 %v6178, %v6178
  %v6208 = vpack.c.b16 %v6179, %v6179
  %v6209 = vpack.c.b16 %v6180, %v6180
  %v6210 = vpack.c.b16 %v6181, %v6181
  %v6211 = vpack.c.b16 %v6182, %v6182
  %v6212 = vpack.c.b16 %v6183, %v6183
  %v6213 = vpack.c.b16 %v6184, %v6184
  %v6214 = vpack.c.b16 %v6185, %v6185
  %v6215 = vpack.c.b16 %v6186, %v6186
  %v6216 = vpack.c.b16 %v6187, %v6187
  %v6217 = vpack.c.b16 %v6188, %v6188
  %v6218 = vpack.c.b16 %v6189, %v6189
  %v6219 = vpack.c.b16 %v6190, %v6190
  %v6220 = vpack.c.b16 %v6191, %v6191
  %v6221 = vpack.c.b16 %v6192, %v6192
  %v6222 = vpack.c.b16 %v6193, %v6193
  %v6223 = vpack.c.b16 %v6194, %v6194
  %v6224 = vpack.c.b16 %v6195, %v6195
  %v6225 = vpack.c.b16 %v6196, %v6196
  %v6226 = vpack.c.b16 %v6197, %v6197
  %v6227 = vpack.c.b16 %v6198, %v6198
  %v6228 = vpack.c.b16 %v6199, %v6199
  %6229 = vrot.lane.b32.xlu0 %v6200, 4
  %v6230 = vpop.permute.xlu0 %6229
  %6231 = vrot.lane.b32.xlu0 %v6201, 4
  %v6232 = vpop.permute.xlu0 %6231
  %6233 = vrot.lane.b32.xlu0 %v6202, 4
  %v6234 = vpop.permute.xlu0 %6233
  %6235 = vrot.lane.b32.xlu0 %v6203, 4
  %v6236 = vpop.permute.xlu0 %6235
  %6237 = vrot.lane.b32.xlu0 %v6204, 4
  %v6238 = vpop.permute.xlu0 %6237
  %6239 = vrot.lane.b32.xlu0 %v6205, 4
  %v6240 = vpop.permute.xlu0 %6239
  %6241 = vrot.lane.b32.xlu0 %v6206, 4
  %v6242 = vpop.permute.xlu0 %6241
  %6243 = vrot.lane.b32.xlu0 %v6207, 4
  %v6244 = vpop.permute.xlu0 %6243
  %6245 = vrot.lane.b32.xlu0 %v6208, 4
  %v6246 = vpop.permute.xlu0 %6245
  %6247 = vrot.lane.b32.xlu0 %v6209, 4
  %v6248 = vpop.permute.xlu0 %6247
  %6249 = vrot.lane.b32.xlu0 %v6210, 4
  %v6250 = vpop.permute.xlu0 %6249
  %6251 = vrot.lane.b32.xlu0 %v6211, 4
  %v6252 = vpop.permute.xlu0 %6251
  %6253 = vrot.lane.b32.xlu0 %v6212, 4
  %v6254 = vpop.permute.xlu0 %6253
  %6255 = vrot.lane.b32.xlu0 %v6213, 4
  %v6256 = vpop.permute.xlu0 %6255
  %6257 = vrot.lane.b32.xlu0 %v6214, 4
  %v6258 = vpop.permute.xlu0 %6257
  %6259 = vrot.lane.b32.xlu0 %v6215, 4
  %v6260 = vpop.permute.xlu0 %6259
  %6261 = vrot.lane.b32.xlu0 %v6216, 4
  %v6262 = vpop.permute.xlu0 %6261
  %6263 = vrot.lane.b32.xlu0 %v6217, 4
  %v6264 = vpop.permute.xlu0 %6263
  %6265 = vrot.lane.b32.xlu0 %v6218, 4
  %v6266 = vpop.permute.xlu0 %6265
  %6267 = vrot.lane.b32.xlu0 %v6219, 4
  %v6268 = vpop.permute.xlu0 %6267
  %6269 = vrot.lane.b32.xlu0 %v6220, 4
  %v6270 = vpop.permute.xlu0 %6269
  %6271 = vrot.lane.b32.xlu0 %v6221, 4
  %v6272 = vpop.permute.xlu0 %6271
  %6273 = vrot.lane.b32.xlu0 %v6222, 4
  %v6274 = vpop.permute.xlu0 %6273
  %6275 = vrot.lane.b32.xlu0 %v6223, 4
  %v6276 = vpop.permute.xlu0 %6275
  %6277 = vrot.lane.b32.xlu0 %v6224, 4
  %v6278 = vpop.permute.xlu0 %6277
  %6279 = vrot.lane.b32.xlu0 %v6225, 4
  %v6280 = vpop.permute.xlu0 %6279
  %6281 = vrot.lane.b32.xlu0 %v6226, 4
  %v6282 = vpop.permute.xlu0 %6281
  %6283 = vrot.lane.b32.xlu0 %v6227, 4
  %v6284 = vpop.permute.xlu0 %6283
  %6285 = vrot.lane.b32.xlu0 %v6228, 4
  %v6286 = vpop.permute.xlu0 %6285
  %vm6316 = vcmask 60448
  %6317 = vst.msk [vmem:[%s3] sm:$0xf] %vm6316, %v6230
  %6318 = vst.msk [vmem:[%s3 + $0x4] sm:$0xf] %vm6316, %v6232
  %6319 = vst.msk [vmem:[%s3 + $0x8] sm:$0xf] %vm6316, %v6234
  %6320 = vst.msk [vmem:[%s3 + $0xc] sm:$0xf] %vm6316, %v6236
  %6321 = vst.msk [vmem:[%s3 + $0x10] sm:$0xf] %vm6316, %v6238
  %6322 = vst.msk [vmem:[%s3 + $0x14] sm:$0xf] %vm6316, %v6240
  %6323 = vst.msk [vmem:[%s3 + $0x18] sm:$0xf] %vm6316, %v6242
  %6324 = vst.msk [vmem:[%s3 + $0x1c] sm:$0xf] %vm6316, %v6244
  %6325 = vst.msk [vmem:[%s3 + $0x20] sm:$0xf] %vm6316, %v6246
  %6326 = vst.msk [vmem:[%s3 + $0x24] sm:$0xf] %vm6316, %v6248
  %6327 = vst.msk [vmem:[%s3 + $0x28] sm:$0xf] %vm6316, %v6250
  %6328 = vst.msk [vmem:[%s3 + $0x2c] sm:$0xf] %vm6316, %v6252
  %6329 = vst.msk [vmem:[%s3 + $0x30] sm:$0xf] %vm6316, %v6254
  %6330 = vst.msk [vmem:[%s3 + $0x34] sm:$0xf] %vm6316, %v6256
  %6331 = vst.msk [vmem:[%s3 + $0x38] sm:$0xf] %vm6316, %v6258
  %6332 = vst.msk [vmem:[%s3 + $0x3c] sm:$0xf] %vm6316, %v6260
  %6333 = vst.msk [vmem:[%s3 + $0x40] sm:$0xf] %vm6316, %v6262
  %6334 = vst.msk [vmem:[%s3 + $0x44] sm:$0xf] %vm6316, %v6264
  %6335 = vst.msk [vmem:[%s3 + $0x48] sm:$0xf] %vm6316, %v6266
  %6336 = vst.msk [vmem:[%s3 + $0x4c] sm:$0xf] %vm6316, %v6268
  %6337 = vst.msk [vmem:[%s3 + $0x50] sm:$0xf] %vm6316, %v6270
  %6338 = vst.msk [vmem:[%s3 + $0x54] sm:$0xf] %vm6316, %v6272
  %6339 = vst.msk [vmem:[%s3 + $0x58] sm:$0xf] %vm6316, %v6274
  %6340 = vst.msk [vmem:[%s3 + $0x5c] sm:$0xf] %vm6316, %v6276
  %6341 = vst.msk [vmem:[%s3 + $0x60] sm:$0xf] %vm6316, %v6278
  %6342 = vst.msk [vmem:[%s3 + $0x64] sm:$0xf] %vm6316, %v6280
  %6343 = vst.msk [vmem:[%s3 + $0x68] sm:$0xf] %vm6316, %v6282
  %6344 = vst.msk [vmem:[%s3 + $0x6c] sm:$0xf] %vm6316, %v6284
  %vm6345 = vcmask 57376
  %6346 = vst.msk [vmem:[%s3 + $0x70] sm:$0x1] %vm6345, %v6286
  %v6347 = vld [vmem:[#allocation3 + $0x4] sm:$0xe]
  %v6348 = vld [vmem:[#allocation3 + $0x8] sm:$0xf]
  %v6349 = vld [vmem:[#allocation3 + $0xc] sm:$0xf]
  %v6350 = vld [vmem:[#allocation3 + $0x10] sm:$0xf]
  %v6351 = vld [vmem:[#allocation3 + $0x14] sm:$0xf]
  %v6352 = vld [vmem:[#allocation3 + $0x18] sm:$0xf]
  %v6353 = vld [vmem:[#allocation3 + $0x1c] sm:$0xf]
  %v6354 = vld [vmem:[#allocation3 + $0x20] sm:$0xf]
  %v6355 = vld [vmem:[#allocation3 + $0x24] sm:$0xf]
  %v6356 = vld [vmem:[#allocation3 + $0x28] sm:$0xf]
  %v6357 = vld [vmem:[#allocation3 + $0x2c] sm:$0xf]
  %v6358 = vld [vmem:[#allocation3 + $0x30] sm:$0xf]
  %v6359 = vld [vmem:[#allocation3 + $0x34] sm:$0xf]
  %v6360 = vld [vmem:[#allocation3 + $0x38] sm:$0xf]
  %v6361 = vld [vmem:[#allocation3 + $0x3c] sm:$0xf]
  %v6362 = vld [vmem:[#allocation3 + $0x40] sm:$0xf]
  %v6363 = vld [vmem:[#allocation3 + $0x44] sm:$0xf]
  %v6364 = vld [vmem:[#allocation3 + $0x48] sm:$0xf]
  %v6365 = vld [vmem:[#allocation3 + $0x4c] sm:$0xf]
  %v6366 = vld [vmem:[#allocation3 + $0x50] sm:$0xf]
  %v6367 = vld [vmem:[#allocation3 + $0x54] sm:$0xf]
  %v6368 = vld [vmem:[#allocation3 + $0x58] sm:$0xf]
  %v6369 = vld [vmem:[#allocation3 + $0x5c] sm:$0xf]
  %v6370 = vld [vmem:[#allocation3 + $0x60] sm:$0xf]
  %v6371 = vld [vmem:[#allocation3 + $0x64] sm:$0xf]
  %v6372 = vld [vmem:[#allocation3 + $0x68] sm:$0xf]
  %v6373 = vld [vmem:[#allocation3 + $0x6c] sm:$0xf]
  %v6374 = vld [vmem:[#allocation3 + $0x70] sm:$0xf]
  %v6375 = vld [vmem:[#allocation3 + $0x74] sm:$0x3]
  %s6376 = scalar_lea.vmem %s2, 32
  %v6377 = vld [vmem:[%s6376] sm:$0xf]
  %v6378 = vld [vmem:[#allocation3 + $0x74] sm:$0x7]
  %s6379 = scalar_lea.vmem %s2, 36
  %v6380 = vld [vmem:[%s6379] sm:$0xf]
  %v6410 = vunpack.c.l.b16 %v6347
  %v6411 = vunpack.c.l.b16 %v6348
  %v6412 = vunpack.c.l.b16 %v6349
  %v6413 = vunpack.c.l.b16 %v6350
  %v6414 = vunpack.c.l.b16 %v6351
  %v6415 = vunpack.c.l.b16 %v6352
  %v6416 = vunpack.c.l.b16 %v6353
  %v6417 = vunpack.c.l.b16 %v6354
  %v6418 = vunpack.c.l.b16 %v6355
  %v6419 = vunpack.c.l.b16 %v6356
  %v6420 = vunpack.c.l.b16 %v6357
  %v6421 = vunpack.c.l.b16 %v6358
  %v6422 = vunpack.c.l.b16 %v6359
  %v6423 = vunpack.c.l.b16 %v6360
  %v6424 = vunpack.c.l.b16 %v6361
  %v6425 = vunpack.c.l.b16 %v6362
  %v6426 = vunpack.c.l.b16 %v6363
  %v6427 = vunpack.c.l.b16 %v6364
  %v6428 = vunpack.c.l.b16 %v6365
  %v6429 = vunpack.c.l.b16 %v6366
  %v6430 = vunpack.c.l.b16 %v6367
  %v6431 = vunpack.c.l.b16 %v6368
  %v6432 = vunpack.c.l.b16 %v6369
  %v6433 = vunpack.c.l.b16 %v6370
  %v6434 = vunpack.c.l.b16 %v6371
  %v6435 = vunpack.c.l.b16 %v6372
  %v6436 = vunpack.c.l.b16 %v6373
  %v6437 = vunpack.c.l.b16 %v6374
  %v6438 = vunpack.c.l.b16 %v6378
  %v6439 = vpack.c.b16 %v6411, %v6410
  %v6440 = vpack.c.b16 %v6413, %v6412
  %v6441 = vpack.c.b16 %v6415, %v6414
  %v6442 = vpack.c.b16 %v6417, %v6416
  %v6443 = vpack.c.b16 %v6419, %v6418
  %v6444 = vpack.c.b16 %v6421, %v6420
  %v6445 = vpack.c.b16 %v6423, %v6422
  %v6446 = vpack.c.b16 %v6425, %v6424
  %v6447 = vpack.c.b16 %v6427, %v6426
  %v6448 = vpack.c.b16 %v6429, %v6428
  %v6449 = vpack.c.b16 %v6431, %v6430
  %v6450 = vpack.c.b16 %v6433, %v6432
  %v6451 = vpack.c.b16 %v6435, %v6434
  %v6452 = vpack.c.b16 %v6437, %v6436
  %v6453 = vpack.c.b16 %v6438, %v6438
  %v6455 = vshrl.u32 %v6439, 16
  %v6457 = vrot.slane %v6455, 1
  %v6458 = vshll.u32 %v6439, 16
  %v6460 = vrot.slane %v6458, 2
  %v6461 = vor.u32 %v6457, %v6460
  %v6463 = vshrl.u32 %v6440, 16
  %v6465 = vrot.slane %v6463, 1
  %v6466 = vshll.u32 %v6440, 16
  %v6468 = vrot.slane %v6466, 2
  %v6469 = vor.u32 %v6465, %v6468
  %v6470 = vsel %vm2005, %v6461, %v6469
  %v6472 = vshrl.u32 %v6441, 16
  %v6474 = vrot.slane %v6472, 1
  %v6475 = vshll.u32 %v6441, 16
  %v6477 = vrot.slane %v6475, 2
  %v6478 = vor.u32 %v6474, %v6477
  %v6479 = vsel %vm2005, %v6469, %v6478
  %v6481 = vshrl.u32 %v6442, 16
  %v6483 = vrot.slane %v6481, 1
  %v6484 = vshll.u32 %v6442, 16
  %v6486 = vrot.slane %v6484, 2
  %v6487 = vor.u32 %v6483, %v6486
  %v6488 = vsel %vm2005, %v6478, %v6487
  %v6490 = vshrl.u32 %v6443, 16
  %v6492 = vrot.slane %v6490, 1
  %v6493 = vshll.u32 %v6443, 16
  %v6495 = vrot.slane %v6493, 2
  %v6496 = vor.u32 %v6492, %v6495
  %v6497 = vsel %vm2005, %v6487, %v6496
  %v6499 = vshrl.u32 %v6444, 16
  %v6501 = vrot.slane %v6499, 1
  %v6502 = vshll.u32 %v6444, 16
  %v6504 = vrot.slane %v6502, 2
  %v6505 = vor.u32 %v6501, %v6504
  %v6506 = vsel %vm2005, %v6496, %v6505
  %v6508 = vshrl.u32 %v6445, 16
  %v6510 = vrot.slane %v6508, 1
  %v6511 = vshll.u32 %v6445, 16
  %v6513 = vrot.slane %v6511, 2
  %v6514 = vor.u32 %v6510, %v6513
  %v6515 = vsel %vm2005, %v6505, %v6514
  %v6517 = vshrl.u32 %v6446, 16
  %v6519 = vrot.slane %v6517, 1
  %v6520 = vshll.u32 %v6446, 16
  %v6522 = vrot.slane %v6520, 2
  %v6523 = vor.u32 %v6519, %v6522
  %v6524 = vsel %vm2005, %v6514, %v6523
  %v6526 = vshrl.u32 %v6447, 16
  %v6528 = vrot.slane %v6526, 1
  %v6529 = vshll.u32 %v6447, 16
  %v6531 = vrot.slane %v6529, 2
  %v6532 = vor.u32 %v6528, %v6531
  %v6533 = vsel %vm2005, %v6523, %v6532
  %v6535 = vshrl.u32 %v6448, 16
  %v6537 = vrot.slane %v6535, 1
  %v6538 = vshll.u32 %v6448, 16
  %v6540 = vrot.slane %v6538, 2
  %v6541 = vor.u32 %v6537, %v6540
  %v6542 = vsel %vm2005, %v6532, %v6541
  %v6544 = vshrl.u32 %v6449, 16
  %v6546 = vrot.slane %v6544, 1
  %v6547 = vshll.u32 %v6449, 16
  %v6549 = vrot.slane %v6547, 2
  %v6550 = vor.u32 %v6546, %v6549
  %v6551 = vsel %vm2005, %v6541, %v6550
  %v6553 = vshrl.u32 %v6450, 16
  %v6555 = vrot.slane %v6553, 1
  %v6556 = vshll.u32 %v6450, 16
  %v6558 = vrot.slane %v6556, 2
  %v6559 = vor.u32 %v6555, %v6558
  %v6560 = vsel %vm2005, %v6550, %v6559
  %v6562 = vshrl.u32 %v6451, 16
  %v6564 = vrot.slane %v6562, 1
  %v6565 = vshll.u32 %v6451, 16
  %v6567 = vrot.slane %v6565, 2
  %v6568 = vor.u32 %v6564, %v6567
  %v6569 = vsel %vm2005, %v6559, %v6568
  %v6571 = vshrl.u32 %v6452, 16
  %v6573 = vrot.slane %v6571, 1
  %v6574 = vshll.u32 %v6452, 16
  %v6576 = vrot.slane %v6574, 2
  %v6577 = vor.u32 %v6573, %v6576
  %v6578 = vsel %vm2005, %v6568, %v6577
  %v6580 = vshrl.u32 %v6453, 16
  %v6582 = vrot.slane %v6580, 1
  %v6583 = vshll.u32 %v6453, 16
  %v6585 = vrot.slane %v6583, 2
  %v6586 = vor.u32 %v6582, %v6585
  %v6587 = vsel %vm2005, %v6577, %v6586
  %v6589 = vsel %vm3049, %v6470, 0
  %v6592 = vsel %vm3049, %v6479, 0
  %v6595 = vsel %vm3049, %v6488, 0
  %v6598 = vsel %vm3049, %v6497, 0
  %v6601 = vsel %vm3049, %v6506, 0
  %v6604 = vsel %vm3049, %v6515, 0
  %v6607 = vsel %vm3049, %v6524, 0
  %v6610 = vsel %vm3049, %v6533, 0
  %v6613 = vsel %vm3049, %v6542, 0
  %v6616 = vsel %vm3049, %v6551, 0
  %v6619 = vsel %vm3049, %v6560, 0
  %v6622 = vsel %vm3049, %v6569, 0
  %v6625 = vsel %vm3049, %v6578, 0
  %v6628 = vsel %vm3049, %v6587, 0
  %v6631 = vsel %vm3049, %v6586, 0
  %v6634 = vsel %vm3095, %v6380, 0
  %6636 = vmatprep.subr.bf16.mxu0 0
  %6637 = vmatpush1.bf16.msra.mxu0 0
  %6638 = vmatprep.subr.bf16.mxu0 0
  %6639 = vmatpush1.bf16.msra.mxu0 0
  %6640 = vmatprep.subr.bf16.mxu0 0
  %6641 = vmatpush1.bf16.msra.mxu0 0
  %6642 = vmatprep.subr.bf16.mxu0 0
  %6643 = vmatpush1.bf16.msra.mxu0 0
  %6644 = vmatprep.subr.bf16.mxu0 0
  %6645 = vmatpush1.bf16.msra.mxu0 0
  %6646 = vmatprep.subr.bf16.mxu0 0
  %6647 = vmatpush1.bf16.msra.mxu0 0
  %6648 = vmatprep.subr.bf16.mxu0 0
  %6649 = vmatpush1.bf16.msra.mxu0 0
  %6650 = vmatprep.subr.bf16.mxu0 0
  %6651 = vmatpush1.bf16.msra.mxu0 %v6634
  %6652 = vmatprep.subr.bf16.mxu0 0
  %6653 = vmatpush2.bf16.msra.mxu0 0
  %6654 = vmatprep.subr.bf16.mxu0 0
  %6655 = vmatpush2.bf16.msra.mxu0 0
  %6656 = vmatprep.subr.bf16.mxu0 0
  %6657 = vmatpush2.bf16.msra.mxu0 0
  %6658 = vmatprep.subr.bf16.mxu0 0
  %6659 = vmatpush2.bf16.msra.mxu0 0
  %6660 = vmatprep.subr.bf16.mxu0 0
  %6661 = vmatpush2.bf16.msra.mxu0 0
  %6662 = vmatprep.subr.bf16.mxu0 0
  %6663 = vmatpush2.bf16.msra.mxu0 0
  %6664 = vmatprep.subr.bf16.mxu0 0
  %6665 = vmatpush2.bf16.msra.mxu0 0
  %6666 = vmatprep.subr.bf16.mxu0 0
  %6667 = vmatpush2.bf16.msra.mxu0 0
  %6668 = vmatprep.mubr.bf16.mxu0 0
  %6669 = vmatmul.mubr.bf16.gmra.mxu0 %v6589
  %v6670 = vpop.f32.mrf.mxu0
  %v6671 = vadd.f32 0.0, %v6670
  %v6672 = vpop.f32.mrf.mxu0
  %v6673 = vpop.f32.mrf.mxu0
  %v6674 = vadd.f32 0.0, %v6673
  %v6675 = vpop.f32.mrf.mxu0
  %6676 = vmatprep.mubr.bf16.mxu0 0
  %6677 = vmatmul.mubr.bf16.gmra.mxu0 %v6592
  %v6678 = vpop.f32.mrf.mxu0
  %v6679 = vadd.f32 0.0, %v6678
  %v6680 = vpop.f32.mrf.mxu0
  %v6681 = vpop.f32.mrf.mxu0
  %v6682 = vadd.f32 0.0, %v6681
  %v6683 = vpop.f32.mrf.mxu0
  %6684 = vmatprep.mubr.bf16.mxu0 0
  %6685 = vmatmul.mubr.bf16.gmra.mxu0 %v6595
  %v6686 = vpop.f32.mrf.mxu0
  %v6687 = vadd.f32 0.0, %v6686
  %v6688 = vpop.f32.mrf.mxu0
  %v6689 = vpop.f32.mrf.mxu0
  %v6690 = vadd.f32 0.0, %v6689
  %v6691 = vpop.f32.mrf.mxu0
  %6692 = vmatprep.mubr.bf16.mxu0 0
  %6693 = vmatmul.mubr.bf16.gmra.mxu0 %v6598
  %v6694 = vpop.f32.mrf.mxu0
  %v6695 = vadd.f32 0.0, %v6694
  %v6696 = vpop.f32.mrf.mxu0
  %v6697 = vpop.f32.mrf.mxu0
  %v6698 = vadd.f32 0.0, %v6697
  %v6699 = vpop.f32.mrf.mxu0
  %6700 = vmatprep.mubr.bf16.mxu0 0
  %6701 = vmatmul.mubr.bf16.gmra.mxu0 %v6601
  %v6702 = vpop.f32.mrf.mxu0
  %v6703 = vadd.f32 0.0, %v6702
  %v6704 = vpop.f32.mrf.mxu0
  %v6705 = vpop.f32.mrf.mxu0
  %v6706 = vadd.f32 0.0, %v6705
  %v6707 = vpop.f32.mrf.mxu0
  %6708 = vmatprep.mubr.bf16.mxu0 0
  %6709 = vmatmul.mubr.bf16.gmra.mxu0 %v6604
  %v6710 = vpop.f32.mrf.mxu0
  %v6711 = vadd.f32 0.0, %v6710
  %v6712 = vpop.f32.mrf.mxu0
  %v6713 = vpop.f32.mrf.mxu0
  %v6714 = vadd.f32 0.0, %v6713
  %v6715 = vpop.f32.mrf.mxu0
  %6716 = vmatprep.mubr.bf16.mxu0 0
  %6717 = vmatmul.mubr.bf16.gmra.mxu0 %v6607
  %v6718 = vpop.f32.mrf.mxu0
  %v6719 = vadd.f32 0.0, %v6718
  %v6720 = vpop.f32.mrf.mxu0
  %v6721 = vpop.f32.mrf.mxu0
  %v6722 = vadd.f32 0.0, %v6721
  %v6723 = vpop.f32.mrf.mxu0
  %6724 = vmatprep.mubr.bf16.mxu0 0
  %6725 = vmatmul.mubr.bf16.gmra.mxu0 %v6610
  %v6726 = vpop.f32.mrf.mxu0
  %v6727 = vadd.f32 0.0, %v6726
  %v6728 = vpop.f32.mrf.mxu0
  %v6729 = vpop.f32.mrf.mxu0
  %v6730 = vadd.f32 0.0, %v6729
  %v6731 = vpop.f32.mrf.mxu0
  %6732 = vmatprep.mubr.bf16.mxu0 0
  %6733 = vmatmul.mubr.bf16.gmra.mxu0 %v6613
  %v6734 = vpop.f32.mrf.mxu0
  %v6735 = vadd.f32 0.0, %v6734
  %v6736 = vpop.f32.mrf.mxu0
  %v6737 = vpop.f32.mrf.mxu0
  %v6738 = vadd.f32 0.0, %v6737
  %v6739 = vpop.f32.mrf.mxu0
  %6740 = vmatprep.mubr.bf16.mxu0 0
  %6741 = vmatmul.mubr.bf16.gmra.mxu0 %v6616
  %v6742 = vpop.f32.mrf.mxu0
  %v6743 = vadd.f32 0.0, %v6742
  %v6744 = vpop.f32.mrf.mxu0
  %v6745 = vpop.f32.mrf.mxu0
  %v6746 = vadd.f32 0.0, %v6745
  %v6747 = vpop.f32.mrf.mxu0
  %6748 = vmatprep.mubr.bf16.mxu0 0
  %6749 = vmatmul.mubr.bf16.gmra.mxu0 %v6619
  %v6750 = vpop.f32.mrf.mxu0
  %v6751 = vadd.f32 0.0, %v6750
  %v6752 = vpop.f32.mrf.mxu0
  %v6753 = vpop.f32.mrf.mxu0
  %v6754 = vadd.f32 0.0, %v6753
  %v6755 = vpop.f32.mrf.mxu0
  %6756 = vmatprep.mubr.bf16.mxu0 0
  %6757 = vmatmul.mubr.bf16.gmra.mxu0 %v6622
  %v6758 = vpop.f32.mrf.mxu0
  %v6759 = vadd.f32 0.0, %v6758
  %v6760 = vpop.f32.mrf.mxu0
  %v6761 = vpop.f32.mrf.mxu0
  %v6762 = vadd.f32 0.0, %v6761
  %v6763 = vpop.f32.mrf.mxu0
  %6764 = vmatprep.mubr.bf16.mxu0 0
  %6765 = vmatmul.mubr.bf16.gmra.mxu0 %v6625
  %v6766 = vpop.f32.mrf.mxu0
  %v6767 = vadd.f32 0.0, %v6766
  %v6768 = vpop.f32.mrf.mxu0
  %v6769 = vpop.f32.mrf.mxu0
  %v6770 = vadd.f32 0.0, %v6769
  %v6771 = vpop.f32.mrf.mxu0
  %6772 = vmatprep.mubr.bf16.mxu0 0
  %6773 = vmatmul.mubr.bf16.gmra.mxu0 %v6628
  %v6774 = vpop.f32.mrf.mxu0
  %v6775 = vadd.f32 0.0, %v6774
  %v6776 = vpop.f32.mrf.mxu0
  %v6777 = vpop.f32.mrf.mxu0
  %v6778 = vadd.f32 0.0, %v6777
  %v6779 = vpop.f32.mrf.mxu0
  %6780 = vmatprep.mubr.bf16.mxu0 0
  %6781 = vmatmul.mubr.bf16.gmra.mxu0 %v6631
  %v6782 = vpop.f32.mrf.mxu0
  %v6783 = vadd.f32 0.0, %v6782
  %v6784 = vpop.f32.mrf.mxu0
  %v6785 = vpop.f32.mrf.mxu0
  %v6786 = vpop.f32.mrf.mxu0
  %6787 = vdwg.mxu0
  %v6789 = vunpack.c.l.b16 %v6375
  %v6790 = vpack.c.b16 %v6789, %v6789
  %v6791 = vrot.slane %v6439, 1
  %v6792 = vrot.slane %v6440, 1
  %v6793 = vsel %vm1721, %v6791, %v6792
  %v6794 = vrot.slane %v6441, 1
  %v6795 = vsel %vm1721, %v6792, %v6794
  %v6796 = vrot.slane %v6442, 1
  %v6797 = vsel %vm1721, %v6794, %v6796
  %v6798 = vrot.slane %v6443, 1
  %v6799 = vsel %vm1721, %v6796, %v6798
  %v6800 = vrot.slane %v6444, 1
  %v6801 = vsel %vm1721, %v6798, %v6800
  %v6802 = vrot.slane %v6445, 1
  %v6803 = vsel %vm1721, %v6800, %v6802
  %v6804 = vrot.slane %v6446, 1
  %v6805 = vsel %vm1721, %v6802, %v6804
  %v6806 = vrot.slane %v6447, 1
  %v6807 = vsel %vm1721, %v6804, %v6806
  %v6808 = vrot.slane %v6448, 1
  %v6809 = vsel %vm1721, %v6806, %v6808
  %v6810 = vrot.slane %v6449, 1
  %v6811 = vsel %vm1721, %v6808, %v6810
  %v6812 = vrot.slane %v6450, 1
  %v6813 = vsel %vm1721, %v6810, %v6812
  %v6814 = vrot.slane %v6451, 1
  %v6815 = vsel %vm1721, %v6812, %v6814
  %v6816 = vrot.slane %v6452, 1
  %v6817 = vsel %vm1721, %v6814, %v6816
  %v6818 = vrot.slane %v6790, 1
  %v6819 = vsel %vm1721, %v6816, %v6818
  %v6821 = vsel %vm3049, %v6793, 0
  %v6824 = vsel %vm3049, %v6795, 0
  %v6827 = vsel %vm3049, %v6797, 0
  %v6830 = vsel %vm3049, %v6799, 0
  %v6833 = vsel %vm3049, %v6801, 0
  %v6836 = vsel %vm3049, %v6803, 0
  %v6839 = vsel %vm3049, %v6805, 0
  %v6842 = vsel %vm3049, %v6807, 0
  %v6845 = vsel %vm3049, %v6809, 0
  %v6848 = vsel %vm3049, %v6811, 0
  %v6851 = vsel %vm3049, %v6813, 0
  %v6854 = vsel %vm3049, %v6815, 0
  %v6857 = vsel %vm3049, %v6817, 0
  %v6860 = vsel %vm3049, %v6819, 0
  %v6863 = vsel %vm3049, %v6818, 0
  %v6866 = vsel %vm3095, %v6377, 0
  %6868 = vmatprep.subr.bf16.mxu0 0
  %6869 = vmatpush1.bf16.msra.mxu0 0
  %6870 = vmatprep.subr.bf16.mxu0 0
  %6871 = vmatpush1.bf16.msra.mxu0 0
  %6872 = vmatprep.subr.bf16.mxu0 0
  %6873 = vmatpush1.bf16.msra.mxu0 0
  %6874 = vmatprep.subr.bf16.mxu0 0
  %6875 = vmatpush1.bf16.msra.mxu0 0
  %6876 = vmatprep.subr.bf16.mxu0 0
  %6877 = vmatpush1.bf16.msra.mxu0 0
  %6878 = vmatprep.subr.bf16.mxu0 0
  %6879 = vmatpush1.bf16.msra.mxu0 0
  %6880 = vmatprep.subr.bf16.mxu0 0
  %6881 = vmatpush1.bf16.msra.mxu0 0
  %6882 = vmatprep.subr.bf16.mxu0 0
  %6883 = vmatpush1.bf16.msra.mxu0 %v6866
  %6884 = vmatprep.subr.bf16.mxu0 0
  %6885 = vmatpush2.bf16.msra.mxu0 0
  %6886 = vmatprep.subr.bf16.mxu0 0
  %6887 = vmatpush2.bf16.msra.mxu0 0
  %6888 = vmatprep.subr.bf16.mxu0 0
  %6889 = vmatpush2.bf16.msra.mxu0 0
  %6890 = vmatprep.subr.bf16.mxu0 0
  %6891 = vmatpush2.bf16.msra.mxu0 0
  %6892 = vmatprep.subr.bf16.mxu0 0
  %6893 = vmatpush2.bf16.msra.mxu0 0
  %6894 = vmatprep.subr.bf16.mxu0 0
  %6895 = vmatpush2.bf16.msra.mxu0 0
  %6896 = vmatprep.subr.bf16.mxu0 0
  %6897 = vmatpush2.bf16.msra.mxu0 0
  %6898 = vmatprep.subr.bf16.mxu0 0
  %6899 = vmatpush2.bf16.msra.mxu0 0
  %6900 = vmatprep.mubr.bf16.mxu0 0
  %6901 = vmatmul.mubr.bf16.gmra.mxu0 %v6821
  %v6902 = vpop.f32.mrf.mxu0
  %v6903 = vadd.f32 %v6671, %v6902
  %v6904 = vpop.f32.mrf.mxu0
  %v6905 = vpop.f32.mrf.mxu0
  %v6906 = vadd.f32 %v6674, %v6905
  %v6907 = vpop.f32.mrf.mxu0
  %6908 = vmatprep.mubr.bf16.mxu0 0
  %6909 = vmatmul.mubr.bf16.gmra.mxu0 %v6824
  %v6910 = vpop.f32.mrf.mxu0
  %v6911 = vadd.f32 %v6679, %v6910
  %v6912 = vpop.f32.mrf.mxu0
  %v6913 = vpop.f32.mrf.mxu0
  %v6914 = vadd.f32 %v6682, %v6913
  %v6915 = vpop.f32.mrf.mxu0
  %6916 = vmatprep.mubr.bf16.mxu0 0
  %6917 = vmatmul.mubr.bf16.gmra.mxu0 %v6827
  %v6918 = vpop.f32.mrf.mxu0
  %v6919 = vadd.f32 %v6687, %v6918
  %v6920 = vpop.f32.mrf.mxu0
  %v6921 = vpop.f32.mrf.mxu0
  %v6922 = vadd.f32 %v6690, %v6921
  %v6923 = vpop.f32.mrf.mxu0
  %6924 = vmatprep.mubr.bf16.mxu0 0
  %6925 = vmatmul.mubr.bf16.gmra.mxu0 %v6830
  %v6926 = vpop.f32.mrf.mxu0
  %v6927 = vadd.f32 %v6695, %v6926
  %v6928 = vpop.f32.mrf.mxu0
  %v6929 = vpop.f32.mrf.mxu0
  %v6930 = vadd.f32 %v6698, %v6929
  %v6931 = vpop.f32.mrf.mxu0
  %6932 = vmatprep.mubr.bf16.mxu0 0
  %6933 = vmatmul.mubr.bf16.gmra.mxu0 %v6833
  %v6934 = vpop.f32.mrf.mxu0
  %v6935 = vadd.f32 %v6703, %v6934
  %v6936 = vpop.f32.mrf.mxu0
  %v6937 = vpop.f32.mrf.mxu0
  %v6938 = vadd.f32 %v6706, %v6937
  %v6939 = vpop.f32.mrf.mxu0
  %6940 = vmatprep.mubr.bf16.mxu0 0
  %6941 = vmatmul.mubr.bf16.gmra.mxu0 %v6836
  %v6942 = vpop.f32.mrf.mxu0
  %v6943 = vadd.f32 %v6711, %v6942
  %v6944 = vpop.f32.mrf.mxu0
  %v6945 = vpop.f32.mrf.mxu0
  %v6946 = vadd.f32 %v6714, %v6945
  %v6947 = vpop.f32.mrf.mxu0
  %6948 = vmatprep.mubr.bf16.mxu0 0
  %6949 = vmatmul.mubr.bf16.gmra.mxu0 %v6839
  %v6950 = vpop.f32.mrf.mxu0
  %v6951 = vadd.f32 %v6719, %v6950
  %v6952 = vpop.f32.mrf.mxu0
  %v6953 = vpop.f32.mrf.mxu0
  %v6954 = vadd.f32 %v6722, %v6953
  %v6955 = vpop.f32.mrf.mxu0
  %6956 = vmatprep.mubr.bf16.mxu0 0
  %6957 = vmatmul.mubr.bf16.gmra.mxu0 %v6842
  %v6958 = vpop.f32.mrf.mxu0
  %v6959 = vadd.f32 %v6727, %v6958
  %v6960 = vpop.f32.mrf.mxu0
  %v6961 = vpop.f32.mrf.mxu0
  %v6962 = vadd.f32 %v6730, %v6961
  %v6963 = vpop.f32.mrf.mxu0
  %6964 = vmatprep.mubr.bf16.mxu0 0
  %6965 = vmatmul.mubr.bf16.gmra.mxu0 %v6845
  %v6966 = vpop.f32.mrf.mxu0
  %v6967 = vadd.f32 %v6735, %v6966
  %v6968 = vpop.f32.mrf.mxu0
  %v6969 = vpop.f32.mrf.mxu0
  %v6970 = vadd.f32 %v6738, %v6969
  %v6971 = vpop.f32.mrf.mxu0
  %6972 = vmatprep.mubr.bf16.mxu0 0
  %6973 = vmatmul.mubr.bf16.gmra.mxu0 %v6848
  %v6974 = vpop.f32.mrf.mxu0
  %v6975 = vadd.f32 %v6743, %v6974
  %v6976 = vpop.f32.mrf.mxu0
  %v6977 = vpop.f32.mrf.mxu0
  %v6978 = vadd.f32 %v6746, %v6977
  %v6979 = vpop.f32.mrf.mxu0
  %6980 = vmatprep.mubr.bf16.mxu0 0
  %6981 = vmatmul.mubr.bf16.gmra.mxu0 %v6851
  %v6982 = vpop.f32.mrf.mxu0
  %v6983 = vadd.f32 %v6751, %v6982
  %v6984 = vpop.f32.mrf.mxu0
  %v6985 = vpop.f32.mrf.mxu0
  %v6986 = vadd.f32 %v6754, %v6985
  %v6987 = vpop.f32.mrf.mxu0
  %6988 = vmatprep.mubr.bf16.mxu0 0
  %6989 = vmatmul.mubr.bf16.gmra.mxu0 %v6854
  %v6990 = vpop.f32.mrf.mxu0
  %v6991 = vadd.f32 %v6759, %v6990
  %v6992 = vpop.f32.mrf.mxu0
  %v6993 = vpop.f32.mrf.mxu0
  %v6994 = vadd.f32 %v6762, %v6993
  %v6995 = vpop.f32.mrf.mxu0
  %6996 = vmatprep.mubr.bf16.mxu0 0
  %6997 = vmatmul.mubr.bf16.gmra.mxu0 %v6857
  %v6998 = vpop.f32.mrf.mxu0
  %v6999 = vadd.f32 %v6767, %v6998
  %v7000 = vpop.f32.mrf.mxu0
  %v7001 = vpop.f32.mrf.mxu0
  %v7002 = vadd.f32 %v6770, %v7001
  %v7003 = vpop.f32.mrf.mxu0
  %7004 = vmatprep.mubr.bf16.mxu0 0
  %7005 = vmatmul.mubr.bf16.gmra.mxu0 %v6860
  %v7006 = vpop.f32.mrf.mxu0
  %v7007 = vadd.f32 %v6775, %v7006
  %v7008 = vpop.f32.mrf.mxu0
  %v7009 = vpop.f32.mrf.mxu0
  %v7010 = vadd.f32 %v6778, %v7009
  %v7011 = vpop.f32.mrf.mxu0
  %7012 = vmatprep.mubr.bf16.mxu0 0
  %7013 = vmatmul.mubr.bf16.gmra.mxu0 %v6863
  %v7014 = vpop.f32.mrf.mxu0
  %v7015 = vadd.f32 %v6783, %v7014
  %v7016 = vpop.f32.mrf.mxu0
  %v7017 = vpop.f32.mrf.mxu0
  %v7018 = vpop.f32.mrf.mxu0
  %7019 = vdwg.mxu0
  %v7020 = vld [vmem:[#allocation3 + $0x8] sm:$0xc]
  %v7021 = vld [vmem:[#allocation3 + $0xc] sm:$0xf]
  %v7022 = vld [vmem:[#allocation3 + $0x10] sm:$0xf]
  %v7023 = vld [vmem:[#allocation3 + $0x14] sm:$0xf]
  %v7024 = vld [vmem:[#allocation3 + $0x18] sm:$0xf]
  %v7025 = vld [vmem:[#allocation3 + $0x1c] sm:$0xf]
  %v7026 = vld [vmem:[#allocation3 + $0x20] sm:$0xf]
  %v7027 = vld [vmem:[#allocation3 + $0x24] sm:$0xf]
  %v7028 = vld [vmem:[#allocation3 + $0x28] sm:$0xf]
  %v7029 = vld [vmem:[#allocation3 + $0x2c] sm:$0xf]
  %v7030 = vld [vmem:[#allocation3 + $0x30] sm:$0xf]
  %v7031 = vld [vmem:[#allocation3 + $0x34] sm:$0xf]
  %v7032 = vld [vmem:[#allocation3 + $0x38] sm:$0xf]
  %v7033 = vld [vmem:[#allocation3 + $0x3c] sm:$0xf]
  %v7034 = vld [vmem:[#allocation3 + $0x40] sm:$0xf]
  %v7035 = vld [vmem:[#allocation3 + $0x44] sm:$0xf]
  %v7036 = vld [vmem:[#allocation3 + $0x48] sm:$0xf]
  %v7037 = vld [vmem:[#allocation3 + $0x4c] sm:$0xf]
  %v7038 = vld [vmem:[#allocation3 + $0x50] sm:$0xf]
  %v7039 = vld [vmem:[#allocation3 + $0x54] sm:$0xf]
  %v7040 = vld [vmem:[#allocation3 + $0x58] sm:$0xf]
  %v7041 = vld [vmem:[#allocation3 + $0x5c] sm:$0xf]
  %v7042 = vld [vmem:[#allocation3 + $0x60] sm:$0xf]
  %v7043 = vld [vmem:[#allocation3 + $0x64] sm:$0xf]
  %v7044 = vld [vmem:[#allocation3 + $0x68] sm:$0xf]
  %v7045 = vld [vmem:[#allocation3 + $0x6c] sm:$0xf]
  %v7046 = vld [vmem:[#allocation3 + $0x70] sm:$0xf]
  %v7047 = vld [vmem:[#allocation3 + $0x74] sm:$0xf]
  %v7048 = vld [vmem:[#allocation3 + $0x78] sm:$0x7]
  %s7049 = scalar_lea.vmem %s2, 40
  %v7050 = vld [vmem:[%s7049] sm:$0xf]
  %v7080 = vunpack.c.l.b16 %v7020
  %v7081 = vunpack.c.l.b16 %v7021
  %v7082 = vunpack.c.l.b16 %v7022
  %v7083 = vunpack.c.l.b16 %v7023
  %v7084 = vunpack.c.l.b16 %v7024
  %v7085 = vunpack.c.l.b16 %v7025
  %v7086 = vunpack.c.l.b16 %v7026
  %v7087 = vunpack.c.l.b16 %v7027
  %v7088 = vunpack.c.l.b16 %v7028
  %v7089 = vunpack.c.l.b16 %v7029
  %v7090 = vunpack.c.l.b16 %v7030
  %v7091 = vunpack.c.l.b16 %v7031
  %v7092 = vunpack.c.l.b16 %v7032
  %v7093 = vunpack.c.l.b16 %v7033
  %v7094 = vunpack.c.l.b16 %v7034
  %v7095 = vunpack.c.l.b16 %v7035
  %v7096 = vunpack.c.l.b16 %v7036
  %v7097 = vunpack.c.l.b16 %v7037
  %v7098 = vunpack.c.l.b16 %v7038
  %v7099 = vunpack.c.l.b16 %v7039
  %v7100 = vunpack.c.l.b16 %v7040
  %v7101 = vunpack.c.l.b16 %v7041
  %v7102 = vunpack.c.l.b16 %v7042
  %v7103 = vunpack.c.l.b16 %v7043
  %v7104 = vunpack.c.l.b16 %v7044
  %v7105 = vunpack.c.l.b16 %v7045
  %v7106 = vunpack.c.l.b16 %v7046
  %v7107 = vunpack.c.l.b16 %v7047
  %v7108 = vunpack.c.l.b16 %v7048
  %v7109 = vpack.c.b16 %v7081, %v7080
  %v7110 = vpack.c.b16 %v7083, %v7082
  %v7111 = vpack.c.b16 %v7085, %v7084
  %v7112 = vpack.c.b16 %v7087, %v7086
  %v7113 = vpack.c.b16 %v7089, %v7088
  %v7114 = vpack.c.b16 %v7091, %v7090
  %v7115 = vpack.c.b16 %v7093, %v7092
  %v7116 = vpack.c.b16 %v7095, %v7094
  %v7117 = vpack.c.b16 %v7097, %v7096
  %v7118 = vpack.c.b16 %v7099, %v7098
  %v7119 = vpack.c.b16 %v7101, %v7100
  %v7120 = vpack.c.b16 %v7103, %v7102
  %v7121 = vpack.c.b16 %v7105, %v7104
  %v7122 = vpack.c.b16 %v7107, %v7106
  %v7123 = vpack.c.b16 %v7108, %v7108
  %v7124 = vrot.slane %v7109, 2
  %v7125 = vrot.slane %v7110, 2
  %v7126 = vsel %vm5696, %v7124, %v7125
  %v7127 = vrot.slane %v7111, 2
  %v7128 = vsel %vm5696, %v7125, %v7127
  %v7129 = vrot.slane %v7112, 2
  %v7130 = vsel %vm5696, %v7127, %v7129
  %v7131 = vrot.slane %v7113, 2
  %v7132 = vsel %vm5696, %v7129, %v7131
  %v7133 = vrot.slane %v7114, 2
  %v7134 = vsel %vm5696, %v7131, %v7133
  %v7135 = vrot.slane %v7115, 2
  %v7136 = vsel %vm5696, %v7133, %v7135
  %v7137 = vrot.slane %v7116, 2
  %v7138 = vsel %vm5696, %v7135, %v7137
  %v7139 = vrot.slane %v7117, 2
  %v7140 = vsel %vm5696, %v7137, %v7139
  %v7141 = vrot.slane %v7118, 2
  %v7142 = vsel %vm5696, %v7139, %v7141
  %v7143 = vrot.slane %v7119, 2
  %v7144 = vsel %vm5696, %v7141, %v7143
  %v7145 = vrot.slane %v7120, 2
  %v7146 = vsel %vm5696, %v7143, %v7145
  %v7147 = vrot.slane %v7121, 2
  %v7148 = vsel %vm5696, %v7145, %v7147
  %v7149 = vrot.slane %v7122, 2
  %v7150 = vsel %vm5696, %v7147, %v7149
  %v7151 = vrot.slane %v7123, 2
  %v7152 = vsel %vm5696, %v7149, %v7151
  %v7154 = vsel %vm3049, %v7126, 0
  %v7157 = vsel %vm3049, %v7128, 0
  %v7160 = vsel %vm3049, %v7130, 0
  %v7163 = vsel %vm3049, %v7132, 0
  %v7166 = vsel %vm3049, %v7134, 0
  %v7169 = vsel %vm3049, %v7136, 0
  %v7172 = vsel %vm3049, %v7138, 0
  %v7175 = vsel %vm3049, %v7140, 0
  %v7178 = vsel %vm3049, %v7142, 0
  %v7181 = vsel %vm3049, %v7144, 0
  %v7184 = vsel %vm3049, %v7146, 0
  %v7187 = vsel %vm3049, %v7148, 0
  %v7190 = vsel %vm3049, %v7150, 0
  %v7193 = vsel %vm3049, %v7152, 0
  %v7196 = vsel %vm3049, %v7151, 0
  %v7199 = vsel %vm3095, %v7050, 0
  %7201 = vmatprep.subr.bf16.mxu0 0
  %7202 = vmatpush1.bf16.msra.mxu0 0
  %7203 = vmatprep.subr.bf16.mxu0 0
  %7204 = vmatpush1.bf16.msra.mxu0 0
  %7205 = vmatprep.subr.bf16.mxu0 0
  %7206 = vmatpush1.bf16.msra.mxu0 0
  %7207 = vmatprep.subr.bf16.mxu0 0
  %7208 = vmatpush1.bf16.msra.mxu0 0
  %7209 = vmatprep.subr.bf16.mxu0 0
  %7210 = vmatpush1.bf16.msra.mxu0 0
  %7211 = vmatprep.subr.bf16.mxu0 0
  %7212 = vmatpush1.bf16.msra.mxu0 0
  %7213 = vmatprep.subr.bf16.mxu0 0
  %7214 = vmatpush1.bf16.msra.mxu0 0
  %7215 = vmatprep.subr.bf16.mxu0 0
  %7216 = vmatpush1.bf16.msra.mxu0 %v7199
  %7217 = vmatprep.subr.bf16.mxu0 0
  %7218 = vmatpush2.bf16.msra.mxu0 0
  %7219 = vmatprep.subr.bf16.mxu0 0
  %7220 = vmatpush2.bf16.msra.mxu0 0
  %7221 = vmatprep.subr.bf16.mxu0 0
  %7222 = vmatpush2.bf16.msra.mxu0 0
  %7223 = vmatprep.subr.bf16.mxu0 0
  %7224 = vmatpush2.bf16.msra.mxu0 0
  %7225 = vmatprep.subr.bf16.mxu0 0
  %7226 = vmatpush2.bf16.msra.mxu0 0
  %7227 = vmatprep.subr.bf16.mxu0 0
  %7228 = vmatpush2.bf16.msra.mxu0 0
  %7229 = vmatprep.subr.bf16.mxu0 0
  %7230 = vmatpush2.bf16.msra.mxu0 0
  %7231 = vmatprep.subr.bf16.mxu0 0
  %7232 = vmatpush2.bf16.msra.mxu0 0
  %7233 = vmatprep.mubr.bf16.mxu0 0
  %7234 = vmatmul.mubr.bf16.gmra.mxu0 %v7154
  %v7235 = vpop.f32.mrf.mxu0
  %v7236 = vadd.f32 0.0, %v7235
  %v7237 = vpop.f32.mrf.mxu0
  %v7238 = vpop.f32.mrf.mxu0
  %v7239 = vadd.f32 0.0, %v7238
  %v7240 = vpop.f32.mrf.mxu0
  %7241 = vmatprep.mubr.bf16.mxu0 0
  %7242 = vmatmul.mubr.bf16.gmra.mxu0 %v7157
  %v7243 = vpop.f32.mrf.mxu0
  %v7244 = vadd.f32 0.0, %v7243
  %v7245 = vpop.f32.mrf.mxu0
  %v7246 = vpop.f32.mrf.mxu0
  %v7247 = vadd.f32 0.0, %v7246
  %v7248 = vpop.f32.mrf.mxu0
  %7249 = vmatprep.mubr.bf16.mxu0 0
  %7250 = vmatmul.mubr.bf16.gmra.mxu0 %v7160
  %v7251 = vpop.f32.mrf.mxu0
  %v7252 = vadd.f32 0.0, %v7251
  %v7253 = vpop.f32.mrf.mxu0
  %v7254 = vpop.f32.mrf.mxu0
  %v7255 = vadd.f32 0.0, %v7254
  %v7256 = vpop.f32.mrf.mxu0
  %7257 = vmatprep.mubr.bf16.mxu0 0
  %7258 = vmatmul.mubr.bf16.gmra.mxu0 %v7163
  %v7259 = vpop.f32.mrf.mxu0
  %v7260 = vadd.f32 0.0, %v7259
  %v7261 = vpop.f32.mrf.mxu0
  %v7262 = vpop.f32.mrf.mxu0
  %v7263 = vadd.f32 0.0, %v7262
  %v7264 = vpop.f32.mrf.mxu0
  %7265 = vmatprep.mubr.bf16.mxu0 0
  %7266 = vmatmul.mubr.bf16.gmra.mxu0 %v7166
  %v7267 = vpop.f32.mrf.mxu0
  %v7268 = vadd.f32 0.0, %v7267
  %v7269 = vpop.f32.mrf.mxu0
  %v7270 = vpop.f32.mrf.mxu0
  %v7271 = vadd.f32 0.0, %v7270
  %v7272 = vpop.f32.mrf.mxu0
  %7273 = vmatprep.mubr.bf16.mxu0 0
  %7274 = vmatmul.mubr.bf16.gmra.mxu0 %v7169
  %v7275 = vpop.f32.mrf.mxu0
  %v7276 = vadd.f32 0.0, %v7275
  %v7277 = vpop.f32.mrf.mxu0
  %v7278 = vpop.f32.mrf.mxu0
  %v7279 = vadd.f32 0.0, %v7278
  %v7280 = vpop.f32.mrf.mxu0
  %7281 = vmatprep.mubr.bf16.mxu0 0
  %7282 = vmatmul.mubr.bf16.gmra.mxu0 %v7172
  %v7283 = vpop.f32.mrf.mxu0
  %v7284 = vadd.f32 0.0, %v7283
  %v7285 = vpop.f32.mrf.mxu0
  %v7286 = vpop.f32.mrf.mxu0
  %v7287 = vadd.f32 0.0, %v7286
  %v7288 = vpop.f32.mrf.mxu0
  %7289 = vmatprep.mubr.bf16.mxu0 0
  %7290 = vmatmul.mubr.bf16.gmra.mxu0 %v7175
  %v7291 = vpop.f32.mrf.mxu0
  %v7292 = vadd.f32 0.0, %v7291
  %v7293 = vpop.f32.mrf.mxu0
  %v7294 = vpop.f32.mrf.mxu0
  %v7295 = vadd.f32 0.0, %v7294
  %v7296 = vpop.f32.mrf.mxu0
  %7297 = vmatprep.mubr.bf16.mxu0 0
  %7298 = vmatmul.mubr.bf16.gmra.mxu0 %v7178
  %v7299 = vpop.f32.mrf.mxu0
  %v7300 = vadd.f32 0.0, %v7299
  %v7301 = vpop.f32.mrf.mxu0
  %v7302 = vpop.f32.mrf.mxu0
  %v7303 = vadd.f32 0.0, %v7302
  %v7304 = vpop.f32.mrf.mxu0
  %7305 = vmatprep.mubr.bf16.mxu0 0
  %7306 = vmatmul.mubr.bf16.gmra.mxu0 %v7181
  %v7307 = vpop.f32.mrf.mxu0
  %v7308 = vadd.f32 0.0, %v7307
  %v7309 = vpop.f32.mrf.mxu0
  %v7310 = vpop.f32.mrf.mxu0
  %v7311 = vadd.f32 0.0, %v7310
  %v7312 = vpop.f32.mrf.mxu0
  %7313 = vmatprep.mubr.bf16.mxu0 0
  %7314 = vmatmul.mubr.bf16.gmra.mxu0 %v7184
  %v7315 = vpop.f32.mrf.mxu0
  %v7316 = vadd.f32 0.0, %v7315
  %v7317 = vpop.f32.mrf.mxu0
  %v7318 = vpop.f32.mrf.mxu0
  %v7319 = vadd.f32 0.0, %v7318
  %v7320 = vpop.f32.mrf.mxu0
  %7321 = vmatprep.mubr.bf16.mxu0 0
  %7322 = vmatmul.mubr.bf16.gmra.mxu0 %v7187
  %v7323 = vpop.f32.mrf.mxu0
  %v7324 = vadd.f32 0.0, %v7323
  %v7325 = vpop.f32.mrf.mxu0
  %v7326 = vpop.f32.mrf.mxu0
  %v7327 = vadd.f32 0.0, %v7326
  %v7328 = vpop.f32.mrf.mxu0
  %7329 = vmatprep.mubr.bf16.mxu0 0
  %7330 = vmatmul.mubr.bf16.gmra.mxu0 %v7190
  %v7331 = vpop.f32.mrf.mxu0
  %v7332 = vadd.f32 0.0, %v7331
  %v7333 = vpop.f32.mrf.mxu0
  %v7334 = vpop.f32.mrf.mxu0
  %v7335 = vadd.f32 0.0, %v7334
  %v7336 = vpop.f32.mrf.mxu0
  %7337 = vmatprep.mubr.bf16.mxu0 0
  %7338 = vmatmul.mubr.bf16.gmra.mxu0 %v7193
  %v7339 = vpop.f32.mrf.mxu0
  %v7340 = vadd.f32 0.0, %v7339
  %v7341 = vpop.f32.mrf.mxu0
  %v7342 = vpop.f32.mrf.mxu0
  %v7343 = vadd.f32 0.0, %v7342
  %v7344 = vpop.f32.mrf.mxu0
  %7345 = vmatprep.mubr.bf16.mxu0 0
  %7346 = vmatmul.mubr.bf16.gmra.mxu0 %v7196
  %v7347 = vpop.f32.mrf.mxu0
  %v7348 = vadd.f32 0.0, %v7347
  %v7349 = vpop.f32.mrf.mxu0
  %v7350 = vpop.f32.mrf.mxu0
  %v7351 = vpop.f32.mrf.mxu0
  %7352 = vdwg.mxu0
  %v7353 = vadd.f32 %v6903, %v7236
  %v7354 = vadd.f32 %v6906, %v7239
  %v7355 = vadd.f32 %v6911, %v7244
  %v7356 = vadd.f32 %v6914, %v7247
  %v7357 = vadd.f32 %v6919, %v7252
  %v7358 = vadd.f32 %v6922, %v7255
  %v7359 = vadd.f32 %v6927, %v7260
  %v7360 = vadd.f32 %v6930, %v7263
  %v7361 = vadd.f32 %v6935, %v7268
  %v7362 = vadd.f32 %v6938, %v7271
  %v7363 = vadd.f32 %v6943, %v7276
  %v7364 = vadd.f32 %v6946, %v7279
  %v7365 = vadd.f32 %v6951, %v7284
  %v7366 = vadd.f32 %v6954, %v7287
  %v7367 = vadd.f32 %v6959, %v7292
  %v7368 = vadd.f32 %v6962, %v7295
  %v7369 = vadd.f32 %v6967, %v7300
  %v7370 = vadd.f32 %v6970, %v7303
  %v7371 = vadd.f32 %v6975, %v7308
  %v7372 = vadd.f32 %v6978, %v7311
  %v7373 = vadd.f32 %v6983, %v7316
  %v7374 = vadd.f32 %v6986, %v7319
  %v7375 = vadd.f32 %v6991, %v7324
  %v7376 = vadd.f32 %v6994, %v7327
  %v7377 = vadd.f32 %v6999, %v7332
  %v7378 = vadd.f32 %v7002, %v7335
  %v7379 = vadd.f32 %v7007, %v7340
  %v7380 = vadd.f32 %v7010, %v7343
  %v7381 = vadd.f32 %v7015, %v7348
  %v7382 = vld [vmem:[#allocation3 + $0x78] sm:$0xf]
  %s7383 = scalar_lea.vmem %s2, 44
  %v7384 = vld [vmem:[%s7383] sm:$0xf]
  %v7386 = vunpack.c.l.b16 %v7382
  %v7387 = vpack.c.b16 %v7386, %v7386
  %vm7388 = vsmask.f32 5376
  %v7390 = vshrl.u32 %v7109, 16
  %v7392 = vrot.slane %v7390, 2
  %v7393 = vshll.u32 %v7109, 16
  %v7395 = vrot.slane %v7393, 3
  %v7396 = vor.u32 %v7392, %v7395
  %v7398 = vshrl.u32 %v7110, 16
  %v7400 = vrot.slane %v7398, 2
  %v7401 = vshll.u32 %v7110, 16
  %v7403 = vrot.slane %v7401, 3
  %v7404 = vor.u32 %v7400, %v7403
  %v7405 = vsel %vm7388, %v7396, %v7404
  %v7407 = vshrl.u32 %v7111, 16
  %v7409 = vrot.slane %v7407, 2
  %v7410 = vshll.u32 %v7111, 16
  %v7412 = vrot.slane %v7410, 3
  %v7413 = vor.u32 %v7409, %v7412
  %v7414 = vsel %vm7388, %v7404, %v7413
  %v7416 = vshrl.u32 %v7112, 16
  %v7418 = vrot.slane %v7416, 2
  %v7419 = vshll.u32 %v7112, 16
  %v7421 = vrot.slane %v7419, 3
  %v7422 = vor.u32 %v7418, %v7421
  %v7423 = vsel %vm7388, %v7413, %v7422
  %v7425 = vshrl.u32 %v7113, 16
  %v7427 = vrot.slane %v7425, 2
  %v7428 = vshll.u32 %v7113, 16
  %v7430 = vrot.slane %v7428, 3
  %v7431 = vor.u32 %v7427, %v7430
  %v7432 = vsel %vm7388, %v7422, %v7431
  %v7434 = vshrl.u32 %v7114, 16
  %v7436 = vrot.slane %v7434, 2
  %v7437 = vshll.u32 %v7114, 16
  %v7439 = vrot.slane %v7437, 3
  %v7440 = vor.u32 %v7436, %v7439
  %v7441 = vsel %vm7388, %v7431, %v7440
  %v7443 = vshrl.u32 %v7115, 16
  %v7445 = vrot.slane %v7443, 2
  %v7446 = vshll.u32 %v7115, 16
  %v7448 = vrot.slane %v7446, 3
  %v7449 = vor.u32 %v7445, %v7448
  %v7450 = vsel %vm7388, %v7440, %v7449
  %v7452 = vshrl.u32 %v7116, 16
  %v7454 = vrot.slane %v7452, 2
  %v7455 = vshll.u32 %v7116, 16
  %v7457 = vrot.slane %v7455, 3
  %v7458 = vor.u32 %v7454, %v7457
  %v7459 = vsel %vm7388, %v7449, %v7458
  %v7461 = vshrl.u32 %v7117, 16
  %v7463 = vrot.slane %v7461, 2
  %v7464 = vshll.u32 %v7117, 16
  %v7466 = vrot.slane %v7464, 3
  %v7467 = vor.u32 %v7463, %v7466
  %v7468 = vsel %vm7388, %v7458, %v7467
  %v7470 = vshrl.u32 %v7118, 16
  %v7472 = vrot.slane %v7470, 2
  %v7473 = vshll.u32 %v7118, 16
  %v7475 = vrot.slane %v7473, 3
  %v7476 = vor.u32 %v7472, %v7475
  %v7477 = vsel %vm7388, %v7467, %v7476
  %v7479 = vshrl.u32 %v7119, 16
  %v7481 = vrot.slane %v7479, 2
  %v7482 = vshll.u32 %v7119, 16
  %v7484 = vrot.slane %v7482, 3
  %v7485 = vor.u32 %v7481, %v7484
  %v7486 = vsel %vm7388, %v7476, %v7485
  %v7488 = vshrl.u32 %v7120, 16
  %v7490 = vrot.slane %v7488, 2
  %v7491 = vshll.u32 %v7120, 16
  %v7493 = vrot.slane %v7491, 3
  %v7494 = vor.u32 %v7490, %v7493
  %v7495 = vsel %vm7388, %v7485, %v7494
  %v7497 = vshrl.u32 %v7121, 16
  %v7499 = vrot.slane %v7497, 2
  %v7500 = vshll.u32 %v7121, 16
  %v7502 = vrot.slane %v7500, 3
  %v7503 = vor.u32 %v7499, %v7502
  %v7504 = vsel %vm7388, %v7494, %v7503
  %v7506 = vshrl.u32 %v7122, 16
  %v7508 = vrot.slane %v7506, 2
  %v7509 = vshll.u32 %v7122, 16
  %v7511 = vrot.slane %v7509, 3
  %v7512 = vor.u32 %v7508, %v7511
  %v7513 = vsel %vm7388, %v7503, %v7512
  %v7515 = vshrl.u32 %v7387, 16
  %v7517 = vrot.slane %v7515, 2
  %v7518 = vshll.u32 %v7387, 16
  %v7520 = vrot.slane %v7518, 3
  %v7521 = vor.u32 %v7517, %v7520
  %v7522 = vsel %vm7388, %v7512, %v7521
  %v7524 = vsel %vm3049, %v7405, 0
  %v7527 = vsel %vm3049, %v7414, 0
  %v7530 = vsel %vm3049, %v7423, 0
  %v7533 = vsel %vm3049, %v7432, 0
  %v7536 = vsel %vm3049, %v7441, 0
  %v7539 = vsel %vm3049, %v7450, 0
  %v7542 = vsel %vm3049, %v7459, 0
  %v7545 = vsel %vm3049, %v7468, 0
  %v7548 = vsel %vm3049, %v7477, 0
  %v7551 = vsel %vm3049, %v7486, 0
  %v7554 = vsel %vm3049, %v7495, 0
  %v7557 = vsel %vm3049, %v7504, 0
  %v7560 = vsel %vm3049, %v7513, 0
  %v7563 = vsel %vm3049, %v7522, 0
  %v7566 = vsel %vm3049, %v7521, 0
  %v7569 = vsel %vm3095, %v7384, 0
  %7571 = vmatprep.subr.bf16.mxu0 0
  %7572 = vmatpush1.bf16.msra.mxu0 0
  %7573 = vmatprep.subr.bf16.mxu0 0
  %7574 = vmatpush1.bf16.msra.mxu0 0
  %7575 = vmatprep.subr.bf16.mxu0 0
  %7576 = vmatpush1.bf16.msra.mxu0 0
  %7577 = vmatprep.subr.bf16.mxu0 0
  %7578 = vmatpush1.bf16.msra.mxu0 0
  %7579 = vmatprep.subr.bf16.mxu0 0
  %7580 = vmatpush1.bf16.msra.mxu0 0
  %7581 = vmatprep.subr.bf16.mxu0 0
  %7582 = vmatpush1.bf16.msra.mxu0 0
  %7583 = vmatprep.subr.bf16.mxu0 0
  %7584 = vmatpush1.bf16.msra.mxu0 0
  %7585 = vmatprep.subr.bf16.mxu0 0
  %7586 = vmatpush1.bf16.msra.mxu0 %v7569
  %7587 = vmatprep.subr.bf16.mxu0 0
  %7588 = vmatpush2.bf16.msra.mxu0 0
  %7589 = vmatprep.subr.bf16.mxu0 0
  %7590 = vmatpush2.bf16.msra.mxu0 0
  %7591 = vmatprep.subr.bf16.mxu0 0
  %7592 = vmatpush2.bf16.msra.mxu0 0
  %7593 = vmatprep.subr.bf16.mxu0 0
  %7594 = vmatpush2.bf16.msra.mxu0 0
  %7595 = vmatprep.subr.bf16.mxu0 0
  %7596 = vmatpush2.bf16.msra.mxu0 0
  %7597 = vmatprep.subr.bf16.mxu0 0
  %7598 = vmatpush2.bf16.msra.mxu0 0
  %7599 = vmatprep.subr.bf16.mxu0 0
  %7600 = vmatpush2.bf16.msra.mxu0 0
  %7601 = vmatprep.subr.bf16.mxu0 0
  %7602 = vmatpush2.bf16.msra.mxu0 0
  %7603 = vmatprep.mubr.bf16.mxu0 0
  %7604 = vmatmul.mubr.bf16.gmra.mxu0 %v7524
  %v7605 = vpop.f32.mrf.mxu0
  %v7606 = vadd.f32 0.0, %v7605
  %v7607 = vpop.f32.mrf.mxu0
  %v7608 = vpop.f32.mrf.mxu0
  %v7609 = vadd.f32 0.0, %v7608
  %v7610 = vpop.f32.mrf.mxu0
  %7611 = vmatprep.mubr.bf16.mxu0 0
  %7612 = vmatmul.mubr.bf16.gmra.mxu0 %v7527
  %v7613 = vpop.f32.mrf.mxu0
  %v7614 = vadd.f32 0.0, %v7613
  %v7615 = vpop.f32.mrf.mxu0
  %v7616 = vpop.f32.mrf.mxu0
  %v7617 = vadd.f32 0.0, %v7616
  %v7618 = vpop.f32.mrf.mxu0
  %7619 = vmatprep.mubr.bf16.mxu0 0
  %7620 = vmatmul.mubr.bf16.gmra.mxu0 %v7530
  %v7621 = vpop.f32.mrf.mxu0
  %v7622 = vadd.f32 0.0, %v7621
  %v7623 = vpop.f32.mrf.mxu0
  %v7624 = vpop.f32.mrf.mxu0
  %v7625 = vadd.f32 0.0, %v7624
  %v7626 = vpop.f32.mrf.mxu0
  %7627 = vmatprep.mubr.bf16.mxu0 0
  %7628 = vmatmul.mubr.bf16.gmra.mxu0 %v7533
  %v7629 = vpop.f32.mrf.mxu0
  %v7630 = vadd.f32 0.0, %v7629
  %v7631 = vpop.f32.mrf.mxu0
  %v7632 = vpop.f32.mrf.mxu0
  %v7633 = vadd.f32 0.0, %v7632
  %v7634 = vpop.f32.mrf.mxu0
  %7635 = vmatprep.mubr.bf16.mxu0 0
  %7636 = vmatmul.mubr.bf16.gmra.mxu0 %v7536
  %v7637 = vpop.f32.mrf.mxu0
  %v7638 = vadd.f32 0.0, %v7637
  %v7639 = vpop.f32.mrf.mxu0
  %v7640 = vpop.f32.mrf.mxu0
  %v7641 = vadd.f32 0.0, %v7640
  %v7642 = vpop.f32.mrf.mxu0
  %7643 = vmatprep.mubr.bf16.mxu0 0
  %7644 = vmatmul.mubr.bf16.gmra.mxu0 %v7539
  %v7645 = vpop.f32.mrf.mxu0
  %v7646 = vadd.f32 0.0, %v7645
  %v7647 = vpop.f32.mrf.mxu0
  %v7648 = vpop.f32.mrf.mxu0
  %v7649 = vadd.f32 0.0, %v7648
  %v7650 = vpop.f32.mrf.mxu0
  %7651 = vmatprep.mubr.bf16.mxu0 0
  %7652 = vmatmul.mubr.bf16.gmra.mxu0 %v7542
  %v7653 = vpop.f32.mrf.mxu0
  %v7654 = vadd.f32 0.0, %v7653
  %v7655 = vpop.f32.mrf.mxu0
  %v7656 = vpop.f32.mrf.mxu0
  %v7657 = vadd.f32 0.0, %v7656
  %v7658 = vpop.f32.mrf.mxu0
  %7659 = vmatprep.mubr.bf16.mxu0 0
  %7660 = vmatmul.mubr.bf16.gmra.mxu0 %v7545
  %v7661 = vpop.f32.mrf.mxu0
  %v7662 = vadd.f32 0.0, %v7661
  %v7663 = vpop.f32.mrf.mxu0
  %v7664 = vpop.f32.mrf.mxu0
  %v7665 = vadd.f32 0.0, %v7664
  %v7666 = vpop.f32.mrf.mxu0
  %7667 = vmatprep.mubr.bf16.mxu0 0
  %7668 = vmatmul.mubr.bf16.gmra.mxu0 %v7548
  %v7669 = vpop.f32.mrf.mxu0
  %v7670 = vadd.f32 0.0, %v7669
  %v7671 = vpop.f32.mrf.mxu0
  %v7672 = vpop.f32.mrf.mxu0
  %v7673 = vadd.f32 0.0, %v7672
  %v7674 = vpop.f32.mrf.mxu0
  %7675 = vmatprep.mubr.bf16.mxu0 0
  %7676 = vmatmul.mubr.bf16.gmra.mxu0 %v7551
  %v7677 = vpop.f32.mrf.mxu0
  %v7678 = vadd.f32 0.0, %v7677
  %v7679 = vpop.f32.mrf.mxu0
  %v7680 = vpop.f32.mrf.mxu0
  %v7681 = vadd.f32 0.0, %v7680
  %v7682 = vpop.f32.mrf.mxu0
  %7683 = vmatprep.mubr.bf16.mxu0 0
  %7684 = vmatmul.mubr.bf16.gmra.mxu0 %v7554
  %v7685 = vpop.f32.mrf.mxu0
  %v7686 = vadd.f32 0.0, %v7685
  %v7687 = vpop.f32.mrf.mxu0
  %v7688 = vpop.f32.mrf.mxu0
  %v7689 = vadd.f32 0.0, %v7688
  %v7690 = vpop.f32.mrf.mxu0
  %7691 = vmatprep.mubr.bf16.mxu0 0
  %7692 = vmatmul.mubr.bf16.gmra.mxu0 %v7557
  %v7693 = vpop.f32.mrf.mxu0
  %v7694 = vadd.f32 0.0, %v7693
  %v7695 = vpop.f32.mrf.mxu0
  %v7696 = vpop.f32.mrf.mxu0
  %v7697 = vadd.f32 0.0, %v7696
  %v7698 = vpop.f32.mrf.mxu0
  %7699 = vmatprep.mubr.bf16.mxu0 0
  %7700 = vmatmul.mubr.bf16.gmra.mxu0 %v7560
  %v7701 = vpop.f32.mrf.mxu0
  %v7702 = vadd.f32 0.0, %v7701
  %v7703 = vpop.f32.mrf.mxu0
  %v7704 = vpop.f32.mrf.mxu0
  %v7705 = vadd.f32 0.0, %v7704
  %v7706 = vpop.f32.mrf.mxu0
  %7707 = vmatprep.mubr.bf16.mxu0 0
  %7708 = vmatmul.mubr.bf16.gmra.mxu0 %v7563
  %v7709 = vpop.f32.mrf.mxu0
  %v7710 = vadd.f32 0.0, %v7709
  %v7711 = vpop.f32.mrf.mxu0
  %v7712 = vpop.f32.mrf.mxu0
  %v7713 = vadd.f32 0.0, %v7712
  %v7714 = vpop.f32.mrf.mxu0
  %7715 = vmatprep.mubr.bf16.mxu0 0
  %7716 = vmatmul.mubr.bf16.gmra.mxu0 %v7566
  %v7717 = vpop.f32.mrf.mxu0
  %v7718 = vadd.f32 0.0, %v7717
  %v7719 = vpop.f32.mrf.mxu0
  %v7720 = vpop.f32.mrf.mxu0
  %v7721 = vpop.f32.mrf.mxu0
  %7722 = vdwg.mxu0
  %v7723 = vadd.f32 %v7353, %v7606
  %v7724 = vadd.f32 %v7354, %v7609
  %v7725 = vadd.f32 %v7355, %v7614
  %v7726 = vadd.f32 %v7356, %v7617
  %v7727 = vadd.f32 %v7357, %v7622
  %v7728 = vadd.f32 %v7358, %v7625
  %v7729 = vadd.f32 %v7359, %v7630
  %v7730 = vadd.f32 %v7360, %v7633
  %v7731 = vadd.f32 %v7361, %v7638
  %v7732 = vadd.f32 %v7362, %v7641
  %v7733 = vadd.f32 %v7363, %v7646
  %v7734 = vadd.f32 %v7364, %v7649
  %v7735 = vadd.f32 %v7365, %v7654
  %v7736 = vadd.f32 %v7366, %v7657
  %v7737 = vadd.f32 %v7367, %v7662
  %v7738 = vadd.f32 %v7368, %v7665
  %v7739 = vadd.f32 %v7369, %v7670
  %v7740 = vadd.f32 %v7370, %v7673
  %v7741 = vadd.f32 %v7371, %v7678
  %v7742 = vadd.f32 %v7372, %v7681
  %v7743 = vadd.f32 %v7373, %v7686
  %v7744 = vadd.f32 %v7374, %v7689
  %v7745 = vadd.f32 %v7375, %v7694
  %v7746 = vadd.f32 %v7376, %v7697
  %v7747 = vadd.f32 %v7377, %v7702
  %v7748 = vadd.f32 %v7378, %v7705
  %v7749 = vadd.f32 %v7379, %v7710
  %v7750 = vadd.f32 %v7380, %v7713
  %v7751 = vadd.f32 %v7381, %v7718
  %v7752 = vsel %vm4200, %v7723, 0.0
  %v7753 = vsel %vm4201, %v7724, 0.0
  %v7754 = vsel %vm4202, %v7725, 0.0
  %v7755 = vsel %vm4203, %v7726, 0.0
  %v7756 = vsel %vm4204, %v7727, 0.0
  %v7757 = vsel %vm4205, %v7728, 0.0
  %v7758 = vsel %vm4206, %v7729, 0.0
  %v7759 = vsel %vm4207, %v7730, 0.0
  %v7760 = vsel %vm4208, %v7731, 0.0
  %v7761 = vsel %vm4209, %v7732, 0.0
  %v7762 = vsel %vm4210, %v7733, 0.0
  %v7763 = vsel %vm4211, %v7734, 0.0
  %v7764 = vsel %vm4212, %v7735, 0.0
  %v7765 = vsel %vm4213, %v7736, 0.0
  %v7766 = vsel %vm4214, %v7737, 0.0
  %v7767 = vsel %vm4215, %v7738, 0.0
  %v7768 = vsel %vm4216, %v7739, 0.0
  %v7769 = vsel %vm4217, %v7740, 0.0
  %v7770 = vsel %vm4218, %v7741, 0.0
  %v7771 = vsel %vm4219, %v7742, 0.0
  %v7772 = vsel %vm4220, %v7743, 0.0
  %v7773 = vsel %vm4221, %v7744, 0.0
  %v7774 = vsel %vm4222, %v7745, 0.0
  %v7775 = vsel %vm4223, %v7746, 0.0
  %v7776 = vsel %vm4224, %v7747, 0.0
  %v7777 = vsel %vm4225, %v7748, 0.0
  %v7778 = vsel %vm4226, %v7749, 0.0
  %v7779 = vsel %vm4227, %v7750, 0.0
  %v7780 = vsel %vm4228, %v7751, 0.0
  %v7781 = vsel %vm4258, %v7752, 0.0
  %v7782 = vsel %vm4258, %v7753, 0.0
  %v7783 = vadd.f32 %v7781, %v7782
  %v7784 = vsel %vm4258, %v7754, 0.0
  %v7785 = vadd.f32 %v7783, %v7784
  %v7786 = vsel %vm4258, %v7755, 0.0
  %v7787 = vadd.f32 %v7785, %v7786
  %v7788 = vsel %vm4258, %v7756, 0.0
  %v7789 = vadd.f32 %v7787, %v7788
  %v7790 = vsel %vm4258, %v7757, 0.0
  %v7791 = vadd.f32 %v7789, %v7790
  %v7792 = vsel %vm4258, %v7758, 0.0
  %v7793 = vadd.f32 %v7791, %v7792
  %v7794 = vsel %vm4258, %v7759, 0.0
  %v7795 = vadd.f32 %v7793, %v7794
  %v7796 = vsel %vm4258, %v7760, 0.0
  %v7797 = vadd.f32 %v7795, %v7796
  %v7798 = vsel %vm4258, %v7761, 0.0
  %v7799 = vadd.f32 %v7797, %v7798
  %v7800 = vsel %vm4258, %v7762, 0.0
  %v7801 = vadd.f32 %v7799, %v7800
  %v7802 = vsel %vm4258, %v7763, 0.0
  %v7803 = vadd.f32 %v7801, %v7802
  %v7804 = vsel %vm4258, %v7764, 0.0
  %v7805 = vadd.f32 %v7803, %v7804
  %v7806 = vsel %vm4258, %v7765, 0.0
  %v7807 = vadd.f32 %v7805, %v7806
  %v7808 = vsel %vm4258, %v7766, 0.0
  %v7809 = vadd.f32 %v7807, %v7808
  %v7810 = vsel %vm4258, %v7767, 0.0
  %v7811 = vadd.f32 %v7809, %v7810
  %v7812 = vsel %vm4258, %v7768, 0.0
  %v7813 = vadd.f32 %v7811, %v7812
  %v7814 = vsel %vm4258, %v7769, 0.0
  %v7815 = vadd.f32 %v7813, %v7814
  %v7816 = vsel %vm4258, %v7770, 0.0
  %v7817 = vadd.f32 %v7815, %v7816
  %v7818 = vsel %vm4258, %v7771, 0.0
  %v7819 = vadd.f32 %v7817, %v7818
  %v7820 = vsel %vm4258, %v7772, 0.0
  %v7821 = vadd.f32 %v7819, %v7820
  %v7822 = vsel %vm4258, %v7773, 0.0
  %v7823 = vadd.f32 %v7821, %v7822
  %v7824 = vsel %vm4258, %v7774, 0.0
  %v7825 = vadd.f32 %v7823, %v7824
  %v7826 = vsel %vm4258, %v7775, 0.0
  %v7827 = vadd.f32 %v7825, %v7826
  %v7828 = vsel %vm4258, %v7776, 0.0
  %v7829 = vadd.f32 %v7827, %v7828
  %v7830 = vsel %vm4258, %v7777, 0.0
  %v7831 = vadd.f32 %v7829, %v7830
  %v7832 = vsel %vm4258, %v7778, 0.0
  %v7833 = vadd.f32 %v7831, %v7832
  %v7834 = vsel %vm4258, %v7779, 0.0
  %v7835 = vadd.f32 %v7833, %v7834
  %v7836 = vsel %vm4314, %v7780, 0.0
  %v7837 = vadd.f32 %v7835, %v7836
  %v7838 = vrot.slane %v7837, 4
  %v7839 = vadd.f32 %v7837, %v7838
  %v7840 = vrot.slane %v7839, 2
  %v7841 = vadd.f32 %v7839, %v7840
  %v7842 = vrot.slane %v7841, 1
  %v7843 = vadd.f32 %v7841, %v7842
  %v7844 = vadd.f32 %v6047, %v7843
  %v7845 = vmul.f32 %v7752, %v7752
  %v7846 = vmul.f32 %v7753, %v7753
  %v7847 = vmul.f32 %v7754, %v7754
  %v7848 = vmul.f32 %v7755, %v7755
  %v7849 = vmul.f32 %v7756, %v7756
  %v7850 = vmul.f32 %v7757, %v7757
  %v7851 = vmul.f32 %v7758, %v7758
  %v7852 = vmul.f32 %v7759, %v7759
  %v7853 = vmul.f32 %v7760, %v7760
  %v7854 = vmul.f32 %v7761, %v7761
  %v7855 = vmul.f32 %v7762, %v7762
  %v7856 = vmul.f32 %v7763, %v7763
  %v7857 = vmul.f32 %v7764, %v7764
  %v7858 = vmul.f32 %v7765, %v7765
  %v7859 = vmul.f32 %v7766, %v7766
  %v7860 = vmul.f32 %v7767, %v7767
  %v7861 = vmul.f32 %v7768, %v7768
  %v7862 = vmul.f32 %v7769, %v7769
  %v7863 = vmul.f32 %v7770, %v7770
  %v7864 = vmul.f32 %v7771, %v7771
  %v7865 = vmul.f32 %v7772, %v7772
  %v7866 = vmul.f32 %v7773, %v7773
  %v7867 = vmul.f32 %v7774, %v7774
  %v7868 = vmul.f32 %v7775, %v7775
  %v7869 = vmul.f32 %v7776, %v7776
  %v7870 = vmul.f32 %v7777, %v7777
  %v7871 = vmul.f32 %v7778, %v7778
  %v7872 = vmul.f32 %v7779, %v7779
  %v7873 = vmul.f32 %v7780, %v7780
  %v7874 = vsel %vm4258, %v7845, 0.0
  %v7875 = vsel %vm4258, %v7846, 0.0
  %v7876 = vadd.f32 %v7874, %v7875
  %v7877 = vsel %vm4258, %v7847, 0.0
  %v7878 = vadd.f32 %v7876, %v7877
  %v7879 = vsel %vm4258, %v7848, 0.0
  %v7880 = vadd.f32 %v7878, %v7879
  %v7881 = vsel %vm4258, %v7849, 0.0
  %v7882 = vadd.f32 %v7880, %v7881
  %v7883 = vsel %vm4258, %v7850, 0.0
  %v7884 = vadd.f32 %v7882, %v7883
  %v7885 = vsel %vm4258, %v7851, 0.0
  %v7886 = vadd.f32 %v7884, %v7885
  %v7887 = vsel %vm4258, %v7852, 0.0
  %v7888 = vadd.f32 %v7886, %v7887
  %v7889 = vsel %vm4258, %v7853, 0.0
  %v7890 = vadd.f32 %v7888, %v7889
  %v7891 = vsel %vm4258, %v7854, 0.0
  %v7892 = vadd.f32 %v7890, %v7891
  %v7893 = vsel %vm4258, %v7855, 0.0
  %v7894 = vadd.f32 %v7892, %v7893
  %v7895 = vsel %vm4258, %v7856, 0.0
  %v7896 = vadd.f32 %v7894, %v7895
  %v7897 = vsel %vm4258, %v7857, 0.0
  %v7898 = vadd.f32 %v7896, %v7897
  %v7899 = vsel %vm4258, %v7858, 0.0
  %v7900 = vadd.f32 %v7898, %v7899
  %v7901 = vsel %vm4258, %v7859, 0.0
  %v7902 = vadd.f32 %v7900, %v7901
  %v7903 = vsel %vm4258, %v7860, 0.0
  %v7904 = vadd.f32 %v7902, %v7903
  %v7905 = vsel %vm4258, %v7861, 0.0
  %v7906 = vadd.f32 %v7904, %v7905
  %v7907 = vsel %vm4258, %v7862, 0.0
  %v7908 = vadd.f32 %v7906, %v7907
  %v7909 = vsel %vm4258, %v7863, 0.0
  %v7910 = vadd.f32 %v7908, %v7909
  %v7911 = vsel %vm4258, %v7864, 0.0
  %v7912 = vadd.f32 %v7910, %v7911
  %v7913 = vsel %vm4258, %v7865, 0.0
  %v7914 = vadd.f32 %v7912, %v7913
  %v7915 = vsel %vm4258, %v7866, 0.0
  %v7916 = vadd.f32 %v7914, %v7915
  %v7917 = vsel %vm4258, %v7867, 0.0
  %v7918 = vadd.f32 %v7916, %v7917
  %v7919 = vsel %vm4258, %v7868, 0.0
  %v7920 = vadd.f32 %v7918, %v7919
  %v7921 = vsel %vm4258, %v7869, 0.0
  %v7922 = vadd.f32 %v7920, %v7921
  %v7923 = vsel %vm4258, %v7870, 0.0
  %v7924 = vadd.f32 %v7922, %v7923
  %v7925 = vsel %vm4258, %v7871, 0.0
  %v7926 = vadd.f32 %v7924, %v7925
  %v7927 = vsel %vm4258, %v7872, 0.0
  %v7928 = vadd.f32 %v7926, %v7927
  %v7929 = vsel %vm4314, %v7873, 0.0
  %v7930 = vadd.f32 %v7928, %v7929
  %v7931 = vrot.slane %v7930, 4
  %v7932 = vadd.f32 %v7930, %v7931
  %v7933 = vrot.slane %v7932, 2
  %v7934 = vadd.f32 %v7932, %v7933
  %v7935 = vrot.slane %v7934, 1
  %v7936 = vadd.f32 %v7934, %v7935
  %v7937 = vadd.f32 %v6140, %v7936
  %v7938 = vpack.c.bf16 %v7753, %v7752
  %v7939 = vpack.c.bf16 %v7755, %v7754
  %v7940 = vpack.c.bf16 %v7757, %v7756
  %v7941 = vpack.c.bf16 %v7759, %v7758
  %v7942 = vpack.c.bf16 %v7761, %v7760
  %v7943 = vpack.c.bf16 %v7763, %v7762
  %v7944 = vpack.c.bf16 %v7765, %v7764
  %v7945 = vpack.c.bf16 %v7767, %v7766
  %v7946 = vpack.c.bf16 %v7769, %v7768
  %v7947 = vpack.c.bf16 %v7771, %v7770
  %v7948 = vpack.c.bf16 %v7773, %v7772
  %v7949 = vpack.c.bf16 %v7775, %v7774
  %v7950 = vpack.c.bf16 %v7777, %v7776
  %v7951 = vpack.c.bf16 %v7779, %v7778
  %v7952 = vpack.c.bf16 %v7780, %v7780
  %v7968 = vunpack.c.l.b16 %v7938
  %v7969 = vunpack.c.h.b16 %v7938
  %v7970 = vunpack.c.l.b16 %v7939
  %v7971 = vunpack.c.h.b16 %v7939
  %v7972 = vunpack.c.l.b16 %v7940
  %v7973 = vunpack.c.h.b16 %v7940
  %v7974 = vunpack.c.l.b16 %v7941
  %v7975 = vunpack.c.h.b16 %v7941
  %v7976 = vunpack.c.l.b16 %v7942
  %v7977 = vunpack.c.h.b16 %v7942
  %v7978 = vunpack.c.l.b16 %v7943
  %v7979 = vunpack.c.h.b16 %v7943
  %v7980 = vunpack.c.l.b16 %v7944
  %v7981 = vunpack.c.h.b16 %v7944
  %v7982 = vunpack.c.l.b16 %v7945
  %v7983 = vunpack.c.h.b16 %v7945
  %v7984 = vunpack.c.l.b16 %v7946
  %v7985 = vunpack.c.h.b16 %v7946
  %v7986 = vunpack.c.l.b16 %v7947
  %v7987 = vunpack.c.h.b16 %v7947
  %v7988 = vunpack.c.l.b16 %v7948
  %v7989 = vunpack.c.h.b16 %v7948
  %v7990 = vunpack.c.l.b16 %v7949
  %v7991 = vunpack.c.h.b16 %v7949
  %v7992 = vunpack.c.l.b16 %v7950
  %v7993 = vunpack.c.h.b16 %v7950
  %v7994 = vunpack.c.l.b16 %v7951
  %v7995 = vunpack.c.h.b16 %v7951
  %v7996 = vunpack.c.l.b16 %v7952
  %v7997 = vpack.c.b16 %v7968, %v7968
  %v7998 = vpack.c.b16 %v7969, %v7969
  %v7999 = vpack.c.b16 %v7970, %v7970
  %v8000 = vpack.c.b16 %v7971, %v7971
  %v8001 = vpack.c.b16 %v7972, %v7972
  %v8002 = vpack.c.b16 %v7973, %v7973
  %v8003 = vpack.c.b16 %v7974, %v7974
  %v8004 = vpack.c.b16 %v7975, %v7975
  %v8005 = vpack.c.b16 %v7976, %v7976
  %v8006 = vpack.c.b16 %v7977, %v7977
  %v8007 = vpack.c.b16 %v7978, %v7978
  %v8008 = vpack.c.b16 %v7979, %v7979
  %v8009 = vpack.c.b16 %v7980, %v7980
  %v8010 = vpack.c.b16 %v7981, %v7981
  %v8011 = vpack.c.b16 %v7982, %v7982
  %v8012 = vpack.c.b16 %v7983, %v7983
  %v8013 = vpack.c.b16 %v7984, %v7984
  %v8014 = vpack.c.b16 %v7985, %v7985
  %v8015 = vpack.c.b16 %v7986, %v7986
  %v8016 = vpack.c.b16 %v7987, %v7987
  %v8017 = vpack.c.b16 %v7988, %v7988
  %v8018 = vpack.c.b16 %v7989, %v7989
  %v8019 = vpack.c.b16 %v7990, %v7990
  %v8020 = vpack.c.b16 %v7991, %v7991
  %v8021 = vpack.c.b16 %v7992, %v7992
  %v8022 = vpack.c.b16 %v7993, %v7993
  %v8023 = vpack.c.b16 %v7994, %v7994
  %v8024 = vpack.c.b16 %v7995, %v7995
  %v8025 = vpack.c.b16 %v7996, %v7996
  %8026 = vrot.lane.b32.xlu0 %v7997, 8
  %v8027 = vpop.permute.xlu0 %8026
  %8028 = vrot.lane.b32.xlu0 %v7998, 8
  %v8029 = vpop.permute.xlu0 %8028
  %8030 = vrot.lane.b32.xlu0 %v7999, 8
  %v8031 = vpop.permute.xlu0 %8030
  %8032 = vrot.lane.b32.xlu0 %v8000, 8
  %v8033 = vpop.permute.xlu0 %8032
  %8034 = vrot.lane.b32.xlu0 %v8001, 8
  %v8035 = vpop.permute.xlu0 %8034
  %8036 = vrot.lane.b32.xlu0 %v8002, 8
  %v8037 = vpop.permute.xlu0 %8036
  %8038 = vrot.lane.b32.xlu0 %v8003, 8
  %v8039 = vpop.permute.xlu0 %8038
  %8040 = vrot.lane.b32.xlu0 %v8004, 8
  %v8041 = vpop.permute.xlu0 %8040
  %8042 = vrot.lane.b32.xlu0 %v8005, 8
  %v8043 = vpop.permute.xlu0 %8042
  %8044 = vrot.lane.b32.xlu0 %v8006, 8
  %v8045 = vpop.permute.xlu0 %8044
  %8046 = vrot.lane.b32.xlu0 %v8007, 8
  %v8047 = vpop.permute.xlu0 %8046
  %8048 = vrot.lane.b32.xlu0 %v8008, 8
  %v8049 = vpop.permute.xlu0 %8048
  %8050 = vrot.lane.b32.xlu0 %v8009, 8
  %v8051 = vpop.permute.xlu0 %8050
  %8052 = vrot.lane.b32.xlu0 %v8010, 8
  %v8053 = vpop.permute.xlu0 %8052
  %8054 = vrot.lane.b32.xlu0 %v8011, 8
  %v8055 = vpop.permute.xlu0 %8054
  %8056 = vrot.lane.b32.xlu0 %v8012, 8
  %v8057 = vpop.permute.xlu0 %8056
  %8058 = vrot.lane.b32.xlu0 %v8013, 8
  %v8059 = vpop.permute.xlu0 %8058
  %8060 = vrot.lane.b32.xlu0 %v8014, 8
  %v8061 = vpop.permute.xlu0 %8060
  %8062 = vrot.lane.b32.xlu0 %v8015, 8
  %v8063 = vpop.permute.xlu0 %8062
  %8064 = vrot.lane.b32.xlu0 %v8016, 8
  %v8065 = vpop.permute.xlu0 %8064
  %8066 = vrot.lane.b32.xlu0 %v8017, 8
  %v8067 = vpop.permute.xlu0 %8066
  %8068 = vrot.lane.b32.xlu0 %v8018, 8
  %v8069 = vpop.permute.xlu0 %8068
  %8070 = vrot.lane.b32.xlu0 %v8019, 8
  %v8071 = vpop.permute.xlu0 %8070
  %8072 = vrot.lane.b32.xlu0 %v8020, 8
  %v8073 = vpop.permute.xlu0 %8072
  %8074 = vrot.lane.b32.xlu0 %v8021, 8
  %v8075 = vpop.permute.xlu0 %8074
  %8076 = vrot.lane.b32.xlu0 %v8022, 8
  %v8077 = vpop.permute.xlu0 %8076
  %8078 = vrot.lane.b32.xlu0 %v8023, 8
  %v8079 = vpop.permute.xlu0 %8078
  %8080 = vrot.lane.b32.xlu0 %v8024, 8
  %v8081 = vpop.permute.xlu0 %8080
  %8082 = vrot.lane.b32.xlu0 %v8025, 8
  %v8083 = vpop.permute.xlu0 %8082
  %vm8113 = vcmask 93248
  %8114 = vst.msk [vmem:[%s3] sm:$0xf] %vm8113, %v8027
  %8115 = vst.msk [vmem:[%s3 + $0x4] sm:$0xf] %vm8113, %v8029
  %8116 = vst.msk [vmem:[%s3 + $0x8] sm:$0xf] %vm8113, %v8031
  %8117 = vst.msk [vmem:[%s3 + $0xc] sm:$0xf] %vm8113, %v8033
  %8118 = vst.msk [vmem:[%s3 + $0x10] sm:$0xf] %vm8113, %v8035
  %8119 = vst.msk [vmem:[%s3 + $0x14] sm:$0xf] %vm8113, %v8037
  %8120 = vst.msk [vmem:[%s3 + $0x18] sm:$0xf] %vm8113, %v8039
  %8121 = vst.msk [vmem:[%s3 + $0x1c] sm:$0xf] %vm8113, %v8041
  %8122 = vst.msk [vmem:[%s3 + $0x20] sm:$0xf] %vm8113, %v8043
  %8123 = vst.msk [vmem:[%s3 + $0x24] sm:$0xf] %vm8113, %v8045
  %8124 = vst.msk [vmem:[%s3 + $0x28] sm:$0xf] %vm8113, %v8047
  %8125 = vst.msk [vmem:[%s3 + $0x2c] sm:$0xf] %vm8113, %v8049
  %8126 = vst.msk [vmem:[%s3 + $0x30] sm:$0xf] %vm8113, %v8051
  %8127 = vst.msk [vmem:[%s3 + $0x34] sm:$0xf] %vm8113, %v8053
  %8128 = vst.msk [vmem:[%s3 + $0x38] sm:$0xf] %vm8113, %v8055
  %8129 = vst.msk [vmem:[%s3 + $0x3c] sm:$0xf] %vm8113, %v8057
  %8130 = vst.msk [vmem:[%s3 + $0x40] sm:$0xf] %vm8113, %v8059
  %8131 = vst.msk [vmem:[%s3 + $0x44] sm:$0xf] %vm8113, %v8061
  %8132 = vst.msk [vmem:[%s3 + $0x48] sm:$0xf] %vm8113, %v8063
  %8133 = vst.msk [vmem:[%s3 + $0x4c] sm:$0xf] %vm8113, %v8065
  %8134 = vst.msk [vmem:[%s3 + $0x50] sm:$0xf] %vm8113, %v8067
  %8135 = vst.msk [vmem:[%s3 + $0x54] sm:$0xf] %vm8113, %v8069
  %8136 = vst.msk [vmem:[%s3 + $0x58] sm:$0xf] %vm8113, %v8071
  %8137 = vst.msk [vmem:[%s3 + $0x5c] sm:$0xf] %vm8113, %v8073
  %8138 = vst.msk [vmem:[%s3 + $0x60] sm:$0xf] %vm8113, %v8075
  %8139 = vst.msk [vmem:[%s3 + $0x64] sm:$0xf] %vm8113, %v8077
  %8140 = vst.msk [vmem:[%s3 + $0x68] sm:$0xf] %vm8113, %v8079
  %8141 = vst.msk [vmem:[%s3 + $0x6c] sm:$0xf] %vm8113, %v8081
  %vm8142 = vcmask 90176
  %8143 = vst.msk [vmem:[%s3 + $0x70] sm:$0x1] %vm8142, %v8083
  %v8144 = vld [vmem:[#allocation3 + $0x4] sm:$0xe]
  %v8145 = vld [vmem:[#allocation3 + $0x8] sm:$0xf]
  %v8146 = vld [vmem:[#allocation3 + $0xc] sm:$0xf]
  %v8147 = vld [vmem:[#allocation3 + $0x10] sm:$0xf]
  %v8148 = vld [vmem:[#allocation3 + $0x14] sm:$0xf]
  %v8149 = vld [vmem:[#allocation3 + $0x18] sm:$0xf]
  %v8150 = vld [vmem:[#allocation3 + $0x1c] sm:$0xf]
  %v8151 = vld [vmem:[#allocation3 + $0x20] sm:$0xf]
  %v8152 = vld [vmem:[#allocation3 + $0x24] sm:$0xf]
  %v8153 = vld [vmem:[#allocation3 + $0x28] sm:$0xf]
  %v8154 = vld [vmem:[#allocation3 + $0x2c] sm:$0xf]
  %v8155 = vld [vmem:[#allocation3 + $0x30] sm:$0xf]
  %v8156 = vld [vmem:[#allocation3 + $0x34] sm:$0xf]
  %v8157 = vld [vmem:[#allocation3 + $0x38] sm:$0xf]
  %v8158 = vld [vmem:[#allocation3 + $0x3c] sm:$0xf]
  %v8159 = vld [vmem:[#allocation3 + $0x40] sm:$0xf]
  %v8160 = vld [vmem:[#allocation3 + $0x44] sm:$0xf]
  %v8161 = vld [vmem:[#allocation3 + $0x48] sm:$0xf]
  %v8162 = vld [vmem:[#allocation3 + $0x4c] sm:$0xf]
  %v8163 = vld [vmem:[#allocation3 + $0x50] sm:$0xf]
  %v8164 = vld [vmem:[#allocation3 + $0x54] sm:$0xf]
  %v8165 = vld [vmem:[#allocation3 + $0x58] sm:$0xf]
  %v8166 = vld [vmem:[#allocation3 + $0x5c] sm:$0xf]
  %v8167 = vld [vmem:[#allocation3 + $0x60] sm:$0xf]
  %v8168 = vld [vmem:[#allocation3 + $0x64] sm:$0xf]
  %v8169 = vld [vmem:[#allocation3 + $0x68] sm:$0xf]
  %v8170 = vld [vmem:[#allocation3 + $0x6c] sm:$0xf]
  %v8171 = vld [vmem:[#allocation3 + $0x70] sm:$0xf]
  %v8172 = vld [vmem:[#allocation3 + $0x74] sm:$0x7]
  %s8173 = scalar_lea.vmem %s2, 48
  %v8174 = vld [vmem:[%s8173] sm:$0xf]
  %v8175 = vld [vmem:[#allocation3 + $0x4] sm:$0xc]
  %s8176 = scalar_lea.vmem %s2, 52
  %v8177 = vld [vmem:[%s8176] sm:$0xf]
  %v8207 = vunpack.c.l.b16 %v8175
  %v8208 = vunpack.c.l.b16 %v8145
  %v8209 = vunpack.c.l.b16 %v8146
  %v8210 = vunpack.c.l.b16 %v8147
  %v8211 = vunpack.c.l.b16 %v8148
  %v8212 = vunpack.c.l.b16 %v8149
  %v8213 = vunpack.c.l.b16 %v8150
  %v8214 = vunpack.c.l.b16 %v8151
  %v8215 = vunpack.c.l.b16 %v8152
  %v8216 = vunpack.c.l.b16 %v8153
  %v8217 = vunpack.c.l.b16 %v8154
  %v8218 = vunpack.c.l.b16 %v8155
  %v8219 = vunpack.c.l.b16 %v8156
  %v8220 = vunpack.c.l.b16 %v8157
  %v8221 = vunpack.c.l.b16 %v8158
  %v8222 = vunpack.c.l.b16 %v8159
  %v8223 = vunpack.c.l.b16 %v8160
  %v8224 = vunpack.c.l.b16 %v8161
  %v8225 = vunpack.c.l.b16 %v8162
  %v8226 = vunpack.c.l.b16 %v8163
  %v8227 = vunpack.c.l.b16 %v8164
  %v8228 = vunpack.c.l.b16 %v8165
  %v8229 = vunpack.c.l.b16 %v8166
  %v8230 = vunpack.c.l.b16 %v8167
  %v8231 = vunpack.c.l.b16 %v8168
  %v8232 = vunpack.c.l.b16 %v8169
  %v8233 = vunpack.c.l.b16 %v8170
  %v8234 = vunpack.c.l.b16 %v8171
  %v8235 = vunpack.c.l.b16 %v8172
  %v8236 = vpack.c.b16 %v8208, %v8207
  %v8237 = vpack.c.b16 %v8210, %v8209
  %v8238 = vpack.c.b16 %v8212, %v8211
  %v8239 = vpack.c.b16 %v8214, %v8213
  %v8240 = vpack.c.b16 %v8216, %v8215
  %v8241 = vpack.c.b16 %v8218, %v8217
  %v8242 = vpack.c.b16 %v8220, %v8219
  %v8243 = vpack.c.b16 %v8222, %v8221
  %v8244 = vpack.c.b16 %v8224, %v8223
  %v8245 = vpack.c.b16 %v8226, %v8225
  %v8246 = vpack.c.b16 %v8228, %v8227
  %v8247 = vpack.c.b16 %v8230, %v8229
  %v8248 = vpack.c.b16 %v8232, %v8231
  %v8249 = vpack.c.b16 %v8234, %v8233
  %v8250 = vpack.c.b16 %v8235, %v8235
  %v8251 = vrot.slane %v8236, 2
  %v8252 = vrot.slane %v8237, 2
  %v8253 = vsel %vm5696, %v8251, %v8252
  %v8254 = vrot.slane %v8238, 2
  %v8255 = vsel %vm5696, %v8252, %v8254
  %v8256 = vrot.slane %v8239, 2
  %v8257 = vsel %vm5696, %v8254, %v8256
  %v8258 = vrot.slane %v8240, 2
  %v8259 = vsel %vm5696, %v8256, %v8258
  %v8260 = vrot.slane %v8241, 2
  %v8261 = vsel %vm5696, %v8258, %v8260
  %v8262 = vrot.slane %v8242, 2
  %v8263 = vsel %vm5696, %v8260, %v8262
  %v8264 = vrot.slane %v8243, 2
  %v8265 = vsel %vm5696, %v8262, %v8264
  %v8266 = vrot.slane %v8244, 2
  %v8267 = vsel %vm5696, %v8264, %v8266
  %v8268 = vrot.slane %v8245, 2
  %v8269 = vsel %vm5696, %v8266, %v8268
  %v8270 = vrot.slane %v8246, 2
  %v8271 = vsel %vm5696, %v8268, %v8270
  %v8272 = vrot.slane %v8247, 2
  %v8273 = vsel %vm5696, %v8270, %v8272
  %v8274 = vrot.slane %v8248, 2
  %v8275 = vsel %vm5696, %v8272, %v8274
  %v8276 = vrot.slane %v8249, 2
  %v8277 = vsel %vm5696, %v8274, %v8276
  %v8278 = vrot.slane %v8250, 2
  %v8279 = vsel %vm5696, %v8276, %v8278
  %v8281 = vsel %vm3049, %v8253, 0
  %v8284 = vsel %vm3049, %v8255, 0
  %v8287 = vsel %vm3049, %v8257, 0
  %v8290 = vsel %vm3049, %v8259, 0
  %v8293 = vsel %vm3049, %v8261, 0
  %v8296 = vsel %vm3049, %v8263, 0
  %v8299 = vsel %vm3049, %v8265, 0
  %v8302 = vsel %vm3049, %v8267, 0
  %v8305 = vsel %vm3049, %v8269, 0
  %v8308 = vsel %vm3049, %v8271, 0
  %v8311 = vsel %vm3049, %v8273, 0
  %v8314 = vsel %vm3049, %v8275, 0
  %v8317 = vsel %vm3049, %v8277, 0
  %v8320 = vsel %vm3049, %v8279, 0
  %v8323 = vsel %vm3049, %v8278, 0
  %v8326 = vsel %vm3095, %v8177, 0
  %8328 = vmatprep.subr.bf16.mxu0 0
  %8329 = vmatpush1.bf16.msra.mxu0 0
  %8330 = vmatprep.subr.bf16.mxu0 0
  %8331 = vmatpush1.bf16.msra.mxu0 0
  %8332 = vmatprep.subr.bf16.mxu0 0
  %8333 = vmatpush1.bf16.msra.mxu0 0
  %8334 = vmatprep.subr.bf16.mxu0 0
  %8335 = vmatpush1.bf16.msra.mxu0 0
  %8336 = vmatprep.subr.bf16.mxu0 0
  %8337 = vmatpush1.bf16.msra.mxu0 0
  %8338 = vmatprep.subr.bf16.mxu0 0
  %8339 = vmatpush1.bf16.msra.mxu0 0
  %8340 = vmatprep.subr.bf16.mxu0 0
  %8341 = vmatpush1.bf16.msra.mxu0 0
  %8342 = vmatprep.subr.bf16.mxu0 0
  %8343 = vmatpush1.bf16.msra.mxu0 %v8326
  %8344 = vmatprep.subr.bf16.mxu0 0
  %8345 = vmatpush2.bf16.msra.mxu0 0
  %8346 = vmatprep.subr.bf16.mxu0 0
  %8347 = vmatpush2.bf16.msra.mxu0 0
  %8348 = vmatprep.subr.bf16.mxu0 0
  %8349 = vmatpush2.bf16.msra.mxu0 0
  %8350 = vmatprep.subr.bf16.mxu0 0
  %8351 = vmatpush2.bf16.msra.mxu0 0
  %8352 = vmatprep.subr.bf16.mxu0 0
  %8353 = vmatpush2.bf16.msra.mxu0 0
  %8354 = vmatprep.subr.bf16.mxu0 0
  %8355 = vmatpush2.bf16.msra.mxu0 0
  %8356 = vmatprep.subr.bf16.mxu0 0
  %8357 = vmatpush2.bf16.msra.mxu0 0
  %8358 = vmatprep.subr.bf16.mxu0 0
  %8359 = vmatpush2.bf16.msra.mxu0 0
  %8360 = vmatprep.mubr.bf16.mxu0 0
  %8361 = vmatmul.mubr.bf16.gmra.mxu0 %v8281
  %v8362 = vpop.f32.mrf.mxu0
  %v8363 = vadd.f32 0.0, %v8362
  %v8364 = vpop.f32.mrf.mxu0
  %v8365 = vpop.f32.mrf.mxu0
  %v8366 = vadd.f32 0.0, %v8365
  %v8367 = vpop.f32.mrf.mxu0
  %8368 = vmatprep.mubr.bf16.mxu0 0
  %8369 = vmatmul.mubr.bf16.gmra.mxu0 %v8284
  %v8370 = vpop.f32.mrf.mxu0
  %v8371 = vadd.f32 0.0, %v8370
  %v8372 = vpop.f32.mrf.mxu0
  %v8373 = vpop.f32.mrf.mxu0
  %v8374 = vadd.f32 0.0, %v8373
  %v8375 = vpop.f32.mrf.mxu0
  %8376 = vmatprep.mubr.bf16.mxu0 0
  %8377 = vmatmul.mubr.bf16.gmra.mxu0 %v8287
  %v8378 = vpop.f32.mrf.mxu0
  %v8379 = vadd.f32 0.0, %v8378
  %v8380 = vpop.f32.mrf.mxu0
  %v8381 = vpop.f32.mrf.mxu0
  %v8382 = vadd.f32 0.0, %v8381
  %v8383 = vpop.f32.mrf.mxu0
  %8384 = vmatprep.mubr.bf16.mxu0 0
  %8385 = vmatmul.mubr.bf16.gmra.mxu0 %v8290
  %v8386 = vpop.f32.mrf.mxu0
  %v8387 = vadd.f32 0.0, %v8386
  %v8388 = vpop.f32.mrf.mxu0
  %v8389 = vpop.f32.mrf.mxu0
  %v8390 = vadd.f32 0.0, %v8389
  %v8391 = vpop.f32.mrf.mxu0
  %8392 = vmatprep.mubr.bf16.mxu0 0
  %8393 = vmatmul.mubr.bf16.gmra.mxu0 %v8293
  %v8394 = vpop.f32.mrf.mxu0
  %v8395 = vadd.f32 0.0, %v8394
  %v8396 = vpop.f32.mrf.mxu0
  %v8397 = vpop.f32.mrf.mxu0
  %v8398 = vadd.f32 0.0, %v8397
  %v8399 = vpop.f32.mrf.mxu0
  %8400 = vmatprep.mubr.bf16.mxu0 0
  %8401 = vmatmul.mubr.bf16.gmra.mxu0 %v8296
  %v8402 = vpop.f32.mrf.mxu0
  %v8403 = vadd.f32 0.0, %v8402
  %v8404 = vpop.f32.mrf.mxu0
  %v8405 = vpop.f32.mrf.mxu0
  %v8406 = vadd.f32 0.0, %v8405
  %v8407 = vpop.f32.mrf.mxu0
  %8408 = vmatprep.mubr.bf16.mxu0 0
  %8409 = vmatmul.mubr.bf16.gmra.mxu0 %v8299
  %v8410 = vpop.f32.mrf.mxu0
  %v8411 = vadd.f32 0.0, %v8410
  %v8412 = vpop.f32.mrf.mxu0
  %v8413 = vpop.f32.mrf.mxu0
  %v8414 = vadd.f32 0.0, %v8413
  %v8415 = vpop.f32.mrf.mxu0
  %8416 = vmatprep.mubr.bf16.mxu0 0
  %8417 = vmatmul.mubr.bf16.gmra.mxu0 %v8302
  %v8418 = vpop.f32.mrf.mxu0
  %v8419 = vadd.f32 0.0, %v8418
  %v8420 = vpop.f32.mrf.mxu0
  %v8421 = vpop.f32.mrf.mxu0
  %v8422 = vadd.f32 0.0, %v8421
  %v8423 = vpop.f32.mrf.mxu0
  %8424 = vmatprep.mubr.bf16.mxu0 0
  %8425 = vmatmul.mubr.bf16.gmra.mxu0 %v8305
  %v8426 = vpop.f32.mrf.mxu0
  %v8427 = vadd.f32 0.0, %v8426
  %v8428 = vpop.f32.mrf.mxu0
  %v8429 = vpop.f32.mrf.mxu0
  %v8430 = vadd.f32 0.0, %v8429
  %v8431 = vpop.f32.mrf.mxu0
  %8432 = vmatprep.mubr.bf16.mxu0 0
  %8433 = vmatmul.mubr.bf16.gmra.mxu0 %v8308
  %v8434 = vpop.f32.mrf.mxu0
  %v8435 = vadd.f32 0.0, %v8434
  %v8436 = vpop.f32.mrf.mxu0
  %v8437 = vpop.f32.mrf.mxu0
  %v8438 = vadd.f32 0.0, %v8437
  %v8439 = vpop.f32.mrf.mxu0
  %8440 = vmatprep.mubr.bf16.mxu0 0
  %8441 = vmatmul.mubr.bf16.gmra.mxu0 %v8311
  %v8442 = vpop.f32.mrf.mxu0
  %v8443 = vadd.f32 0.0, %v8442
  %v8444 = vpop.f32.mrf.mxu0
  %v8445 = vpop.f32.mrf.mxu0
  %v8446 = vadd.f32 0.0, %v8445
  %v8447 = vpop.f32.mrf.mxu0
  %8448 = vmatprep.mubr.bf16.mxu0 0
  %8449 = vmatmul.mubr.bf16.gmra.mxu0 %v8314
  %v8450 = vpop.f32.mrf.mxu0
  %v8451 = vadd.f32 0.0, %v8450
  %v8452 = vpop.f32.mrf.mxu0
  %v8453 = vpop.f32.mrf.mxu0
  %v8454 = vadd.f32 0.0, %v8453
  %v8455 = vpop.f32.mrf.mxu0
  %8456 = vmatprep.mubr.bf16.mxu0 0
  %8457 = vmatmul.mubr.bf16.gmra.mxu0 %v8317
  %v8458 = vpop.f32.mrf.mxu0
  %v8459 = vadd.f32 0.0, %v8458
  %v8460 = vpop.f32.mrf.mxu0
  %v8461 = vpop.f32.mrf.mxu0
  %v8462 = vadd.f32 0.0, %v8461
  %v8463 = vpop.f32.mrf.mxu0
  %8464 = vmatprep.mubr.bf16.mxu0 0
  %8465 = vmatmul.mubr.bf16.gmra.mxu0 %v8320
  %v8466 = vpop.f32.mrf.mxu0
  %v8467 = vadd.f32 0.0, %v8466
  %v8468 = vpop.f32.mrf.mxu0
  %v8469 = vpop.f32.mrf.mxu0
  %v8470 = vadd.f32 0.0, %v8469
  %v8471 = vpop.f32.mrf.mxu0
  %8472 = vmatprep.mubr.bf16.mxu0 0
  %8473 = vmatmul.mubr.bf16.gmra.mxu0 %v8323
  %v8474 = vpop.f32.mrf.mxu0
  %v8475 = vadd.f32 0.0, %v8474
  %v8476 = vpop.f32.mrf.mxu0
  %v8477 = vpop.f32.mrf.mxu0
  %v8478 = vpop.f32.mrf.mxu0
  %8479 = vdwg.mxu0
  %v8481 = vunpack.c.l.b16 %v8144
  %v8482 = vpack.c.b16 %v8208, %v8481
  %v8484 = vshrl.u32 %v8482, 16
  %v8486 = vrot.slane %v8484, 1
  %v8487 = vshll.u32 %v8482, 16
  %v8489 = vrot.slane %v8487, 2
  %v8490 = vor.u32 %v8486, %v8489
  %v8492 = vshrl.u32 %v8237, 16
  %v8494 = vrot.slane %v8492, 1
  %v8495 = vshll.u32 %v8237, 16
  %v8497 = vrot.slane %v8495, 2
  %v8498 = vor.u32 %v8494, %v8497
  %v8499 = vsel %vm2005, %v8490, %v8498
  %v8501 = vshrl.u32 %v8238, 16
  %v8503 = vrot.slane %v8501, 1
  %v8504 = vshll.u32 %v8238, 16
  %v8506 = vrot.slane %v8504, 2
  %v8507 = vor.u32 %v8503, %v8506
  %v8508 = vsel %vm2005, %v8498, %v8507
  %v8510 = vshrl.u32 %v8239, 16
  %v8512 = vrot.slane %v8510, 1
  %v8513 = vshll.u32 %v8239, 16
  %v8515 = vrot.slane %v8513, 2
  %v8516 = vor.u32 %v8512, %v8515
  %v8517 = vsel %vm2005, %v8507, %v8516
  %v8519 = vshrl.u32 %v8240, 16
  %v8521 = vrot.slane %v8519, 1
  %v8522 = vshll.u32 %v8240, 16
  %v8524 = vrot.slane %v8522, 2
  %v8525 = vor.u32 %v8521, %v8524
  %v8526 = vsel %vm2005, %v8516, %v8525
  %v8528 = vshrl.u32 %v8241, 16
  %v8530 = vrot.slane %v8528, 1
  %v8531 = vshll.u32 %v8241, 16
  %v8533 = vrot.slane %v8531, 2
  %v8534 = vor.u32 %v8530, %v8533
  %v8535 = vsel %vm2005, %v8525, %v8534
  %v8537 = vshrl.u32 %v8242, 16
  %v8539 = vrot.slane %v8537, 1
  %v8540 = vshll.u32 %v8242, 16
  %v8542 = vrot.slane %v8540, 2
  %v8543 = vor.u32 %v8539, %v8542
  %v8544 = vsel %vm2005, %v8534, %v8543
  %v8546 = vshrl.u32 %v8243, 16
  %v8548 = vrot.slane %v8546, 1
  %v8549 = vshll.u32 %v8243, 16
  %v8551 = vrot.slane %v8549, 2
  %v8552 = vor.u32 %v8548, %v8551
  %v8553 = vsel %vm2005, %v8543, %v8552
  %v8555 = vshrl.u32 %v8244, 16
  %v8557 = vrot.slane %v8555, 1
  %v8558 = vshll.u32 %v8244, 16
  %v8560 = vrot.slane %v8558, 2
  %v8561 = vor.u32 %v8557, %v8560
  %v8562 = vsel %vm2005, %v8552, %v8561
  %v8564 = vshrl.u32 %v8245, 16
  %v8566 = vrot.slane %v8564, 1
  %v8567 = vshll.u32 %v8245, 16
  %v8569 = vrot.slane %v8567, 2
  %v8570 = vor.u32 %v8566, %v8569
  %v8571 = vsel %vm2005, %v8561, %v8570
  %v8573 = vshrl.u32 %v8246, 16
  %v8575 = vrot.slane %v8573, 1
  %v8576 = vshll.u32 %v8246, 16
  %v8578 = vrot.slane %v8576, 2
  %v8579 = vor.u32 %v8575, %v8578
  %v8580 = vsel %vm2005, %v8570, %v8579
  %v8582 = vshrl.u32 %v8247, 16
  %v8584 = vrot.slane %v8582, 1
  %v8585 = vshll.u32 %v8247, 16
  %v8587 = vrot.slane %v8585, 2
  %v8588 = vor.u32 %v8584, %v8587
  %v8589 = vsel %vm2005, %v8579, %v8588
  %v8591 = vshrl.u32 %v8248, 16
  %v8593 = vrot.slane %v8591, 1
  %v8594 = vshll.u32 %v8248, 16
  %v8596 = vrot.slane %v8594, 2
  %v8597 = vor.u32 %v8593, %v8596
  %v8598 = vsel %vm2005, %v8588, %v8597
  %v8600 = vshrl.u32 %v8249, 16
  %v8602 = vrot.slane %v8600, 1
  %v8603 = vshll.u32 %v8249, 16
  %v8605 = vrot.slane %v8603, 2
  %v8606 = vor.u32 %v8602, %v8605
  %v8607 = vsel %vm2005, %v8597, %v8606
  %v8609 = vshrl.u32 %v8250, 16
  %v8611 = vrot.slane %v8609, 1
  %v8612 = vshll.u32 %v8250, 16
  %v8614 = vrot.slane %v8612, 2
  %v8615 = vor.u32 %v8611, %v8614
  %v8616 = vsel %vm2005, %v8606, %v8615
  %v8618 = vsel %vm3049, %v8499, 0
  %v8621 = vsel %vm3049, %v8508, 0
  %v8624 = vsel %vm3049, %v8517, 0
  %v8627 = vsel %vm3049, %v8526, 0
  %v8630 = vsel %vm3049, %v8535, 0
  %v8633 = vsel %vm3049, %v8544, 0
  %v8636 = vsel %vm3049, %v8553, 0
  %v8639 = vsel %vm3049, %v8562, 0
  %v8642 = vsel %vm3049, %v8571, 0
  %v8645 = vsel %vm3049, %v8580, 0
  %v8648 = vsel %vm3049, %v8589, 0
  %v8651 = vsel %vm3049, %v8598, 0
  %v8654 = vsel %vm3049, %v8607, 0
  %v8657 = vsel %vm3049, %v8616, 0
  %v8660 = vsel %vm3049, %v8615, 0
  %v8663 = vsel %vm3095, %v8174, 0
  %8665 = vmatprep.subr.bf16.mxu0 0
  %8666 = vmatpush1.bf16.msra.mxu0 0
  %8667 = vmatprep.subr.bf16.mxu0 0
  %8668 = vmatpush1.bf16.msra.mxu0 0
  %8669 = vmatprep.subr.bf16.mxu0 0
  %8670 = vmatpush1.bf16.msra.mxu0 0
  %8671 = vmatprep.subr.bf16.mxu0 0
  %8672 = vmatpush1.bf16.msra.mxu0 0
  %8673 = vmatprep.subr.bf16.mxu0 0
  %8674 = vmatpush1.bf16.msra.mxu0 0
  %8675 = vmatprep.subr.bf16.mxu0 0
  %8676 = vmatpush1.bf16.msra.mxu0 0
  %8677 = vmatprep.subr.bf16.mxu0 0
  %8678 = vmatpush1.bf16.msra.mxu0 0
  %8679 = vmatprep.subr.bf16.mxu0 0
  %8680 = vmatpush1.bf16.msra.mxu0 %v8663
  %8681 = vmatprep.subr.bf16.mxu0 0
  %8682 = vmatpush2.bf16.msra.mxu0 0
  %8683 = vmatprep.subr.bf16.mxu0 0
  %8684 = vmatpush2.bf16.msra.mxu0 0
  %8685 = vmatprep.subr.bf16.mxu0 0
  %8686 = vmatpush2.bf16.msra.mxu0 0
  %8687 = vmatprep.subr.bf16.mxu0 0
  %8688 = vmatpush2.bf16.msra.mxu0 0
  %8689 = vmatprep.subr.bf16.mxu0 0
  %8690 = vmatpush2.bf16.msra.mxu0 0
  %8691 = vmatprep.subr.bf16.mxu0 0
  %8692 = vmatpush2.bf16.msra.mxu0 0
  %8693 = vmatprep.subr.bf16.mxu0 0
  %8694 = vmatpush2.bf16.msra.mxu0 0
  %8695 = vmatprep.subr.bf16.mxu0 0
  %8696 = vmatpush2.bf16.msra.mxu0 0
  %8697 = vmatprep.mubr.bf16.mxu0 0
  %8698 = vmatmul.mubr.bf16.gmra.mxu0 %v8618
  %v8699 = vpop.f32.mrf.mxu0
  %v8700 = vadd.f32 %v8363, %v8699
  %v8701 = vpop.f32.mrf.mxu0
  %v8702 = vpop.f32.mrf.mxu0
  %v8703 = vadd.f32 %v8366, %v8702
  %v8704 = vpop.f32.mrf.mxu0
  %8705 = vmatprep.mubr.bf16.mxu0 0
  %8706 = vmatmul.mubr.bf16.gmra.mxu0 %v8621
  %v8707 = vpop.f32.mrf.mxu0
  %v8708 = vadd.f32 %v8371, %v8707
  %v8709 = vpop.f32.mrf.mxu0
  %v8710 = vpop.f32.mrf.mxu0
  %v8711 = vadd.f32 %v8374, %v8710
  %v8712 = vpop.f32.mrf.mxu0
  %8713 = vmatprep.mubr.bf16.mxu0 0
  %8714 = vmatmul.mubr.bf16.gmra.mxu0 %v8624
  %v8715 = vpop.f32.mrf.mxu0
  %v8716 = vadd.f32 %v8379, %v8715
  %v8717 = vpop.f32.mrf.mxu0
  %v8718 = vpop.f32.mrf.mxu0
  %v8719 = vadd.f32 %v8382, %v8718
  %v8720 = vpop.f32.mrf.mxu0
  %8721 = vmatprep.mubr.bf16.mxu0 0
  %8722 = vmatmul.mubr.bf16.gmra.mxu0 %v8627
  %v8723 = vpop.f32.mrf.mxu0
  %v8724 = vadd.f32 %v8387, %v8723
  %v8725 = vpop.f32.mrf.mxu0
  %v8726 = vpop.f32.mrf.mxu0
  %v8727 = vadd.f32 %v8390, %v8726
  %v8728 = vpop.f32.mrf.mxu0
  %8729 = vmatprep.mubr.bf16.mxu0 0
  %8730 = vmatmul.mubr.bf16.gmra.mxu0 %v8630
  %v8731 = vpop.f32.mrf.mxu0
  %v8732 = vadd.f32 %v8395, %v8731
  %v8733 = vpop.f32.mrf.mxu0
  %v8734 = vpop.f32.mrf.mxu0
  %v8735 = vadd.f32 %v8398, %v8734
  %v8736 = vpop.f32.mrf.mxu0
  %8737 = vmatprep.mubr.bf16.mxu0 0
  %8738 = vmatmul.mubr.bf16.gmra.mxu0 %v8633
  %v8739 = vpop.f32.mrf.mxu0
  %v8740 = vadd.f32 %v8403, %v8739
  %v8741 = vpop.f32.mrf.mxu0
  %v8742 = vpop.f32.mrf.mxu0
  %v8743 = vadd.f32 %v8406, %v8742
  %v8744 = vpop.f32.mrf.mxu0
  %8745 = vmatprep.mubr.bf16.mxu0 0
  %8746 = vmatmul.mubr.bf16.gmra.mxu0 %v8636
  %v8747 = vpop.f32.mrf.mxu0
  %v8748 = vadd.f32 %v8411, %v8747
  %v8749 = vpop.f32.mrf.mxu0
  %v8750 = vpop.f32.mrf.mxu0
  %v8751 = vadd.f32 %v8414, %v8750
  %v8752 = vpop.f32.mrf.mxu0
  %8753 = vmatprep.mubr.bf16.mxu0 0
  %8754 = vmatmul.mubr.bf16.gmra.mxu0 %v8639
  %v8755 = vpop.f32.mrf.mxu0
  %v8756 = vadd.f32 %v8419, %v8755
  %v8757 = vpop.f32.mrf.mxu0
  %v8758 = vpop.f32.mrf.mxu0
  %v8759 = vadd.f32 %v8422, %v8758
  %v8760 = vpop.f32.mrf.mxu0
  %8761 = vmatprep.mubr.bf16.mxu0 0
  %8762 = vmatmul.mubr.bf16.gmra.mxu0 %v8642
  %v8763 = vpop.f32.mrf.mxu0
  %v8764 = vadd.f32 %v8427, %v8763
  %v8765 = vpop.f32.mrf.mxu0
  %v8766 = vpop.f32.mrf.mxu0
  %v8767 = vadd.f32 %v8430, %v8766
  %v8768 = vpop.f32.mrf.mxu0
  %8769 = vmatprep.mubr.bf16.mxu0 0
  %8770 = vmatmul.mubr.bf16.gmra.mxu0 %v8645
  %v8771 = vpop.f32.mrf.mxu0
  %v8772 = vadd.f32 %v8435, %v8771
  %v8773 = vpop.f32.mrf.mxu0
  %v8774 = vpop.f32.mrf.mxu0
  %v8775 = vadd.f32 %v8438, %v8774
  %v8776 = vpop.f32.mrf.mxu0
  %8777 = vmatprep.mubr.bf16.mxu0 0
  %8778 = vmatmul.mubr.bf16.gmra.mxu0 %v8648
  %v8779 = vpop.f32.mrf.mxu0
  %v8780 = vadd.f32 %v8443, %v8779
  %v8781 = vpop.f32.mrf.mxu0
  %v8782 = vpop.f32.mrf.mxu0
  %v8783 = vadd.f32 %v8446, %v8782
  %v8784 = vpop.f32.mrf.mxu0
  %8785 = vmatprep.mubr.bf16.mxu0 0
  %8786 = vmatmul.mubr.bf16.gmra.mxu0 %v8651
  %v8787 = vpop.f32.mrf.mxu0
  %v8788 = vadd.f32 %v8451, %v8787
  %v8789 = vpop.f32.mrf.mxu0
  %v8790 = vpop.f32.mrf.mxu0
  %v8791 = vadd.f32 %v8454, %v8790
  %v8792 = vpop.f32.mrf.mxu0
  %8793 = vmatprep.mubr.bf16.mxu0 0
  %8794 = vmatmul.mubr.bf16.gmra.mxu0 %v8654
  %v8795 = vpop.f32.mrf.mxu0
  %v8796 = vadd.f32 %v8459, %v8795
  %v8797 = vpop.f32.mrf.mxu0
  %v8798 = vpop.f32.mrf.mxu0
  %v8799 = vadd.f32 %v8462, %v8798
  %v8800 = vpop.f32.mrf.mxu0
  %8801 = vmatprep.mubr.bf16.mxu0 0
  %8802 = vmatmul.mubr.bf16.gmra.mxu0 %v8657
  %v8803 = vpop.f32.mrf.mxu0
  %v8804 = vadd.f32 %v8467, %v8803
  %v8805 = vpop.f32.mrf.mxu0
  %v8806 = vpop.f32.mrf.mxu0
  %v8807 = vadd.f32 %v8470, %v8806
  %v8808 = vpop.f32.mrf.mxu0
  %8809 = vmatprep.mubr.bf16.mxu0 0
  %8810 = vmatmul.mubr.bf16.gmra.mxu0 %v8660
  %v8811 = vpop.f32.mrf.mxu0
  %v8812 = vadd.f32 %v8475, %v8811
  %v8813 = vpop.f32.mrf.mxu0
  %v8814 = vpop.f32.mrf.mxu0
  %v8815 = vpop.f32.mrf.mxu0
  %8816 = vdwg.mxu0
  %v8817 = vld [vmem:[#allocation3 + $0x8] sm:$0xc]
  %v8818 = vld [vmem:[#allocation3 + $0xc] sm:$0xf]
  %v8819 = vld [vmem:[#allocation3 + $0x10] sm:$0xf]
  %v8820 = vld [vmem:[#allocation3 + $0x14] sm:$0xf]
  %v8821 = vld [vmem:[#allocation3 + $0x18] sm:$0xf]
  %v8822 = vld [vmem:[#allocation3 + $0x1c] sm:$0xf]
  %v8823 = vld [vmem:[#allocation3 + $0x20] sm:$0xf]
  %v8824 = vld [vmem:[#allocation3 + $0x24] sm:$0xf]
  %v8825 = vld [vmem:[#allocation3 + $0x28] sm:$0xf]
  %v8826 = vld [vmem:[#allocation3 + $0x2c] sm:$0xf]
  %v8827 = vld [vmem:[#allocation3 + $0x30] sm:$0xf]
  %v8828 = vld [vmem:[#allocation3 + $0x34] sm:$0xf]
  %v8829 = vld [vmem:[#allocation3 + $0x38] sm:$0xf]
  %v8830 = vld [vmem:[#allocation3 + $0x3c] sm:$0xf]
  %v8831 = vld [vmem:[#allocation3 + $0x40] sm:$0xf]
  %v8832 = vld [vmem:[#allocation3 + $0x44] sm:$0xf]
  %v8833 = vld [vmem:[#allocation3 + $0x48] sm:$0xf]
  %v8834 = vld [vmem:[#allocation3 + $0x4c] sm:$0xf]
  %v8835 = vld [vmem:[#allocation3 + $0x50] sm:$0xf]
  %v8836 = vld [vmem:[#allocation3 + $0x54] sm:$0xf]
  %v8837 = vld [vmem:[#allocation3 + $0x58] sm:$0xf]
  %v8838 = vld [vmem:[#allocation3 + $0x5c] sm:$0xf]
  %v8839 = vld [vmem:[#allocation3 + $0x60] sm:$0xf]
  %v8840 = vld [vmem:[#allocation3 + $0x64] sm:$0xf]
  %v8841 = vld [vmem:[#allocation3 + $0x68] sm:$0xf]
  %v8842 = vld [vmem:[#allocation3 + $0x6c] sm:$0xf]
  %v8843 = vld [vmem:[#allocation3 + $0x70] sm:$0xf]
  %v8844 = vld [vmem:[#allocation3 + $0x74] sm:$0xf]
  %v8845 = vld [vmem:[#allocation3 + $0x78] sm:$0xf]
  %s8846 = scalar_lea.vmem %s2, 56
  %v8847 = vld [vmem:[%s8846] sm:$0xf]
  %v8877 = vunpack.c.l.b16 %v8817
  %v8878 = vunpack.c.l.b16 %v8818
  %v8879 = vunpack.c.l.b16 %v8819
  %v8880 = vunpack.c.l.b16 %v8820
  %v8881 = vunpack.c.l.b16 %v8821
  %v8882 = vunpack.c.l.b16 %v8822
  %v8883 = vunpack.c.l.b16 %v8823
  %v8884 = vunpack.c.l.b16 %v8824
  %v8885 = vunpack.c.l.b16 %v8825
  %v8886 = vunpack.c.l.b16 %v8826
  %v8887 = vunpack.c.l.b16 %v8827
  %v8888 = vunpack.c.l.b16 %v8828
  %v8889 = vunpack.c.l.b16 %v8829
  %v8890 = vunpack.c.l.b16 %v8830
  %v8891 = vunpack.c.l.b16 %v8831
  %v8892 = vunpack.c.l.b16 %v8832
  %v8893 = vunpack.c.l.b16 %v8833
  %v8894 = vunpack.c.l.b16 %v8834
  %v8895 = vunpack.c.l.b16 %v8835
  %v8896 = vunpack.c.l.b16 %v8836
  %v8897 = vunpack.c.l.b16 %v8837
  %v8898 = vunpack.c.l.b16 %v8838
  %v8899 = vunpack.c.l.b16 %v8839
  %v8900 = vunpack.c.l.b16 %v8840
  %v8901 = vunpack.c.l.b16 %v8841
  %v8902 = vunpack.c.l.b16 %v8842
  %v8903 = vunpack.c.l.b16 %v8843
  %v8904 = vunpack.c.l.b16 %v8844
  %v8905 = vunpack.c.l.b16 %v8845
  %v8906 = vpack.c.b16 %v8878, %v8877
  %v8907 = vpack.c.b16 %v8880, %v8879
  %v8908 = vpack.c.b16 %v8882, %v8881
  %v8909 = vpack.c.b16 %v8884, %v8883
  %v8910 = vpack.c.b16 %v8886, %v8885
  %v8911 = vpack.c.b16 %v8888, %v8887
  %v8912 = vpack.c.b16 %v8890, %v8889
  %v8913 = vpack.c.b16 %v8892, %v8891
  %v8914 = vpack.c.b16 %v8894, %v8893
  %v8915 = vpack.c.b16 %v8896, %v8895
  %v8916 = vpack.c.b16 %v8898, %v8897
  %v8917 = vpack.c.b16 %v8900, %v8899
  %v8918 = vpack.c.b16 %v8902, %v8901
  %v8919 = vpack.c.b16 %v8904, %v8903
  %v8920 = vpack.c.b16 %v8905, %v8905
  %v8922 = vshrl.u32 %v8906, 16
  %v8924 = vrot.slane %v8922, 2
  %v8925 = vshll.u32 %v8906, 16
  %v8927 = vrot.slane %v8925, 3
  %v8928 = vor.u32 %v8924, %v8927
  %v8930 = vshrl.u32 %v8907, 16
  %v8932 = vrot.slane %v8930, 2
  %v8933 = vshll.u32 %v8907, 16
  %v8935 = vrot.slane %v8933, 3
  %v8936 = vor.u32 %v8932, %v8935
  %v8937 = vsel %vm7388, %v8928, %v8936
  %v8939 = vshrl.u32 %v8908, 16
  %v8941 = vrot.slane %v8939, 2
  %v8942 = vshll.u32 %v8908, 16
  %v8944 = vrot.slane %v8942, 3
  %v8945 = vor.u32 %v8941, %v8944
  %v8946 = vsel %vm7388, %v8936, %v8945
  %v8948 = vshrl.u32 %v8909, 16
  %v8950 = vrot.slane %v8948, 2
  %v8951 = vshll.u32 %v8909, 16
  %v8953 = vrot.slane %v8951, 3
  %v8954 = vor.u32 %v8950, %v8953
  %v8955 = vsel %vm7388, %v8945, %v8954
  %v8957 = vshrl.u32 %v8910, 16
  %v8959 = vrot.slane %v8957, 2
  %v8960 = vshll.u32 %v8910, 16
  %v8962 = vrot.slane %v8960, 3
  %v8963 = vor.u32 %v8959, %v8962
  %v8964 = vsel %vm7388, %v8954, %v8963
  %v8966 = vshrl.u32 %v8911, 16
  %v8968 = vrot.slane %v8966, 2
  %v8969 = vshll.u32 %v8911, 16
  %v8971 = vrot.slane %v8969, 3
  %v8972 = vor.u32 %v8968, %v8971
  %v8973 = vsel %vm7388, %v8963, %v8972
  %v8975 = vshrl.u32 %v8912, 16
  %v8977 = vrot.slane %v8975, 2
  %v8978 = vshll.u32 %v8912, 16
  %v8980 = vrot.slane %v8978, 3
  %v8981 = vor.u32 %v8977, %v8980
  %v8982 = vsel %vm7388, %v8972, %v8981
  %v8984 = vshrl.u32 %v8913, 16
  %v8986 = vrot.slane %v8984, 2
  %v8987 = vshll.u32 %v8913, 16
  %v8989 = vrot.slane %v8987, 3
  %v8990 = vor.u32 %v8986, %v8989
  %v8991 = vsel %vm7388, %v8981, %v8990
  %v8993 = vshrl.u32 %v8914, 16
  %v8995 = vrot.slane %v8993, 2
  %v8996 = vshll.u32 %v8914, 16
  %v8998 = vrot.slane %v8996, 3
  %v8999 = vor.u32 %v8995, %v8998
  %v9000 = vsel %vm7388, %v8990, %v8999
  %v9002 = vshrl.u32 %v8915, 16
  %v9004 = vrot.slane %v9002, 2
  %v9005 = vshll.u32 %v8915, 16
  %v9007 = vrot.slane %v9005, 3
  %v9008 = vor.u32 %v9004, %v9007
  %v9009 = vsel %vm7388, %v8999, %v9008
  %v9011 = vshrl.u32 %v8916, 16
  %v9013 = vrot.slane %v9011, 2
  %v9014 = vshll.u32 %v8916, 16
  %v9016 = vrot.slane %v9014, 3
  %v9017 = vor.u32 %v9013, %v9016
  %v9018 = vsel %vm7388, %v9008, %v9017
  %v9020 = vshrl.u32 %v8917, 16
  %v9022 = vrot.slane %v9020, 2
  %v9023 = vshll.u32 %v8917, 16
  %v9025 = vrot.slane %v9023, 3
  %v9026 = vor.u32 %v9022, %v9025
  %v9027 = vsel %vm7388, %v9017, %v9026
  %v9029 = vshrl.u32 %v8918, 16
  %v9031 = vrot.slane %v9029, 2
  %v9032 = vshll.u32 %v8918, 16
  %v9034 = vrot.slane %v9032, 3
  %v9035 = vor.u32 %v9031, %v9034
  %v9036 = vsel %vm7388, %v9026, %v9035
  %v9038 = vshrl.u32 %v8919, 16
  %v9040 = vrot.slane %v9038, 2
  %v9041 = vshll.u32 %v8919, 16
  %v9043 = vrot.slane %v9041, 3
  %v9044 = vor.u32 %v9040, %v9043
  %v9045 = vsel %vm7388, %v9035, %v9044
  %v9047 = vshrl.u32 %v8920, 16
  %v9049 = vrot.slane %v9047, 2
  %v9050 = vshll.u32 %v8920, 16
  %v9052 = vrot.slane %v9050, 3
  %v9053 = vor.u32 %v9049, %v9052
  %v9054 = vsel %vm7388, %v9044, %v9053
  %v9056 = vsel %vm3049, %v8937, 0
  %v9059 = vsel %vm3049, %v8946, 0
  %v9062 = vsel %vm3049, %v8955, 0
  %v9065 = vsel %vm3049, %v8964, 0
  %v9068 = vsel %vm3049, %v8973, 0
  %v9071 = vsel %vm3049, %v8982, 0
  %v9074 = vsel %vm3049, %v8991, 0
  %v9077 = vsel %vm3049, %v9000, 0
  %v9080 = vsel %vm3049, %v9009, 0
  %v9083 = vsel %vm3049, %v9018, 0
  %v9086 = vsel %vm3049, %v9027, 0
  %v9089 = vsel %vm3049, %v9036, 0
  %v9092 = vsel %vm3049, %v9045, 0
  %v9095 = vsel %vm3049, %v9054, 0
  %v9098 = vsel %vm3049, %v9053, 0
  %v9101 = vsel %vm3095, %v8847, 0
  %9103 = vmatprep.subr.bf16.mxu0 0
  %9104 = vmatpush1.bf16.msra.mxu0 0
  %9105 = vmatprep.subr.bf16.mxu0 0
  %9106 = vmatpush1.bf16.msra.mxu0 0
  %9107 = vmatprep.subr.bf16.mxu0 0
  %9108 = vmatpush1.bf16.msra.mxu0 0
  %9109 = vmatprep.subr.bf16.mxu0 0
  %9110 = vmatpush1.bf16.msra.mxu0 0
  %9111 = vmatprep.subr.bf16.mxu0 0
  %9112 = vmatpush1.bf16.msra.mxu0 0
  %9113 = vmatprep.subr.bf16.mxu0 0
  %9114 = vmatpush1.bf16.msra.mxu0 0
  %9115 = vmatprep.subr.bf16.mxu0 0
  %9116 = vmatpush1.bf16.msra.mxu0 0
  %9117 = vmatprep.subr.bf16.mxu0 0
  %9118 = vmatpush1.bf16.msra.mxu0 %v9101
  %9119 = vmatprep.subr.bf16.mxu0 0
  %9120 = vmatpush2.bf16.msra.mxu0 0
  %9121 = vmatprep.subr.bf16.mxu0 0
  %9122 = vmatpush2.bf16.msra.mxu0 0
  %9123 = vmatprep.subr.bf16.mxu0 0
  %9124 = vmatpush2.bf16.msra.mxu0 0
  %9125 = vmatprep.subr.bf16.mxu0 0
  %9126 = vmatpush2.bf16.msra.mxu0 0
  %9127 = vmatprep.subr.bf16.mxu0 0
  %9128 = vmatpush2.bf16.msra.mxu0 0
  %9129 = vmatprep.subr.bf16.mxu0 0
  %9130 = vmatpush2.bf16.msra.mxu0 0
  %9131 = vmatprep.subr.bf16.mxu0 0
  %9132 = vmatpush2.bf16.msra.mxu0 0
  %9133 = vmatprep.subr.bf16.mxu0 0
  %9134 = vmatpush2.bf16.msra.mxu0 0
  %9135 = vmatprep.mubr.bf16.mxu0 0
  %9136 = vmatmul.mubr.bf16.gmra.mxu0 %v9056
  %v9137 = vpop.f32.mrf.mxu0
  %v9138 = vadd.f32 0.0, %v9137
  %v9139 = vpop.f32.mrf.mxu0
  %v9140 = vpop.f32.mrf.mxu0
  %v9141 = vadd.f32 0.0, %v9140
  %v9142 = vpop.f32.mrf.mxu0
  %9143 = vmatprep.mubr.bf16.mxu0 0
  %9144 = vmatmul.mubr.bf16.gmra.mxu0 %v9059
  %v9145 = vpop.f32.mrf.mxu0
  %v9146 = vadd.f32 0.0, %v9145
  %v9147 = vpop.f32.mrf.mxu0
  %v9148 = vpop.f32.mrf.mxu0
  %v9149 = vadd.f32 0.0, %v9148
  %v9150 = vpop.f32.mrf.mxu0
  %9151 = vmatprep.mubr.bf16.mxu0 0
  %9152 = vmatmul.mubr.bf16.gmra.mxu0 %v9062
  %v9153 = vpop.f32.mrf.mxu0
  %v9154 = vadd.f32 0.0, %v9153
  %v9155 = vpop.f32.mrf.mxu0
  %v9156 = vpop.f32.mrf.mxu0
  %v9157 = vadd.f32 0.0, %v9156
  %v9158 = vpop.f32.mrf.mxu0
  %9159 = vmatprep.mubr.bf16.mxu0 0
  %9160 = vmatmul.mubr.bf16.gmra.mxu0 %v9065
  %v9161 = vpop.f32.mrf.mxu0
  %v9162 = vadd.f32 0.0, %v9161
  %v9163 = vpop.f32.mrf.mxu0
  %v9164 = vpop.f32.mrf.mxu0
  %v9165 = vadd.f32 0.0, %v9164
  %v9166 = vpop.f32.mrf.mxu0
  %9167 = vmatprep.mubr.bf16.mxu0 0
  %9168 = vmatmul.mubr.bf16.gmra.mxu0 %v9068
  %v9169 = vpop.f32.mrf.mxu0
  %v9170 = vadd.f32 0.0, %v9169
  %v9171 = vpop.f32.mrf.mxu0
  %v9172 = vpop.f32.mrf.mxu0
  %v9173 = vadd.f32 0.0, %v9172
  %v9174 = vpop.f32.mrf.mxu0
  %9175 = vmatprep.mubr.bf16.mxu0 0
  %9176 = vmatmul.mubr.bf16.gmra.mxu0 %v9071
  %v9177 = vpop.f32.mrf.mxu0
  %v9178 = vadd.f32 0.0, %v9177
  %v9179 = vpop.f32.mrf.mxu0
  %v9180 = vpop.f32.mrf.mxu0
  %v9181 = vadd.f32 0.0, %v9180
  %v9182 = vpop.f32.mrf.mxu0
  %9183 = vmatprep.mubr.bf16.mxu0 0
  %9184 = vmatmul.mubr.bf16.gmra.mxu0 %v9074
  %v9185 = vpop.f32.mrf.mxu0
  %v9186 = vadd.f32 0.0, %v9185
  %v9187 = vpop.f32.mrf.mxu0
  %v9188 = vpop.f32.mrf.mxu0
  %v9189 = vadd.f32 0.0, %v9188
  %v9190 = vpop.f32.mrf.mxu0
  %9191 = vmatprep.mubr.bf16.mxu0 0
  %9192 = vmatmul.mubr.bf16.gmra.mxu0 %v9077
  %v9193 = vpop.f32.mrf.mxu0
  %v9194 = vadd.f32 0.0, %v9193
  %v9195 = vpop.f32.mrf.mxu0
  %v9196 = vpop.f32.mrf.mxu0
  %v9197 = vadd.f32 0.0, %v9196
  %v9198 = vpop.f32.mrf.mxu0
  %9199 = vmatprep.mubr.bf16.mxu0 0
  %9200 = vmatmul.mubr.bf16.gmra.mxu0 %v9080
  %v9201 = vpop.f32.mrf.mxu0
  %v9202 = vadd.f32 0.0, %v9201
  %v9203 = vpop.f32.mrf.mxu0
  %v9204 = vpop.f32.mrf.mxu0
  %v9205 = vadd.f32 0.0, %v9204
  %v9206 = vpop.f32.mrf.mxu0
  %9207 = vmatprep.mubr.bf16.mxu0 0
  %9208 = vmatmul.mubr.bf16.gmra.mxu0 %v9083
  %v9209 = vpop.f32.mrf.mxu0
  %v9210 = vadd.f32 0.0, %v9209
  %v9211 = vpop.f32.mrf.mxu0
  %v9212 = vpop.f32.mrf.mxu0
  %v9213 = vadd.f32 0.0, %v9212
  %v9214 = vpop.f32.mrf.mxu0
  %9215 = vmatprep.mubr.bf16.mxu0 0
  %9216 = vmatmul.mubr.bf16.gmra.mxu0 %v9086
  %v9217 = vpop.f32.mrf.mxu0
  %v9218 = vadd.f32 0.0, %v9217
  %v9219 = vpop.f32.mrf.mxu0
  %v9220 = vpop.f32.mrf.mxu0
  %v9221 = vadd.f32 0.0, %v9220
  %v9222 = vpop.f32.mrf.mxu0
  %9223 = vmatprep.mubr.bf16.mxu0 0
  %9224 = vmatmul.mubr.bf16.gmra.mxu0 %v9089
  %v9225 = vpop.f32.mrf.mxu0
  %v9226 = vadd.f32 0.0, %v9225
  %v9227 = vpop.f32.mrf.mxu0
  %v9228 = vpop.f32.mrf.mxu0
  %v9229 = vadd.f32 0.0, %v9228
  %v9230 = vpop.f32.mrf.mxu0
  %9231 = vmatprep.mubr.bf16.mxu0 0
  %9232 = vmatmul.mubr.bf16.gmra.mxu0 %v9092
  %v9233 = vpop.f32.mrf.mxu0
  %v9234 = vadd.f32 0.0, %v9233
  %v9235 = vpop.f32.mrf.mxu0
  %v9236 = vpop.f32.mrf.mxu0
  %v9237 = vadd.f32 0.0, %v9236
  %v9238 = vpop.f32.mrf.mxu0
  %9239 = vmatprep.mubr.bf16.mxu0 0
  %9240 = vmatmul.mubr.bf16.gmra.mxu0 %v9095
  %v9241 = vpop.f32.mrf.mxu0
  %v9242 = vadd.f32 0.0, %v9241
  %v9243 = vpop.f32.mrf.mxu0
  %v9244 = vpop.f32.mrf.mxu0
  %v9245 = vadd.f32 0.0, %v9244
  %v9246 = vpop.f32.mrf.mxu0
  %9247 = vmatprep.mubr.bf16.mxu0 0
  %9248 = vmatmul.mubr.bf16.gmra.mxu0 %v9098
  %v9249 = vpop.f32.mrf.mxu0
  %v9250 = vadd.f32 0.0, %v9249
  %v9251 = vpop.f32.mrf.mxu0
  %v9252 = vpop.f32.mrf.mxu0
  %v9253 = vpop.f32.mrf.mxu0
  %9254 = vdwg.mxu0
  %v9255 = vadd.f32 %v8700, %v9138
  %v9256 = vadd.f32 %v8703, %v9141
  %v9257 = vadd.f32 %v8708, %v9146
  %v9258 = vadd.f32 %v8711, %v9149
  %v9259 = vadd.f32 %v8716, %v9154
  %v9260 = vadd.f32 %v8719, %v9157
  %v9261 = vadd.f32 %v8724, %v9162
  %v9262 = vadd.f32 %v8727, %v9165
  %v9263 = vadd.f32 %v8732, %v9170
  %v9264 = vadd.f32 %v8735, %v9173
  %v9265 = vadd.f32 %v8740, %v9178
  %v9266 = vadd.f32 %v8743, %v9181
  %v9267 = vadd.f32 %v8748, %v9186
  %v9268 = vadd.f32 %v8751, %v9189
  %v9269 = vadd.f32 %v8756, %v9194
  %v9270 = vadd.f32 %v8759, %v9197
  %v9271 = vadd.f32 %v8764, %v9202
  %v9272 = vadd.f32 %v8767, %v9205
  %v9273 = vadd.f32 %v8772, %v9210
  %v9274 = vadd.f32 %v8775, %v9213
  %v9275 = vadd.f32 %v8780, %v9218
  %v9276 = vadd.f32 %v8783, %v9221
  %v9277 = vadd.f32 %v8788, %v9226
  %v9278 = vadd.f32 %v8791, %v9229
  %v9279 = vadd.f32 %v8796, %v9234
  %v9280 = vadd.f32 %v8799, %v9237
  %v9281 = vadd.f32 %v8804, %v9242
  %v9282 = vadd.f32 %v8807, %v9245
  %v9283 = vadd.f32 %v8812, %v9250
  %v9284 = vld [vmem:[#allocation3 + $0x8] sm:$0x8]
  %s9285 = scalar_lea.vmem %s2, 60
  %v9286 = vld [vmem:[%s9285] sm:$0xf]
  %v9288 = vunpack.c.l.b16 %v9284
  %v9289 = vpack.c.b16 %v8878, %v9288
  %vm9290 = vcmask 1044480
  %v9291 = vrot.slane %v9289, 3
  %v9292 = vrot.slane %v8907, 3
  %v9293 = vsel %vm9290, %v9291, %v9292
  %v9294 = vrot.slane %v8908, 3
  %v9295 = vsel %vm9290, %v9292, %v9294
  %v9296 = vrot.slane %v8909, 3
  %v9297 = vsel %vm9290, %v9294, %v9296
  %v9298 = vrot.slane %v8910, 3
  %v9299 = vsel %vm9290, %v9296, %v9298
  %v9300 = vrot.slane %v8911, 3
  %v9301 = vsel %vm9290, %v9298, %v9300
  %v9302 = vrot.slane %v8912, 3
  %v9303 = vsel %vm9290, %v9300, %v9302
  %v9304 = vrot.slane %v8913, 3
  %v9305 = vsel %vm9290, %v9302, %v9304
  %v9306 = vrot.slane %v8914, 3
  %v9307 = vsel %vm9290, %v9304, %v9306
  %v9308 = vrot.slane %v8915, 3
  %v9309 = vsel %vm9290, %v9306, %v9308
  %v9310 = vrot.slane %v8916, 3
  %v9311 = vsel %vm9290, %v9308, %v9310
  %v9312 = vrot.slane %v8917, 3
  %v9313 = vsel %vm9290, %v9310, %v9312
  %v9314 = vrot.slane %v8918, 3
  %v9315 = vsel %vm9290, %v9312, %v9314
  %v9316 = vrot.slane %v8919, 3
  %v9317 = vsel %vm9290, %v9314, %v9316
  %v9318 = vrot.slane %v8920, 3
  %v9319 = vsel %vm9290, %v9316, %v9318
  %v9321 = vsel %vm3049, %v9293, 0
  %v9324 = vsel %vm3049, %v9295, 0
  %v9327 = vsel %vm3049, %v9297, 0
  %v9330 = vsel %vm3049, %v9299, 0
  %v9333 = vsel %vm3049, %v9301, 0
  %v9336 = vsel %vm3049, %v9303, 0
  %v9339 = vsel %vm3049, %v9305, 0
  %v9342 = vsel %vm3049, %v9307, 0
  %v9345 = vsel %vm3049, %v9309, 0
  %v9348 = vsel %vm3049, %v9311, 0
  %v9351 = vsel %vm3049, %v9313, 0
  %v9354 = vsel %vm3049, %v9315, 0
  %v9357 = vsel %vm3049, %v9317, 0
  %v9360 = vsel %vm3049, %v9319, 0
  %v9363 = vsel %vm3049, %v9318, 0
  %v9366 = vsel %vm3095, %v9286, 0
  %9368 = vmatprep.subr.bf16.mxu0 0
  %9369 = vmatpush1.bf16.msra.mxu0 0
  %9370 = vmatprep.subr.bf16.mxu0 0
  %9371 = vmatpush1.bf16.msra.mxu0 0
  %9372 = vmatprep.subr.bf16.mxu0 0
  %9373 = vmatpush1.bf16.msra.mxu0 0
  %9374 = vmatprep.subr.bf16.mxu0 0
  %9375 = vmatpush1.bf16.msra.mxu0 0
  %9376 = vmatprep.subr.bf16.mxu0 0
  %9377 = vmatpush1.bf16.msra.mxu0 0
  %9378 = vmatprep.subr.bf16.mxu0 0
  %9379 = vmatpush1.bf16.msra.mxu0 0
  %9380 = vmatprep.subr.bf16.mxu0 0
  %9381 = vmatpush1.bf16.msra.mxu0 0
  %9382 = vmatprep.subr.bf16.mxu0 0
  %9383 = vmatpush1.bf16.msra.mxu0 %v9366
  %9384 = vmatprep.subr.bf16.mxu0 0
  %9385 = vmatpush2.bf16.msra.mxu0 0
  %9386 = vmatprep.subr.bf16.mxu0 0
  %9387 = vmatpush2.bf16.msra.mxu0 0
  %9388 = vmatprep.subr.bf16.mxu0 0
  %9389 = vmatpush2.bf16.msra.mxu0 0
  %9390 = vmatprep.subr.bf16.mxu0 0
  %9391 = vmatpush2.bf16.msra.mxu0 0
  %9392 = vmatprep.subr.bf16.mxu0 0
  %9393 = vmatpush2.bf16.msra.mxu0 0
  %9394 = vmatprep.subr.bf16.mxu0 0
  %9395 = vmatpush2.bf16.msra.mxu0 0
  %9396 = vmatprep.subr.bf16.mxu0 0
  %9397 = vmatpush2.bf16.msra.mxu0 0
  %9398 = vmatprep.subr.bf16.mxu0 0
  %9399 = vmatpush2.bf16.msra.mxu0 0
  %9400 = vmatprep.mubr.bf16.mxu0 0
  %9401 = vmatmul.mubr.bf16.gmra.mxu0 %v9321
  %v9402 = vpop.f32.mrf.mxu0
  %v9403 = vadd.f32 0.0, %v9402
  %v9404 = vpop.f32.mrf.mxu0
  %v9405 = vpop.f32.mrf.mxu0
  %v9406 = vadd.f32 0.0, %v9405
  %v9407 = vpop.f32.mrf.mxu0
  %9408 = vmatprep.mubr.bf16.mxu0 0
  %9409 = vmatmul.mubr.bf16.gmra.mxu0 %v9324
  %v9410 = vpop.f32.mrf.mxu0
  %v9411 = vadd.f32 0.0, %v9410
  %v9412 = vpop.f32.mrf.mxu0
  %v9413 = vpop.f32.mrf.mxu0
  %v9414 = vadd.f32 0.0, %v9413
  %v9415 = vpop.f32.mrf.mxu0
  %9416 = vmatprep.mubr.bf16.mxu0 0
  %9417 = vmatmul.mubr.bf16.gmra.mxu0 %v9327
  %v9418 = vpop.f32.mrf.mxu0
  %v9419 = vadd.f32 0.0, %v9418
  %v9420 = vpop.f32.mrf.mxu0
  %v9421 = vpop.f32.mrf.mxu0
  %v9422 = vadd.f32 0.0, %v9421
  %v9423 = vpop.f32.mrf.mxu0
  %9424 = vmatprep.mubr.bf16.mxu0 0
  %9425 = vmatmul.mubr.bf16.gmra.mxu0 %v9330
  %v9426 = vpop.f32.mrf.mxu0
  %v9427 = vadd.f32 0.0, %v9426
  %v9428 = vpop.f32.mrf.mxu0
  %v9429 = vpop.f32.mrf.mxu0
  %v9430 = vadd.f32 0.0, %v9429
  %v9431 = vpop.f32.mrf.mxu0
  %9432 = vmatprep.mubr.bf16.mxu0 0
  %9433 = vmatmul.mubr.bf16.gmra.mxu0 %v9333
  %v9434 = vpop.f32.mrf.mxu0
  %v9435 = vadd.f32 0.0, %v9434
  %v9436 = vpop.f32.mrf.mxu0
  %v9437 = vpop.f32.mrf.mxu0
  %v9438 = vadd.f32 0.0, %v9437
  %v9439 = vpop.f32.mrf.mxu0
  %9440 = vmatprep.mubr.bf16.mxu0 0
  %9441 = vmatmul.mubr.bf16.gmra.mxu0 %v9336
  %v9442 = vpop.f32.mrf.mxu0
  %v9443 = vadd.f32 0.0, %v9442
  %v9444 = vpop.f32.mrf.mxu0
  %v9445 = vpop.f32.mrf.mxu0
  %v9446 = vadd.f32 0.0, %v9445
  %v9447 = vpop.f32.mrf.mxu0
  %9448 = vmatprep.mubr.bf16.mxu0 0
  %9449 = vmatmul.mubr.bf16.gmra.mxu0 %v9339
  %v9450 = vpop.f32.mrf.mxu0
  %v9451 = vadd.f32 0.0, %v9450
  %v9452 = vpop.f32.mrf.mxu0
  %v9453 = vpop.f32.mrf.mxu0
  %v9454 = vadd.f32 0.0, %v9453
  %v9455 = vpop.f32.mrf.mxu0
  %9456 = vmatprep.mubr.bf16.mxu0 0
  %9457 = vmatmul.mubr.bf16.gmra.mxu0 %v9342
  %v9458 = vpop.f32.mrf.mxu0
  %v9459 = vadd.f32 0.0, %v9458
  %v9460 = vpop.f32.mrf.mxu0
  %v9461 = vpop.f32.mrf.mxu0
  %v9462 = vadd.f32 0.0, %v9461
  %v9463 = vpop.f32.mrf.mxu0
  %9464 = vmatprep.mubr.bf16.mxu0 0
  %9465 = vmatmul.mubr.bf16.gmra.mxu0 %v9345
  %v9466 = vpop.f32.mrf.mxu0
  %v9467 = vadd.f32 0.0, %v9466
  %v9468 = vpop.f32.mrf.mxu0
  %v9469 = vpop.f32.mrf.mxu0
  %v9470 = vadd.f32 0.0, %v9469
  %v9471 = vpop.f32.mrf.mxu0
  %9472 = vmatprep.mubr.bf16.mxu0 0
  %9473 = vmatmul.mubr.bf16.gmra.mxu0 %v9348
  %v9474 = vpop.f32.mrf.mxu0
  %v9475 = vadd.f32 0.0, %v9474
  %v9476 = vpop.f32.mrf.mxu0
  %v9477 = vpop.f32.mrf.mxu0
  %v9478 = vadd.f32 0.0, %v9477
  %v9479 = vpop.f32.mrf.mxu0
  %9480 = vmatprep.mubr.bf16.mxu0 0
  %9481 = vmatmul.mubr.bf16.gmra.mxu0 %v9351
  %v9482 = vpop.f32.mrf.mxu0
  %v9483 = vadd.f32 0.0, %v9482
  %v9484 = vpop.f32.mrf.mxu0
  %v9485 = vpop.f32.mrf.mxu0
  %v9486 = vadd.f32 0.0, %v9485
  %v9487 = vpop.f32.mrf.mxu0
  %9488 = vmatprep.mubr.bf16.mxu0 0
  %9489 = vmatmul.mubr.bf16.gmra.mxu0 %v9354
  %v9490 = vpop.f32.mrf.mxu0
  %v9491 = vadd.f32 0.0, %v9490
  %v9492 = vpop.f32.mrf.mxu0
  %v9493 = vpop.f32.mrf.mxu0
  %v9494 = vadd.f32 0.0, %v9493
  %v9495 = vpop.f32.mrf.mxu0
  %9496 = vmatprep.mubr.bf16.mxu0 0
  %9497 = vmatmul.mubr.bf16.gmra.mxu0 %v9357
  %v9498 = vpop.f32.mrf.mxu0
  %v9499 = vadd.f32 0.0, %v9498
  %v9500 = vpop.f32.mrf.mxu0
  %v9501 = vpop.f32.mrf.mxu0
  %v9502 = vadd.f32 0.0, %v9501
  %v9503 = vpop.f32.mrf.mxu0
  %9504 = vmatprep.mubr.bf16.mxu0 0
  %9505 = vmatmul.mubr.bf16.gmra.mxu0 %v9360
  %v9506 = vpop.f32.mrf.mxu0
  %v9507 = vadd.f32 0.0, %v9506
  %v9508 = vpop.f32.mrf.mxu0
  %v9509 = vpop.f32.mrf.mxu0
  %v9510 = vadd.f32 0.0, %v9509
  %v9511 = vpop.f32.mrf.mxu0
  %9512 = vmatprep.mubr.bf16.mxu0 0
  %9513 = vmatmul.mubr.bf16.gmra.mxu0 %v9363
  %v9514 = vpop.f32.mrf.mxu0
  %v9515 = vadd.f32 0.0, %v9514
  %v9516 = vpop.f32.mrf.mxu0
  %v9517 = vpop.f32.mrf.mxu0
  %v9518 = vpop.f32.mrf.mxu0
  %9519 = vdwg.mxu0
  %v9520 = vadd.f32 %v9255, %v9403
  %v9521 = vadd.f32 %v9256, %v9406
  %v9522 = vadd.f32 %v9257, %v9411
  %v9523 = vadd.f32 %v9258, %v9414
  %v9524 = vadd.f32 %v9259, %v9419
  %v9525 = vadd.f32 %v9260, %v9422
  %v9526 = vadd.f32 %v9261, %v9427
  %v9527 = vadd.f32 %v9262, %v9430
  %v9528 = vadd.f32 %v9263, %v9435
  %v9529 = vadd.f32 %v9264, %v9438
  %v9530 = vadd.f32 %v9265, %v9443
  %v9531 = vadd.f32 %v9266, %v9446
  %v9532 = vadd.f32 %v9267, %v9451
  %v9533 = vadd.f32 %v9268, %v9454
  %v9534 = vadd.f32 %v9269, %v9459
  %v9535 = vadd.f32 %v9270, %v9462
  %v9536 = vadd.f32 %v9271, %v9467
  %v9537 = vadd.f32 %v9272, %v9470
  %v9538 = vadd.f32 %v9273, %v9475
  %v9539 = vadd.f32 %v9274, %v9478
  %v9540 = vadd.f32 %v9275, %v9483
  %v9541 = vadd.f32 %v9276, %v9486
  %v9542 = vadd.f32 %v9277, %v9491
  %v9543 = vadd.f32 %v9278, %v9494
  %v9544 = vadd.f32 %v9279, %v9499
  %v9545 = vadd.f32 %v9280, %v9502
  %v9546 = vadd.f32 %v9281, %v9507
  %v9547 = vadd.f32 %v9282, %v9510
  %v9548 = vadd.f32 %v9283, %v9515
  %v9549 = vsel %vm4200, %v9520, 0.0
  %v9550 = vsel %vm4201, %v9521, 0.0
  %v9551 = vsel %vm4202, %v9522, 0.0
  %v9552 = vsel %vm4203, %v9523, 0.0
  %v9553 = vsel %vm4204, %v9524, 0.0
  %v9554 = vsel %vm4205, %v9525, 0.0
  %v9555 = vsel %vm4206, %v9526, 0.0
  %v9556 = vsel %vm4207, %v9527, 0.0
  %v9557 = vsel %vm4208, %v9528, 0.0
  %v9558 = vsel %vm4209, %v9529, 0.0
  %v9559 = vsel %vm4210, %v9530, 0.0
  %v9560 = vsel %vm4211, %v9531, 0.0
  %v9561 = vsel %vm4212, %v9532, 0.0
  %v9562 = vsel %vm4213, %v9533, 0.0
  %v9563 = vsel %vm4214, %v9534, 0.0
  %v9564 = vsel %vm4215, %v9535, 0.0
  %v9565 = vsel %vm4216, %v9536, 0.0
  %v9566 = vsel %vm4217, %v9537, 0.0
  %v9567 = vsel %vm4218, %v9538, 0.0
  %v9568 = vsel %vm4219, %v9539, 0.0
  %v9569 = vsel %vm4220, %v9540, 0.0
  %v9570 = vsel %vm4221, %v9541, 0.0
  %v9571 = vsel %vm4222, %v9542, 0.0
  %v9572 = vsel %vm4223, %v9543, 0.0
  %v9573 = vsel %vm4224, %v9544, 0.0
  %v9574 = vsel %vm4225, %v9545, 0.0
  %v9575 = vsel %vm4226, %v9546, 0.0
  %v9576 = vsel %vm4227, %v9547, 0.0
  %v9577 = vsel %vm4228, %v9548, 0.0
  %v9578 = vsel %vm4258, %v9549, 0.0
  %v9579 = vsel %vm4258, %v9550, 0.0
  %v9580 = vadd.f32 %v9578, %v9579
  %v9581 = vsel %vm4258, %v9551, 0.0
  %v9582 = vadd.f32 %v9580, %v9581
  %v9583 = vsel %vm4258, %v9552, 0.0
  %v9584 = vadd.f32 %v9582, %v9583
  %v9585 = vsel %vm4258, %v9553, 0.0
  %v9586 = vadd.f32 %v9584, %v9585
  %v9587 = vsel %vm4258, %v9554, 0.0
  %v9588 = vadd.f32 %v9586, %v9587
  %v9589 = vsel %vm4258, %v9555, 0.0
  %v9590 = vadd.f32 %v9588, %v9589
  %v9591 = vsel %vm4258, %v9556, 0.0
  %v9592 = vadd.f32 %v9590, %v9591
  %v9593 = vsel %vm4258, %v9557, 0.0
  %v9594 = vadd.f32 %v9592, %v9593
  %v9595 = vsel %vm4258, %v9558, 0.0
  %v9596 = vadd.f32 %v9594, %v9595
  %v9597 = vsel %vm4258, %v9559, 0.0
  %v9598 = vadd.f32 %v9596, %v9597
  %v9599 = vsel %vm4258, %v9560, 0.0
  %v9600 = vadd.f32 %v9598, %v9599
  %v9601 = vsel %vm4258, %v9561, 0.0
  %v9602 = vadd.f32 %v9600, %v9601
  %v9603 = vsel %vm4258, %v9562, 0.0
  %v9604 = vadd.f32 %v9602, %v9603
  %v9605 = vsel %vm4258, %v9563, 0.0
  %v9606 = vadd.f32 %v9604, %v9605
  %v9607 = vsel %vm4258, %v9564, 0.0
  %v9608 = vadd.f32 %v9606, %v9607
  %v9609 = vsel %vm4258, %v9565, 0.0
  %v9610 = vadd.f32 %v9608, %v9609
  %v9611 = vsel %vm4258, %v9566, 0.0
  %v9612 = vadd.f32 %v9610, %v9611
  %v9613 = vsel %vm4258, %v9567, 0.0
  %v9614 = vadd.f32 %v9612, %v9613
  %v9615 = vsel %vm4258, %v9568, 0.0
  %v9616 = vadd.f32 %v9614, %v9615
  %v9617 = vsel %vm4258, %v9569, 0.0
  %v9618 = vadd.f32 %v9616, %v9617
  %v9619 = vsel %vm4258, %v9570, 0.0
  %v9620 = vadd.f32 %v9618, %v9619
  %v9621 = vsel %vm4258, %v9571, 0.0
  %v9622 = vadd.f32 %v9620, %v9621
  %v9623 = vsel %vm4258, %v9572, 0.0
  %v9624 = vadd.f32 %v9622, %v9623
  %v9625 = vsel %vm4258, %v9573, 0.0
  %v9626 = vadd.f32 %v9624, %v9625
  %v9627 = vsel %vm4258, %v9574, 0.0
  %v9628 = vadd.f32 %v9626, %v9627
  %v9629 = vsel %vm4258, %v9575, 0.0
  %v9630 = vadd.f32 %v9628, %v9629
  %v9631 = vsel %vm4258, %v9576, 0.0
  %v9632 = vadd.f32 %v9630, %v9631
  %v9633 = vsel %vm4314, %v9577, 0.0
  %v9634 = vadd.f32 %v9632, %v9633
  %v9635 = vrot.slane %v9634, 4
  %v9636 = vadd.f32 %v9634, %v9635
  %v9637 = vrot.slane %v9636, 2
  %v9638 = vadd.f32 %v9636, %v9637
  %v9639 = vrot.slane %v9638, 1
  %v9640 = vadd.f32 %v9638, %v9639
  %v9641 = vadd.f32 %v7844, %v9640
  %v9642 = vmul.f32 %v9549, %v9549
  %v9643 = vmul.f32 %v9550, %v9550
  %v9644 = vmul.f32 %v9551, %v9551
  %v9645 = vmul.f32 %v9552, %v9552
  %v9646 = vmul.f32 %v9553, %v9553
  %v9647 = vmul.f32 %v9554, %v9554
  %v9648 = vmul.f32 %v9555, %v9555
  %v9649 = vmul.f32 %v9556, %v9556
  %v9650 = vmul.f32 %v9557, %v9557
  %v9651 = vmul.f32 %v9558, %v9558
  %v9652 = vmul.f32 %v9559, %v9559
  %v9653 = vmul.f32 %v9560, %v9560
  %v9654 = vmul.f32 %v9561, %v9561
  %v9655 = vmul.f32 %v9562, %v9562
  %v9656 = vmul.f32 %v9563, %v9563
  %v9657 = vmul.f32 %v9564, %v9564
  %v9658 = vmul.f32 %v9565, %v9565
  %v9659 = vmul.f32 %v9566, %v9566
  %v9660 = vmul.f32 %v9567, %v9567
  %v9661 = vmul.f32 %v9568, %v9568
  %v9662 = vmul.f32 %v9569, %v9569
  %v9663 = vmul.f32 %v9570, %v9570
  %v9664 = vmul.f32 %v9571, %v9571
  %v9665 = vmul.f32 %v9572, %v9572
  %v9666 = vmul.f32 %v9573, %v9573
  %v9667 = vmul.f32 %v9574, %v9574
  %v9668 = vmul.f32 %v9575, %v9575
  %v9669 = vmul.f32 %v9576, %v9576
  %v9670 = vmul.f32 %v9577, %v9577
  %v9671 = vsel %vm4258, %v9642, 0.0
  %v9672 = vsel %vm4258, %v9643, 0.0
  %v9673 = vadd.f32 %v9671, %v9672
  %v9674 = vsel %vm4258, %v9644, 0.0
  %v9675 = vadd.f32 %v9673, %v9674
  %v9676 = vsel %vm4258, %v9645, 0.0
  %v9677 = vadd.f32 %v9675, %v9676
  %v9678 = vsel %vm4258, %v9646, 0.0
  %v9679 = vadd.f32 %v9677, %v9678
  %v9680 = vsel %vm4258, %v9647, 0.0
  %v9681 = vadd.f32 %v9679, %v9680
  %v9682 = vsel %vm4258, %v9648, 0.0
  %v9683 = vadd.f32 %v9681, %v9682
  %v9684 = vsel %vm4258, %v9649, 0.0
  %v9685 = vadd.f32 %v9683, %v9684
  %v9686 = vsel %vm4258, %v9650, 0.0
  %v9687 = vadd.f32 %v9685, %v9686
  %v9688 = vsel %vm4258, %v9651, 0.0
  %v9689 = vadd.f32 %v9687, %v9688
  %v9690 = vsel %vm4258, %v9652, 0.0
  %v9691 = vadd.f32 %v9689, %v9690
  %v9692 = vsel %vm4258, %v9653, 0.0
  %v9693 = vadd.f32 %v9691, %v9692
  %v9694 = vsel %vm4258, %v9654, 0.0
  %v9695 = vadd.f32 %v9693, %v9694
  %v9696 = vsel %vm4258, %v9655, 0.0
  %v9697 = vadd.f32 %v9695, %v9696
  %v9698 = vsel %vm4258, %v9656, 0.0
  %v9699 = vadd.f32 %v9697, %v9698
  %v9700 = vsel %vm4258, %v9657, 0.0
  %v9701 = vadd.f32 %v9699, %v9700
  %v9702 = vsel %vm4258, %v9658, 0.0
  %v9703 = vadd.f32 %v9701, %v9702
  %v9704 = vsel %vm4258, %v9659, 0.0
  %v9705 = vadd.f32 %v9703, %v9704
  %v9706 = vsel %vm4258, %v9660, 0.0
  %v9707 = vadd.f32 %v9705, %v9706
  %v9708 = vsel %vm4258, %v9661, 0.0
  %v9709 = vadd.f32 %v9707, %v9708
  %v9710 = vsel %vm4258, %v9662, 0.0
  %v9711 = vadd.f32 %v9709, %v9710
  %v9712 = vsel %vm4258, %v9663, 0.0
  %v9713 = vadd.f32 %v9711, %v9712
  %v9714 = vsel %vm4258, %v9664, 0.0
  %v9715 = vadd.f32 %v9713, %v9714
  %v9716 = vsel %vm4258, %v9665, 0.0
  %v9717 = vadd.f32 %v9715, %v9716
  %v9718 = vsel %vm4258, %v9666, 0.0
  %v9719 = vadd.f32 %v9717, %v9718
  %v9720 = vsel %vm4258, %v9667, 0.0
  %v9721 = vadd.f32 %v9719, %v9720
  %v9722 = vsel %vm4258, %v9668, 0.0
  %v9723 = vadd.f32 %v9721, %v9722
  %v9724 = vsel %vm4258, %v9669, 0.0
  %v9725 = vadd.f32 %v9723, %v9724
  %v9726 = vsel %vm4314, %v9670, 0.0
  %v9727 = vadd.f32 %v9725, %v9726
  %v9728 = vrot.slane %v9727, 4
  %v9729 = vadd.f32 %v9727, %v9728
  %v9730 = vrot.slane %v9729, 2
  %v9731 = vadd.f32 %v9729, %v9730
  %v9732 = vrot.slane %v9731, 1
  %v9733 = vadd.f32 %v9731, %v9732
  %v9734 = vadd.f32 %v7937, %v9733
  %v9735 = vpack.c.bf16 %v9550, %v9549
  %v9736 = vpack.c.bf16 %v9552, %v9551
  %v9737 = vpack.c.bf16 %v9554, %v9553
  %v9738 = vpack.c.bf16 %v9556, %v9555
  %v9739 = vpack.c.bf16 %v9558, %v9557
  %v9740 = vpack.c.bf16 %v9560, %v9559
  %v9741 = vpack.c.bf16 %v9562, %v9561
  %v9742 = vpack.c.bf16 %v9564, %v9563
  %v9743 = vpack.c.bf16 %v9566, %v9565
  %v9744 = vpack.c.bf16 %v9568, %v9567
  %v9745 = vpack.c.bf16 %v9570, %v9569
  %v9746 = vpack.c.bf16 %v9572, %v9571
  %v9747 = vpack.c.bf16 %v9574, %v9573
  %v9748 = vpack.c.bf16 %v9576, %v9575
  %v9749 = vpack.c.bf16 %v9577, %v9577
  %v9765 = vunpack.c.l.b16 %v9735
  %v9766 = vunpack.c.h.b16 %v9735
  %v9767 = vunpack.c.l.b16 %v9736
  %v9768 = vunpack.c.h.b16 %v9736
  %v9769 = vunpack.c.l.b16 %v9737
  %v9770 = vunpack.c.h.b16 %v9737
  %v9771 = vunpack.c.l.b16 %v9738
  %v9772 = vunpack.c.h.b16 %v9738
  %v9773 = vunpack.c.l.b16 %v9739
  %v9774 = vunpack.c.h.b16 %v9739
  %v9775 = vunpack.c.l.b16 %v9740
  %v9776 = vunpack.c.h.b16 %v9740
  %v9777 = vunpack.c.l.b16 %v9741
  %v9778 = vunpack.c.h.b16 %v9741
  %v9779 = vunpack.c.l.b16 %v9742
  %v9780 = vunpack.c.h.b16 %v9742
  %v9781 = vunpack.c.l.b16 %v9743
  %v9782 = vunpack.c.h.b16 %v9743
  %v9783 = vunpack.c.l.b16 %v9744
  %v9784 = vunpack.c.h.b16 %v9744
  %v9785 = vunpack.c.l.b16 %v9745
  %v9786 = vunpack.c.h.b16 %v9745
  %v9787 = vunpack.c.l.b16 %v9746
  %v9788 = vunpack.c.h.b16 %v9746
  %v9789 = vunpack.c.l.b16 %v9747
  %v9790 = vunpack.c.h.b16 %v9747
  %v9791 = vunpack.c.l.b16 %v9748
  %v9792 = vunpack.c.h.b16 %v9748
  %v9793 = vunpack.c.l.b16 %v9749
  %v9794 = vpack.c.b16 %v9765, %v9765
  %v9795 = vpack.c.b16 %v9766, %v9766
  %v9796 = vpack.c.b16 %v9767, %v9767
  %v9797 = vpack.c.b16 %v9768, %v9768
  %v9798 = vpack.c.b16 %v9769, %v9769
  %v9799 = vpack.c.b16 %v9770, %v9770
  %v9800 = vpack.c.b16 %v9771, %v9771
  %v9801 = vpack.c.b16 %v9772, %v9772
  %v9802 = vpack.c.b16 %v9773, %v9773
  %v9803 = vpack.c.b16 %v9774, %v9774
  %v9804 = vpack.c.b16 %v9775, %v9775
  %v9805 = vpack.c.b16 %v9776, %v9776
  %v9806 = vpack.c.b16 %v9777, %v9777
  %v9807 = vpack.c.b16 %v9778, %v9778
  %v9808 = vpack.c.b16 %v9779, %v9779
  %v9809 = vpack.c.b16 %v9780, %v9780
  %v9810 = vpack.c.b16 %v9781, %v9781
  %v9811 = vpack.c.b16 %v9782, %v9782
  %v9812 = vpack.c.b16 %v9783, %v9783
  %v9813 = vpack.c.b16 %v9784, %v9784
  %v9814 = vpack.c.b16 %v9785, %v9785
  %v9815 = vpack.c.b16 %v9786, %v9786
  %v9816 = vpack.c.b16 %v9787, %v9787
  %v9817 = vpack.c.b16 %v9788, %v9788
  %v9818 = vpack.c.b16 %v9789, %v9789
  %v9819 = vpack.c.b16 %v9790, %v9790
  %v9820 = vpack.c.b16 %v9791, %v9791
  %v9821 = vpack.c.b16 %v9792, %v9792
  %v9822 = vpack.c.b16 %v9793, %v9793
  %9823 = vrot.lane.b32.xlu0 %v9794, 12
  %v9824 = vpop.permute.xlu0 %9823
  %9825 = vrot.lane.b32.xlu0 %v9795, 12
  %v9826 = vpop.permute.xlu0 %9825
  %9827 = vrot.lane.b32.xlu0 %v9796, 12
  %v9828 = vpop.permute.xlu0 %9827
  %9829 = vrot.lane.b32.xlu0 %v9797, 12
  %v9830 = vpop.permute.xlu0 %9829
  %9831 = vrot.lane.b32.xlu0 %v9798, 12
  %v9832 = vpop.permute.xlu0 %9831
  %9833 = vrot.lane.b32.xlu0 %v9799, 12
  %v9834 = vpop.permute.xlu0 %9833
  %9835 = vrot.lane.b32.xlu0 %v9800, 12
  %v9836 = vpop.permute.xlu0 %9835
  %9837 = vrot.lane.b32.xlu0 %v9801, 12
  %v9838 = vpop.permute.xlu0 %9837
  %9839 = vrot.lane.b32.xlu0 %v9802, 12
  %v9840 = vpop.permute.xlu0 %9839
  %9841 = vrot.lane.b32.xlu0 %v9803, 12
  %v9842 = vpop.permute.xlu0 %9841
  %9843 = vrot.lane.b32.xlu0 %v9804, 12
  %v9844 = vpop.permute.xlu0 %9843
  %9845 = vrot.lane.b32.xlu0 %v9805, 12
  %v9846 = vpop.permute.xlu0 %9845
  %9847 = vrot.lane.b32.xlu0 %v9806, 12
  %v9848 = vpop.permute.xlu0 %9847
  %9849 = vrot.lane.b32.xlu0 %v9807, 12
  %v9850 = vpop.permute.xlu0 %9849
  %9851 = vrot.lane.b32.xlu0 %v9808, 12
  %v9852 = vpop.permute.xlu0 %9851
  %9853 = vrot.lane.b32.xlu0 %v9809, 12
  %v9854 = vpop.permute.xlu0 %9853
  %9855 = vrot.lane.b32.xlu0 %v9810, 12
  %v9856 = vpop.permute.xlu0 %9855
  %9857 = vrot.lane.b32.xlu0 %v9811, 12
  %v9858 = vpop.permute.xlu0 %9857
  %9859 = vrot.lane.b32.xlu0 %v9812, 12
  %v9860 = vpop.permute.xlu0 %9859
  %9861 = vrot.lane.b32.xlu0 %v9813, 12
  %v9862 = vpop.permute.xlu0 %9861
  %9863 = vrot.lane.b32.xlu0 %v9814, 12
  %v9864 = vpop.permute.xlu0 %9863
  %9865 = vrot.lane.b32.xlu0 %v9815, 12
  %v9866 = vpop.permute.xlu0 %9865
  %9867 = vrot.lane.b32.xlu0 %v9816, 12
  %v9868 = vpop.permute.xlu0 %9867
  %9869 = vrot.lane.b32.xlu0 %v9817, 12
  %v9870 = vpop.permute.xlu0 %9869
  %9871 = vrot.lane.b32.xlu0 %v9818, 12
  %v9872 = vpop.permute.xlu0 %9871
  %9873 = vrot.lane.b32.xlu0 %v9819, 12
  %v9874 = vpop.permute.xlu0 %9873
  %9875 = vrot.lane.b32.xlu0 %v9820, 12
  %v9876 = vpop.permute.xlu0 %9875
  %9877 = vrot.lane.b32.xlu0 %v9821, 12
  %v9878 = vpop.permute.xlu0 %9877
  %9879 = vrot.lane.b32.xlu0 %v9822, 12
  %v9880 = vpop.permute.xlu0 %9879
  %vm9910 = vcmask 126048
  %9911 = vst.msk [vmem:[%s3] sm:$0xf] %vm9910, %v9824
  %9912 = vst.msk [vmem:[%s3 + $0x4] sm:$0xf] %vm9910, %v9826
  %9913 = vst.msk [vmem:[%s3 + $0x8] sm:$0xf] %vm9910, %v9828
  %9914 = vst.msk [vmem:[%s3 + $0xc] sm:$0xf] %vm9910, %v9830
  %9915 = vst.msk [vmem:[%s3 + $0x10] sm:$0xf] %vm9910, %v9832
  %9916 = vst.msk [vmem:[%s3 + $0x14] sm:$0xf] %vm9910, %v9834
  %9917 = vst.msk [vmem:[%s3 + $0x18] sm:$0xf] %vm9910, %v9836
  %9918 = vst.msk [vmem:[%s3 + $0x1c] sm:$0xf] %vm9910, %v9838
  %9919 = vst.msk [vmem:[%s3 + $0x20] sm:$0xf] %vm9910, %v9840
  %9920 = vst.msk [vmem:[%s3 + $0x24] sm:$0xf] %vm9910, %v9842
  %9921 = vst.msk [vmem:[%s3 + $0x28] sm:$0xf] %vm9910, %v9844
  %9922 = vst.msk [vmem:[%s3 + $0x2c] sm:$0xf] %vm9910, %v9846
  %9923 = vst.msk [vmem:[%s3 + $0x30] sm:$0xf] %vm9910, %v9848
  %9924 = vst.msk [vmem:[%s3 + $0x34] sm:$0xf] %vm9910, %v9850
  %9925 = vst.msk [vmem:[%s3 + $0x38] sm:$0xf] %vm9910, %v9852
  %9926 = vst.msk [vmem:[%s3 + $0x3c] sm:$0xf] %vm9910, %v9854
  %9927 = vst.msk [vmem:[%s3 + $0x40] sm:$0xf] %vm9910, %v9856
  %9928 = vst.msk [vmem:[%s3 + $0x44] sm:$0xf] %vm9910, %v9858
  %9929 = vst.msk [vmem:[%s3 + $0x48] sm:$0xf] %vm9910, %v9860
  %9930 = vst.msk [vmem:[%s3 + $0x4c] sm:$0xf] %vm9910, %v9862
  %9931 = vst.msk [vmem:[%s3 + $0x50] sm:$0xf] %vm9910, %v9864
  %9932 = vst.msk [vmem:[%s3 + $0x54] sm:$0xf] %vm9910, %v9866
  %9933 = vst.msk [vmem:[%s3 + $0x58] sm:$0xf] %vm9910, %v9868
  %9934 = vst.msk [vmem:[%s3 + $0x5c] sm:$0xf] %vm9910, %v9870
  %9935 = vst.msk [vmem:[%s3 + $0x60] sm:$0xf] %vm9910, %v9872
  %9936 = vst.msk [vmem:[%s3 + $0x64] sm:$0xf] %vm9910, %v9874
  %9937 = vst.msk [vmem:[%s3 + $0x68] sm:$0xf] %vm9910, %v9876
  %9938 = vst.msk [vmem:[%s3 + $0x6c] sm:$0xf] %vm9910, %v9878
  %vm9939 = vcmask 122976
  %9940 = vst.msk [vmem:[%s3 + $0x70] sm:$0x1] %vm9939, %v9880
  %9941 = vst.msk [vmem:[%s4] sm:$0x1] %vm4563, %v9641
  %9942 = vst.msk [vmem:[%s4 + $0x1] sm:$0x1] %vm4563, %v9734
  // Predicated region
  $region14: #{unet_innermost_block_forward.1} parent=0 // pred_check
    _
  $region15: #{unet_innermost_block_forward.1} parent=0 // pred_check_branch
    %9944 = sbr.rel (0) target = $region17
  $region16: #{unet_innermost_block_forward.1} parent=0 // pred_region
    _
  $region17: #{unet_innermost_block_forward.1} parent=0 // pred_fallthru
    _
  // Predicated region
  $region18: #{unet_innermost_block_forward.1} parent=0 // pred_check
    _
  $region19: #{unet_innermost_block_forward.1} parent=0 // pred_check_branch
    %9946 = sbr.rel (0) target = $region21
  $region20: #{unet_innermost_block_forward.1} parent=0 // pred_region
    _
  $region21: #{unet_innermost_block_forward.1} parent=0 // pred_fallthru
    _
  // Predicated region
  $region22: #{unet_innermost_block_forward.1} parent=0 // pred_check
    _
  $region23: #{unet_innermost_block_forward.1} parent=0 // pred_check_branch
    %9948 = sbr.rel (0) target = $region25
  $region24: #{unet_innermost_block_forward.1} parent=0 // pred_region
    _
  $region25: #{unet_innermost_block_forward.1} parent=0 // pred_fallthru
    _
  // Predicated region
  $region26: #{unet_innermost_block_forward.1} parent=0 // pred_check
    _
  $region27: #{unet_innermost_block_forward.1} parent=0 // pred_check_branch
    %9950 = sbr.rel (0) target = $region29
  $region28: #{unet_innermost_block_forward.1} parent=0 // pred_region
    _
  $region29: #{unet_innermost_block_forward.1} parent=0 // pred_fallthru
    _

</llo_original>
